<compile_context>
chip_gen: v7x
topology: tpu7x:2x2x1
jax: 0.10.0
libtpu: 0.0.40
codegen_flags: <defaults>
</compile_context>

<pallas_src>
import functools
import math

import jax
import jax.numpy as jnp
from jax.experimental import pallas as pl
from jax.experimental.pallas import tpu as pltpu


def _layer_norm(x, w, b, eps=1e-5):
    mu = jnp.mean(x, axis=-1, keepdims=True)
    var = jnp.mean(jnp.square(x - mu), axis=-1, keepdims=True)
    return (x - mu) * jax.lax.rsqrt(var + eps) * w + b


# --------------------------------------------------------------------------- #
# Kernel: one grid step == one transformer encoder layer; the row-attention /
# cosine / fc epilogue is gated on the last step.
# --------------------------------------------------------------------------- #
def _kernel(q_ref, comb_ref,
            wq_ref, bq_ref, wk_ref, bk_ref, wv_ref, bv_ref,
            wo_ref, ob_ref, ln1w_ref, ln1b_ref,
            ff1w_ref, ff1b_ref, ff2w_ref, ff2b_ref, ln2w_ref, ln2b_ref,
            rwq_ref, rbq_ref, rwk_ref, rbk_ref, rwv_ref, rbv_ref,
            fcw_ref, fcb_ref,
            out_ref,
            x_scr,
            *, B, Lq, E, R, C, F, H, NC):
    hd = E // H
    BLq = B * Lq
    BR = B * R
    inv_scale_head = 1.0 / math.sqrt(hd)
    inv_scale_attn = 1.0 / math.sqrt(F)
    eps_cos = 1e-8
    bf16 = jnp.bfloat16

    l = pl.program_id(0)

    @pl.when(l == 0)
    def _init():
        x_scr[...] = q_ref[...]

    # -------------------- encoder layer l (post-norm) ----------------------
    x = x_scr[...]                                           # (B*Lq, E) f32
    x16 = x.astype(bf16)

    q = jnp.dot(x16, wq_ref[...], preferred_element_type=jnp.float32) + bq_ref[...]
    k = jnp.dot(x16, wk_ref[...], preferred_element_type=jnp.float32) + bk_ref[...]
    v = jnp.dot(x16, wv_ref[...], preferred_element_type=jnp.float32) + bv_ref[...]

    # stack heads on the leading axis -> (H*B, Lq, hd); only lane slices at
    # static offsets + leading-dim reshapes + axis-0 concat (all proven safe).
    def split_heads(t):
        return jnp.concatenate(
            [t[:, h * hd:(h + 1) * hd].reshape(B, Lq, hd) for h in range(H)],
            axis=0)

    qh = split_heads(q)
    kh = split_heads(k)
    vh = split_heads(v)

    s = jnp.einsum("nqd,nkd->nqk", qh, kh,
                   preferred_element_type=jnp.float32) * inv_scale_head
    p = jax.nn.softmax(s, axis=-1)                            # ONE softmax / layer
    ctx = jnp.einsum("nqk,nkd->nqd", p, vh,
                     preferred_element_type=jnp.float32)      # (H*B, Lq, hd)
    ctx_h = ctx.reshape(H, BLq, hd)                           # leading dims only

    proj = jnp.einsum("hmd,hde->hme", ctx_h.astype(bf16), wo_ref[...],
                      preferred_element_type=jnp.float32)     # (H, BLq, E)
    attn = jnp.sum(proj, axis=0) + ob_ref[...]
    x = _layer_norm(x + attn, ln1w_ref[...], ln1b_ref[...])

    # feed-forward (ReLU); bf16 MXU operands, f32 accumulation
    x16b = x.astype(bf16)
    hdn = jnp.maximum(
        jnp.dot(x16b, ff1w_ref[...], preferred_element_type=jnp.float32)
        + ff1b_ref[...], 0.0)
    ff = jnp.dot(hdn.astype(bf16), ff2w_ref[...],
                 preferred_element_type=jnp.float32) + ff2b_ref[...]
    x = _layer_norm(x + ff, ln2w_ref[...], ln2b_ref[...])
    x_scr[...] = x

    # -------------------- epilogue on the last layer ------------------------
    @pl.when(l == pl.num_programs(0) - 1)
    def _epilogue():
        q_repr = jnp.mean(x.reshape(B, Lq, E), axis=1)        # (B, E)

        # row branch: Attention over all B*R rows at once
        xc16 = comb_ref[...].astype(bf16)                     # (B*R*C, F)
        rq = jnp.dot(xc16, rwq_ref[...], preferred_element_type=jnp.float32) + rbq_ref[...]
        rk = jnp.dot(xc16, rwk_ref[...], preferred_element_type=jnp.float32) + rbk_ref[...]
        rv = jnp.dot(xc16, rwv_ref[...], preferred_element_type=jnp.float32) + rbv_ref[...]
        rq3 = rq.reshape(BR, C, F)
        rk3 = rk.reshape(BR, C, F)
        rv3 = rv.reshape(BR, C, F)
        sc = jnp.einsum("ncf,nkf->nck", rq3, rk3,
                        preferred_element_type=jnp.float32) * inv_scale_attn
        aw = jax.nn.softmax(sc, axis=-1)
        weighted = jnp.einsum("nck,nkf->ncf", aw, rv3,
                              preferred_element_type=jnp.float32)   # (BR, C, F)

        # cosine similarity (qsq removed; rsq fused; tiny loop only for dots)
        q_rows = jnp.broadcast_to(q_repr[:, None, :], (B, R, E)).reshape(BR, E)
        q_norm = jnp.maximum(
            jnp.sqrt(jnp.sum(q_rows * q_rows, axis=-1, keepdims=True)), eps_cos)
        rsq = jnp.sum(jnp.sum(weighted * weighted, axis=-1), axis=-1,
                      keepdims=True)                                  # (BR, 1)
        r_norm = jnp.maximum(jnp.sqrt(rsq), eps_cos)
        dots = jnp.zeros((BR, 1), jnp.float32)
        for c in range(C):
            dots = dots + jnp.sum(weighted[:, c, :] * q_rows[:, c * F:(c + 1) * F],
                                  axis=-1, keepdims=True)
        sims = dots / (q_norm * r_norm)                               # (BR, 1)

        # fc: Linear(1, num_classes); lane-dense 2-D store
        out_ref[...] = sims * fcw_ref[...] + fcb_ref[...]             # (BR, NC)


# --------------------------------------------------------------------------- #
# Wrapper: JAX glue (embedding gather, repeat, concat, weight splitting) +
# pallas_call with a layer grid.
# --------------------------------------------------------------------------- #
def question_row_classifier_forward(params, question_embeddings, row_embeddings,
                                    column_indices, *, num_heads, num_layers):
    B, Lq, E = question_embeddings.shape
    _, R, C, Dr = row_embeddings.shape
    H, L = num_heads, num_layers
    hd = E // H
    bf = jnp.bfloat16

    # glue: nn.Embedding lookup + expand over rows + concat -> (B*R*C, Dr+Dc)
    col_embeds = jnp.take(params["col_emb_table"], column_indices, axis=0)
    Dc = col_embeds.shape[-1]
    F = Dr + Dc
    assert E == C * F, "cosine_similarity requires E == num_columns * (Dr + Dc)"
    rows_flat = row_embeddings.reshape(B * R, C, Dr)
    cols_flat = jnp.broadcast_to(col_embeds[:, None], (B, R, C, Dc)).reshape(B * R, C, Dc)
    combined = jnp.concatenate([rows_flat, cols_flat], axis=-1).astype(jnp.float32)
    combined2 = combined.reshape(B * R * C, F)

    # split the fused in_proj weight, cast matmul weights to bf16, reshape
    # biases/LN params to (L, 1, X) so every per-layer block is >= 2-D.
    in_w, in_b = params["in_w"], params["in_b"]              # (L, E, 3E), (L, 3E)
    wq_t = in_w[:, :, :E].astype(bf)
    wk_t = in_w[:, :, E:2 * E].astype(bf)
    wv_t = in_w[:, :, 2 * E:].astype(bf)
    bq_t = in_b[:, None, :E]
    bk_t = in_b[:, None, E:2 * E]
    bv_t = in_b[:, None, 2 * E:]
    wo_h = params["out_w"].reshape(L, H, hd, E).astype(bf)   # per-head out proj
    ob = params["out_b"][:, None, :]
    ln1w = params["ln1_w"][:, None, :]
    ln1b = params["ln1_b"][:, None, :]
    ff1w = params["ff1_w"].astype(bf)
    ff1b = params["ff1_b"][:, None, :]
    ff2w = params["ff2_w"].astype(bf)
    ff2b = params["ff2_b"][:, None, :]
    ln2w = params["ln2_w"][:, None, :]
    ln2b = params["ln2_b"][:, None, :]
    rwq = params["wq"].astype(bf)
    rwk = params["wk"].astype(bf)
    rwv = params["wv"].astype(bf)
    rbq = params["bq"][None, :]
    rbk = params["bk"][None, :]
    rbv = params["bv"][None, :]
    fc_w = params["fc_w"][None, :]
    fc_b = params["fc_b"][None, :]

    FF = params["ff1_w"].shape[-1]
    NC = params["fc_b"].shape[0]
    BLq, BR, BRC = B * Lq, B * R, B * R * C

    q2d = question_embeddings.astype(jnp.float32).reshape(BLq, E)

    # --- BlockSpecs -----------------------------------------------------------
    def resident(shape):                       # stays in VMEM across all layers
        return pl.BlockSpec(shape, lambda l: (0, 0))

    def per_layer3(shape):                     # (L, A, B) -> (A, B) block of layer l
        return pl.BlockSpec((None,) + shape, lambda l: (l, 0, 0))

    def per_layer4(shape):                     # (L, A, B, C) -> (A, B, C) block
        return pl.BlockSpec((None,) + shape, lambda l: (l, 0, 0, 0))

    in_specs = [
        resident((BLq, E)),                              # question tokens
        resident((BRC, F)),                              # combined row/col embeds
        per_layer3((E, E)), per_layer3((1, E)),          # wq, bq
        per_layer3((E, E)), per_layer3((1, E)),          # wk, bk
        per_layer3((E, E)), per_layer3((1, E)),          # wv, bv
        per_layer4((H, hd, E)), per_layer3((1, E)),      # wo (per-head), ob
        per_layer3((1, E)), per_layer3((1, E)),          # ln1w, ln1b
        per_layer3((E, FF)), per_layer3((1, FF)),        # ff1w, ff1b
        per_layer3((FF, E)), per_layer3((1, E)),         # ff2w, ff2b
        per_layer3((1, E)), per_layer3((1, E)),          # ln2w, ln2b
        resident((F, F)), resident((1, F)),              # row wq, bq
        resident((F, F)), resident((1, F)),              # row wk, bk
        resident((F, F)), resident((1, F)),              # row wv, bv
        resident((1, NC)), resident((1, NC)),            # fc_w, fc_b
    ]

    inputs = (
        q2d, combined2,
        wq_t, bq_t, wk_t, bk_t, wv_t, bv_t,
        wo_h, ob, ln1w, ln1b,
        ff1w, ff1b, ff2w, ff2b, ln2w, ln2b,
        rwq, rbq, rwk, rbk, rwv, rbv,
        fc_w, fc_b,
    )

    kernel = functools.partial(_kernel, B=B, Lq=Lq, E=E, R=R, C=C, F=F,
                               H=H, NC=NC)

    flops = int(
        L * (2 * BLq * E * 3 * E             # q/k/v projections
             + 2 * BLq * E * E               # out projection
             + 4 * B * H * Lq * Lq * hd      # attention scores + context
             + 4 * BLq * E * FF)             # feed-forward
        + 6 * BRC * F * F                    # row q/k/v projections
        + 4 * BR * C * C * F)                # row attention
    transcendentals = int(L * B * H * Lq * Lq + BR * C * C)
    bytes_accessed = int(sum(a.size * a.dtype.itemsize for a in inputs)
                         + BR * NC * 4)

    out2d = pl.pallas_call(
        kernel,
        out_shape=jax.ShapeDtypeStruct((BR, NC), jnp.float32),
        grid_spec=pltpu.PrefetchScalarGridSpec(
            num_scalar_prefetch=0,
            grid=(L,),
            in_specs=in_specs,
            out_specs=pl.BlockSpec((BR, NC), lambda l: (0, 0)),
            scratch_shapes=[pltpu.VMEM((BLq, E), jnp.float32)],
        ),
        compiler_params=pltpu.CompilerParams(
            dimension_semantics=("arbitrary",),          # scratch carried across layers
            vmem_limit_bytes=32 * 1024 * 1024),
        cost_estimate=pl.CostEstimate(flops=flops,
                                      transcendentals=transcendentals,
                                      bytes_accessed=bytes_accessed),
    )(*inputs)

    return out2d.reshape(B, R, NC)            # metadata-only reshape in the wrapper


# --------------------------------------------------------------------------- #
# Deterministic parameter init.  All weight matrices are stored in math layout
# (in_features, out_features), i.e. the transpose of torch.nn.Linear storage.
# --------------------------------------------------------------------------- #
def init_params(key, *, E, H, L, FF, F, num_columns, col_dim, num_classes):
    keys = jax.random.split(key, 16)

    def w(k, shape, fan_in):
        return jax.random.normal(k, shape, jnp.float32) / math.sqrt(fan_in)

    return {
        "in_w":  w(keys[0], (L, E, 3 * E), E),
        "in_b":  w(keys[1], (L, 3 * E), E),
        "out_w": w(keys[2], (L, E, E), E),
        "out_b": w(keys[3], (L, E), E),
        "ln1_w": jnp.ones((L, E), jnp.float32),
        "ln1_b": jnp.zeros((L, E), jnp.float32),
        "ff1_w": w(keys[4], (L, E, FF), E),
        "ff1_b": w(keys[5], (L, FF), E),
        "ff2_w": w(keys[6], (L, FF, E), FF),
        "ff2_b": w(keys[7], (L, E), FF),
        "ln2_w": jnp.ones((L, E), jnp.float32),
        "ln2_b": jnp.zeros((L, E), jnp.float32),
        "wq": w(keys[8], (F, F), F),  "bq": w(keys[9], (F,), F),
        "wk": w(keys[10], (F, F), F), "bk": w(keys[11], (F,), F),
        "wv": w(keys[12], (F, F), F), "bv": w(keys[13], (F,), F),
        "fc_w": w(keys[14], (num_classes,), 1),
        "fc_b": jnp.zeros((num_classes,), jnp.float32),
        "col_emb_table": jax.random.normal(keys[15], (num_columns, col_dim),
                                           jnp.float32),
    }


# --------------------------------------------------------------------------- #
# Pure-JAX reference used only to validate the kernel.  It mirrors the
# kernel's deliberate bf16 matmul-operand casts (QKV / out-proj / FF /
# row-branch projections all accumulate in f32) so the comparison is
# like-for-like; everything else is f32.
# --------------------------------------------------------------------------- #
def _reference_forward(params, question, combined, *, B, R, C, F, H, L):
    E = question.shape[-1]
    hd = E // H
    bf = jnp.bfloat16
    x = question
    for l in range(L):
        qkv = jnp.dot(x.astype(bf), params["in_w"][l].astype(bf),
                      preferred_element_type=jnp.float32) + params["in_b"][l]
        q, k, v = qkv[..., :E], qkv[..., E:2 * E], qkv[..., 2 * E:]
        q = q.reshape(B, -1, H, hd)
        k = k.reshape(B, -1, H, hd)
        v = v.reshape(B, -1, H, hd)
        s = jnp.einsum("bqhd,bkhd->bhqk", q, k) / math.sqrt(hd)
        p = jax.nn.softmax(s, axis=-1)
        ctx = jnp.einsum("bhqk,bkhd->bqhd", p, v).reshape(B, -1, E)
        attn = jnp.dot(ctx.astype(bf), params["out_w"][l].astype(bf),
                       preferred_element_type=jnp.float32) + params["out_b"][l]
        x = _layer_norm(x + attn, params["ln1_w"][l], params["ln1_b"][l])
        h1 = jax.nn.relu(
            jnp.dot(x.astype(bf), params["ff1_w"][l].astype(bf),
                    preferred_element_type=jnp.float32) + params["ff1_b"][l])
        ff = jnp.dot(h1.astype(bf), params["ff2_w"][l].astype(bf),
                     preferred_element_type=jnp.float32) + params["ff2_b"][l]
        x = _layer_norm(x + ff, params["ln2_w"][l], params["ln2_b"][l])
    q_repr = x.mean(axis=1)                                    # (B, E)

    c16 = combined.astype(bf)
    qs = jnp.dot(c16, params["wq"].astype(bf),
                 preferred_element_type=jnp.float32) + params["bq"]
    ks = jnp.dot(c16, params["wk"].astype(bf),
                 preferred_element_type=jnp.float32) + params["bk"]
    vs = jnp.dot(c16, params["wv"].astype(bf),
                 preferred_element_type=jnp.float32) + params["bv"]
    scores = jnp.einsum("ncf,nkf->nck", qs, ks) / math.sqrt(F)
    attn = jax.nn.softmax(scores, axis=-1)
    weighted = jnp.einsum("nck,nkf->ncf", attn, vs)            # (B*R, C, F)
    row_repr = weighted.reshape(B, R, C * F)

    eps = 1e-8
    dots = jnp.sum(q_repr[:, None, :] * row_repr, axis=-1)
    qn = jnp.maximum(jnp.linalg.norm(q_repr, axis=-1, keepdims=True), eps)
    rn = jnp.maximum(jnp.linalg.norm(row_repr, axis=-1), eps)
    sims = dots / (qn * rn)
    return sims[..., None] * params["fc_w"] + params["fc_b"]


if __name__ == "__main__":
    B, Lq, R, C = 2, 8, 3, 4          # batch, question length, rows, columns
    Dr = Dc = 8                       # row-cell / column-name embedding dims
    F = Dr + Dc                       # Attention feature dim (concat width)
    E = C * F                         # transformer d_model = 64
    H, L, NC = 4, 2, 2                # heads, encoder layers, classes
    FF = 2048                         # nn.TransformerEncoderLayer default dim_feedforward

    root = jax.random.PRNGKey(0)
    kp, kq, kr = jax.random.split(root, 3)
    params = init_params(kp, E=E, H=H, L=L, FF=FF, F=F, num_columns=C,
                         col_dim=Dc, num_classes=NC)
    question = jax.random.normal(kq, (B, Lq, E), jnp.float32)
    rows = jax.random.normal(kr, (B, R, C, Dr), jnp.float32)
    col_idx = jnp.tile(jnp.arange(C, dtype=jnp.int32)[None, :], (B, 1))

    fwd = jax.jit(functools.partial(question_row_classifier_forward,
                                    num_heads=H, num_layers=L))
    logits = jax.block_until_ready(fwd(params, question, rows, col_idx))
    assert logits.shape == (B, R, NC)

    # validate against a vectorized pure-JAX reference
    with jax.default_matmul_precision("highest"):
        col_embeds = jnp.take(params["col_emb_table"], col_idx, axis=0)
        rows_flat = rows.reshape(B * R, C, Dr)
        cols_flat = jnp.broadcast_to(col_embeds[:, None],
                                     (B, R, C, Dc)).reshape(B * R, C, Dc)
        combined = jnp.concatenate([rows_flat, cols_flat], axis=-1)
        ref = _reference_forward(params, question, combined,
                                 B=B, R=R, C=C, F=F, H=H, L=L)
    err = float(jnp.max(jnp.abs(logits - ref)))
    assert jnp.allclose(logits, ref, atol=2e-2, rtol=2e-2), f"max abs err {err}"
    print("KERNEL_OK")
</pallas_src>

<mosaic_0001>
module attributes {stable_mosaic.version = 11 : i64} {
  func.func @_kernel(%arg0: i32, %arg1: memref<16x64xf32, #tpu.memory_space<vmem>>, %arg2: memref<24x16xf32, #tpu.memory_space<vmem>>, %arg3: memref<1x64x64xbf16, #tpu.memory_space<vmem>>, %arg4: memref<1x1x64xf32, #tpu.memory_space<vmem>>, %arg5: memref<1x64x64xbf16, #tpu.memory_space<vmem>>, %arg6: memref<1x1x64xf32, #tpu.memory_space<vmem>>, %arg7: memref<1x64x64xbf16, #tpu.memory_space<vmem>>, %arg8: memref<1x1x64xf32, #tpu.memory_space<vmem>>, %arg9: memref<1x4x16x64xbf16, #tpu.memory_space<vmem>>, %arg10: memref<1x1x64xf32, #tpu.memory_space<vmem>>, %arg11: memref<1x1x64xf32, #tpu.memory_space<vmem>>, %arg12: memref<1x1x64xf32, #tpu.memory_space<vmem>>, %arg13: memref<1x64x2048xbf16, #tpu.memory_space<vmem>>, %arg14: memref<1x1x2048xf32, #tpu.memory_space<vmem>>, %arg15: memref<1x2048x64xbf16, #tpu.memory_space<vmem>>, %arg16: memref<1x1x64xf32, #tpu.memory_space<vmem>>, %arg17: memref<1x1x64xf32, #tpu.memory_space<vmem>>, %arg18: memref<1x1x64xf32, #tpu.memory_space<vmem>>, %arg19: memref<16x16xbf16, #tpu.memory_space<vmem>>, %arg20: memref<1x16xf32, #tpu.memory_space<vmem>>, %arg21: memref<16x16xbf16, #tpu.memory_space<vmem>>, %arg22: memref<1x16xf32, #tpu.memory_space<vmem>>, %arg23: memref<16x16xbf16, #tpu.memory_space<vmem>>, %arg24: memref<1x16xf32, #tpu.memory_space<vmem>>, %arg25: memref<1x2xf32, #tpu.memory_space<vmem>>, %arg26: memref<1x2xf32, #tpu.memory_space<vmem>>, %arg27: memref<6x2xf32, #tpu.memory_space<vmem>>, %arg28: memref<16x64xf32, #tpu.memory_space<vmem>>) attributes {dimension_semantics = [#tpu.dimension_semantics<arbitrary>], iteration_bounds = array<i64: 2>, scalar_prefetch = 0 : i64, scratch_operands = 1 : i64, tpu.core_type = #tpu.core_type<tc>, window_params = [{pipeline_mode = #tpu.pipeline_mode<synchronous>, transform_indices = @transform_0, window_bounds = array<i64: 16, 64>}, {pipeline_mode = #tpu.pipeline_mode<synchronous>, transform_indices = @transform_1, window_bounds = array<i64: 24, 16>}, {transform_indices = @transform_2, window_bounds = array<i64: 1, 64, 64>}, {transform_indices = @transform_3, window_bounds = array<i64: 1, 1, 64>}, {transform_indices = @transform_4, window_bounds = array<i64: 1, 64, 64>}, {transform_indices = @transform_5, window_bounds = array<i64: 1, 1, 64>}, {transform_indices = @transform_6, window_bounds = array<i64: 1, 64, 64>}, {transform_indices = @transform_7, window_bounds = array<i64: 1, 1, 64>}, {transform_indices = @transform_8, window_bounds = array<i64: 1, 4, 16, 64>}, {transform_indices = @transform_9, window_bounds = array<i64: 1, 1, 64>}, {transform_indices = @transform_10, window_bounds = array<i64: 1, 1, 64>}, {transform_indices = @transform_11, window_bounds = array<i64: 1, 1, 64>}, {transform_indices = @transform_12, window_bounds = array<i64: 1, 64, 2048>}, {transform_indices = @transform_13, window_bounds = array<i64: 1, 1, 2048>}, {transform_indices = @transform_14, window_bounds = array<i64: 1, 2048, 64>}, {transform_indices = @transform_15, window_bounds = array<i64: 1, 1, 64>}, {transform_indices = @transform_16, window_bounds = array<i64: 1, 1, 64>}, {transform_indices = @transform_17, window_bounds = array<i64: 1, 1, 64>}, {pipeline_mode = #tpu.pipeline_mode<synchronous>, transform_indices = @transform_18, window_bounds = array<i64: 16, 16>}, {pipeline_mode = #tpu.pipeline_mode<synchronous>, transform_indices = @transform_19, window_bounds = array<i64: 1, 16>}, {pipeline_mode = #tpu.pipeline_mode<synchronous>, transform_indices = @transform_20, window_bounds = array<i64: 16, 16>}, {pipeline_mode = #tpu.pipeline_mode<synchronous>, transform_indices = @transform_21, window_bounds = array<i64: 1, 16>}, {pipeline_mode = #tpu.pipeline_mode<synchronous>, transform_indices = @transform_22, window_bounds = array<i64: 16, 16>}, {pipeline_mode = #tpu.pipeline_mode<synchronous>, transform_indices = @transform_23, window_bounds = array<i64: 1, 16>}, {pipeline_mode = #tpu.pipeline_mode<synchronous>, transform_indices = @transform_24, window_bounds = array<i64: 1, 2>}, {pipeline_mode = #tpu.pipeline_mode<synchronous>, transform_indices = @transform_25, window_bounds = array<i64: 1, 2>}, {pipeline_mode = #tpu.pipeline_mode<synchronous>, transform_indices = @transform_26, window_bounds = array<i64: 6, 2>}]} {
    %c0_i32 = arith.constant 0 : i32
    %0 = arith.cmpi eq, %arg0, %c0_i32 : i32
    %1 = arith.extui %0 : i1 to i32
    %c0_i32_0 = arith.constant 0 : i32
    %2 = arith.cmpi ne, %1, %c0_i32_0 : i32
    scf.if %2 {
      %c0_77 = arith.constant 0 : index
      %c0_78 = arith.constant 0 : index
      %154 = vector.load %arg1[%c0_77, %c0_78] : memref<16x64xf32, #tpu.memory_space<vmem>>, vector<16x64xf32>
      %c0_79 = arith.constant 0 : index
      %c0_80 = arith.constant 0 : index
      %155 = vector.load %arg28[%c0_79, %c0_80] : memref<16x64xf32, #tpu.memory_space<vmem>>, vector<16x64xf32>
      tpu.vector_store %arg28[%c0_79, %c0_80], %154 {strides = array<i32>} : memref<16x64xf32, #tpu.memory_space<vmem>>, vector<16x64xf32>,
    } else {
    }
    %c0 = arith.constant 0 : index
    %c0_1 = arith.constant 0 : index
    %3 = vector.load %arg28[%c0, %c0_1] : memref<16x64xf32, #tpu.memory_space<vmem>>, vector<16x64xf32>
    %4 = arith.truncf %3 : vector<16x64xf32> to vector<16x64xbf16>
    %c0_2 = arith.constant 0 : index
    %c0_3 = arith.constant 0 : index
    %c0_4 = arith.constant 0 : index
    %5 = vector.load %arg3[%c0_2, %c0_3, %c0_4] : memref<1x64x64xbf16, #tpu.memory_space<vmem>>, vector<1x64x64xbf16>
    %6 = vector.shape_cast %5 : vector<1x64x64xbf16> to vector<64x64xbf16>
    %cst = arith.constant dense<0.000000e+00> : vector<16x64xf32>
    %7 = tpu.matmul %4, %6, %cst {dimension_numbers = #tpu.dot_dimension_numbers<[1], [0], [0], [1], [0, 0, 1, 1], [], []>} : vector<16x64xbf16>, vector<64x64xbf16>, vector<16x64xf32> -> vector<16x64xf32>
    %c0_5 = arith.constant 0 : index
    %c0_6 = arith.constant 0 : index
    %c0_7 = arith.constant 0 : index
    %8 = vector.load %arg4[%c0_5, %c0_6, %c0_7] : memref<1x1x64xf32, #tpu.memory_space<vmem>>, vector<1x1x64xf32>
    %9 = vector.shape_cast %8 : vector<1x1x64xf32> to vector<1x64xf32>
    %10 = vector.broadcast %9 : vector<1x64xf32> to vector<16x64xf32>
    %11 = arith.addf %7, %10 : vector<16x64xf32>
    %c0_8 = arith.constant 0 : index
    %c0_9 = arith.constant 0 : index
    %c0_10 = arith.constant 0 : index
    %12 = vector.load %arg5[%c0_8, %c0_9, %c0_10] : memref<1x64x64xbf16, #tpu.memory_space<vmem>>, vector<1x64x64xbf16>
    %13 = vector.shape_cast %12 : vector<1x64x64xbf16> to vector<64x64xbf16>
    %cst_11 = arith.constant dense<0.000000e+00> : vector<16x64xf32>
    %14 = tpu.matmul %4, %13, %cst_11 {dimension_numbers = #tpu.dot_dimension_numbers<[1], [0], [0], [1], [0, 0, 1, 1], [], []>} : vector<16x64xbf16>, vector<64x64xbf16>, vector<16x64xf32> -> vector<16x64xf32>
    %c0_12 = arith.constant 0 : index
    %c0_13 = arith.constant 0 : index
    %c0_14 = arith.constant 0 : index
    %15 = vector.load %arg6[%c0_12, %c0_13, %c0_14] : memref<1x1x64xf32, #tpu.memory_space<vmem>>, vector<1x1x64xf32>
    %16 = vector.shape_cast %15 : vector<1x1x64xf32> to vector<1x64xf32>
    %17 = vector.broadcast %16 : vector<1x64xf32> to vector<16x64xf32>
    %18 = arith.addf %14, %17 : vector<16x64xf32>
    %c0_15 = arith.constant 0 : index
    %c0_16 = arith.constant 0 : index
    %c0_17 = arith.constant 0 : index
    %19 = vector.load %arg7[%c0_15, %c0_16, %c0_17] : memref<1x64x64xbf16, #tpu.memory_space<vmem>>, vector<1x64x64xbf16>
    %20 = vector.shape_cast %19 : vector<1x64x64xbf16> to vector<64x64xbf16>
    %cst_18 = arith.constant dense<0.000000e+00> : vector<16x64xf32>
    %21 = tpu.matmul %4, %20, %cst_18 {dimension_numbers = #tpu.dot_dimension_numbers<[1], [0], [0], [1], [0, 0, 1, 1], [], []>} : vector<16x64xbf16>, vector<64x64xbf16>, vector<16x64xf32> -> vector<16x64xf32>
    %c0_19 = arith.constant 0 : index
    %c0_20 = arith.constant 0 : index
    %c0_21 = arith.constant 0 : index
    %22 = vector.load %arg8[%c0_19, %c0_20, %c0_21] : memref<1x1x64xf32, #tpu.memory_space<vmem>>, vector<1x1x64xf32>
    %23 = vector.shape_cast %22 : vector<1x1x64xf32> to vector<1x64xf32>
    %24 = vector.broadcast %23 : vector<1x64xf32> to vector<16x64xf32>
    %25 = arith.addf %21, %24 : vector<16x64xf32>
    %26 = vector.extract_strided_slice %11 {offsets = [0, 0], sizes = [16, 16], strides = [1, 1]} : vector<16x64xf32> to vector<16x16xf32>
    %27 = vector.shape_cast %26 : vector<16x16xf32> to vector<2x8x16xf32>
    %28 = vector.extract_strided_slice %11 {offsets = [0, 16], sizes = [16, 16], strides = [1, 1]} : vector<16x64xf32> to vector<16x16xf32>
    %29 = vector.shape_cast %28 : vector<16x16xf32> to vector<2x8x16xf32>
    %30 = vector.extract_strided_slice %11 {offsets = [0, 32], sizes = [16, 16], strides = [1, 1]} : vector<16x64xf32> to vector<16x16xf32>
    %31 = vector.shape_cast %30 : vector<16x16xf32> to vector<2x8x16xf32>
    %32 = vector.extract_strided_slice %11 {offsets = [0, 48], sizes = [16, 16], strides = [1, 1]} : vector<16x64xf32> to vector<16x16xf32>
    %33 = vector.shape_cast %32 : vector<16x16xf32> to vector<2x8x16xf32>
    %34 = tpu.concatenate %27, %29, %31, %33 in 0 : vector<2x8x16xf32>, vector<2x8x16xf32>, vector<2x8x16xf32>, vector<2x8x16xf32> -> vector<8x8x16xf32>
    %35 = vector.extract_strided_slice %18 {offsets = [0, 0], sizes = [16, 16], strides = [1, 1]} : vector<16x64xf32> to vector<16x16xf32>
    %36 = vector.shape_cast %35 : vector<16x16xf32> to vector<2x8x16xf32>
    %37 = vector.extract_strided_slice %18 {offsets = [0, 16], sizes = [16, 16], strides = [1, 1]} : vector<16x64xf32> to vector<16x16xf32>
    %38 = vector.shape_cast %37 : vector<16x16xf32> to vector<2x8x16xf32>
    %39 = vector.extract_strided_slice %18 {offsets = [0, 32], sizes = [16, 16], strides = [1, 1]} : vector<16x64xf32> to vector<16x16xf32>
    %40 = vector.shape_cast %39 : vector<16x16xf32> to vector<2x8x16xf32>
    %41 = vector.extract_strided_slice %18 {offsets = [0, 48], sizes = [16, 16], strides = [1, 1]} : vector<16x64xf32> to vector<16x16xf32>
    %42 = vector.shape_cast %41 : vector<16x16xf32> to vector<2x8x16xf32>
    %43 = tpu.concatenate %36, %38, %40, %42 in 0 : vector<2x8x16xf32>, vector<2x8x16xf32>, vector<2x8x16xf32>, vector<2x8x16xf32> -> vector<8x8x16xf32>
    %44 = vector.extract_strided_slice %25 {offsets = [0, 0], sizes = [16, 16], strides = [1, 1]} : vector<16x64xf32> to vector<16x16xf32>
    %45 = vector.shape_cast %44 : vector<16x16xf32> to vector<2x8x16xf32>
    %46 = vector.extract_strided_slice %25 {offsets = [0, 16], sizes = [16, 16], strides = [1, 1]} : vector<16x64xf32> to vector<16x16xf32>
    %47 = vector.shape_cast %46 : vector<16x16xf32> to vector<2x8x16xf32>
    %48 = vector.extract_strided_slice %25 {offsets = [0, 32], sizes = [16, 16], strides = [1, 1]} : vector<16x64xf32> to vector<16x16xf32>
    %49 = vector.shape_cast %48 : vector<16x16xf32> to vector<2x8x16xf32>
    %50 = vector.extract_strided_slice %25 {offsets = [0, 48], sizes = [16, 16], strides = [1, 1]} : vector<16x64xf32> to vector<16x16xf32>
    %51 = vector.shape_cast %50 : vector<16x16xf32> to vector<2x8x16xf32>
    %52 = tpu.concatenate %45, %47, %49, %51 in 0 : vector<2x8x16xf32>, vector<2x8x16xf32>, vector<2x8x16xf32>, vector<2x8x16xf32> -> vector<8x8x16xf32>
    "tpu.trace_start"() <{level = 10 : i32, message = "nqd,nkd->nqk"}> : () -> ()
    %cst_22 = arith.constant dense<0.000000e+00> : vector<8x8x8xf32>
    %53 = tpu.matmul %34, %43, %cst_22 {dimension_numbers = #tpu.dot_dimension_numbers<[2], [2], [1], [1], [0, 0, 0, 1, 1, 1], [0], [0]>} : vector<8x8x16xf32>, vector<8x8x16xf32>, vector<8x8x8xf32> -> vector<8x8x8xf32>
    "tpu.trace_stop"() : () -> ()
    %cst_23 = arith.constant 2.500000e-01 : f32
    %54 = vector.broadcast %cst_23 : f32 to vector<8x8x8xf32>
    %55 = arith.mulf %53, %54 : vector<8x8x8xf32>
    %cst_24 = arith.constant dense<0xFF800000> : vector<8x8xf32>
    %56 = vector.multi_reduction <maximumf>, %55, %cst_24 [2] : vector<8x8x8xf32> to vector<8x8xf32>
    %cst_25 = arith.constant 0xFF800000 : f32
    %57 = vector.broadcast %cst_25 : f32 to vector<8x8xf32>
    %58 = arith.maximumf %57, %56 : vector<8x8xf32>
    %59 = vector.shape_cast %58 : vector<8x8xf32> to vector<8x8x1xf32>
    %60 = vector.broadcast %59 : vector<8x8x1xf32> to vector<8x8x8xf32>
    %61 = arith.subf %55, %60 : vector<8x8x8xf32>
    %62 = math.exp %61 : vector<8x8x8xf32>
    %cst_26 = arith.constant dense<0.000000e+00> : vector<8x8xf32>
    %63 = vector.multi_reduction <add>, %62, %cst_26 [2] : vector<8x8x8xf32> to vector<8x8xf32>
    %64 = vector.shape_cast %63 : vector<8x8xf32> to vector<8x8x1xf32>
    %65 = vector.broadcast %64 : vector<8x8x1xf32> to vector<8x8x8xf32>
    %66 = arith.divf %62, %65 : vector<8x8x8xf32>
    "tpu.trace_start"() <{level = 10 : i32, message = "nqk,nkd->nqd"}> : () -> ()
    %cst_27 = arith.constant dense<0.000000e+00> : vector<8x8x16xf32>
    %67 = tpu.matmul %66, %52, %cst_27 {dimension_numbers = #tpu.dot_dimension_numbers<[2], [1], [1], [2], [0, 0, 0, 1, 1, 2], [0], [0]>} : vector<8x8x8xf32>, vector<8x8x16xf32>, vector<8x8x16xf32> -> vector<8x8x16xf32>
    "tpu.trace_stop"() : () -> ()
    %68 = vector.shape_cast %67 : vector<8x8x16xf32> to vector<4x16x16xf32>
    %69 = arith.truncf %68 : vector<4x16x16xf32> to vector<4x16x16xbf16>
    %c0_28 = arith.constant 0 : index
    %c0_29 = arith.constant 0 : index
    %c0_30 = arith.constant 0 : index
    %c0_31 = arith.constant 0 : index
    %70 = vector.load %arg9[%c0_28, %c0_29, %c0_30, %c0_31] : memref<1x4x16x64xbf16, #tpu.memory_space<vmem>>, vector<1x4x16x64xbf16>
    %71 = vector.shape_cast %70 : vector<1x4x16x64xbf16> to vector<4x16x64xbf16>
    "tpu.trace_start"() <{level = 10 : i32, message = "hmd,hde->hme"}> : () -> ()
    %cst_32 = arith.constant dense<0.000000e+00> : vector<4x16x64xf32>
    %72 = tpu.matmul %69, %71, %cst_32 {dimension_numbers = #tpu.dot_dimension_numbers<[2], [1], [1], [2], [0, 0, 0, 1, 1, 2], [0], [0]>} : vector<4x16x16xbf16>, vector<4x16x64xbf16>, vector<4x16x64xf32> -> vector<4x16x64xf32>
    "tpu.trace_stop"() : () -> ()
    %cst_33 = arith.constant dense<0.000000e+00> : vector<16x64xf32>
    %73 = vector.multi_reduction <add>, %72, %cst_33 [0] : vector<4x16x64xf32> to vector<16x64xf32>
    %c0_34 = arith.constant 0 : index
    %c0_35 = arith.constant 0 : index
    %c0_36 = arith.constant 0 : index
    %74 = vector.load %arg10[%c0_34, %c0_35, %c0_36] : memref<1x1x64xf32, #tpu.memory_space<vmem>>, vector<1x1x64xf32>
    %75 = vector.shape_cast %74 : vector<1x1x64xf32> to vector<1x64xf32>
    %76 = vector.broadcast %75 : vector<1x64xf32> to vector<16x64xf32>
    %77 = arith.addf %73, %76 : vector<16x64xf32>
    %78 = arith.addf %3, %77 : vector<16x64xf32>
    %c0_37 = arith.constant 0 : index
    %c0_38 = arith.constant 0 : index
    %c0_39 = arith.constant 0 : index
    %79 = vector.load %arg11[%c0_37, %c0_38, %c0_39] : memref<1x1x64xf32, #tpu.memory_space<vmem>>, vector<1x1x64xf32>
    %80 = vector.shape_cast %79 : vector<1x1x64xf32> to vector<1x64xf32>
    %c0_40 = arith.constant 0 : index
    %c0_41 = arith.constant 0 : index
    %c0_42 = arith.constant 0 : index
    %81 = vector.load %arg12[%c0_40, %c0_41, %c0_42] : memref<1x1x64xf32, #tpu.memory_space<vmem>>, vector<1x1x64xf32>
    %82 = vector.shape_cast %81 : vector<1x1x64xf32> to vector<1x64xf32>
    %cst_43 = arith.constant dense<0.000000e+00> : vector<16xf32>
    %83 = vector.multi_reduction <add>, %78, %cst_43 [1] : vector<16x64xf32> to vector<16xf32>
    %84 = vector.shape_cast %83 : vector<16xf32> to vector<16x1xf32>
    %cst_44 = arith.constant 6.400000e+01 : f32
    %85 = vector.broadcast %cst_44 : f32 to vector<16x1xf32>
    %86 = arith.divf %84, %85 : vector<16x1xf32>
    %87 = vector.broadcast %86 : vector<16x1xf32> to vector<16x64xf32>
    %88 = arith.subf %78, %87 : vector<16x64xf32>
    %89 = arith.mulf %88, %88 : vector<16x64xf32>
    %cst_45 = arith.constant dense<0.000000e+00> : vector<16xf32>
    %90 = vector.multi_reduction <add>, %89, %cst_45 [1] : vector<16x64xf32> to vector<16xf32>
    %91 = vector.shape_cast %90 : vector<16xf32> to vector<16x1xf32>
    %cst_46 = arith.constant 6.400000e+01 : f32
    %92 = vector.broadcast %cst_46 : f32 to vector<16x1xf32>
    %93 = arith.divf %91, %92 : vector<16x1xf32>
    %94 = vector.broadcast %86 : vector<16x1xf32> to vector<16x64xf32>
    %95 = arith.subf %78, %94 : vector<16x64xf32>
    %cst_47 = arith.constant 9.99999974E-6 : f32
    %96 = vector.broadcast %cst_47 : f32 to vector<16x1xf32>
    %97 = arith.addf %93, %96 : vector<16x1xf32>
    %98 = math.rsqrt %97 : vector<16x1xf32>
    %99 = vector.broadcast %98 : vector<16x1xf32> to vector<16x64xf32>
    %100 = arith.mulf %95, %99 : vector<16x64xf32>
    %101 = vector.broadcast %80 : vector<1x64xf32> to vector<16x64xf32>
    %102 = arith.mulf %100, %101 : vector<16x64xf32>
    %103 = vector.broadcast %82 : vector<1x64xf32> to vector<16x64xf32>
    %104 = arith.addf %102, %103 : vector<16x64xf32>
    %105 = arith.truncf %104 : vector<16x64xf32> to vector<16x64xbf16>
    %c0_48 = arith.constant 0 : index
    %c0_49 = arith.constant 0 : index
    %c0_50 = arith.constant 0 : index
    %106 = vector.load %arg13[%c0_48, %c0_49, %c0_50] : memref<1x64x2048xbf16, #tpu.memory_space<vmem>>, vector<1x64x2048xbf16>
    %107 = vector.shape_cast %106 : vector<1x64x2048xbf16> to vector<64x2048xbf16>
    %cst_51 = arith.constant dense<0.000000e+00> : vector<16x2048xf32>
    %108 = tpu.matmul %105, %107, %cst_51 {dimension_numbers = #tpu.dot_dimension_numbers<[1], [0], [0], [1], [0, 0, 1, 1], [], []>} : vector<16x64xbf16>, vector<64x2048xbf16>, vector<16x2048xf32> -> vector<16x2048xf32>
    %c0_52 = arith.constant 0 : index
    %c0_53 = arith.constant 0 : index
    %c0_54 = arith.constant 0 : index
    %109 = vector.load %arg14[%c0_52, %c0_53, %c0_54] : memref<1x1x2048xf32, #tpu.memory_space<vmem>>, vector<1x1x2048xf32>
    %110 = vector.shape_cast %109 : vector<1x1x2048xf32> to vector<1x2048xf32>
    %111 = vector.broadcast %110 : vector<1x2048xf32> to vector<16x2048xf32>
    %112 = arith.addf %108, %111 : vector<16x2048xf32>
    %cst_55 = arith.constant 0.000000e+00 : f32
    %113 = vector.broadcast %cst_55 : f32 to vector<16x2048xf32>
    %114 = arith.maximumf %112, %113 : vector<16x2048xf32>
    %115 = arith.truncf %114 : vector<16x2048xf32> to vector<16x2048xbf16>
    %c0_56 = arith.constant 0 : index
    %c0_57 = arith.constant 0 : index
    %c0_58 = arith.constant 0 : index
    %116 = vector.load %arg15[%c0_56, %c0_57, %c0_58] : memref<1x2048x64xbf16, #tpu.memory_space<vmem>>, vector<1x2048x64xbf16>
    %117 = vector.shape_cast %116 : vector<1x2048x64xbf16> to vector<2048x64xbf16>
    %cst_59 = arith.constant dense<0.000000e+00> : vector<16x64xf32>
    %118 = tpu.matmul %115, %117, %cst_59 {dimension_numbers = #tpu.dot_dimension_numbers<[1], [0], [0], [1], [0, 0, 1, 1], [], []>} : vector<16x2048xbf16>, vector<2048x64xbf16>, vector<16x64xf32> -> vector<16x64xf32>
    %c0_60 = arith.constant 0 : index
    %c0_61 = arith.constant 0 : index
    %c0_62 = arith.constant 0 : index
    %119 = vector.load %arg16[%c0_60, %c0_61, %c0_62] : memref<1x1x64xf32, #tpu.memory_space<vmem>>, vector<1x1x64xf32>
    %120 = vector.shape_cast %119 : vector<1x1x64xf32> to vector<1x64xf32>
    %121 = vector.broadcast %120 : vector<1x64xf32> to vector<16x64xf32>
    %122 = arith.addf %118, %121 : vector<16x64xf32>
    %123 = arith.addf %104, %122 : vector<16x64xf32>
    %c0_63 = arith.constant 0 : index
    %c0_64 = arith.constant 0 : index
    %c0_65 = arith.constant 0 : index
    %124 = vector.load %arg17[%c0_63, %c0_64, %c0_65] : memref<1x1x64xf32, #tpu.memory_space<vmem>>, vector<1x1x64xf32>
    %125 = vector.shape_cast %124 : vector<1x1x64xf32> to vector<1x64xf32>
    %c0_66 = arith.constant 0 : index
    %c0_67 = arith.constant 0 : index
    %c0_68 = arith.constant 0 : index
    %126 = vector.load %arg18[%c0_66, %c0_67, %c0_68] : memref<1x1x64xf32, #tpu.memory_space<vmem>>, vector<1x1x64xf32>
    %127 = vector.shape_cast %126 : vector<1x1x64xf32> to vector<1x64xf32>
    %cst_69 = arith.constant dense<0.000000e+00> : vector<16xf32>
    %128 = vector.multi_reduction <add>, %123, %cst_69 [1] : vector<16x64xf32> to vector<16xf32>
    %129 = vector.shape_cast %128 : vector<16xf32> to vector<16x1xf32>
    %cst_70 = arith.constant 6.400000e+01 : f32
    %130 = vector.broadcast %cst_70 : f32 to vector<16x1xf32>
    %131 = arith.divf %129, %130 : vector<16x1xf32>
    %132 = vector.broadcast %131 : vector<16x1xf32> to vector<16x64xf32>
    %133 = arith.subf %123, %132 : vector<16x64xf32>
    %134 = arith.mulf %133, %133 : vector<16x64xf32>
    %cst_71 = arith.constant dense<0.000000e+00> : vector<16xf32>
    %135 = vector.multi_reduction <add>, %134, %cst_71 [1] : vector<16x64xf32> to vector<16xf32>
    %136 = vector.shape_cast %135 : vector<16xf32> to vector<16x1xf32>
    %cst_72 = arith.constant 6.400000e+01 : f32
    %137 = vector.broadcast %cst_72 : f32 to vector<16x1xf32>
    %138 = arith.divf %136, %137 : vector<16x1xf32>
    %139 = vector.broadcast %131 : vector<16x1xf32> to vector<16x64xf32>
    %140 = arith.subf %123, %139 : vector<16x64xf32>
    %cst_73 = arith.constant 9.99999974E-6 : f32
    %141 = vector.broadcast %cst_73 : f32 to vector<16x1xf32>
    %142 = arith.addf %138, %141 : vector<16x1xf32>
    %143 = math.rsqrt %142 : vector<16x1xf32>
    %144 = vector.broadcast %143 : vector<16x1xf32> to vector<16x64xf32>
    %145 = arith.mulf %140, %144 : vector<16x64xf32>
    %146 = vector.broadcast %125 : vector<1x64xf32> to vector<16x64xf32>
    %147 = arith.mulf %145, %146 : vector<16x64xf32>
    %148 = vector.broadcast %127 : vector<1x64xf32> to vector<16x64xf32>
    %149 = arith.addf %147, %148 : vector<16x64xf32>
    %c0_74 = arith.constant 0 : index
    %c0_75 = arith.constant 0 : index
    %150 = vector.load %arg28[%c0_74, %c0_75] : memref<16x64xf32, #tpu.memory_space<vmem>>, vector<16x64xf32>
    tpu.vector_store %arg28[%c0_74, %c0_75], %149 {strides = array<i32>} : memref<16x64xf32, #tpu.memory_space<vmem>>, vector<16x64xf32>,
    %c1_i32 = arith.constant 1 : i32
    %151 = arith.cmpi eq, %arg0, %c1_i32 : i32
    %152 = arith.extui %151 : i1 to i32
    %c0_i32_76 = arith.constant 0 : i32
    %153 = arith.cmpi ne, %152, %c0_i32_76 : i32
    scf.if %153 {
      %154 = vector.shape_cast %149 : vector<16x64xf32> to vector<2x8x64xf32>
      %cst_77 = arith.constant dense<0.000000e+00> : vector<2x64xf32>
      %155 = vector.multi_reduction <add>, %154, %cst_77 [1] : vector<2x8x64xf32> to vector<2x64xf32>
      %cst_78 = arith.constant 8.000000e+00 : f32
      %156 = vector.broadcast %cst_78 : f32 to vector<2x64xf32>
      %157 = arith.divf %155, %156 : vector<2x64xf32>
      %c0_79 = arith.constant 0 : index
      %c0_80 = arith.constant 0 : index
      %158 = vector.load %arg2[%c0_79, %c0_80] : memref<24x16xf32, #tpu.memory_space<vmem>>, vector<24x16xf32>
      %159 = arith.truncf %158 : vector<24x16xf32> to vector<24x16xbf16>
      %c0_81 = arith.constant 0 : index
      %c0_82 = arith.constant 0 : index
      %160 = vector.load %arg19[%c0_81, %c0_82] : memref<16x16xbf16, #tpu.memory_space<vmem>>, vector<16x16xbf16>
      %cst_83 = arith.constant dense<0.000000e+00> : vector<24x16xf32>
      %161 = tpu.matmul %159, %160, %cst_83 {dimension_numbers = #tpu.dot_dimension_numbers<[1], [0], [0], [1], [0, 0, 1, 1], [], []>} : vector<24x16xbf16>, vector<16x16xbf16>, vector<24x16xf32> -> vector<24x16xf32>
      %c0_84 = arith.constant 0 : index
      %c0_85 = arith.constant 0 : index
      %162 = vector.load %arg20[%c0_84, %c0_85] : memref<1x16xf32, #tpu.memory_space<vmem>>, vector<1x16xf32>
      %163 = vector.broadcast %162 : vector<1x16xf32> to vector<24x16xf32>
      %164 = arith.addf %161, %163 : vector<24x16xf32>
      %c0_86 = arith.constant 0 : index
      %c0_87 = arith.constant 0 : index
      %165 = vector.load %arg21[%c0_86, %c0_87] : memref<16x16xbf16, #tpu.memory_space<vmem>>, vector<16x16xbf16>
      %cst_88 = arith.constant dense<0.000000e+00> : vector<24x16xf32>
      %166 = tpu.matmul %159, %165, %cst_88 {dimension_numbers = #tpu.dot_dimension_numbers<[1], [0], [0], [1], [0, 0, 1, 1], [], []>} : vector<24x16xbf16>, vector<16x16xbf16>, vector<24x16xf32> -> vector<24x16xf32>
      %c0_89 = arith.constant 0 : index
      %c0_90 = arith.constant 0 : index
      %167 = vector.load %arg22[%c0_89, %c0_90] : memref<1x16xf32, #tpu.memory_space<vmem>>, vector<1x16xf32>
      %168 = vector.broadcast %167 : vector<1x16xf32> to vector<24x16xf32>
      %169 = arith.addf %166, %168 : vector<24x16xf32>
      %c0_91 = arith.constant 0 : index
      %c0_92 = arith.constant 0 : index
      %170 = vector.load %arg23[%c0_91, %c0_92] : memref<16x16xbf16, #tpu.memory_space<vmem>>, vector<16x16xbf16>
      %cst_93 = arith.constant dense<0.000000e+00> : vector<24x16xf32>
      %171 = tpu.matmul %159, %170, %cst_93 {dimension_numbers = #tpu.dot_dimension_numbers<[1], [0], [0], [1], [0, 0, 1, 1], [], []>} : vector<24x16xbf16>, vector<16x16xbf16>, vector<24x16xf32> -> vector<24x16xf32>
      %c0_94 = arith.constant 0 : index
      %c0_95 = arith.constant 0 : index
      %172 = vector.load %arg24[%c0_94, %c0_95] : memref<1x16xf32, #tpu.memory_space<vmem>>, vector<1x16xf32>
      %173 = vector.broadcast %172 : vector<1x16xf32> to vector<24x16xf32>
      %174 = arith.addf %171, %173 : vector<24x16xf32>
      %175 = vector.shape_cast %164 : vector<24x16xf32> to vector<6x4x16xf32>
      %176 = vector.shape_cast %169 : vector<24x16xf32> to vector<6x4x16xf32>
      %177 = vector.shape_cast %174 : vector<24x16xf32> to vector<6x4x16xf32>
      "tpu.trace_start"() <{level = 10 : i32, message = "ncf,nkf->nck"}> : () -> ()
      %cst_96 = arith.constant dense<0.000000e+00> : vector<6x4x4xf32>
      %178 = tpu.matmul %175, %176, %cst_96 {dimension_numbers = #tpu.dot_dimension_numbers<[2], [2], [1], [1], [0, 0, 0, 1, 1, 1], [0], [0]>} : vector<6x4x16xf32>, vector<6x4x16xf32>, vector<6x4x4xf32> -> vector<6x4x4xf32>
      "tpu.trace_stop"() : () -> ()
      %cst_97 = arith.constant 2.500000e-01 : f32
      %179 = vector.broadcast %cst_97 : f32 to vector<6x4x4xf32>
      %180 = arith.mulf %178, %179 : vector<6x4x4xf32>
      %cst_98 = arith.constant dense<0xFF800000> : vector<6x4xf32>
      %181 = vector.multi_reduction <maximumf>, %180, %cst_98 [2] : vector<6x4x4xf32> to vector<6x4xf32>
      %cst_99 = arith.constant 0xFF800000 : f32
      %182 = vector.broadcast %cst_99 : f32 to vector<6x4xf32>
      %183 = arith.maximumf %182, %181 : vector<6x4xf32>
      %184 = vector.shape_cast %183 : vector<6x4xf32> to vector<6x4x1xf32>
      %185 = vector.broadcast %184 : vector<6x4x1xf32> to vector<6x4x4xf32>
      %186 = arith.subf %180, %185 : vector<6x4x4xf32>
      %187 = math.exp %186 : vector<6x4x4xf32>
      %cst_100 = arith.constant dense<0.000000e+00> : vector<6x4xf32>
      %188 = vector.multi_reduction <add>, %187, %cst_100 [2] : vector<6x4x4xf32> to vector<6x4xf32>
      %189 = vector.shape_cast %188 : vector<6x4xf32> to vector<6x4x1xf32>
      %190 = vector.broadcast %189 : vector<6x4x1xf32> to vector<6x4x4xf32>
      %191 = arith.divf %187, %190 : vector<6x4x4xf32>
      "tpu.trace_start"() <{level = 10 : i32, message = "nck,nkf->ncf"}> : () -> ()
      %cst_101 = arith.constant dense<0.000000e+00> : vector<6x4x16xf32>
      %192 = tpu.matmul %191, %177, %cst_101 {dimension_numbers = #tpu.dot_dimension_numbers<[2], [1], [1], [2], [0, 0, 0, 1, 1, 2], [0], [0]>} : vector<6x4x4xf32>, vector<6x4x16xf32>, vector<6x4x16xf32> -> vector<6x4x16xf32>
      "tpu.trace_stop"() : () -> ()
      %193 = vector.shape_cast %157 : vector<2x64xf32> to vector<2x1x64xf32>
      %194 = vector.shape_cast %193 : vector<2x1x64xf32> to vector<2x1x64xf32>
      %195 = vector.broadcast %194 : vector<2x1x64xf32> to vector<2x3x64xf32>
      %196 = vector.shape_cast %195 : vector<2x3x64xf32> to vector<6x64xf32>
      %197 = arith.mulf %196, %196 : vector<6x64xf32>
      %cst_102 = arith.constant dense<0.000000e+00> : vector<6xf32>
      %198 = vector.multi_reduction <add>, %197, %cst_102 [1] : vector<6x64xf32> to vector<6xf32>
      %199 = vector.shape_cast %198 : vector<6xf32> to vector<6x1xf32>
      %200 = math.sqrt %199 : vector<6x1xf32>
      %cst_103 = arith.constant 9.99999993E-9 : f32
      %201 = vector.broadcast %cst_103 : f32 to vector<6x1xf32>
      %202 = arith.maximumf %200, %201 : vector<6x1xf32>
      %203 = arith.mulf %192, %192 : vector<6x4x16xf32>
      %cst_104 = arith.constant dense<0.000000e+00> : vector<6x4xf32>
      %204 = vector.multi_reduction <add>, %203, %cst_104 [2] : vector<6x4x16xf32> to vector<6x4xf32>
      %cst_105 = arith.constant dense<0.000000e+00> : vector<6xf32>
      %205 = vector.multi_reduction <add>, %204, %cst_105 [1] : vector<6x4xf32> to vector<6xf32>
      %206 = vector.shape_cast %205 : vector<6xf32> to vector<6x1xf32>
      %207 = math.sqrt %206 : vector<6x1xf32>
      %cst_106 = arith.constant 9.99999993E-9 : f32
      %208 = vector.broadcast %cst_106 : f32 to vector<6x1xf32>
      %209 = arith.maximumf %207, %208 : vector<6x1xf32>
      %cst_107 = arith.constant 0.000000e+00 : f32
      %210 = vector.broadcast %cst_107 : f32 to vector<6x1xf32>
      %211 = vector.extract_strided_slice %192 {offsets = [0, 0, 0], sizes = [6, 1, 16], strides = [1, 1, 1]} : vector<6x4x16xf32> to vector<6x1x16xf32>
      %212 = vector.shape_cast %211 : vector<6x1x16xf32> to vector<6x16xf32>
      %213 = vector.extract_strided_slice %196 {offsets = [0, 0], sizes = [6, 16], strides = [1, 1]} : vector<6x64xf32> to vector<6x16xf32>
      %214 = arith.mulf %212, %213 : vector<6x16xf32>
      %cst_108 = arith.constant dense<0.000000e+00> : vector<6xf32>
      %215 = vector.multi_reduction <add>, %214, %cst_108 [1] : vector<6x16xf32> to vector<6xf32>
      %216 = vector.shape_cast %215 : vector<6xf32> to vector<6x1xf32>
      %217 = arith.addf %210, %216 : vector<6x1xf32>
      %218 = vector.extract_strided_slice %192 {offsets = [0, 1, 0], sizes = [6, 1, 16], strides = [1, 1, 1]} : vector<6x4x16xf32> to vector<6x1x16xf32>
      %219 = vector.shape_cast %218 : vector<6x1x16xf32> to vector<6x16xf32>
      %220 = vector.extract_strided_slice %196 {offsets = [0, 16], sizes = [6, 16], strides = [1, 1]} : vector<6x64xf32> to vector<6x16xf32>
      %221 = arith.mulf %219, %220 : vector<6x16xf32>
      %cst_109 = arith.constant dense<0.000000e+00> : vector<6xf32>
      %222 = vector.multi_reduction <add>, %221, %cst_109 [1] : vector<6x16xf32> to vector<6xf32>
      %223 = vector.shape_cast %222 : vector<6xf32> to vector<6x1xf32>
      %224 = arith.addf %217, %223 : vector<6x1xf32>
      %225 = vector.extract_strided_slice %192 {offsets = [0, 2, 0], sizes = [6, 1, 16], strides = [1, 1, 1]} : vector<6x4x16xf32> to vector<6x1x16xf32>
      %226 = vector.shape_cast %225 : vector<6x1x16xf32> to vector<6x16xf32>
      %227 = vector.extract_strided_slice %196 {offsets = [0, 32], sizes = [6, 16], strides = [1, 1]} : vector<6x64xf32> to vector<6x16xf32>
      %228 = arith.mulf %226, %227 : vector<6x16xf32>
      %cst_110 = arith.constant dense<0.000000e+00> : vector<6xf32>
      %229 = vector.multi_reduction <add>, %228, %cst_110 [1] : vector<6x16xf32> to vector<6xf32>
      %230 = vector.shape_cast %229 : vector<6xf32> to vector<6x1xf32>
      %231 = arith.addf %224, %230 : vector<6x1xf32>
      %232 = vector.extract_strided_slice %192 {offsets = [0, 3, 0], sizes = [6, 1, 16], strides = [1, 1, 1]} : vector<6x4x16xf32> to vector<6x1x16xf32>
      %233 = vector.shape_cast %232 : vector<6x1x16xf32> to vector<6x16xf32>
      %234 = vector.extract_strided_slice %196 {offsets = [0, 48], sizes = [6, 16], strides = [1, 1]} : vector<6x64xf32> to vector<6x16xf32>
      %235 = arith.mulf %233, %234 : vector<6x16xf32>
      %cst_111 = arith.constant dense<0.000000e+00> : vector<6xf32>
      %236 = vector.multi_reduction <add>, %235, %cst_111 [1] : vector<6x16xf32> to vector<6xf32>
      %237 = vector.shape_cast %236 : vector<6xf32> to vector<6x1xf32>
      %238 = arith.addf %231, %237 : vector<6x1xf32>
      %239 = arith.mulf %202, %209 : vector<6x1xf32>
      %240 = arith.divf %238, %239 : vector<6x1xf32>
      %c0_112 = arith.constant 0 : index
      %c0_113 = arith.constant 0 : index
      %241 = vector.load %arg25[%c0_112, %c0_113] : memref<1x2xf32, #tpu.memory_space<vmem>>, vector<1x2xf32>
      %242 = vector.broadcast %240 : vector<6x1xf32> to vector<6x2xf32>
      %243 = vector.broadcast %241 : vector<1x2xf32> to vector<6x2xf32>
      %244 = arith.mulf %242, %243 : vector<6x2xf32>
      %c0_114 = arith.constant 0 : index
      %c0_115 = arith.constant 0 : index
      %245 = vector.load %arg26[%c0_114, %c0_115] : memref<1x2xf32, #tpu.memory_space<vmem>>, vector<1x2xf32>
      %246 = vector.broadcast %245 : vector<1x2xf32> to vector<6x2xf32>
      %247 = arith.addf %244, %246 : vector<6x2xf32>
      %c0_116 = arith.constant 0 : index
      %c0_117 = arith.constant 0 : index
      %248 = vector.load %arg27[%c0_116, %c0_117] : memref<6x2xf32, #tpu.memory_space<vmem>>, vector<6x2xf32>
      tpu.vector_store %arg27[%c0_116, %c0_117], %247 {strides = array<i32>} : memref<6x2xf32, #tpu.memory_space<vmem>>, vector<6x2xf32>,
    } else {
    }
    return
  }
  func.func @transform_0(%arg0: i32) -> (i32, i32) {
    %c0_i32 = arith.constant 0 : i32
    %c0_i32_0 = arith.constant 0 : i32
    %c0_i32_1 = arith.constant 0 : i32
    return %c0_i32, %c0_i32_0 : i32, i32
  }
  func.func @transform_1(%arg0: i32) -> (i32, i32) {
    %c0_i32 = arith.constant 0 : i32
    %c0_i32_0 = arith.constant 0 : i32
    %c0_i32_1 = arith.constant 0 : i32
    return %c0_i32, %c0_i32_0 : i32, i32
  }
  func.func @transform_2(%arg0: i32) -> (i32, i32, i32) {
    %c0_i32 = arith.constant 0 : i32
    %c0_i32_0 = arith.constant 0 : i32
    %c0_i32_1 = arith.constant 0 : i32
    return %arg0, %c0_i32, %c0_i32_0 : i32, i32, i32
  }
  func.func @transform_3(%arg0: i32) -> (i32, i32, i32) {
    %c0_i32 = arith.constant 0 : i32
    %c0_i32_0 = arith.constant 0 : i32
    %c0_i32_1 = arith.constant 0 : i32
    return %arg0, %c0_i32, %c0_i32_0 : i32, i32, i32
  }
  func.func @transform_4(%arg0: i32) -> (i32, i32, i32) {
    %c0_i32 = arith.constant 0 : i32
    %c0_i32_0 = arith.constant 0 : i32
    %c0_i32_1 = arith.constant 0 : i32
    return %arg0, %c0_i32, %c0_i32_0 : i32, i32, i32
  }
  func.func @transform_5(%arg0: i32) -> (i32, i32, i32) {
    %c0_i32 = arith.constant 0 : i32
    %c0_i32_0 = arith.constant 0 : i32
    %c0_i32_1 = arith.constant 0 : i32
    return %arg0, %c0_i32, %c0_i32_0 : i32, i32, i32
  }
  func.func @transform_6(%arg0: i32) -> (i32, i32, i32) {
    %c0_i32 = arith.constant 0 : i32
    %c0_i32_0 = arith.constant 0 : i32
    %c0_i32_1 = arith.constant 0 : i32
    return %arg0, %c0_i32, %c0_i32_0 : i32, i32, i32
  }
  func.func @transform_7(%arg0: i32) -> (i32, i32, i32) {
    %c0_i32 = arith.constant 0 : i32
    %c0_i32_0 = arith.constant 0 : i32
    %c0_i32_1 = arith.constant 0 : i32
    return %arg0, %c0_i32, %c0_i32_0 : i32, i32, i32
  }
  func.func @transform_8(%arg0: i32) -> (i32, i32, i32, i32) {
    %c0_i32 = arith.constant 0 : i32
    %c0_i32_0 = arith.constant 0 : i32
    %c0_i32_1 = arith.constant 0 : i32
    %c0_i32_2 = arith.constant 0 : i32
    return %arg0, %c0_i32, %c0_i32_0, %c0_i32_1 : i32, i32, i32, i32
  }
  func.func @transform_9(%arg0: i32) -> (i32, i32, i32) {
    %c0_i32 = arith.constant 0 : i32
    %c0_i32_0 = arith.constant 0 : i32
    %c0_i32_1 = arith.constant 0 : i32
    return %arg0, %c0_i32, %c0_i32_0 : i32, i32, i32
  }
  func.func @transform_10(%arg0: i32) -> (i32, i32, i32) {
    %c0_i32 = arith.constant 0 : i32
    %c0_i32_0 = arith.constant 0 : i32
    %c0_i32_1 = arith.constant 0 : i32
    return %arg0, %c0_i32, %c0_i32_0 : i32, i32, i32
  }
  func.func @transform_11(%arg0: i32) -> (i32, i32, i32) {
    %c0_i32 = arith.constant 0 : i32
    %c0_i32_0 = arith.constant 0 : i32
    %c0_i32_1 = arith.constant 0 : i32
    return %arg0, %c0_i32, %c0_i32_0 : i32, i32, i32
  }
  func.func @transform_12(%arg0: i32) -> (i32, i32, i32) {
    %c0_i32 = arith.constant 0 : i32
    %c0_i32_0 = arith.constant 0 : i32
    %c0_i32_1 = arith.constant 0 : i32
    return %arg0, %c0_i32, %c0_i32_0 : i32, i32, i32
  }
  func.func @transform_13(%arg0: i32) -> (i32, i32, i32) {
    %c0_i32 = arith.constant 0 : i32
    %c0_i32_0 = arith.constant 0 : i32
    %c0_i32_1 = arith.constant 0 : i32
    return %arg0, %c0_i32, %c0_i32_0 : i32, i32, i32
  }
  func.func @transform_14(%arg0: i32) -> (i32, i32, i32) {
    %c0_i32 = arith.constant 0 : i32
    %c0_i32_0 = arith.constant 0 : i32
    %c0_i32_1 = arith.constant 0 : i32
    return %arg0, %c0_i32, %c0_i32_0 : i32, i32, i32
  }
  func.func @transform_15(%arg0: i32) -> (i32, i32, i32) {
    %c0_i32 = arith.constant 0 : i32
    %c0_i32_0 = arith.constant 0 : i32
    %c0_i32_1 = arith.constant 0 : i32
    return %arg0, %c0_i32, %c0_i32_0 : i32, i32, i32
  }
  func.func @transform_16(%arg0: i32) -> (i32, i32, i32) {
    %c0_i32 = arith.constant 0 : i32
    %c0_i32_0 = arith.constant 0 : i32
    %c0_i32_1 = arith.constant 0 : i32
    return %arg0, %c0_i32, %c0_i32_0 : i32, i32, i32
  }
  func.func @transform_17(%arg0: i32) -> (i32, i32, i32) {
    %c0_i32 = arith.constant 0 : i32
    %c0_i32_0 = arith.constant 0 : i32
    %c0_i32_1 = arith.constant 0 : i32
    return %arg0, %c0_i32, %c0_i32_0 : i32, i32, i32
  }
  func.func @transform_18(%arg0: i32) -> (i32, i32) {
    %c0_i32 = arith.constant 0 : i32
    %c0_i32_0 = arith.constant 0 : i32
    %c0_i32_1 = arith.constant 0 : i32
    return %c0_i32, %c0_i32_0 : i32, i32
  }
  func.func @transform_19(%arg0: i32) -> (i32, i32) {
    %c0_i32 = arith.constant 0 : i32
    %c0_i32_0 = arith.constant 0 : i32
    %c0_i32_1 = arith.constant 0 : i32
    return %c0_i32, %c0_i32_0 : i32, i32
  }
  func.func @transform_20(%arg0: i32) -> (i32, i32) {
    %c0_i32 = arith.constant 0 : i32
    %c0_i32_0 = arith.constant 0 : i32
    %c0_i32_1 = arith.constant 0 : i32
    return %c0_i32, %c0_i32_0 : i32, i32
  }
  func.func @transform_21(%arg0: i32) -> (i32, i32) {
    %c0_i32 = arith.constant 0 : i32
    %c0_i32_0 = arith.constant 0 : i32
    %c0_i32_1 = arith.constant 0 : i32
    return %c0_i32, %c0_i32_0 : i32, i32
  }
  func.func @transform_22(%arg0: i32) -> (i32, i32) {
    %c0_i32 = arith.constant 0 : i32
    %c0_i32_0 = arith.constant 0 : i32
    %c0_i32_1 = arith.constant 0 : i32
    return %c0_i32, %c0_i32_0 : i32, i32
  }
  func.func @transform_23(%arg0: i32) -> (i32, i32) {
    %c0_i32 = arith.constant 0 : i32
    %c0_i32_0 = arith.constant 0 : i32
    %c0_i32_1 = arith.constant 0 : i32
    return %c0_i32, %c0_i32_0 : i32, i32
  }
  func.func @transform_24(%arg0: i32) -> (i32, i32) {
    %c0_i32 = arith.constant 0 : i32
    %c0_i32_0 = arith.constant 0 : i32
    %c0_i32_1 = arith.constant 0 : i32
    return %c0_i32, %c0_i32_0 : i32, i32
  }
  func.func @transform_25(%arg0: i32) -> (i32, i32) {
    %c0_i32 = arith.constant 0 : i32
    %c0_i32_0 = arith.constant 0 : i32
    %c0_i32_1 = arith.constant 0 : i32
    return %c0_i32, %c0_i32_0 : i32, i32
  }
  func.func @transform_26(%arg0: i32) -> (i32, i32) {
    %c0_i32 = arith.constant 0 : i32
    %c0_i32_0 = arith.constant 0 : i32
    %c0_i32_1 = arith.constant 0 : i32
    return %c0_i32, %c0_i32_0 : i32, i32
  }
}

</mosaic_0001>

<llo_original>
// kernel: question_row_classifier_forward.1
$region0: #{question_row_classifier_forward.1}
  #allocation0 [shape = 'u32[]', space=smem, size = 0x4, offset = 0x4, fixed_abs, tag = 'smem constant byte address 0x4 - core index']
  #allocation1 [shape = 'u32[144,128]{1,0:T(1,128)}', space=vmem, size = 0x12000, scoped, tag = 'internal scratch']
  #allocation2 [shape = 'f32[16,64]{1,0:T(8,128)}', space=vmem, size = 0x2000, scoped, tag = 'scratch operand']
  %s0 = inlined_call_operand.vmem [shape: f32[16,64], index: 0, kind: input, shape index: {}]
  %s1 = inlined_call_operand.vmem [shape: f32[24,16], index: 1, kind: input, shape index: {}]
  %s2 = inlined_call_operand.vmem [shape: bf16[2,64,64], index: 2, kind: input, shape index: {}]
  %s3 = inlined_call_operand.vmem [shape: f32[2,1,64], index: 3, kind: input, shape index: {}]
  %s4 = inlined_call_operand.vmem [shape: bf16[2,64,64], index: 4, kind: input, shape index: {}]
  %s5 = inlined_call_operand.vmem [shape: f32[2,1,64], index: 5, kind: input, shape index: {}]
  %s6 = inlined_call_operand.vmem [shape: bf16[2,64,64], index: 6, kind: input, shape index: {}]
  %s7 = inlined_call_operand.vmem [shape: f32[2,1,64], index: 7, kind: input, shape index: {}]
  %s8 = inlined_call_operand.vmem [shape: bf16[2,4,16,64], index: 8, kind: input, shape index: {}]
  %s9 = inlined_call_operand.vmem [shape: f32[2,1,64], index: 9, kind: input, shape index: {}]
  %s10 = inlined_call_operand.vmem [shape: f32[2,1,64], index: 10, kind: input, shape index: {}]
  %s11 = inlined_call_operand.vmem [shape: f32[2,1,64], index: 11, kind: input, shape index: {}]
  %s12 = inlined_call_operand.vmem [shape: bf16[2,64,2048], index: 12, kind: input, shape index: {}]
  %s13 = inlined_call_operand.vmem [shape: f32[2,1,2048], index: 13, kind: input, shape index: {}]
  %s14 = inlined_call_operand.vmem [shape: bf16[2,2048,64], index: 14, kind: input, shape index: {}]
  %s15 = inlined_call_operand.vmem [shape: f32[2,1,64], index: 15, kind: input, shape index: {}]
  %s16 = inlined_call_operand.vmem [shape: f32[2,1,64], index: 16, kind: input, shape index: {}]
  %s17 = inlined_call_operand.vmem [shape: f32[2,1,64], index: 17, kind: input, shape index: {}]
  %s18 = inlined_call_operand.vmem [shape: bf16[16,16], index: 18, kind: input, shape index: {}]
  %s19 = inlined_call_operand.vmem [shape: f32[1,16], index: 19, kind: input, shape index: {}]
  %s20 = inlined_call_operand.vmem [shape: bf16[16,16], index: 20, kind: input, shape index: {}]
  %s21 = inlined_call_operand.vmem [shape: f32[1,16], index: 21, kind: input, shape index: {}]
  %s22 = inlined_call_operand.vmem [shape: bf16[16,16], index: 22, kind: input, shape index: {}]
  %s23 = inlined_call_operand.vmem [shape: f32[1,16], index: 23, kind: input, shape index: {}]
  %s24 = inlined_call_operand.vmem [shape: f32[1,2], index: 24, kind: input, shape index: {}]
  %s25 = inlined_call_operand.vmem [shape: f32[1,2], index: 25, kind: input, shape index: {}]
  %s26 = inlined_call_operand.vmem [shape: f32[6,2], index: 26, kind: output, shape index: {}]
  %s27 = sld [smem:[#allocation0]]
  $region145: #{question_row_classifier_forward.1} parent=0
    _
  %s29 = ssub.s32 1, %s27
  %s30 = scalar_select 0, %s29, %s27
  loop: start=0, step=1, limit=4
  $region2: #{question_row_classifier_forward.1} parent=0 // loop_pre_header
    _
  $region3: #{question_row_classifier_forward.1} parent=0 // loop_header
    %s32 = sphi 0, %s36
    %p33 = scmp.ge.s32.totalorder %s32, 4
    %s40 = sphi 0, %s40
    %s42 = sphi 0, %s40
    %s43 = sphi 0, %s42
    %s57 = sphi 0, %s43
    %s61 = sphi 0, %s61
    %s63 = sphi 0, %s61
    %s64 = sphi 0, %s63
    %s78 = sphi 0, %s64
    %s84 = sphi 0, %s86
    %s87 = sphi 0, %s84
    %s88 = sphi 0, %s87
    %s104 = sphi 0, %s88
    %s110 = sphi 0, %s112
    %s113 = sphi 0, %s110
    %s114 = sphi 0, %s113
    %s130 = sphi 0, %s114
    %s136 = sphi 0, %s138
    %s139 = sphi 0, %s136
    %s140 = sphi 0, %s139
    %s156 = sphi 0, %s140
    %s162 = sphi 0, %s164
    %s165 = sphi 0, %s162
    %s166 = sphi 0, %s165
    %s182 = sphi 0, %s166
    %s188 = sphi 0, %s190
    %s191 = sphi 0, %s188
    %s192 = sphi 0, %s191
    %s208 = sphi 0, %s192
    %s214 = sphi 0, %s216
    %s217 = sphi 0, %s214
    %s218 = sphi 0, %s217
    %s234 = sphi 0, %s218
    %s240 = sphi 0, %s242
    %s243 = sphi 0, %s240
    %s244 = sphi 0, %s243
    %s260 = sphi 0, %s244
    %s266 = sphi 0, %s268
    %s269 = sphi 0, %s266
    %s270 = sphi 0, %s269
    %s286 = sphi 0, %s270
    %s292 = sphi 0, %s294
    %s295 = sphi 0, %s292
    %s296 = sphi 0, %s295
    %s312 = sphi 0, %s296
    %s318 = sphi 0, %s320
    %s321 = sphi 0, %s318
    %s322 = sphi 0, %s321
    %s338 = sphi 0, %s322
    %s344 = sphi 0, %s346
    %s347 = sphi 0, %s344
    %s348 = sphi 0, %s347
    %s364 = sphi 0, %s348
    %s370 = sphi 0, %s372
    %s373 = sphi 0, %s370
    %s374 = sphi 0, %s373
    %s390 = sphi 0, %s374
    %s396 = sphi 0, %s398
    %s399 = sphi 0, %s396
    %s400 = sphi 0, %s399
    %s416 = sphi 0, %s400
    %s422 = sphi 0, %s424
    %s425 = sphi 0, %s422
    %s426 = sphi 0, %s425
    %s442 = sphi 0, %s426
    %s448 = sphi 0, %s450
    %s451 = sphi 0, %s448
    %s452 = sphi 0, %s451
    %s468 = sphi 0, %s452
    %s474 = sphi 0, %s476
    %s477 = sphi 0, %s474
    %s478 = sphi 0, %s477
    %s494 = sphi 0, %s478
    %s498 = sphi 0, %s498
    %s500 = sphi 0, %s498
    %s501 = sphi 0, %s500
    %s515 = sphi 0, %s501
    %s519 = sphi 0, %s519
    %s521 = sphi 0, %s519
    %s522 = sphi 0, %s521
    %s536 = sphi 0, %s522
    %s540 = sphi 0, %s540
    %s542 = sphi 0, %s540
    %s543 = sphi 0, %s542
    %s557 = sphi 0, %s543
    %s561 = sphi 0, %s561
    %s563 = sphi 0, %s561
    %s564 = sphi 0, %s563
    %s578 = sphi 0, %s564
    %s582 = sphi 0, %s582
    %s584 = sphi 0, %s582
    %s585 = sphi 0, %s584
    %s599 = sphi 0, %s585
    %s603 = sphi 0, %s603
    %s605 = sphi 0, %s603
    %s606 = sphi 0, %s605
    %s620 = sphi 0, %s606
    %s624 = sphi 0, %s624
    %s626 = sphi 0, %s624
    %s627 = sphi 0, %s626
    %s641 = sphi 0, %s627
    %s645 = sphi 0, %s645
    %s647 = sphi 0, %s645
    %s648 = sphi 0, %s647
    %s662 = sphi 0, %s648
    %s666 = sphi 0, %s666
    %s668 = sphi 0, %s666
    %s669 = sphi 0, %s668
    %s683 = sphi 0, %s669
  $region4: #{question_row_classifier_forward.1} parent=0 // loop_header_branch
    %35 = sbr.rel (%p33) target = $region8
  $region5: #{question_row_classifier_forward.1} parent=0 // loop_body
    %s37 = ssub.s32 %s32, 1
    %s38 = ssub.s32 %s32, 2
    %s39 = sadd.s32 %s32, 1
    %s41 = sadd.s32 %s40, 1
    %p44 = scmp.eq.s32.totalorder %s32, 1
    %p45 = scmp.ne.s32.totalorder %s40, %s42
    %p46 = scmp.eq.s32.totalorder %s32, 0
    %p47 = por %p45, %p46
    %p48 = scmp.ne.s32.totalorder %s40, %s42
    %p49 = scmp.eq.s32.totalorder %s37, 1
    %p50 = por %p48, %p49
    %p51 = scmp.ne.s32.totalorder %s42, %s43
    %p52 = scmp.eq.s32.totalorder %s37, 0
    %p53 = por %p51, %p52
    %p54 = scmp.ne.s32.totalorder %s42, %s43
    %p55 = scmp.eq.s32.totalorder %s38, 1
    %p56 = por %p54, %p55
    %p58 = scmp.ne.s32.totalorder %s43, %s57
    %p59 = scmp.eq.s32.totalorder %s38, 0
    %p60 = por %p58, %p59
    %s62 = sadd.s32 %s61, 1
    %p65 = scmp.eq.s32.totalorder %s32, 1
    %p66 = scmp.ne.s32.totalorder %s61, %s63
    %p67 = scmp.eq.s32.totalorder %s32, 0
    %p68 = por %p66, %p67
    %p69 = scmp.ne.s32.totalorder %s61, %s63
    %p70 = scmp.eq.s32.totalorder %s37, 1
    %p71 = por %p69, %p70
    %p72 = scmp.ne.s32.totalorder %s63, %s64
    %p73 = scmp.eq.s32.totalorder %s37, 0
    %p74 = por %p72, %p73
    %p75 = scmp.ne.s32.totalorder %s63, %s64
    %p76 = scmp.eq.s32.totalorder %s38, 1
    %p77 = por %p75, %p76
    %p79 = scmp.ne.s32.totalorder %s64, %s78
    %p80 = scmp.eq.s32.totalorder %s38, 0
    %p81 = por %p79, %p80
    %s82 = ssub.s32 %s32, %s39
    %p83 = scmp.eq.s32.totalorder %s82, 0
    %s85 = sadd.s32 %s84, 1
    %s86 = scalar_select %p83, %s84, %s85
    %p89 = pneg %p83
    %p90 = scmp.eq.s32.totalorder %s32, 1
    %p91 = por %p89, %p90
    %p92 = scmp.ne.s32.totalorder %s84, %s87
    %p93 = scmp.eq.s32.totalorder %s32, 0
    %p94 = por %p92, %p93
    %p95 = scmp.ne.s32.totalorder %s84, %s87
    %p96 = scmp.eq.s32.totalorder %s37, 1
    %p97 = por %p95, %p96
    %p98 = scmp.ne.s32.totalorder %s87, %s88
    %p99 = scmp.eq.s32.totalorder %s37, 0
    %p100 = por %p98, %p99
    %p101 = scmp.ne.s32.totalorder %s87, %s88
    %p102 = scmp.eq.s32.totalorder %s38, 1
    %p103 = por %p101, %p102
    %p105 = scmp.ne.s32.totalorder %s88, %s104
    %p106 = scmp.eq.s32.totalorder %s38, 0
    %p107 = por %p105, %p106
    %s108 = ssub.s32 %s32, %s39
    %p109 = scmp.eq.s32.totalorder %s108, 0
    %s111 = sadd.s32 %s110, 1
    %s112 = scalar_select %p109, %s110, %s111
    %p115 = pneg %p109
    %p116 = scmp.eq.s32.totalorder %s32, 1
    %p117 = por %p115, %p116
    %p118 = scmp.ne.s32.totalorder %s110, %s113
    %p119 = scmp.eq.s32.totalorder %s32, 0
    %p120 = por %p118, %p119
    %p121 = scmp.ne.s32.totalorder %s110, %s113
    %p122 = scmp.eq.s32.totalorder %s37, 1
    %p123 = por %p121, %p122
    %p124 = scmp.ne.s32.totalorder %s113, %s114
    %p125 = scmp.eq.s32.totalorder %s37, 0
    %p126 = por %p124, %p125
    %p127 = scmp.ne.s32.totalorder %s113, %s114
    %p128 = scmp.eq.s32.totalorder %s38, 1
    %p129 = por %p127, %p128
    %p131 = scmp.ne.s32.totalorder %s114, %s130
    %p132 = scmp.eq.s32.totalorder %s38, 0
    %p133 = por %p131, %p132
    %s134 = ssub.s32 %s32, %s39
    %p135 = scmp.eq.s32.totalorder %s134, 0
    %s137 = sadd.s32 %s136, 1
    %s138 = scalar_select %p135, %s136, %s137
    %p141 = pneg %p135
    %p142 = scmp.eq.s32.totalorder %s32, 1
    %p143 = por %p141, %p142
    %p144 = scmp.ne.s32.totalorder %s136, %s139
    %p145 = scmp.eq.s32.totalorder %s32, 0
    %p146 = por %p144, %p145
    %p147 = scmp.ne.s32.totalorder %s136, %s139
    %p148 = scmp.eq.s32.totalorder %s37, 1
    %p149 = por %p147, %p148
    %p150 = scmp.ne.s32.totalorder %s139, %s140
    %p151 = scmp.eq.s32.totalorder %s37, 0
    %p152 = por %p150, %p151
    %p153 = scmp.ne.s32.totalorder %s139, %s140
    %p154 = scmp.eq.s32.totalorder %s38, 1
    %p155 = por %p153, %p154
    %p157 = scmp.ne.s32.totalorder %s140, %s156
    %p158 = scmp.eq.s32.totalorder %s38, 0
    %p159 = por %p157, %p158
    %s160 = ssub.s32 %s32, %s39
    %p161 = scmp.eq.s32.totalorder %s160, 0
    %s163 = sadd.s32 %s162, 1
    %s164 = scalar_select %p161, %s162, %s163
    %p167 = pneg %p161
    %p168 = scmp.eq.s32.totalorder %s32, 1
    %p169 = por %p167, %p168
    %p170 = scmp.ne.s32.totalorder %s162, %s165
    %p171 = scmp.eq.s32.totalorder %s32, 0
    %p172 = por %p170, %p171
    %p173 = scmp.ne.s32.totalorder %s162, %s165
    %p174 = scmp.eq.s32.totalorder %s37, 1
    %p175 = por %p173, %p174
    %p176 = scmp.ne.s32.totalorder %s165, %s166
    %p177 = scmp.eq.s32.totalorder %s37, 0
    %p178 = por %p176, %p177
    %p179 = scmp.ne.s32.totalorder %s165, %s166
    %p180 = scmp.eq.s32.totalorder %s38, 1
    %p181 = por %p179, %p180
    %p183 = scmp.ne.s32.totalorder %s166, %s182
    %p184 = scmp.eq.s32.totalorder %s38, 0
    %p185 = por %p183, %p184
    %s186 = ssub.s32 %s32, %s39
    %p187 = scmp.eq.s32.totalorder %s186, 0
    %s189 = sadd.s32 %s188, 1
    %s190 = scalar_select %p187, %s188, %s189
    %p193 = pneg %p187
    %p194 = scmp.eq.s32.totalorder %s32, 1
    %p195 = por %p193, %p194
    %p196 = scmp.ne.s32.totalorder %s188, %s191
    %p197 = scmp.eq.s32.totalorder %s32, 0
    %p198 = por %p196, %p197
    %p199 = scmp.ne.s32.totalorder %s188, %s191
    %p200 = scmp.eq.s32.totalorder %s37, 1
    %p201 = por %p199, %p200
    %p202 = scmp.ne.s32.totalorder %s191, %s192
    %p203 = scmp.eq.s32.totalorder %s37, 0
    %p204 = por %p202, %p203
    %p205 = scmp.ne.s32.totalorder %s191, %s192
    %p206 = scmp.eq.s32.totalorder %s38, 1
    %p207 = por %p205, %p206
    %p209 = scmp.ne.s32.totalorder %s192, %s208
    %p210 = scmp.eq.s32.totalorder %s38, 0
    %p211 = por %p209, %p210
    %s212 = ssub.s32 %s32, %s39
    %p213 = scmp.eq.s32.totalorder %s212, 0
    %s215 = sadd.s32 %s214, 1
    %s216 = scalar_select %p213, %s214, %s215
    %p219 = pneg %p213
    %p220 = scmp.eq.s32.totalorder %s32, 1
    %p221 = por %p219, %p220
    %p222 = scmp.ne.s32.totalorder %s214, %s217
    %p223 = scmp.eq.s32.totalorder %s32, 0
    %p224 = por %p222, %p223
    %p225 = scmp.ne.s32.totalorder %s214, %s217
    %p226 = scmp.eq.s32.totalorder %s37, 1
    %p227 = por %p225, %p226
    %p228 = scmp.ne.s32.totalorder %s217, %s218
    %p229 = scmp.eq.s32.totalorder %s37, 0
    %p230 = por %p228, %p229
    %p231 = scmp.ne.s32.totalorder %s217, %s218
    %p232 = scmp.eq.s32.totalorder %s38, 1
    %p233 = por %p231, %p232
    %p235 = scmp.ne.s32.totalorder %s218, %s234
    %p236 = scmp.eq.s32.totalorder %s38, 0
    %p237 = por %p235, %p236
    %s238 = ssub.s32 %s32, %s39
    %p239 = scmp.eq.s32.totalorder %s238, 0
    %s241 = sadd.s32 %s240, 1
    %s242 = scalar_select %p239, %s240, %s241
    %p245 = pneg %p239
    %p246 = scmp.eq.s32.totalorder %s32, 1
    %p247 = por %p245, %p246
    %p248 = scmp.ne.s32.totalorder %s240, %s243
    %p249 = scmp.eq.s32.totalorder %s32, 0
    %p250 = por %p248, %p249
    %p251 = scmp.ne.s32.totalorder %s240, %s243
    %p252 = scmp.eq.s32.totalorder %s37, 1
    %p253 = por %p251, %p252
    %p254 = scmp.ne.s32.totalorder %s243, %s244
    %p255 = scmp.eq.s32.totalorder %s37, 0
    %p256 = por %p254, %p255
    %p257 = scmp.ne.s32.totalorder %s243, %s244
    %p258 = scmp.eq.s32.totalorder %s38, 1
    %p259 = por %p257, %p258
    %p261 = scmp.ne.s32.totalorder %s244, %s260
    %p262 = scmp.eq.s32.totalorder %s38, 0
    %p263 = por %p261, %p262
    %s264 = ssub.s32 %s32, %s39
    %p265 = scmp.eq.s32.totalorder %s264, 0
    %s267 = sadd.s32 %s266, 1
    %s268 = scalar_select %p265, %s266, %s267
    %p271 = pneg %p265
    %p272 = scmp.eq.s32.totalorder %s32, 1
    %p273 = por %p271, %p272
    %p274 = scmp.ne.s32.totalorder %s266, %s269
    %p275 = scmp.eq.s32.totalorder %s32, 0
    %p276 = por %p274, %p275
    %p277 = scmp.ne.s32.totalorder %s266, %s269
    %p278 = scmp.eq.s32.totalorder %s37, 1
    %p279 = por %p277, %p278
    %p280 = scmp.ne.s32.totalorder %s269, %s270
    %p281 = scmp.eq.s32.totalorder %s37, 0
    %p282 = por %p280, %p281
    %p283 = scmp.ne.s32.totalorder %s269, %s270
    %p284 = scmp.eq.s32.totalorder %s38, 1
    %p285 = por %p283, %p284
    %p287 = scmp.ne.s32.totalorder %s270, %s286
    %p288 = scmp.eq.s32.totalorder %s38, 0
    %p289 = por %p287, %p288
    %s290 = ssub.s32 %s32, %s39
    %p291 = scmp.eq.s32.totalorder %s290, 0
    %s293 = sadd.s32 %s292, 1
    %s294 = scalar_select %p291, %s292, %s293
    %p297 = pneg %p291
    %p298 = scmp.eq.s32.totalorder %s32, 1
    %p299 = por %p297, %p298
    %p300 = scmp.ne.s32.totalorder %s292, %s295
    %p301 = scmp.eq.s32.totalorder %s32, 0
    %p302 = por %p300, %p301
    %p303 = scmp.ne.s32.totalorder %s292, %s295
    %p304 = scmp.eq.s32.totalorder %s37, 1
    %p305 = por %p303, %p304
    %p306 = scmp.ne.s32.totalorder %s295, %s296
    %p307 = scmp.eq.s32.totalorder %s37, 0
    %p308 = por %p306, %p307
    %p309 = scmp.ne.s32.totalorder %s295, %s296
    %p310 = scmp.eq.s32.totalorder %s38, 1
    %p311 = por %p309, %p310
    %p313 = scmp.ne.s32.totalorder %s296, %s312
    %p314 = scmp.eq.s32.totalorder %s38, 0
    %p315 = por %p313, %p314
    %s316 = ssub.s32 %s32, %s39
    %p317 = scmp.eq.s32.totalorder %s316, 0
    %s319 = sadd.s32 %s318, 1
    %s320 = scalar_select %p317, %s318, %s319
    %p323 = pneg %p317
    %p324 = scmp.eq.s32.totalorder %s32, 1
    %p325 = por %p323, %p324
    %p326 = scmp.ne.s32.totalorder %s318, %s321
    %p327 = scmp.eq.s32.totalorder %s32, 0
    %p328 = por %p326, %p327
    %p329 = scmp.ne.s32.totalorder %s318, %s321
    %p330 = scmp.eq.s32.totalorder %s37, 1
    %p331 = por %p329, %p330
    %p332 = scmp.ne.s32.totalorder %s321, %s322
    %p333 = scmp.eq.s32.totalorder %s37, 0
    %p334 = por %p332, %p333
    %p335 = scmp.ne.s32.totalorder %s321, %s322
    %p336 = scmp.eq.s32.totalorder %s38, 1
    %p337 = por %p335, %p336
    %p339 = scmp.ne.s32.totalorder %s322, %s338
    %p340 = scmp.eq.s32.totalorder %s38, 0
    %p341 = por %p339, %p340
    %s342 = ssub.s32 %s32, %s39
    %p343 = scmp.eq.s32.totalorder %s342, 0
    %s345 = sadd.s32 %s344, 1
    %s346 = scalar_select %p343, %s344, %s345
    %p349 = pneg %p343
    %p350 = scmp.eq.s32.totalorder %s32, 1
    %p351 = por %p349, %p350
    %p352 = scmp.ne.s32.totalorder %s344, %s347
    %p353 = scmp.eq.s32.totalorder %s32, 0
    %p354 = por %p352, %p353
    %p355 = scmp.ne.s32.totalorder %s344, %s347
    %p356 = scmp.eq.s32.totalorder %s37, 1
    %p357 = por %p355, %p356
    %p358 = scmp.ne.s32.totalorder %s347, %s348
    %p359 = scmp.eq.s32.totalorder %s37, 0
    %p360 = por %p358, %p359
    %p361 = scmp.ne.s32.totalorder %s347, %s348
    %p362 = scmp.eq.s32.totalorder %s38, 1
    %p363 = por %p361, %p362
    %p365 = scmp.ne.s32.totalorder %s348, %s364
    %p366 = scmp.eq.s32.totalorder %s38, 0
    %p367 = por %p365, %p366
    %s368 = ssub.s32 %s32, %s39
    %p369 = scmp.eq.s32.totalorder %s368, 0
    %s371 = sadd.s32 %s370, 1
    %s372 = scalar_select %p369, %s370, %s371
    %p375 = pneg %p369
    %p376 = scmp.eq.s32.totalorder %s32, 1
    %p377 = por %p375, %p376
    %p378 = scmp.ne.s32.totalorder %s370, %s373
    %p379 = scmp.eq.s32.totalorder %s32, 0
    %p380 = por %p378, %p379
    %p381 = scmp.ne.s32.totalorder %s370, %s373
    %p382 = scmp.eq.s32.totalorder %s37, 1
    %p383 = por %p381, %p382
    %p384 = scmp.ne.s32.totalorder %s373, %s374
    %p385 = scmp.eq.s32.totalorder %s37, 0
    %p386 = por %p384, %p385
    %p387 = scmp.ne.s32.totalorder %s373, %s374
    %p388 = scmp.eq.s32.totalorder %s38, 1
    %p389 = por %p387, %p388
    %p391 = scmp.ne.s32.totalorder %s374, %s390
    %p392 = scmp.eq.s32.totalorder %s38, 0
    %p393 = por %p391, %p392
    %s394 = ssub.s32 %s32, %s39
    %p395 = scmp.eq.s32.totalorder %s394, 0
    %s397 = sadd.s32 %s396, 1
    %s398 = scalar_select %p395, %s396, %s397
    %p401 = pneg %p395
    %p402 = scmp.eq.s32.totalorder %s32, 1
    %p403 = por %p401, %p402
    %p404 = scmp.ne.s32.totalorder %s396, %s399
    %p405 = scmp.eq.s32.totalorder %s32, 0
    %p406 = por %p404, %p405
    %p407 = scmp.ne.s32.totalorder %s396, %s399
    %p408 = scmp.eq.s32.totalorder %s37, 1
    %p409 = por %p407, %p408
    %p410 = scmp.ne.s32.totalorder %s399, %s400
    %p411 = scmp.eq.s32.totalorder %s37, 0
    %p412 = por %p410, %p411
    %p413 = scmp.ne.s32.totalorder %s399, %s400
    %p414 = scmp.eq.s32.totalorder %s38, 1
    %p415 = por %p413, %p414
    %p417 = scmp.ne.s32.totalorder %s400, %s416
    %p418 = scmp.eq.s32.totalorder %s38, 0
    %p419 = por %p417, %p418
    %s420 = ssub.s32 %s32, %s39
    %p421 = scmp.eq.s32.totalorder %s420, 0
    %s423 = sadd.s32 %s422, 1
    %s424 = scalar_select %p421, %s422, %s423
    %p427 = pneg %p421
    %p428 = scmp.eq.s32.totalorder %s32, 1
    %p429 = por %p427, %p428
    %p430 = scmp.ne.s32.totalorder %s422, %s425
    %p431 = scmp.eq.s32.totalorder %s32, 0
    %p432 = por %p430, %p431
    %p433 = scmp.ne.s32.totalorder %s422, %s425
    %p434 = scmp.eq.s32.totalorder %s37, 1
    %p435 = por %p433, %p434
    %p436 = scmp.ne.s32.totalorder %s425, %s426
    %p437 = scmp.eq.s32.totalorder %s37, 0
    %p438 = por %p436, %p437
    %p439 = scmp.ne.s32.totalorder %s425, %s426
    %p440 = scmp.eq.s32.totalorder %s38, 1
    %p441 = por %p439, %p440
    %p443 = scmp.ne.s32.totalorder %s426, %s442
    %p444 = scmp.eq.s32.totalorder %s38, 0
    %p445 = por %p443, %p444
    %s446 = ssub.s32 %s32, %s39
    %p447 = scmp.eq.s32.totalorder %s446, 0
    %s449 = sadd.s32 %s448, 1
    %s450 = scalar_select %p447, %s448, %s449
    %p453 = pneg %p447
    %p454 = scmp.eq.s32.totalorder %s32, 1
    %p455 = por %p453, %p454
    %p456 = scmp.ne.s32.totalorder %s448, %s451
    %p457 = scmp.eq.s32.totalorder %s32, 0
    %p458 = por %p456, %p457
    %p459 = scmp.ne.s32.totalorder %s448, %s451
    %p460 = scmp.eq.s32.totalorder %s37, 1
    %p461 = por %p459, %p460
    %p462 = scmp.ne.s32.totalorder %s451, %s452
    %p463 = scmp.eq.s32.totalorder %s37, 0
    %p464 = por %p462, %p463
    %p465 = scmp.ne.s32.totalorder %s451, %s452
    %p466 = scmp.eq.s32.totalorder %s38, 1
    %p467 = por %p465, %p466
    %p469 = scmp.ne.s32.totalorder %s452, %s468
    %p470 = scmp.eq.s32.totalorder %s38, 0
    %p471 = por %p469, %p470
    %s472 = ssub.s32 %s32, %s39
    %p473 = scmp.eq.s32.totalorder %s472, 0
    %s475 = sadd.s32 %s474, 1
    %s476 = scalar_select %p473, %s474, %s475
    %p479 = pneg %p473
    %p480 = scmp.eq.s32.totalorder %s32, 1
    %p481 = por %p479, %p480
    %p482 = scmp.ne.s32.totalorder %s474, %s477
    %p483 = scmp.eq.s32.totalorder %s32, 0
    %p484 = por %p482, %p483
    %p485 = scmp.ne.s32.totalorder %s474, %s477
    %p486 = scmp.eq.s32.totalorder %s37, 1
    %p487 = por %p485, %p486
    %p488 = scmp.ne.s32.totalorder %s477, %s478
    %p489 = scmp.eq.s32.totalorder %s37, 0
    %p490 = por %p488, %p489
    %p491 = scmp.ne.s32.totalorder %s477, %s478
    %p492 = scmp.eq.s32.totalorder %s38, 1
    %p493 = por %p491, %p492
    %p495 = scmp.ne.s32.totalorder %s478, %s494
    %p496 = scmp.eq.s32.totalorder %s38, 0
    %p497 = por %p495, %p496
    %s499 = sadd.s32 %s498, 1
    %p502 = scmp.eq.s32.totalorder %s32, 1
    %p503 = scmp.ne.s32.totalorder %s498, %s500
    %p504 = scmp.eq.s32.totalorder %s32, 0
    %p505 = por %p503, %p504
    %p506 = scmp.ne.s32.totalorder %s498, %s500
    %p507 = scmp.eq.s32.totalorder %s37, 1
    %p508 = por %p506, %p507
    %p509 = scmp.ne.s32.totalorder %s500, %s501
    %p510 = scmp.eq.s32.totalorder %s37, 0
    %p511 = por %p509, %p510
    %p512 = scmp.ne.s32.totalorder %s500, %s501
    %p513 = scmp.eq.s32.totalorder %s38, 1
    %p514 = por %p512, %p513
    %p516 = scmp.ne.s32.totalorder %s501, %s515
    %p517 = scmp.eq.s32.totalorder %s38, 0
    %p518 = por %p516, %p517
    %s520 = sadd.s32 %s519, 1
    %p523 = scmp.eq.s32.totalorder %s32, 1
    %p524 = scmp.ne.s32.totalorder %s519, %s521
    %p525 = scmp.eq.s32.totalorder %s32, 0
    %p526 = por %p524, %p525
    %p527 = scmp.ne.s32.totalorder %s519, %s521
    %p528 = scmp.eq.s32.totalorder %s37, 1
    %p529 = por %p527, %p528
    %p530 = scmp.ne.s32.totalorder %s521, %s522
    %p531 = scmp.eq.s32.totalorder %s37, 0
    %p532 = por %p530, %p531
    %p533 = scmp.ne.s32.totalorder %s521, %s522
    %p534 = scmp.eq.s32.totalorder %s38, 1
    %p535 = por %p533, %p534
    %p537 = scmp.ne.s32.totalorder %s522, %s536
    %p538 = scmp.eq.s32.totalorder %s38, 0
    %p539 = por %p537, %p538
    %s541 = sadd.s32 %s540, 1
    %p544 = scmp.eq.s32.totalorder %s32, 1
    %p545 = scmp.ne.s32.totalorder %s540, %s542
    %p546 = scmp.eq.s32.totalorder %s32, 0
    %p547 = por %p545, %p546
    %p548 = scmp.ne.s32.totalorder %s540, %s542
    %p549 = scmp.eq.s32.totalorder %s37, 1
    %p550 = por %p548, %p549
    %p551 = scmp.ne.s32.totalorder %s542, %s543
    %p552 = scmp.eq.s32.totalorder %s37, 0
    %p553 = por %p551, %p552
    %p554 = scmp.ne.s32.totalorder %s542, %s543
    %p555 = scmp.eq.s32.totalorder %s38, 1
    %p556 = por %p554, %p555
    %p558 = scmp.ne.s32.totalorder %s543, %s557
    %p559 = scmp.eq.s32.totalorder %s38, 0
    %p560 = por %p558, %p559
    %s562 = sadd.s32 %s561, 1
    %p565 = scmp.eq.s32.totalorder %s32, 1
    %p566 = scmp.ne.s32.totalorder %s561, %s563
    %p567 = scmp.eq.s32.totalorder %s32, 0
    %p568 = por %p566, %p567
    %p569 = scmp.ne.s32.totalorder %s561, %s563
    %p570 = scmp.eq.s32.totalorder %s37, 1
    %p571 = por %p569, %p570
    %p572 = scmp.ne.s32.totalorder %s563, %s564
    %p573 = scmp.eq.s32.totalorder %s37, 0
    %p574 = por %p572, %p573
    %p575 = scmp.ne.s32.totalorder %s563, %s564
    %p576 = scmp.eq.s32.totalorder %s38, 1
    %p577 = por %p575, %p576
    %p579 = scmp.ne.s32.totalorder %s564, %s578
    %p580 = scmp.eq.s32.totalorder %s38, 0
    %p581 = por %p579, %p580
    %s583 = sadd.s32 %s582, 1
    %p586 = scmp.eq.s32.totalorder %s32, 1
    %p587 = scmp.ne.s32.totalorder %s582, %s584
    %p588 = scmp.eq.s32.totalorder %s32, 0
    %p589 = por %p587, %p588
    %p590 = scmp.ne.s32.totalorder %s582, %s584
    %p591 = scmp.eq.s32.totalorder %s37, 1
    %p592 = por %p590, %p591
    %p593 = scmp.ne.s32.totalorder %s584, %s585
    %p594 = scmp.eq.s32.totalorder %s37, 0
    %p595 = por %p593, %p594
    %p596 = scmp.ne.s32.totalorder %s584, %s585
    %p597 = scmp.eq.s32.totalorder %s38, 1
    %p598 = por %p596, %p597
    %p600 = scmp.ne.s32.totalorder %s585, %s599
    %p601 = scmp.eq.s32.totalorder %s38, 0
    %p602 = por %p600, %p601
    %s604 = sadd.s32 %s603, 1
    %p607 = scmp.eq.s32.totalorder %s32, 1
    %p608 = scmp.ne.s32.totalorder %s603, %s605
    %p609 = scmp.eq.s32.totalorder %s32, 0
    %p610 = por %p608, %p609
    %p611 = scmp.ne.s32.totalorder %s603, %s605
    %p612 = scmp.eq.s32.totalorder %s37, 1
    %p613 = por %p611, %p612
    %p614 = scmp.ne.s32.totalorder %s605, %s606
    %p615 = scmp.eq.s32.totalorder %s37, 0
    %p616 = por %p614, %p615
    %p617 = scmp.ne.s32.totalorder %s605, %s606
    %p618 = scmp.eq.s32.totalorder %s38, 1
    %p619 = por %p617, %p618
    %p621 = scmp.ne.s32.totalorder %s606, %s620
    %p622 = scmp.eq.s32.totalorder %s38, 0
    %p623 = por %p621, %p622
    %s625 = sadd.s32 %s624, 1
    %p628 = scmp.eq.s32.totalorder %s32, 1
    %p629 = scmp.ne.s32.totalorder %s624, %s626
    %p630 = scmp.eq.s32.totalorder %s32, 0
    %p631 = por %p629, %p630
    %p632 = scmp.ne.s32.totalorder %s624, %s626
    %p633 = scmp.eq.s32.totalorder %s37, 1
    %p634 = por %p632, %p633
    %p635 = scmp.ne.s32.totalorder %s626, %s627
    %p636 = scmp.eq.s32.totalorder %s37, 0
    %p637 = por %p635, %p636
    %p638 = scmp.ne.s32.totalorder %s626, %s627
    %p639 = scmp.eq.s32.totalorder %s38, 1
    %p640 = por %p638, %p639
    %p642 = scmp.ne.s32.totalorder %s627, %s641
    %p643 = scmp.eq.s32.totalorder %s38, 0
    %p644 = por %p642, %p643
    %s646 = sadd.s32 %s645, 1
    %p649 = scmp.eq.s32.totalorder %s32, 1
    %p650 = scmp.ne.s32.totalorder %s645, %s647
    %p651 = scmp.eq.s32.totalorder %s32, 0
    %p652 = por %p650, %p651
    %p653 = scmp.ne.s32.totalorder %s645, %s647
    %p654 = scmp.eq.s32.totalorder %s37, 1
    %p655 = por %p653, %p654
    %p656 = scmp.ne.s32.totalorder %s647, %s648
    %p657 = scmp.eq.s32.totalorder %s37, 0
    %p658 = por %p656, %p657
    %p659 = scmp.ne.s32.totalorder %s647, %s648
    %p660 = scmp.eq.s32.totalorder %s38, 1
    %p661 = por %p659, %p660
    %p663 = scmp.ne.s32.totalorder %s648, %s662
    %p664 = scmp.eq.s32.totalorder %s38, 0
    %p665 = por %p663, %p664
    %s667 = sadd.s32 %s666, 1
    %p670 = scmp.eq.s32.totalorder %s32, 1
    %p671 = scmp.ne.s32.totalorder %s666, %s668
    %p672 = scmp.eq.s32.totalorder %s32, 0
    %p673 = por %p671, %p672
    %p674 = scmp.ne.s32.totalorder %s666, %s668
    %p675 = scmp.eq.s32.totalorder %s37, 1
    %p676 = por %p674, %p675
    %p677 = scmp.ne.s32.totalorder %s668, %s669
    %p678 = scmp.eq.s32.totalorder %s37, 0
    %p679 = por %p677, %p678
    %p680 = scmp.ne.s32.totalorder %s668, %s669
    %p681 = scmp.eq.s32.totalorder %s38, 1
    %p682 = por %p680, %p681
    %p684 = scmp.ne.s32.totalorder %s669, %s683
    %p685 = scmp.eq.s32.totalorder %s38, 0
    %p686 = por %p684, %p685
    %p687 = scmp.le.s32.totalorder 1, %s32
    %p688 = scmp.lt.s32.totalorder %s32, 3
    %p689 = pnand %p687, %p688
    %p690 = pneg %p689
    // Predicated region
    $region9: #{question_row_classifier_forward.1} parent=5 // pred_check
      _
    $region10: #{question_row_classifier_forward.1} parent=5 // pred_check_branch
      %692 = sbr.rel (%p689) target = $region12
    $region11: #{question_row_classifier_forward.1} parent=5 // pred_region
      %s693 = ssub.s32 %s32, 1
      // Predicated region
      $region13: #{question_row_classifier_forward.1} parent=11 // pred_check
        %p694 = pneg %p53
      $region14: #{question_row_classifier_forward.1} parent=11 // pred_check_branch
        %696 = sbr.rel (%p694) target = $region16
      $region15: #{question_row_classifier_forward.1} parent=11 // pred_region
        _
      $region16: #{question_row_classifier_forward.1} parent=11 // pred_fallthru
        _
      // Predicated region
      $region17: #{question_row_classifier_forward.1} parent=11 // pred_check
        %p697 = pneg %p74
      $region18: #{question_row_classifier_forward.1} parent=11 // pred_check_branch
        %699 = sbr.rel (%p697) target = $region20
      $region19: #{question_row_classifier_forward.1} parent=11 // pred_region
        _
      $region20: #{question_row_classifier_forward.1} parent=11 // pred_fallthru
        _
      // Predicated region
      $region21: #{question_row_classifier_forward.1} parent=11 // pred_check
        %p700 = pneg %p511
      $region22: #{question_row_classifier_forward.1} parent=11 // pred_check_branch
        %702 = sbr.rel (%p700) target = $region24
      $region23: #{question_row_classifier_forward.1} parent=11 // pred_region
        _
      $region24: #{question_row_classifier_forward.1} parent=11 // pred_fallthru
        _
      // Predicated region
      $region25: #{question_row_classifier_forward.1} parent=11 // pred_check
        %p703 = pneg %p532
      $region26: #{question_row_classifier_forward.1} parent=11 // pred_check_branch
        %705 = sbr.rel (%p703) target = $region28
      $region27: #{question_row_classifier_forward.1} parent=11 // pred_region
        _
      $region28: #{question_row_classifier_forward.1} parent=11 // pred_fallthru
        _
      // Predicated region
      $region29: #{question_row_classifier_forward.1} parent=11 // pred_check
        %p706 = pneg %p553
      $region30: #{question_row_classifier_forward.1} parent=11 // pred_check_branch
        %708 = sbr.rel (%p706) target = $region32
      $region31: #{question_row_classifier_forward.1} parent=11 // pred_region
        _
      $region32: #{question_row_classifier_forward.1} parent=11 // pred_fallthru
        _
      // Predicated region
      $region33: #{question_row_classifier_forward.1} parent=11 // pred_check
        %p709 = pneg %p574
      $region34: #{question_row_classifier_forward.1} parent=11 // pred_check_branch
        %711 = sbr.rel (%p709) target = $region36
      $region35: #{question_row_classifier_forward.1} parent=11 // pred_region
        _
      $region36: #{question_row_classifier_forward.1} parent=11 // pred_fallthru
        _
      // Predicated region
      $region37: #{question_row_classifier_forward.1} parent=11 // pred_check
        %p712 = pneg %p595
      $region38: #{question_row_classifier_forward.1} parent=11 // pred_check_branch
        %714 = sbr.rel (%p712) target = $region40
      $region39: #{question_row_classifier_forward.1} parent=11 // pred_region
        _
      $region40: #{question_row_classifier_forward.1} parent=11 // pred_fallthru
        _
      // Predicated region
      $region41: #{question_row_classifier_forward.1} parent=11 // pred_check
        %p715 = pneg %p616
      $region42: #{question_row_classifier_forward.1} parent=11 // pred_check_branch
        %717 = sbr.rel (%p715) target = $region44
      $region43: #{question_row_classifier_forward.1} parent=11 // pred_region
        _
      $region44: #{question_row_classifier_forward.1} parent=11 // pred_fallthru
        _
      // Predicated region
      $region45: #{question_row_classifier_forward.1} parent=11 // pred_check
        %p718 = pneg %p637
      $region46: #{question_row_classifier_forward.1} parent=11 // pred_check_branch
        %720 = sbr.rel (%p718) target = $region48
      $region47: #{question_row_classifier_forward.1} parent=11 // pred_region
        _
      $region48: #{question_row_classifier_forward.1} parent=11 // pred_fallthru
        _
      // Predicated region
      $region49: #{question_row_classifier_forward.1} parent=11 // pred_check
        %p721 = pneg %p658
      $region50: #{question_row_classifier_forward.1} parent=11 // pred_check_branch
        %723 = sbr.rel (%p721) target = $region52
      $region51: #{question_row_classifier_forward.1} parent=11 // pred_region
        _
      $region52: #{question_row_classifier_forward.1} parent=11 // pred_fallthru
        _
    $region12: #{question_row_classifier_forward.1} parent=5 // pred_fallthru
      _
    %p724 = scmp.lt.s32.totalorder %s32, 2
    // Predicated region
    $region53: #{question_row_classifier_forward.1} parent=5 // pred_check
      %p725 = pneg %p724
    $region54: #{question_row_classifier_forward.1} parent=5 // pred_check_branch
      %727 = sbr.rel (%p725) target = $region56
    $region55: #{question_row_classifier_forward.1} parent=5 // pred_region
      // Predicated region
      $region57: #{question_row_classifier_forward.1} parent=55 // pred_check
        %p728 = pneg %p94
      $region58: #{question_row_classifier_forward.1} parent=55 // pred_check_branch
        %730 = sbr.rel (%p728) target = $region60
      $region59: #{question_row_classifier_forward.1} parent=55 // pred_region
        %p731 = scmp.lt.s32.totalorder %s32, 1
        %s732 = scalar_select %p731, %s32, 1
        %s733 = smul.addr %s732, 8
        %s734 = smul.addr %s733, 4
        %s735 = scalar_lea.vmem %s2, %s734
      $region60: #{question_row_classifier_forward.1} parent=55 // pred_fallthru
        _
      // Predicated region
      $region61: #{question_row_classifier_forward.1} parent=55 // pred_check
        %p736 = pneg %p120
      $region62: #{question_row_classifier_forward.1} parent=55 // pred_check_branch
        %738 = sbr.rel (%p736) target = $region64
      $region63: #{question_row_classifier_forward.1} parent=55 // pred_region
        %p739 = scmp.lt.s32.totalorder %s32, 1
        %s740 = scalar_select %p739, %s32, 1
        %s741 = scalar_lea.vmem %s3, %s740
      $region64: #{question_row_classifier_forward.1} parent=55 // pred_fallthru
        _
      // Predicated region
      $region65: #{question_row_classifier_forward.1} parent=55 // pred_check
        %p742 = pneg %p146
      $region66: #{question_row_classifier_forward.1} parent=55 // pred_check_branch
        %744 = sbr.rel (%p742) target = $region68
      $region67: #{question_row_classifier_forward.1} parent=55 // pred_region
        %p745 = scmp.lt.s32.totalorder %s32, 1
        %s746 = scalar_select %p745, %s32, 1
        %s747 = smul.addr %s746, 8
        %s748 = smul.addr %s747, 4
        %s749 = scalar_lea.vmem %s4, %s748
      $region68: #{question_row_classifier_forward.1} parent=55 // pred_fallthru
        _
      // Predicated region
      $region69: #{question_row_classifier_forward.1} parent=55 // pred_check
        %p750 = pneg %p172
      $region70: #{question_row_classifier_forward.1} parent=55 // pred_check_branch
        %752 = sbr.rel (%p750) target = $region72
      $region71: #{question_row_classifier_forward.1} parent=55 // pred_region
        %p753 = scmp.lt.s32.totalorder %s32, 1
        %s754 = scalar_select %p753, %s32, 1
        %s755 = scalar_lea.vmem %s5, %s754
      $region72: #{question_row_classifier_forward.1} parent=55 // pred_fallthru
        _
      // Predicated region
      $region73: #{question_row_classifier_forward.1} parent=55 // pred_check
        %p756 = pneg %p198
      $region74: #{question_row_classifier_forward.1} parent=55 // pred_check_branch
        %758 = sbr.rel (%p756) target = $region76
      $region75: #{question_row_classifier_forward.1} parent=55 // pred_region
        %p759 = scmp.lt.s32.totalorder %s32, 1
        %s760 = scalar_select %p759, %s32, 1
        %s761 = smul.addr %s760, 8
        %s762 = smul.addr %s761, 4
        %s763 = scalar_lea.vmem %s6, %s762
      $region76: #{question_row_classifier_forward.1} parent=55 // pred_fallthru
        _
      // Predicated region
      $region77: #{question_row_classifier_forward.1} parent=55 // pred_check
        %p764 = pneg %p224
      $region78: #{question_row_classifier_forward.1} parent=55 // pred_check_branch
        %766 = sbr.rel (%p764) target = $region80
      $region79: #{question_row_classifier_forward.1} parent=55 // pred_region
        %p767 = scmp.lt.s32.totalorder %s32, 1
        %s768 = scalar_select %p767, %s32, 1
        %s769 = scalar_lea.vmem %s7, %s768
      $region80: #{question_row_classifier_forward.1} parent=55 // pred_fallthru
        _
      // Predicated region
      $region81: #{question_row_classifier_forward.1} parent=55 // pred_check
        %p770 = pneg %p250
      $region82: #{question_row_classifier_forward.1} parent=55 // pred_check_branch
        %772 = sbr.rel (%p770) target = $region84
      $region83: #{question_row_classifier_forward.1} parent=55 // pred_region
        %p773 = scmp.lt.s32.totalorder %s32, 1
        %s774 = scalar_select %p773, %s32, 1
        %s775 = smul.addr %s774, 8
        %s776 = smul.addr %s775, 4
        %s777 = scalar_lea.vmem %s8, %s776
      $region84: #{question_row_classifier_forward.1} parent=55 // pred_fallthru
        _
      // Predicated region
      $region85: #{question_row_classifier_forward.1} parent=55 // pred_check
        %p778 = pneg %p276
      $region86: #{question_row_classifier_forward.1} parent=55 // pred_check_branch
        %780 = sbr.rel (%p778) target = $region88
      $region87: #{question_row_classifier_forward.1} parent=55 // pred_region
        %p781 = scmp.lt.s32.totalorder %s32, 1
        %s782 = scalar_select %p781, %s32, 1
        %s783 = scalar_lea.vmem %s9, %s782
      $region88: #{question_row_classifier_forward.1} parent=55 // pred_fallthru
        _
      // Predicated region
      $region89: #{question_row_classifier_forward.1} parent=55 // pred_check
        %p784 = pneg %p302
      $region90: #{question_row_classifier_forward.1} parent=55 // pred_check_branch
        %786 = sbr.rel (%p784) target = $region92
      $region91: #{question_row_classifier_forward.1} parent=55 // pred_region
        %p787 = scmp.lt.s32.totalorder %s32, 1
        %s788 = scalar_select %p787, %s32, 1
        %s789 = scalar_lea.vmem %s10, %s788
      $region92: #{question_row_classifier_forward.1} parent=55 // pred_fallthru
        _
      // Predicated region
      $region93: #{question_row_classifier_forward.1} parent=55 // pred_check
        %p790 = pneg %p328
      $region94: #{question_row_classifier_forward.1} parent=55 // pred_check_branch
        %792 = sbr.rel (%p790) target = $region96
      $region95: #{question_row_classifier_forward.1} parent=55 // pred_region
        %p793 = scmp.lt.s32.totalorder %s32, 1
        %s794 = scalar_select %p793, %s32, 1
        %s795 = scalar_lea.vmem %s11, %s794
      $region96: #{question_row_classifier_forward.1} parent=55 // pred_fallthru
        _
      // Predicated region
      $region97: #{question_row_classifier_forward.1} parent=55 // pred_check
        %p796 = pneg %p354
      $region98: #{question_row_classifier_forward.1} parent=55 // pred_check_branch
        %798 = sbr.rel (%p796) target = $region100
      $region99: #{question_row_classifier_forward.1} parent=55 // pred_region
        %p799 = scmp.lt.s32.totalorder %s32, 1
        %s800 = scalar_select %p799, %s32, 1
        %s801 = smul.addr %s800, 128
        %s802 = smul.addr %s801, 4
        %s803 = scalar_lea.vmem %s12, %s802
      $region100: #{question_row_classifier_forward.1} parent=55 // pred_fallthru
        _
      // Predicated region
      $region101: #{question_row_classifier_forward.1} parent=55 // pred_check
        %p804 = pneg %p380
      $region102: #{question_row_classifier_forward.1} parent=55 // pred_check_branch
        %806 = sbr.rel (%p804) target = $region104
      $region103: #{question_row_classifier_forward.1} parent=55 // pred_region
        %p807 = scmp.lt.s32.totalorder %s32, 1
        %s808 = scalar_select %p807, %s32, 1
        %s809 = smul.addr %s808, 16
        %s810 = scalar_lea.vmem %s13, %s809
      $region104: #{question_row_classifier_forward.1} parent=55 // pred_fallthru
        _
      // Predicated region
      $region105: #{question_row_classifier_forward.1} parent=55 // pred_check
        %p811 = pneg %p406
      $region106: #{question_row_classifier_forward.1} parent=55 // pred_check_branch
        %813 = sbr.rel (%p811) target = $region108
      $region107: #{question_row_classifier_forward.1} parent=55 // pred_region
        %p814 = scmp.lt.s32.totalorder %s32, 1
        %s815 = scalar_select %p814, %s32, 1
        %s816 = smul.addr %s815, 256
        %s817 = smul.addr %s816, 4
        %s818 = scalar_lea.vmem %s14, %s817
      $region108: #{question_row_classifier_forward.1} parent=55 // pred_fallthru
        _
      // Predicated region
      $region109: #{question_row_classifier_forward.1} parent=55 // pred_check
        %p819 = pneg %p432
      $region110: #{question_row_classifier_forward.1} parent=55 // pred_check_branch
        %821 = sbr.rel (%p819) target = $region112
      $region111: #{question_row_classifier_forward.1} parent=55 // pred_region
        %p822 = scmp.lt.s32.totalorder %s32, 1
        %s823 = scalar_select %p822, %s32, 1
        %s824 = scalar_lea.vmem %s15, %s823
      $region112: #{question_row_classifier_forward.1} parent=55 // pred_fallthru
        _
      // Predicated region
      $region113: #{question_row_classifier_forward.1} parent=55 // pred_check
        %p825 = pneg %p458
      $region114: #{question_row_classifier_forward.1} parent=55 // pred_check_branch
        %827 = sbr.rel (%p825) target = $region116
      $region115: #{question_row_classifier_forward.1} parent=55 // pred_region
        %p828 = scmp.lt.s32.totalorder %s32, 1
        %s829 = scalar_select %p828, %s32, 1
        %s830 = scalar_lea.vmem %s16, %s829
      $region116: #{question_row_classifier_forward.1} parent=55 // pred_fallthru
        _
      // Predicated region
      $region117: #{question_row_classifier_forward.1} parent=55 // pred_check
        %p831 = pneg %p484
      $region118: #{question_row_classifier_forward.1} parent=55 // pred_check_branch
        %833 = sbr.rel (%p831) target = $region120
      $region119: #{question_row_classifier_forward.1} parent=55 // pred_region
        %p834 = scmp.lt.s32.totalorder %s32, 1
        %s835 = scalar_select %p834, %s32, 1
        %s836 = scalar_lea.vmem %s17, %s835
      $region120: #{question_row_classifier_forward.1} parent=55 // pred_fallthru
        _
    $region56: #{question_row_classifier_forward.1} parent=5 // pred_fallthru
      _
    %p837 = scmp.le.s32.totalorder 1, %s32
    %p838 = scmp.lt.s32.totalorder %s32, 3
    %p839 = pnand %p837, %p838
    %p840 = pneg %p839
    // Predicated region
    $region121: #{question_row_classifier_forward.1} parent=5 // pred_check
      _
    $region122: #{question_row_classifier_forward.1} parent=5 // pred_check_branch
      %842 = sbr.rel (%p839) target = $region124
    $region123: #{question_row_classifier_forward.1} parent=5 // pred_region
      %s843 = ssub.s32 %s32, 1
      %p844 = pneg %p53
      %p845 = pneg %p50
      %p846 = pneg %p74
      %p847 = pneg %p71
      %p848 = scmp.lt.s32.totalorder %s37, 1
      %s849 = scalar_select %p848, %s37, 1
      %s850 = smul.addr %s849, 8
      %s851 = smul.addr %s850, 4
      %s852 = scalar_lea.vmem %s2, %s851
      %p853 = pneg %p100
      %p854 = pneg %p97
      %p855 = scmp.lt.s32.totalorder %s37, 1
      %s856 = scalar_select %p855, %s37, 1
      %s857 = scalar_lea.vmem %s3, %s856
      %p858 = pneg %p126
      %p859 = pneg %p123
      %p860 = scmp.lt.s32.totalorder %s37, 1
      %s861 = scalar_select %p860, %s37, 1
      %s862 = smul.addr %s861, 8
      %s863 = smul.addr %s862, 4
      %s864 = scalar_lea.vmem %s4, %s863
      %p865 = pneg %p152
      %p866 = pneg %p149
      %p867 = scmp.lt.s32.totalorder %s37, 1
      %s868 = scalar_select %p867, %s37, 1
      %s869 = scalar_lea.vmem %s5, %s868
      %p870 = pneg %p178
      %p871 = pneg %p175
      %p872 = scmp.lt.s32.totalorder %s37, 1
      %s873 = scalar_select %p872, %s37, 1
      %s874 = smul.addr %s873, 8
      %s875 = smul.addr %s874, 4
      %s876 = scalar_lea.vmem %s6, %s875
      %p877 = pneg %p204
      %p878 = pneg %p201
      %p879 = scmp.lt.s32.totalorder %s37, 1
      %s880 = scalar_select %p879, %s37, 1
      %s881 = scalar_lea.vmem %s7, %s880
      %p882 = pneg %p230
      %p883 = pneg %p227
      %p884 = scmp.lt.s32.totalorder %s37, 1
      %s885 = scalar_select %p884, %s37, 1
      %s886 = smul.addr %s885, 8
      %s887 = smul.addr %s886, 4
      %s888 = scalar_lea.vmem %s8, %s887
      %p889 = pneg %p256
      %p890 = pneg %p253
      %p891 = scmp.lt.s32.totalorder %s37, 1
      %s892 = scalar_select %p891, %s37, 1
      %s893 = scalar_lea.vmem %s9, %s892
      %p894 = pneg %p282
      %p895 = pneg %p279
      %p896 = scmp.lt.s32.totalorder %s37, 1
      %s897 = scalar_select %p896, %s37, 1
      %s898 = scalar_lea.vmem %s10, %s897
      %p899 = pneg %p308
      %p900 = pneg %p305
      %p901 = scmp.lt.s32.totalorder %s37, 1
      %s902 = scalar_select %p901, %s37, 1
      %s903 = scalar_lea.vmem %s11, %s902
      %p904 = pneg %p334
      %p905 = pneg %p331
      %p906 = scmp.lt.s32.totalorder %s37, 1
      %s907 = scalar_select %p906, %s37, 1
      %s908 = smul.addr %s907, 128
      %s909 = smul.addr %s908, 4
      %s910 = scalar_lea.vmem %s12, %s909
      %p911 = pneg %p360
      %p912 = pneg %p357
      %p913 = scmp.lt.s32.totalorder %s37, 1
      %s914 = scalar_select %p913, %s37, 1
      %s915 = smul.addr %s914, 16
      %s916 = scalar_lea.vmem %s13, %s915
      %p917 = pneg %p386
      %p918 = pneg %p383
      %p919 = scmp.lt.s32.totalorder %s37, 1
      %s920 = scalar_select %p919, %s37, 1
      %s921 = smul.addr %s920, 256
      %s922 = smul.addr %s921, 4
      %s923 = scalar_lea.vmem %s14, %s922
      %p924 = pneg %p412
      %p925 = pneg %p409
      %p926 = scmp.lt.s32.totalorder %s37, 1
      %s927 = scalar_select %p926, %s37, 1
      %s928 = scalar_lea.vmem %s15, %s927
      %p929 = pneg %p438
      %p930 = pneg %p435
      %p931 = scmp.lt.s32.totalorder %s37, 1
      %s932 = scalar_select %p931, %s37, 1
      %s933 = scalar_lea.vmem %s16, %s932
      %p934 = pneg %p464
      %p935 = pneg %p461
      %p936 = scmp.lt.s32.totalorder %s37, 1
      %s937 = scalar_select %p936, %s37, 1
      %s938 = scalar_lea.vmem %s17, %s937
      %p939 = pneg %p490
      %p940 = pneg %p487
      %p941 = pneg %p511
      %p942 = pneg %p508
      %p943 = pneg %p532
      %p944 = pneg %p529
      %p945 = pneg %p553
      %p946 = pneg %p550
      %p947 = pneg %p574
      %p948 = pneg %p571
      %p949 = pneg %p595
      %p950 = pneg %p592
      %p951 = pneg %p616
      %p952 = pneg %p613
      %p953 = pneg %p637
      %p954 = pneg %p634
      %p955 = pneg %p658
      %p956 = pneg %p655
      %p957 = pneg %p679
      %p958 = pneg %p676
      %p959 = scmp.lt.s32.totalorder %s37, 1
      %s960 = scalar_select %p959, %s37, 1
      %s961 = smul.addr %s960, 8
      %s962 = smul.addr %s961, 4
      %s963 = scalar_lea.vmem %s2, %s962
      %p964 = scmp.lt.s32.totalorder %s37, 1
      %s965 = scalar_select %p964, %s37, 1
      %s966 = scalar_lea.vmem %s3, %s965
      %p967 = scmp.lt.s32.totalorder %s37, 1
      %s968 = scalar_select %p967, %s37, 1
      %s969 = smul.addr %s968, 8
      %s970 = smul.addr %s969, 4
      %s971 = scalar_lea.vmem %s4, %s970
      %p972 = scmp.lt.s32.totalorder %s37, 1
      %s973 = scalar_select %p972, %s37, 1
      %s974 = scalar_lea.vmem %s5, %s973
      %p975 = scmp.lt.s32.totalorder %s37, 1
      %s976 = scalar_select %p975, %s37, 1
      %s977 = smul.addr %s976, 8
      %s978 = smul.addr %s977, 4
      %s979 = scalar_lea.vmem %s6, %s978
      %p980 = scmp.lt.s32.totalorder %s37, 1
      %s981 = scalar_select %p980, %s37, 1
      %s982 = scalar_lea.vmem %s7, %s981
      %p983 = scmp.lt.s32.totalorder %s37, 1
      %s984 = scalar_select %p983, %s37, 1
      %s985 = smul.addr %s984, 8
      %s986 = smul.addr %s985, 4
      %s987 = scalar_lea.vmem %s8, %s986
      %p988 = scmp.lt.s32.totalorder %s37, 1
      %s989 = scalar_select %p988, %s37, 1
      %s990 = scalar_lea.vmem %s9, %s989
      %p991 = scmp.lt.s32.totalorder %s37, 1
      %s992 = scalar_select %p991, %s37, 1
      %s993 = scalar_lea.vmem %s10, %s992
      %p994 = scmp.lt.s32.totalorder %s37, 1
      %s995 = scalar_select %p994, %s37, 1
      %s996 = scalar_lea.vmem %s11, %s995
      %p997 = scmp.lt.s32.totalorder %s37, 1
      %s998 = scalar_select %p997, %s37, 1
      %s999 = smul.addr %s998, 128
      %s1000 = smul.addr %s999, 4
      %s1001 = scalar_lea.vmem %s12, %s1000
      %p1002 = scmp.lt.s32.totalorder %s37, 1
      %s1003 = scalar_select %p1002, %s37, 1
      %s1004 = smul.addr %s1003, 16
      %s1005 = scalar_lea.vmem %s13, %s1004
      %p1006 = scmp.lt.s32.totalorder %s37, 1
      %s1007 = scalar_select %p1006, %s37, 1
      %s1008 = smul.addr %s1007, 256
      %s1009 = smul.addr %s1008, 4
      %s1010 = scalar_lea.vmem %s14, %s1009
      %p1011 = scmp.lt.s32.totalorder %s37, 1
      %s1012 = scalar_select %p1011, %s37, 1
      %s1013 = scalar_lea.vmem %s15, %s1012
      %p1014 = scmp.lt.s32.totalorder %s37, 1
      %s1015 = scalar_select %p1014, %s37, 1
      %s1016 = scalar_lea.vmem %s16, %s1015
      %p1017 = scmp.lt.s32.totalorder %s37, 1
      %s1018 = scalar_select %p1017, %s37, 1
      %s1019 = scalar_lea.vmem %s17, %s1018
      %p1021 = scmp.eq.s32.totalorder %s37, 0
      // Predicated region
      $region125: #{question_row_classifier_forward.1} parent=123 // pred_check
        %p1022 = pneg %p1021
      $region126: #{question_row_classifier_forward.1} parent=123 // pred_check_branch
        %1024 = sbr.rel (%p1022) target = $region128
      $region127: #{question_row_classifier_forward.1} parent=123 // pred_region
        %v1025 = vld [vmem:[%s0] sm:$0xff]
        %v1026 = vld [vmem:[%s0 + $0x8] sm:$0xff]
        %vm1027 = vcmask 523264
        %1028 = vst.msk [vmem:[#allocation2] sm:$0xff] %vm1027, %v1025
        %1029 = vst.msk [vmem:[#allocation2 + $0x8] sm:$0xff] %vm1027, %v1026
      $region128: #{question_row_classifier_forward.1} parent=123 // pred_fallthru
        _
      %v1030 = vld [vmem:[#allocation2] sm:$0xff]
      %v1031 = vld [vmem:[#allocation2 + $0x8] sm:$0xff]
      %v1032 = vpack.c.bf16 %v1031, %v1030
      %v1033 = vld [vmem:[%s963] sm:$0xf]
      %v1034 = vld [vmem:[%s963 + $0x4] sm:$0xf]
      %v1035 = vld [vmem:[%s963 + $0x8] sm:$0xf]
      %v1036 = vld [vmem:[%s963 + $0xc] sm:$0xf]
      %v1037 = vld [vmem:[%s963 + $0x10] sm:$0xf]
      %v1038 = vld [vmem:[%s963 + $0x14] sm:$0xf]
      %v1039 = vld [vmem:[%s963 + $0x18] sm:$0xf]
      %v1040 = vld [vmem:[%s963 + $0x1c] sm:$0xf]
      %v1041 = vld [vmem:[%s966] sm:$0x1]
      %v1043 = vlaneseq
      %v1044 = vshrl.u32 %v1043, 7
      %v1045 = vsub.s32 0, %v1044
      %v1046 = vrot.slane %v1041, %v1045
      %v1056 = vunpack.c.l.b16 %v1033
      %v1057 = vunpack.c.l.b16 %v1034
      %v1058 = vunpack.c.l.b16 %v1035
      %v1059 = vunpack.c.l.b16 %v1036
      %v1060 = vunpack.c.l.b16 %v1037
      %v1061 = vunpack.c.l.b16 %v1038
      %v1062 = vunpack.c.l.b16 %v1039
      %v1063 = vunpack.c.l.b16 %v1040
      %v1064 = vpack.c.b16 %v1057, %v1056
      %v1065 = vpack.c.b16 %v1059, %v1058
      %v1066 = vpack.c.b16 %v1061, %v1060
      %v1067 = vpack.c.b16 %v1063, %v1062
      %vm1072 = vcmask 523264
      %v1074 = vsel %vm1072, %v1032, 0
      %1076 = vmatprep.subr.bf16.mxu0 0
      %1077 = vmatpush1.bf16.msra.mxu0 %v1064
      %1078 = vmatprep.subr.bf16.mxu0 0
      %1079 = vmatpush1.bf16.msra.mxu0 %v1065
      %1080 = vmatprep.subr.bf16.mxu0 0
      %1081 = vmatpush1.bf16.msra.mxu0 %v1066
      %1082 = vmatprep.subr.bf16.mxu0 0
      %1083 = vmatpush1.bf16.msra.mxu0 %v1067
      %1084 = vmatprep.subr.bf16.mxu0 0
      %1085 = vmatpush1.bf16.msra.mxu0 0
      %1086 = vmatprep.subr.bf16.mxu0 0
      %1087 = vmatpush1.bf16.msra.mxu0 0
      %1088 = vmatprep.subr.bf16.mxu0 0
      %1089 = vmatpush1.bf16.msra.mxu0 0
      %1090 = vmatprep.subr.bf16.mxu0 0
      %1091 = vmatpush1.bf16.msra.mxu0 0
      %1092 = vmatprep.subr.bf16.mxu0 0
      %1093 = vmatpush1.bf16.msra.mxu0 0
      %1094 = vmatprep.subr.bf16.mxu0 0
      %1095 = vmatpush1.bf16.msra.mxu0 0
      %1096 = vmatprep.subr.bf16.mxu0 0
      %1097 = vmatpush1.bf16.msra.mxu0 0
      %1098 = vmatprep.subr.bf16.mxu0 0
      %1099 = vmatpush1.bf16.msra.mxu0 0
      %1100 = vmatprep.subr.bf16.mxu0 0
      %1101 = vmatpush1.bf16.msra.mxu0 0
      %1102 = vmatprep.subr.bf16.mxu0 0
      %1103 = vmatpush1.bf16.msra.mxu0 0
      %1104 = vmatprep.subr.bf16.mxu0 0
      %1105 = vmatpush1.bf16.msra.mxu0 0
      %1106 = vmatprep.subr.bf16.mxu0 0
      %1107 = vmatpush1.bf16.msra.mxu0 0
      %1108 = vmatprep.mubr.bf16.mxu0 0
      %1109 = vmatmul.mubr.bf16.gmra.mrb[0].mxu0 %v1074
      %v1110 = vpop.f32.mrb[0].mxu0
      %v1111 = vadd.f32 %v1046, %v1110
      %v1112 = vpop.f32.mrb[0].mxu0
      %v1113 = vpop.f32.mrb[0].mxu0
      %v1114 = vadd.f32 %v1046, %v1113
      %v1115 = vpop.f32.mrb[0].mxu0
      %1116 = vdwg.mxu0
      %v1117 = vld [vmem:[%s971] sm:$0xf]
      %v1118 = vld [vmem:[%s971 + $0x4] sm:$0xf]
      %v1119 = vld [vmem:[%s971 + $0x8] sm:$0xf]
      %v1120 = vld [vmem:[%s971 + $0xc] sm:$0xf]
      %v1121 = vld [vmem:[%s971 + $0x10] sm:$0xf]
      %v1122 = vld [vmem:[%s971 + $0x14] sm:$0xf]
      %v1123 = vld [vmem:[%s971 + $0x18] sm:$0xf]
      %v1124 = vld [vmem:[%s971 + $0x1c] sm:$0xf]
      %v1125 = vld [vmem:[%s974] sm:$0x1]
      %v1127 = vlaneseq
      %v1128 = vshrl.u32 %v1127, 7
      %v1129 = vsub.s32 0, %v1128
      %v1130 = vrot.slane %v1125, %v1129
      %v1140 = vunpack.c.l.b16 %v1117
      %v1141 = vunpack.c.l.b16 %v1118
      %v1142 = vunpack.c.l.b16 %v1119
      %v1143 = vunpack.c.l.b16 %v1120
      %v1144 = vunpack.c.l.b16 %v1121
      %v1145 = vunpack.c.l.b16 %v1122
      %v1146 = vunpack.c.l.b16 %v1123
      %v1147 = vunpack.c.l.b16 %v1124
      %v1148 = vpack.c.b16 %v1141, %v1140
      %v1149 = vpack.c.b16 %v1143, %v1142
      %v1150 = vpack.c.b16 %v1145, %v1144
      %v1151 = vpack.c.b16 %v1147, %v1146
      %1156 = vmatprep.subr.bf16.mxu0 0
      %1157 = vmatpush1.bf16.msra.mxu0 %v1148
      %1158 = vmatprep.subr.bf16.mxu0 0
      %1159 = vmatpush1.bf16.msra.mxu0 %v1149
      %1160 = vmatprep.subr.bf16.mxu0 0
      %1161 = vmatpush1.bf16.msra.mxu0 %v1150
      %1162 = vmatprep.subr.bf16.mxu0 0
      %1163 = vmatpush1.bf16.msra.mxu0 %v1151
      %1164 = vmatprep.subr.bf16.mxu0 0
      %1165 = vmatpush1.bf16.msra.mxu0 0
      %1166 = vmatprep.subr.bf16.mxu0 0
      %1167 = vmatpush1.bf16.msra.mxu0 0
      %1168 = vmatprep.subr.bf16.mxu0 0
      %1169 = vmatpush1.bf16.msra.mxu0 0
      %1170 = vmatprep.subr.bf16.mxu0 0
      %1171 = vmatpush1.bf16.msra.mxu0 0
      %1172 = vmatprep.subr.bf16.mxu0 0
      %1173 = vmatpush1.bf16.msra.mxu0 0
      %1174 = vmatprep.subr.bf16.mxu0 0
      %1175 = vmatpush1.bf16.msra.mxu0 0
      %1176 = vmatprep.subr.bf16.mxu0 0
      %1177 = vmatpush1.bf16.msra.mxu0 0
      %1178 = vmatprep.subr.bf16.mxu0 0
      %1179 = vmatpush1.bf16.msra.mxu0 0
      %1180 = vmatprep.subr.bf16.mxu0 0
      %1181 = vmatpush1.bf16.msra.mxu0 0
      %1182 = vmatprep.subr.bf16.mxu0 0
      %1183 = vmatpush1.bf16.msra.mxu0 0
      %1184 = vmatprep.subr.bf16.mxu0 0
      %1185 = vmatpush1.bf16.msra.mxu0 0
      %1186 = vmatprep.subr.bf16.mxu0 0
      %1187 = vmatpush1.bf16.msra.mxu0 0
      %1188 = vmatprep.mubr.bf16.mxu0 0
      %1189 = vmatmul.mubr.bf16.gmra.mrb[0].mxu0 %v1074
      %v1190 = vpop.f32.mrb[0].mxu0
      %v1191 = vadd.f32 %v1130, %v1190
      %v1192 = vpop.f32.mrb[0].mxu0
      %v1193 = vpop.f32.mrb[0].mxu0
      %v1194 = vadd.f32 %v1130, %v1193
      %v1195 = vpop.f32.mrb[0].mxu0
      %1196 = vdwg.mxu0
      %v1197 = vld [vmem:[%s979] sm:$0xf]
      %v1198 = vld [vmem:[%s979 + $0x4] sm:$0xf]
      %v1199 = vld [vmem:[%s979 + $0x8] sm:$0xf]
      %v1200 = vld [vmem:[%s979 + $0xc] sm:$0xf]
      %v1201 = vld [vmem:[%s979 + $0x10] sm:$0xf]
      %v1202 = vld [vmem:[%s979 + $0x14] sm:$0xf]
      %v1203 = vld [vmem:[%s979 + $0x18] sm:$0xf]
      %v1204 = vld [vmem:[%s979 + $0x1c] sm:$0xf]
      %v1205 = vld [vmem:[%s982] sm:$0x1]
      %v1207 = vlaneseq
      %v1208 = vshrl.u32 %v1207, 7
      %v1209 = vsub.s32 0, %v1208
      %v1210 = vrot.slane %v1205, %v1209
      %v1220 = vunpack.c.l.b16 %v1197
      %v1221 = vunpack.c.l.b16 %v1198
      %v1222 = vunpack.c.l.b16 %v1199
      %v1223 = vunpack.c.l.b16 %v1200
      %v1224 = vunpack.c.l.b16 %v1201
      %v1225 = vunpack.c.l.b16 %v1202
      %v1226 = vunpack.c.l.b16 %v1203
      %v1227 = vunpack.c.l.b16 %v1204
      %v1228 = vpack.c.b16 %v1221, %v1220
      %v1229 = vpack.c.b16 %v1223, %v1222
      %v1230 = vpack.c.b16 %v1225, %v1224
      %v1231 = vpack.c.b16 %v1227, %v1226
      %1236 = vmatprep.subr.bf16.mxu0 0
      %1237 = vmatpush1.bf16.msra.mxu0 %v1228
      %1238 = vmatprep.subr.bf16.mxu0 0
      %1239 = vmatpush1.bf16.msra.mxu0 %v1229
      %1240 = vmatprep.subr.bf16.mxu0 0
      %1241 = vmatpush1.bf16.msra.mxu0 %v1230
      %1242 = vmatprep.subr.bf16.mxu0 0
      %1243 = vmatpush1.bf16.msra.mxu0 %v1231
      %1244 = vmatprep.subr.bf16.mxu0 0
      %1245 = vmatpush1.bf16.msra.mxu0 0
      %1246 = vmatprep.subr.bf16.mxu0 0
      %1247 = vmatpush1.bf16.msra.mxu0 0
      %1248 = vmatprep.subr.bf16.mxu0 0
      %1249 = vmatpush1.bf16.msra.mxu0 0
      %1250 = vmatprep.subr.bf16.mxu0 0
      %1251 = vmatpush1.bf16.msra.mxu0 0
      %1252 = vmatprep.subr.bf16.mxu0 0
      %1253 = vmatpush1.bf16.msra.mxu0 0
      %1254 = vmatprep.subr.bf16.mxu0 0
      %1255 = vmatpush1.bf16.msra.mxu0 0
      %1256 = vmatprep.subr.bf16.mxu0 0
      %1257 = vmatpush1.bf16.msra.mxu0 0
      %1258 = vmatprep.subr.bf16.mxu0 0
      %1259 = vmatpush1.bf16.msra.mxu0 0
      %1260 = vmatprep.subr.bf16.mxu0 0
      %1261 = vmatpush1.bf16.msra.mxu0 0
      %1262 = vmatprep.subr.bf16.mxu0 0
      %1263 = vmatpush1.bf16.msra.mxu0 0
      %1264 = vmatprep.subr.bf16.mxu0 0
      %1265 = vmatpush1.bf16.msra.mxu0 0
      %1266 = vmatprep.subr.bf16.mxu0 0
      %1267 = vmatpush1.bf16.msra.mxu0 0
      %1268 = vmatprep.mubr.bf16.mxu0 0
      %1269 = vmatmul.mubr.bf16.gmra.mrb[0].mxu0 %v1074
      %v1270 = vpop.f32.mrb[0].mxu0
      %v1271 = vadd.f32 %v1210, %v1270
      %v1272 = vpop.f32.mrb[0].mxu0
      %v1273 = vpop.f32.mrb[0].mxu0
      %v1274 = vadd.f32 %v1210, %v1273
      %v1275 = vpop.f32.mrb[0].mxu0
      %1276 = vdwg.mxu0
      %1279 = vrot.lane.b32.xlu0 %v1111, 112
      %v1280 = vpop.permute.xlu0 %1279
      %1281 = vrot.lane.b32.xlu0 %v1114, 112
      %v1282 = vpop.permute.xlu0 %1281
      %1283 = vrot.lane.b32.xlu0 %v1111, 96
      %v1284 = vpop.permute.xlu0 %1283
      %1285 = vrot.lane.b32.xlu0 %v1114, 96
      %v1286 = vpop.permute.xlu0 %1285
      %1287 = vrot.lane.b32.xlu0 %v1111, 80
      %v1288 = vpop.permute.xlu0 %1287
      %1289 = vrot.lane.b32.xlu0 %v1114, 80
      %v1290 = vpop.permute.xlu0 %1289
      %1293 = vrot.lane.b32.xlu0 %v1191, 112
      %v1294 = vpop.permute.xlu0 %1293
      %1295 = vrot.lane.b32.xlu0 %v1194, 112
      %v1296 = vpop.permute.xlu0 %1295
      %1297 = vrot.lane.b32.xlu0 %v1191, 96
      %v1298 = vpop.permute.xlu0 %1297
      %1299 = vrot.lane.b32.xlu0 %v1194, 96
      %v1300 = vpop.permute.xlu0 %1299
      %1301 = vrot.lane.b32.xlu0 %v1191, 80
      %v1302 = vpop.permute.xlu0 %1301
      %1303 = vrot.lane.b32.xlu0 %v1194, 80
      %v1304 = vpop.permute.xlu0 %1303
      %1307 = vrot.lane.b32.xlu0 %v1271, 112
      %v1308 = vpop.permute.xlu0 %1307
      %1309 = vrot.lane.b32.xlu0 %v1274, 112
      %v1310 = vpop.permute.xlu0 %1309
      %1313 = vrot.lane.b32.xlu0 %v1271, 96
      %v1314 = vpop.permute.xlu0 %1313
      %1315 = vrot.lane.b32.xlu0 %v1274, 96
      %v1316 = vpop.permute.xlu0 %1315
      %1319 = vrot.lane.b32.xlu0 %v1271, 80
      %v1320 = vpop.permute.xlu0 %1319
      %1321 = vrot.lane.b32.xlu0 %v1274, 80
      %v1322 = vpop.permute.xlu0 %1321
      %vm1325 = vcmask 130048
      %v1326 = vsel %vm1325, %v1111, 0
      %v1328 = vsel %vm1325, %v1191, 0
      %1330 = vmatprep.subr.mxu0 0.0
      %1331 = vmatpush1.xpose.msra.mxu0 %v1328
      %1332 = vmatprep.subr.mxu0 0.0
      %1333 = vmatpush1.xpose.msra.mxu0 0.0
      %1334 = vmatprep.subr.mxu0 0.0
      %1335 = vmatpush1.xpose.msra.mxu0 0.0
      %1336 = vmatprep.subr.mxu0 0.0
      %1337 = vmatpush1.xpose.msra.mxu0 0.0
      %1338 = vmatprep.subr.mxu0 0.0
      %1339 = vmatpush1.xpose.msra.mxu0 0.0
      %1340 = vmatprep.subr.mxu0 0.0
      %1341 = vmatpush1.xpose.msra.mxu0 0.0
      %1342 = vmatprep.subr.mxu0 0.0
      %1343 = vmatpush1.xpose.msra.mxu0 0.0
      %1344 = vmatprep.subr.mxu0 0.0
      %1345 = vmatpush1.xpose.msra.mxu0 0.0
      %1346 = vmatprep.subr.mxu0 0.0
      %1347 = vmatpush1.xpose.msra.mxu0 0.0
      %1348 = vmatprep.subr.mxu0 0.0
      %1349 = vmatpush1.xpose.msra.mxu0 0.0
      %1350 = vmatprep.subr.mxu0 0.0
      %1351 = vmatpush1.xpose.msra.mxu0 0.0
      %1352 = vmatprep.subr.mxu0 0.0
      %1353 = vmatpush1.xpose.msra.mxu0 0.0
      %1354 = vmatprep.subr.mxu0 0.0
      %1355 = vmatpush1.xpose.msra.mxu0 0.0
      %1356 = vmatprep.subr.mxu0 0.0
      %1357 = vmatpush1.xpose.msra.mxu0 0.0
      %1358 = vmatprep.subr.mxu0 0.0
      %1359 = vmatpush1.xpose.msra.mxu0 0.0
      %1360 = vmatprep.subr.mxu0 0.0
      %1361 = vmatpush1.xpose.msra.mxu0 0.0
      %1362 = vmatprep.subr.mxu0 0.0
      %1363 = vmatpush1.xpose.msra.mxu0 0.0
      %1364 = vmatprep.subr.mxu0 0.0
      %1365 = vmatpush1.xpose.msra.mxu0 0.0
      %1366 = vmatprep.subr.mxu0 0.0
      %1367 = vmatpush1.xpose.msra.mxu0 0.0
      %1368 = vmatprep.subr.mxu0 0.0
      %1369 = vmatpush1.xpose.msra.mxu0 0.0
      %1370 = vmatprep.subr.mxu0 0.0
      %1371 = vmatpush1.xpose.msra.mxu0 0.0
      %1372 = vmatprep.subr.mxu0 0.0
      %1373 = vmatpush1.xpose.msra.mxu0 0.0
      %1374 = vmatprep.subr.mxu0 0.0
      %1375 = vmatpush1.xpose.msra.mxu0 0.0
      %1376 = vmatprep.subr.mxu0 0.0
      %1377 = vmatpush1.xpose.msra.mxu0 0.0
      %1378 = vmatprep.subr.mxu0 0.0
      %1379 = vmatpush1.xpose.msra.mxu0 0.0
      %1380 = vmatprep.subr.mxu0 0.0
      %1381 = vmatpush1.xpose.msra.mxu0 0.0
      %1382 = vmatprep.subr.mxu0 0.0
      %1383 = vmatpush1.xpose.msra.mxu0 0.0
      %1384 = vmatprep.subr.mxu0 0.0
      %1385 = vmatpush1.xpose.msra.mxu0 0.0
      %1386 = vmatprep.subr.mxu0 0.0
      %1387 = vmatpush1.xpose.msra.mxu0 0.0
      %1388 = vmatprep.subr.mxu0 0.0
      %1389 = vmatpush1.xpose.msra.mxu0 0.0
      %1390 = vmatprep.subr.mxu0 0.0
      %1391 = vmatpush1.xpose.msra.mxu0 0.0
      %1392 = vmatprep.subr.mxu0 0.0
      %1393 = vmatpush1.xpose.msra.mxu0 0.0
      %1394 = vmatprep.mubr.f32.mxu0 0.0
      %1395 = vmatmul.mubr.f32.gmra.mrb[0].mxu0 %v1326
      %v1396 = vpop.f32.mrb[0].mxu0
      %v1397 = vadd.f32 0.0, %v1396
      %v1398 = vpop.f32.mrb[0].mxu0
      %1399 = vdwg.mxu0
      %v1400 = vsel %vm1325, %v1114, 0
      %v1402 = vsel %vm1325, %v1194, 0
      %1404 = vmatprep.subr.mxu0 0.0
      %1405 = vmatpush1.xpose.msra.mxu0 %v1402
      %1406 = vmatprep.subr.mxu0 0.0
      %1407 = vmatpush1.xpose.msra.mxu0 0.0
      %1408 = vmatprep.subr.mxu0 0.0
      %1409 = vmatpush1.xpose.msra.mxu0 0.0
      %1410 = vmatprep.subr.mxu0 0.0
      %1411 = vmatpush1.xpose.msra.mxu0 0.0
      %1412 = vmatprep.subr.mxu0 0.0
      %1413 = vmatpush1.xpose.msra.mxu0 0.0
      %1414 = vmatprep.subr.mxu0 0.0
      %1415 = vmatpush1.xpose.msra.mxu0 0.0
      %1416 = vmatprep.subr.mxu0 0.0
      %1417 = vmatpush1.xpose.msra.mxu0 0.0
      %1418 = vmatprep.subr.mxu0 0.0
      %1419 = vmatpush1.xpose.msra.mxu0 0.0
      %1420 = vmatprep.subr.mxu0 0.0
      %1421 = vmatpush1.xpose.msra.mxu0 0.0
      %1422 = vmatprep.subr.mxu0 0.0
      %1423 = vmatpush1.xpose.msra.mxu0 0.0
      %1424 = vmatprep.subr.mxu0 0.0
      %1425 = vmatpush1.xpose.msra.mxu0 0.0
      %1426 = vmatprep.subr.mxu0 0.0
      %1427 = vmatpush1.xpose.msra.mxu0 0.0
      %1428 = vmatprep.subr.mxu0 0.0
      %1429 = vmatpush1.xpose.msra.mxu0 0.0
      %1430 = vmatprep.subr.mxu0 0.0
      %1431 = vmatpush1.xpose.msra.mxu0 0.0
      %1432 = vmatprep.subr.mxu0 0.0
      %1433 = vmatpush1.xpose.msra.mxu0 0.0
      %1434 = vmatprep.subr.mxu0 0.0
      %1435 = vmatpush1.xpose.msra.mxu0 0.0
      %1436 = vmatprep.subr.mxu0 0.0
      %1437 = vmatpush1.xpose.msra.mxu0 0.0
      %1438 = vmatprep.subr.mxu0 0.0
      %1439 = vmatpush1.xpose.msra.mxu0 0.0
      %1440 = vmatprep.subr.mxu0 0.0
      %1441 = vmatpush1.xpose.msra.mxu0 0.0
      %1442 = vmatprep.subr.mxu0 0.0
      %1443 = vmatpush1.xpose.msra.mxu0 0.0
      %1444 = vmatprep.subr.mxu0 0.0
      %1445 = vmatpush1.xpose.msra.mxu0 0.0
      %1446 = vmatprep.subr.mxu0 0.0
      %1447 = vmatpush1.xpose.msra.mxu0 0.0
      %1448 = vmatprep.subr.mxu0 0.0
      %1449 = vmatpush1.xpose.msra.mxu0 0.0
      %1450 = vmatprep.subr.mxu0 0.0
      %1451 = vmatpush1.xpose.msra.mxu0 0.0
      %1452 = vmatprep.subr.mxu0 0.0
      %1453 = vmatpush1.xpose.msra.mxu0 0.0
      %1454 = vmatprep.subr.mxu0 0.0
      %1455 = vmatpush1.xpose.msra.mxu0 0.0
      %1456 = vmatprep.subr.mxu0 0.0
      %1457 = vmatpush1.xpose.msra.mxu0 0.0
      %1458 = vmatprep.subr.mxu0 0.0
      %1459 = vmatpush1.xpose.msra.mxu0 0.0
      %1460 = vmatprep.subr.mxu0 0.0
      %1461 = vmatpush1.xpose.msra.mxu0 0.0
      %1462 = vmatprep.subr.mxu0 0.0
      %1463 = vmatpush1.xpose.msra.mxu0 0.0
      %1464 = vmatprep.subr.mxu0 0.0
      %1465 = vmatpush1.xpose.msra.mxu0 0.0
      %1466 = vmatprep.subr.mxu0 0.0
      %1467 = vmatpush1.xpose.msra.mxu0 0.0
      %1468 = vmatprep.mubr.f32.mxu0 0.0
      %1469 = vmatmul.mubr.f32.gmra.mrb[0].mxu0 %v1400
      %v1470 = vpop.f32.mrb[0].mxu0
      %v1471 = vadd.f32 0.0, %v1470
      %v1472 = vpop.f32.mrb[0].mxu0
      %1473 = vdwg.mxu0
      %v1474 = vsel %vm1325, %v1280, 0
      %v1476 = vsel %vm1325, %v1294, 0
      %1478 = vmatprep.subr.mxu0 0.0
      %1479 = vmatpush1.xpose.msra.mxu0 %v1476
      %1480 = vmatprep.subr.mxu0 0.0
      %1481 = vmatpush1.xpose.msra.mxu0 0.0
      %1482 = vmatprep.subr.mxu0 0.0
      %1483 = vmatpush1.xpose.msra.mxu0 0.0
      %1484 = vmatprep.subr.mxu0 0.0
      %1485 = vmatpush1.xpose.msra.mxu0 0.0
      %1486 = vmatprep.subr.mxu0 0.0
      %1487 = vmatpush1.xpose.msra.mxu0 0.0
      %1488 = vmatprep.subr.mxu0 0.0
      %1489 = vmatpush1.xpose.msra.mxu0 0.0
      %1490 = vmatprep.subr.mxu0 0.0
      %1491 = vmatpush1.xpose.msra.mxu0 0.0
      %1492 = vmatprep.subr.mxu0 0.0
      %1493 = vmatpush1.xpose.msra.mxu0 0.0
      %1494 = vmatprep.subr.mxu0 0.0
      %1495 = vmatpush1.xpose.msra.mxu0 0.0
      %1496 = vmatprep.subr.mxu0 0.0
      %1497 = vmatpush1.xpose.msra.mxu0 0.0
      %1498 = vmatprep.subr.mxu0 0.0
      %1499 = vmatpush1.xpose.msra.mxu0 0.0
      %1500 = vmatprep.subr.mxu0 0.0
      %1501 = vmatpush1.xpose.msra.mxu0 0.0
      %1502 = vmatprep.subr.mxu0 0.0
      %1503 = vmatpush1.xpose.msra.mxu0 0.0
      %1504 = vmatprep.subr.mxu0 0.0
      %1505 = vmatpush1.xpose.msra.mxu0 0.0
      %1506 = vmatprep.subr.mxu0 0.0
      %1507 = vmatpush1.xpose.msra.mxu0 0.0
      %1508 = vmatprep.subr.mxu0 0.0
      %1509 = vmatpush1.xpose.msra.mxu0 0.0
      %1510 = vmatprep.subr.mxu0 0.0
      %1511 = vmatpush1.xpose.msra.mxu0 0.0
      %1512 = vmatprep.subr.mxu0 0.0
      %1513 = vmatpush1.xpose.msra.mxu0 0.0
      %1514 = vmatprep.subr.mxu0 0.0
      %1515 = vmatpush1.xpose.msra.mxu0 0.0
      %1516 = vmatprep.subr.mxu0 0.0
      %1517 = vmatpush1.xpose.msra.mxu0 0.0
      %1518 = vmatprep.subr.mxu0 0.0
      %1519 = vmatpush1.xpose.msra.mxu0 0.0
      %1520 = vmatprep.subr.mxu0 0.0
      %1521 = vmatpush1.xpose.msra.mxu0 0.0
      %1522 = vmatprep.subr.mxu0 0.0
      %1523 = vmatpush1.xpose.msra.mxu0 0.0
      %1524 = vmatprep.subr.mxu0 0.0
      %1525 = vmatpush1.xpose.msra.mxu0 0.0
      %1526 = vmatprep.subr.mxu0 0.0
      %1527 = vmatpush1.xpose.msra.mxu0 0.0
      %1528 = vmatprep.subr.mxu0 0.0
      %1529 = vmatpush1.xpose.msra.mxu0 0.0
      %1530 = vmatprep.subr.mxu0 0.0
      %1531 = vmatpush1.xpose.msra.mxu0 0.0
      %1532 = vmatprep.subr.mxu0 0.0
      %1533 = vmatpush1.xpose.msra.mxu0 0.0
      %1534 = vmatprep.subr.mxu0 0.0
      %1535 = vmatpush1.xpose.msra.mxu0 0.0
      %1536 = vmatprep.subr.mxu0 0.0
      %1537 = vmatpush1.xpose.msra.mxu0 0.0
      %1538 = vmatprep.subr.mxu0 0.0
      %1539 = vmatpush1.xpose.msra.mxu0 0.0
      %1540 = vmatprep.subr.mxu0 0.0
      %1541 = vmatpush1.xpose.msra.mxu0 0.0
      %1542 = vmatprep.mubr.f32.mxu0 0.0
      %1543 = vmatmul.mubr.f32.gmra.mrb[0].mxu0 %v1474
      %v1544 = vpop.f32.mrb[0].mxu0
      %v1545 = vadd.f32 0.0, %v1544
      %v1546 = vpop.f32.mrb[0].mxu0
      %1547 = vdwg.mxu0
      %v1548 = vsel %vm1325, %v1282, 0
      %v1550 = vsel %vm1325, %v1296, 0
      %1552 = vmatprep.subr.mxu0 0.0
      %1553 = vmatpush1.xpose.msra.mxu0 %v1550
      %1554 = vmatprep.subr.mxu0 0.0
      %1555 = vmatpush1.xpose.msra.mxu0 0.0
      %1556 = vmatprep.subr.mxu0 0.0
      %1557 = vmatpush1.xpose.msra.mxu0 0.0
      %1558 = vmatprep.subr.mxu0 0.0
      %1559 = vmatpush1.xpose.msra.mxu0 0.0
      %1560 = vmatprep.subr.mxu0 0.0
      %1561 = vmatpush1.xpose.msra.mxu0 0.0
      %1562 = vmatprep.subr.mxu0 0.0
      %1563 = vmatpush1.xpose.msra.mxu0 0.0
      %1564 = vmatprep.subr.mxu0 0.0
      %1565 = vmatpush1.xpose.msra.mxu0 0.0
      %1566 = vmatprep.subr.mxu0 0.0
      %1567 = vmatpush1.xpose.msra.mxu0 0.0
      %1568 = vmatprep.subr.mxu0 0.0
      %1569 = vmatpush1.xpose.msra.mxu0 0.0
      %1570 = vmatprep.subr.mxu0 0.0
      %1571 = vmatpush1.xpose.msra.mxu0 0.0
      %1572 = vmatprep.subr.mxu0 0.0
      %1573 = vmatpush1.xpose.msra.mxu0 0.0
      %1574 = vmatprep.subr.mxu0 0.0
      %1575 = vmatpush1.xpose.msra.mxu0 0.0
      %1576 = vmatprep.subr.mxu0 0.0
      %1577 = vmatpush1.xpose.msra.mxu0 0.0
      %1578 = vmatprep.subr.mxu0 0.0
      %1579 = vmatpush1.xpose.msra.mxu0 0.0
      %1580 = vmatprep.subr.mxu0 0.0
      %1581 = vmatpush1.xpose.msra.mxu0 0.0
      %1582 = vmatprep.subr.mxu0 0.0
      %1583 = vmatpush1.xpose.msra.mxu0 0.0
      %1584 = vmatprep.subr.mxu0 0.0
      %1585 = vmatpush1.xpose.msra.mxu0 0.0
      %1586 = vmatprep.subr.mxu0 0.0
      %1587 = vmatpush1.xpose.msra.mxu0 0.0
      %1588 = vmatprep.subr.mxu0 0.0
      %1589 = vmatpush1.xpose.msra.mxu0 0.0
      %1590 = vmatprep.subr.mxu0 0.0
      %1591 = vmatpush1.xpose.msra.mxu0 0.0
      %1592 = vmatprep.subr.mxu0 0.0
      %1593 = vmatpush1.xpose.msra.mxu0 0.0
      %1594 = vmatprep.subr.mxu0 0.0
      %1595 = vmatpush1.xpose.msra.mxu0 0.0
      %1596 = vmatprep.subr.mxu0 0.0
      %1597 = vmatpush1.xpose.msra.mxu0 0.0
      %1598 = vmatprep.subr.mxu0 0.0
      %1599 = vmatpush1.xpose.msra.mxu0 0.0
      %1600 = vmatprep.subr.mxu0 0.0
      %1601 = vmatpush1.xpose.msra.mxu0 0.0
      %1602 = vmatprep.subr.mxu0 0.0
      %1603 = vmatpush1.xpose.msra.mxu0 0.0
      %1604 = vmatprep.subr.mxu0 0.0
      %1605 = vmatpush1.xpose.msra.mxu0 0.0
      %1606 = vmatprep.subr.mxu0 0.0
      %1607 = vmatpush1.xpose.msra.mxu0 0.0
      %1608 = vmatprep.subr.mxu0 0.0
      %1609 = vmatpush1.xpose.msra.mxu0 0.0
      %1610 = vmatprep.subr.mxu0 0.0
      %1611 = vmatpush1.xpose.msra.mxu0 0.0
      %1612 = vmatprep.subr.mxu0 0.0
      %1613 = vmatpush1.xpose.msra.mxu0 0.0
      %1614 = vmatprep.subr.mxu0 0.0
      %1615 = vmatpush1.xpose.msra.mxu0 0.0
      %1616 = vmatprep.mubr.f32.mxu0 0.0
      %1617 = vmatmul.mubr.f32.gmra.mrb[0].mxu0 %v1548
      %v1618 = vpop.f32.mrb[0].mxu0
      %v1619 = vadd.f32 0.0, %v1618
      %v1620 = vpop.f32.mrb[0].mxu0
      %1621 = vdwg.mxu0
      %v1622 = vsel %vm1325, %v1284, 0
      %v1624 = vsel %vm1325, %v1298, 0
      %1626 = vmatprep.subr.mxu0 0.0
      %1627 = vmatpush1.xpose.msra.mxu0 %v1624
      %1628 = vmatprep.subr.mxu0 0.0
      %1629 = vmatpush1.xpose.msra.mxu0 0.0
      %1630 = vmatprep.subr.mxu0 0.0
      %1631 = vmatpush1.xpose.msra.mxu0 0.0
      %1632 = vmatprep.subr.mxu0 0.0
      %1633 = vmatpush1.xpose.msra.mxu0 0.0
      %1634 = vmatprep.subr.mxu0 0.0
      %1635 = vmatpush1.xpose.msra.mxu0 0.0
      %1636 = vmatprep.subr.mxu0 0.0
      %1637 = vmatpush1.xpose.msra.mxu0 0.0
      %1638 = vmatprep.subr.mxu0 0.0
      %1639 = vmatpush1.xpose.msra.mxu0 0.0
      %1640 = vmatprep.subr.mxu0 0.0
      %1641 = vmatpush1.xpose.msra.mxu0 0.0
      %1642 = vmatprep.subr.mxu0 0.0
      %1643 = vmatpush1.xpose.msra.mxu0 0.0
      %1644 = vmatprep.subr.mxu0 0.0
      %1645 = vmatpush1.xpose.msra.mxu0 0.0
      %1646 = vmatprep.subr.mxu0 0.0
      %1647 = vmatpush1.xpose.msra.mxu0 0.0
      %1648 = vmatprep.subr.mxu0 0.0
      %1649 = vmatpush1.xpose.msra.mxu0 0.0
      %1650 = vmatprep.subr.mxu0 0.0
      %1651 = vmatpush1.xpose.msra.mxu0 0.0
      %1652 = vmatprep.subr.mxu0 0.0
      %1653 = vmatpush1.xpose.msra.mxu0 0.0
      %1654 = vmatprep.subr.mxu0 0.0
      %1655 = vmatpush1.xpose.msra.mxu0 0.0
      %1656 = vmatprep.subr.mxu0 0.0
      %1657 = vmatpush1.xpose.msra.mxu0 0.0
      %1658 = vmatprep.subr.mxu0 0.0
      %1659 = vmatpush1.xpose.msra.mxu0 0.0
      %1660 = vmatprep.subr.mxu0 0.0
      %1661 = vmatpush1.xpose.msra.mxu0 0.0
      %1662 = vmatprep.subr.mxu0 0.0
      %1663 = vmatpush1.xpose.msra.mxu0 0.0
      %1664 = vmatprep.subr.mxu0 0.0
      %1665 = vmatpush1.xpose.msra.mxu0 0.0
      %1666 = vmatprep.subr.mxu0 0.0
      %1667 = vmatpush1.xpose.msra.mxu0 0.0
      %1668 = vmatprep.subr.mxu0 0.0
      %1669 = vmatpush1.xpose.msra.mxu0 0.0
      %1670 = vmatprep.subr.mxu0 0.0
      %1671 = vmatpush1.xpose.msra.mxu0 0.0
      %1672 = vmatprep.subr.mxu0 0.0
      %1673 = vmatpush1.xpose.msra.mxu0 0.0
      %1674 = vmatprep.subr.mxu0 0.0
      %1675 = vmatpush1.xpose.msra.mxu0 0.0
      %1676 = vmatprep.subr.mxu0 0.0
      %1677 = vmatpush1.xpose.msra.mxu0 0.0
      %1678 = vmatprep.subr.mxu0 0.0
      %1679 = vmatpush1.xpose.msra.mxu0 0.0
      %1680 = vmatprep.subr.mxu0 0.0
      %1681 = vmatpush1.xpose.msra.mxu0 0.0
      %1682 = vmatprep.subr.mxu0 0.0
      %1683 = vmatpush1.xpose.msra.mxu0 0.0
      %1684 = vmatprep.subr.mxu0 0.0
      %1685 = vmatpush1.xpose.msra.mxu0 0.0
      %1686 = vmatprep.subr.mxu0 0.0
      %1687 = vmatpush1.xpose.msra.mxu0 0.0
      %1688 = vmatprep.subr.mxu0 0.0
      %1689 = vmatpush1.xpose.msra.mxu0 0.0
      %1690 = vmatprep.mubr.f32.mxu0 0.0
      %1691 = vmatmul.mubr.f32.gmra.mrb[0].mxu0 %v1622
      %v1692 = vpop.f32.mrb[0].mxu0
      %v1693 = vadd.f32 0.0, %v1692
      %v1694 = vpop.f32.mrb[0].mxu0
      %1695 = vdwg.mxu0
      %v1696 = vsel %vm1325, %v1286, 0
      %v1698 = vsel %vm1325, %v1300, 0
      %1700 = vmatprep.subr.mxu0 0.0
      %1701 = vmatpush1.xpose.msra.mxu0 %v1698
      %1702 = vmatprep.subr.mxu0 0.0
      %1703 = vmatpush1.xpose.msra.mxu0 0.0
      %1704 = vmatprep.subr.mxu0 0.0
      %1705 = vmatpush1.xpose.msra.mxu0 0.0
      %1706 = vmatprep.subr.mxu0 0.0
      %1707 = vmatpush1.xpose.msra.mxu0 0.0
      %1708 = vmatprep.subr.mxu0 0.0
      %1709 = vmatpush1.xpose.msra.mxu0 0.0
      %1710 = vmatprep.subr.mxu0 0.0
      %1711 = vmatpush1.xpose.msra.mxu0 0.0
      %1712 = vmatprep.subr.mxu0 0.0
      %1713 = vmatpush1.xpose.msra.mxu0 0.0
      %1714 = vmatprep.subr.mxu0 0.0
      %1715 = vmatpush1.xpose.msra.mxu0 0.0
      %1716 = vmatprep.subr.mxu0 0.0
      %1717 = vmatpush1.xpose.msra.mxu0 0.0
      %1718 = vmatprep.subr.mxu0 0.0
      %1719 = vmatpush1.xpose.msra.mxu0 0.0
      %1720 = vmatprep.subr.mxu0 0.0
      %1721 = vmatpush1.xpose.msra.mxu0 0.0
      %1722 = vmatprep.subr.mxu0 0.0
      %1723 = vmatpush1.xpose.msra.mxu0 0.0
      %1724 = vmatprep.subr.mxu0 0.0
      %1725 = vmatpush1.xpose.msra.mxu0 0.0
      %1726 = vmatprep.subr.mxu0 0.0
      %1727 = vmatpush1.xpose.msra.mxu0 0.0
      %1728 = vmatprep.subr.mxu0 0.0
      %1729 = vmatpush1.xpose.msra.mxu0 0.0
      %1730 = vmatprep.subr.mxu0 0.0
      %1731 = vmatpush1.xpose.msra.mxu0 0.0
      %1732 = vmatprep.subr.mxu0 0.0
      %1733 = vmatpush1.xpose.msra.mxu0 0.0
      %1734 = vmatprep.subr.mxu0 0.0
      %1735 = vmatpush1.xpose.msra.mxu0 0.0
      %1736 = vmatprep.subr.mxu0 0.0
      %1737 = vmatpush1.xpose.msra.mxu0 0.0
      %1738 = vmatprep.subr.mxu0 0.0
      %1739 = vmatpush1.xpose.msra.mxu0 0.0
      %1740 = vmatprep.subr.mxu0 0.0
      %1741 = vmatpush1.xpose.msra.mxu0 0.0
      %1742 = vmatprep.subr.mxu0 0.0
      %1743 = vmatpush1.xpose.msra.mxu0 0.0
      %1744 = vmatprep.subr.mxu0 0.0
      %1745 = vmatpush1.xpose.msra.mxu0 0.0
      %1746 = vmatprep.subr.mxu0 0.0
      %1747 = vmatpush1.xpose.msra.mxu0 0.0
      %1748 = vmatprep.subr.mxu0 0.0
      %1749 = vmatpush1.xpose.msra.mxu0 0.0
      %1750 = vmatprep.subr.mxu0 0.0
      %1751 = vmatpush1.xpose.msra.mxu0 0.0
      %1752 = vmatprep.subr.mxu0 0.0
      %1753 = vmatpush1.xpose.msra.mxu0 0.0
      %1754 = vmatprep.subr.mxu0 0.0
      %1755 = vmatpush1.xpose.msra.mxu0 0.0
      %1756 = vmatprep.subr.mxu0 0.0
      %1757 = vmatpush1.xpose.msra.mxu0 0.0
      %1758 = vmatprep.subr.mxu0 0.0
      %1759 = vmatpush1.xpose.msra.mxu0 0.0
      %1760 = vmatprep.subr.mxu0 0.0
      %1761 = vmatpush1.xpose.msra.mxu0 0.0
      %1762 = vmatprep.subr.mxu0 0.0
      %1763 = vmatpush1.xpose.msra.mxu0 0.0
      %1764 = vmatprep.mubr.f32.mxu0 0.0
      %1765 = vmatmul.mubr.f32.gmra.mrb[0].mxu0 %v1696
      %v1766 = vpop.f32.mrb[0].mxu0
      %v1767 = vadd.f32 0.0, %v1766
      %v1768 = vpop.f32.mrb[0].mxu0
      %1769 = vdwg.mxu0
      %v1770 = vsel %vm1325, %v1288, 0
      %v1772 = vsel %vm1325, %v1302, 0
      %1774 = vmatprep.subr.mxu0 0.0
      %1775 = vmatpush1.xpose.msra.mxu0 %v1772
      %1776 = vmatprep.subr.mxu0 0.0
      %1777 = vmatpush1.xpose.msra.mxu0 0.0
      %1778 = vmatprep.subr.mxu0 0.0
      %1779 = vmatpush1.xpose.msra.mxu0 0.0
      %1780 = vmatprep.subr.mxu0 0.0
      %1781 = vmatpush1.xpose.msra.mxu0 0.0
      %1782 = vmatprep.subr.mxu0 0.0
      %1783 = vmatpush1.xpose.msra.mxu0 0.0
      %1784 = vmatprep.subr.mxu0 0.0
      %1785 = vmatpush1.xpose.msra.mxu0 0.0
      %1786 = vmatprep.subr.mxu0 0.0
      %1787 = vmatpush1.xpose.msra.mxu0 0.0
      %1788 = vmatprep.subr.mxu0 0.0
      %1789 = vmatpush1.xpose.msra.mxu0 0.0
      %1790 = vmatprep.subr.mxu0 0.0
      %1791 = vmatpush1.xpose.msra.mxu0 0.0
      %1792 = vmatprep.subr.mxu0 0.0
      %1793 = vmatpush1.xpose.msra.mxu0 0.0
      %1794 = vmatprep.subr.mxu0 0.0
      %1795 = vmatpush1.xpose.msra.mxu0 0.0
      %1796 = vmatprep.subr.mxu0 0.0
      %1797 = vmatpush1.xpose.msra.mxu0 0.0
      %1798 = vmatprep.subr.mxu0 0.0
      %1799 = vmatpush1.xpose.msra.mxu0 0.0
      %1800 = vmatprep.subr.mxu0 0.0
      %1801 = vmatpush1.xpose.msra.mxu0 0.0
      %1802 = vmatprep.subr.mxu0 0.0
      %1803 = vmatpush1.xpose.msra.mxu0 0.0
      %1804 = vmatprep.subr.mxu0 0.0
      %1805 = vmatpush1.xpose.msra.mxu0 0.0
      %1806 = vmatprep.subr.mxu0 0.0
      %1807 = vmatpush1.xpose.msra.mxu0 0.0
      %1808 = vmatprep.subr.mxu0 0.0
      %1809 = vmatpush1.xpose.msra.mxu0 0.0
      %1810 = vmatprep.subr.mxu0 0.0
      %1811 = vmatpush1.xpose.msra.mxu0 0.0
      %1812 = vmatprep.subr.mxu0 0.0
      %1813 = vmatpush1.xpose.msra.mxu0 0.0
      %1814 = vmatprep.subr.mxu0 0.0
      %1815 = vmatpush1.xpose.msra.mxu0 0.0
      %1816 = vmatprep.subr.mxu0 0.0
      %1817 = vmatpush1.xpose.msra.mxu0 0.0
      %1818 = vmatprep.subr.mxu0 0.0
      %1819 = vmatpush1.xpose.msra.mxu0 0.0
      %1820 = vmatprep.subr.mxu0 0.0
      %1821 = vmatpush1.xpose.msra.mxu0 0.0
      %1822 = vmatprep.subr.mxu0 0.0
      %1823 = vmatpush1.xpose.msra.mxu0 0.0
      %1824 = vmatprep.subr.mxu0 0.0
      %1825 = vmatpush1.xpose.msra.mxu0 0.0
      %1826 = vmatprep.subr.mxu0 0.0
      %1827 = vmatpush1.xpose.msra.mxu0 0.0
      %1828 = vmatprep.subr.mxu0 0.0
      %1829 = vmatpush1.xpose.msra.mxu0 0.0
      %1830 = vmatprep.subr.mxu0 0.0
      %1831 = vmatpush1.xpose.msra.mxu0 0.0
      %1832 = vmatprep.subr.mxu0 0.0
      %1833 = vmatpush1.xpose.msra.mxu0 0.0
      %1834 = vmatprep.subr.mxu0 0.0
      %1835 = vmatpush1.xpose.msra.mxu0 0.0
      %1836 = vmatprep.subr.mxu0 0.0
      %1837 = vmatpush1.xpose.msra.mxu0 0.0
      %1838 = vmatprep.mubr.f32.mxu0 0.0
      %1839 = vmatmul.mubr.f32.gmra.mrb[0].mxu0 %v1770
      %v1840 = vpop.f32.mrb[0].mxu0
      %v1841 = vadd.f32 0.0, %v1840
      %v1842 = vpop.f32.mrb[0].mxu0
      %1843 = vdwg.mxu0
      %v1844 = vsel %vm1325, %v1290, 0
      %v1846 = vsel %vm1325, %v1304, 0
      %1848 = vmatprep.subr.mxu0 0.0
      %1849 = vmatpush1.xpose.msra.mxu0 %v1846
      %1850 = vmatprep.subr.mxu0 0.0
      %1851 = vmatpush1.xpose.msra.mxu0 0.0
      %1852 = vmatprep.subr.mxu0 0.0
      %1853 = vmatpush1.xpose.msra.mxu0 0.0
      %1854 = vmatprep.subr.mxu0 0.0
      %1855 = vmatpush1.xpose.msra.mxu0 0.0
      %1856 = vmatprep.subr.mxu0 0.0
      %1857 = vmatpush1.xpose.msra.mxu0 0.0
      %1858 = vmatprep.subr.mxu0 0.0
      %1859 = vmatpush1.xpose.msra.mxu0 0.0
      %1860 = vmatprep.subr.mxu0 0.0
      %1861 = vmatpush1.xpose.msra.mxu0 0.0
      %1862 = vmatprep.subr.mxu0 0.0
      %1863 = vmatpush1.xpose.msra.mxu0 0.0
      %1864 = vmatprep.subr.mxu0 0.0
      %1865 = vmatpush1.xpose.msra.mxu0 0.0
      %1866 = vmatprep.subr.mxu0 0.0
      %1867 = vmatpush1.xpose.msra.mxu0 0.0
      %1868 = vmatprep.subr.mxu0 0.0
      %1869 = vmatpush1.xpose.msra.mxu0 0.0
      %1870 = vmatprep.subr.mxu0 0.0
      %1871 = vmatpush1.xpose.msra.mxu0 0.0
      %1872 = vmatprep.subr.mxu0 0.0
      %1873 = vmatpush1.xpose.msra.mxu0 0.0
      %1874 = vmatprep.subr.mxu0 0.0
      %1875 = vmatpush1.xpose.msra.mxu0 0.0
      %1876 = vmatprep.subr.mxu0 0.0
      %1877 = vmatpush1.xpose.msra.mxu0 0.0
      %1878 = vmatprep.subr.mxu0 0.0
      %1879 = vmatpush1.xpose.msra.mxu0 0.0
      %1880 = vmatprep.subr.mxu0 0.0
      %1881 = vmatpush1.xpose.msra.mxu0 0.0
      %1882 = vmatprep.subr.mxu0 0.0
      %1883 = vmatpush1.xpose.msra.mxu0 0.0
      %1884 = vmatprep.subr.mxu0 0.0
      %1885 = vmatpush1.xpose.msra.mxu0 0.0
      %1886 = vmatprep.subr.mxu0 0.0
      %1887 = vmatpush1.xpose.msra.mxu0 0.0
      %1888 = vmatprep.subr.mxu0 0.0
      %1889 = vmatpush1.xpose.msra.mxu0 0.0
      %1890 = vmatprep.subr.mxu0 0.0
      %1891 = vmatpush1.xpose.msra.mxu0 0.0
      %1892 = vmatprep.subr.mxu0 0.0
      %1893 = vmatpush1.xpose.msra.mxu0 0.0
      %1894 = vmatprep.subr.mxu0 0.0
      %1895 = vmatpush1.xpose.msra.mxu0 0.0
      %1896 = vmatprep.subr.mxu0 0.0
      %1897 = vmatpush1.xpose.msra.mxu0 0.0
      %1898 = vmatprep.subr.mxu0 0.0
      %1899 = vmatpush1.xpose.msra.mxu0 0.0
      %1900 = vmatprep.subr.mxu0 0.0
      %1901 = vmatpush1.xpose.msra.mxu0 0.0
      %1902 = vmatprep.subr.mxu0 0.0
      %1903 = vmatpush1.xpose.msra.mxu0 0.0
      %1904 = vmatprep.subr.mxu0 0.0
      %1905 = vmatpush1.xpose.msra.mxu0 0.0
      %1906 = vmatprep.subr.mxu0 0.0
      %1907 = vmatpush1.xpose.msra.mxu0 0.0
      %1908 = vmatprep.subr.mxu0 0.0
      %1909 = vmatpush1.xpose.msra.mxu0 0.0
      %1910 = vmatprep.subr.mxu0 0.0
      %1911 = vmatpush1.xpose.msra.mxu0 0.0
      %1912 = vmatprep.mubr.f32.mxu0 0.0
      %1913 = vmatmul.mubr.f32.gmra.mrb[0].mxu0 %v1844
      %v1914 = vpop.f32.mrb[0].mxu0
      %v1915 = vadd.f32 0.0, %v1914
      %v1916 = vpop.f32.mrb[0].mxu0
      %1917 = vdwg.mxu0
      %v1918 = vmul.f32 %v1397, 0.25
      %v1919 = vmul.f32 %v1471, 0.25
      %v1920 = vmul.f32 %v1545, 0.25
      %v1921 = vmul.f32 %v1619, 0.25
      %v1922 = vmul.f32 %v1693, 0.25
      %v1923 = vmul.f32 %v1767, 0.25
      %v1924 = vmul.f32 %v1841, 0.25
      %v1925 = vmul.f32 %v1915, 0.25
      %vm1926 = vcmask 64512
      %v1927 = vsel %vm1926, %v1918, -inf
      %1928 = vmax.xlane.f32.xlu0 %v1927
      %v1929 = vpop.xlane.xlu0 %1928
      %v1930 = vsel %vm1926, %v1919, -inf
      %1931 = vmax.xlane.f32.xlu0 %v1930
      %v1932 = vpop.xlane.xlu0 %1931
      %v1933 = vsel %vm1926, %v1920, -inf
      %1934 = vmax.xlane.f32.xlu0 %v1933
      %v1935 = vpop.xlane.xlu0 %1934
      %v1936 = vsel %vm1926, %v1921, -inf
      %1937 = vmax.xlane.f32.xlu0 %v1936
      %v1938 = vpop.xlane.xlu0 %1937
      %v1939 = vsel %vm1926, %v1922, -inf
      %1940 = vmax.xlane.f32.xlu0 %v1939
      %v1941 = vpop.xlane.xlu0 %1940
      %v1942 = vsel %vm1926, %v1923, -inf
      %1943 = vmax.xlane.f32.xlu0 %v1942
      %v1944 = vpop.xlane.xlu0 %1943
      %v1945 = vsel %vm1926, %v1924, -inf
      %1946 = vmax.xlane.f32.xlu0 %v1945
      %v1947 = vpop.xlane.xlu0 %1946
      %v1948 = vsel %vm1926, %v1925, -inf
      %1949 = vmax.xlane.f32.xlu0 %v1948
      %v1950 = vpop.xlane.xlu0 %1949
      %v1951 = vsub.f32 %v1918, %v1929
      %v1952 = vsub.f32 %v1919, %v1932
      %v1953 = vsub.f32 %v1920, %v1935
      %v1954 = vsub.f32 %v1921, %v1938
      %v1955 = vsub.f32 %v1922, %v1941
      %v1956 = vsub.f32 %v1923, %v1944
      %v1957 = vsub.f32 %v1924, %v1947
      %v1958 = vsub.f32 %v1925, %v1950
      %v1959 = vmul.f32 %v1951, 1.442695
      %v1960 = vpow.pop %v1959
      %v1961 = vmul.f32 %v1952, 1.442695
      %v1962 = vpow.pop %v1961
      %v1963 = vmul.f32 %v1953, 1.442695
      %v1964 = vpow.pop %v1963
      %v1965 = vmul.f32 %v1954, 1.442695
      %v1966 = vpow.pop %v1965
      %v1967 = vmul.f32 %v1955, 1.442695
      %v1968 = vpow.pop %v1967
      %v1969 = vmul.f32 %v1956, 1.442695
      %v1970 = vpow.pop %v1969
      %v1971 = vmul.f32 %v1957, 1.442695
      %v1972 = vpow.pop %v1971
      %v1973 = vmul.f32 %v1958, 1.442695
      %v1974 = vpow.pop %v1973
      %v1975 = vsel %vm1926, %v1960, 0.0
      %1976 = vadd.xlane.f32.xlu0 %v1975
      %v1977 = vpop.xlane.xlu0 %1976
      %v1978 = vsel %vm1926, %v1962, 0.0
      %1979 = vadd.xlane.f32.xlu0 %v1978
      %v1980 = vpop.xlane.xlu0 %1979
      %v1981 = vsel %vm1926, %v1964, 0.0
      %1982 = vadd.xlane.f32.xlu0 %v1981
      %v1983 = vpop.xlane.xlu0 %1982
      %v1984 = vsel %vm1926, %v1966, 0.0
      %1985 = vadd.xlane.f32.xlu0 %v1984
      %v1986 = vpop.xlane.xlu0 %1985
      %v1987 = vsel %vm1926, %v1968, 0.0
      %1988 = vadd.xlane.f32.xlu0 %v1987
      %v1989 = vpop.xlane.xlu0 %1988
      %v1990 = vsel %vm1926, %v1970, 0.0
      %1991 = vadd.xlane.f32.xlu0 %v1990
      %v1992 = vpop.xlane.xlu0 %1991
      %v1993 = vsel %vm1926, %v1972, 0.0
      %1994 = vadd.xlane.f32.xlu0 %v1993
      %v1995 = vpop.xlane.xlu0 %1994
      %v1996 = vsel %vm1926, %v1974, 0.0
      %1997 = vadd.xlane.f32.xlu0 %v1996
      %v1998 = vpop.xlane.xlu0 %1997
      %v1999 = vrcp.pop %v1977
      %v2000 = vmul.f32 %v1960, %v1999
      %v2001 = vrcp.pop %v1980
      %v2002 = vmul.f32 %v1962, %v2001
      %v2003 = vrcp.pop %v1983
      %v2004 = vmul.f32 %v1964, %v2003
      %v2005 = vrcp.pop %v1986
      %v2006 = vmul.f32 %v1966, %v2005
      %v2007 = vrcp.pop %v1989
      %v2008 = vmul.f32 %v1968, %v2007
      %v2009 = vrcp.pop %v1992
      %v2010 = vmul.f32 %v1970, %v2009
      %v2011 = vrcp.pop %v1995
      %v2012 = vmul.f32 %v1972, %v2011
      %v2013 = vrcp.pop %v1998
      %v2014 = vmul.f32 %v1974, %v2013
      %v2016 = vsel %vm1926, %v2000, 0
      %2018 = vmatprep.subr.mxu0 0.0
      %2019 = vmatpush1.msra.mxu0 %v1271
      %2020 = vmatprep.subr.mxu0 0.0
      %2021 = vmatpush1.msra.mxu0 0.0
      %2022 = vmatprep.subr.mxu0 0.0
      %2023 = vmatpush1.msra.mxu0 0.0
      %2024 = vmatprep.subr.mxu0 0.0
      %2025 = vmatpush1.msra.mxu0 0.0
      %2026 = vmatprep.subr.mxu0 0.0
      %2027 = vmatpush1.msra.mxu0 0.0
      %2028 = vmatprep.subr.mxu0 0.0
      %2029 = vmatpush1.msra.mxu0 0.0
      %2030 = vmatprep.subr.mxu0 0.0
      %2031 = vmatpush1.msra.mxu0 0.0
      %2032 = vmatprep.subr.mxu0 0.0
      %2033 = vmatpush1.msra.mxu0 0.0
      %2034 = vmatprep.subr.mxu0 0.0
      %2035 = vmatpush1.msra.mxu0 0.0
      %2036 = vmatprep.subr.mxu0 0.0
      %2037 = vmatpush1.msra.mxu0 0.0
      %2038 = vmatprep.subr.mxu0 0.0
      %2039 = vmatpush1.msra.mxu0 0.0
      %2040 = vmatprep.subr.mxu0 0.0
      %2041 = vmatpush1.msra.mxu0 0.0
      %2042 = vmatprep.subr.mxu0 0.0
      %2043 = vmatpush1.msra.mxu0 0.0
      %2044 = vmatprep.subr.mxu0 0.0
      %2045 = vmatpush1.msra.mxu0 0.0
      %2046 = vmatprep.subr.mxu0 0.0
      %2047 = vmatpush1.msra.mxu0 0.0
      %2048 = vmatprep.subr.mxu0 0.0
      %2049 = vmatpush1.msra.mxu0 0.0
      %2050 = vmatprep.subr.mxu0 0.0
      %2051 = vmatpush1.msra.mxu0 0.0
      %2052 = vmatprep.subr.mxu0 0.0
      %2053 = vmatpush1.msra.mxu0 0.0
      %2054 = vmatprep.subr.mxu0 0.0
      %2055 = vmatpush1.msra.mxu0 0.0
      %2056 = vmatprep.subr.mxu0 0.0
      %2057 = vmatpush1.msra.mxu0 0.0
      %2058 = vmatprep.subr.mxu0 0.0
      %2059 = vmatpush1.msra.mxu0 0.0
      %2060 = vmatprep.subr.mxu0 0.0
      %2061 = vmatpush1.msra.mxu0 0.0
      %2062 = vmatprep.subr.mxu0 0.0
      %2063 = vmatpush1.msra.mxu0 0.0
      %2064 = vmatprep.subr.mxu0 0.0
      %2065 = vmatpush1.msra.mxu0 0.0
      %2066 = vmatprep.subr.mxu0 0.0
      %2067 = vmatpush1.msra.mxu0 0.0
      %2068 = vmatprep.subr.mxu0 0.0
      %2069 = vmatpush1.msra.mxu0 0.0
      %2070 = vmatprep.subr.mxu0 0.0
      %2071 = vmatpush1.msra.mxu0 0.0
      %2072 = vmatprep.subr.mxu0 0.0
      %2073 = vmatpush1.msra.mxu0 0.0
      %2074 = vmatprep.subr.mxu0 0.0
      %2075 = vmatpush1.msra.mxu0 0.0
      %2076 = vmatprep.subr.mxu0 0.0
      %2077 = vmatpush1.msra.mxu0 0.0
      %2078 = vmatprep.subr.mxu0 0.0
      %2079 = vmatpush1.msra.mxu0 0.0
      %2080 = vmatprep.subr.mxu0 0.0
      %2081 = vmatpush1.msra.mxu0 0.0
      %2082 = vmatprep.mubr.f32.mxu0 0.0
      %2083 = vmatmul.mubr.f32.gmra.mrb[0].mxu0 %v2016
      %v2084 = vpop.f32.mrb[0].mxu0
      %v2085 = vadd.f32 0.0, %v2084
      %v2086 = vpop.f32.mrb[0].mxu0
      %2087 = vdwg.mxu0
      %v2089 = vsel %vm1926, %v2002, 0
      %2091 = vmatprep.subr.mxu0 0.0
      %2092 = vmatpush1.msra.mxu0 %v1274
      %2093 = vmatprep.subr.mxu0 0.0
      %2094 = vmatpush1.msra.mxu0 0.0
      %2095 = vmatprep.subr.mxu0 0.0
      %2096 = vmatpush1.msra.mxu0 0.0
      %2097 = vmatprep.subr.mxu0 0.0
      %2098 = vmatpush1.msra.mxu0 0.0
      %2099 = vmatprep.subr.mxu0 0.0
      %2100 = vmatpush1.msra.mxu0 0.0
      %2101 = vmatprep.subr.mxu0 0.0
      %2102 = vmatpush1.msra.mxu0 0.0
      %2103 = vmatprep.subr.mxu0 0.0
      %2104 = vmatpush1.msra.mxu0 0.0
      %2105 = vmatprep.subr.mxu0 0.0
      %2106 = vmatpush1.msra.mxu0 0.0
      %2107 = vmatprep.subr.mxu0 0.0
      %2108 = vmatpush1.msra.mxu0 0.0
      %2109 = vmatprep.subr.mxu0 0.0
      %2110 = vmatpush1.msra.mxu0 0.0
      %2111 = vmatprep.subr.mxu0 0.0
      %2112 = vmatpush1.msra.mxu0 0.0
      %2113 = vmatprep.subr.mxu0 0.0
      %2114 = vmatpush1.msra.mxu0 0.0
      %2115 = vmatprep.subr.mxu0 0.0
      %2116 = vmatpush1.msra.mxu0 0.0
      %2117 = vmatprep.subr.mxu0 0.0
      %2118 = vmatpush1.msra.mxu0 0.0
      %2119 = vmatprep.subr.mxu0 0.0
      %2120 = vmatpush1.msra.mxu0 0.0
      %2121 = vmatprep.subr.mxu0 0.0
      %2122 = vmatpush1.msra.mxu0 0.0
      %2123 = vmatprep.subr.mxu0 0.0
      %2124 = vmatpush1.msra.mxu0 0.0
      %2125 = vmatprep.subr.mxu0 0.0
      %2126 = vmatpush1.msra.mxu0 0.0
      %2127 = vmatprep.subr.mxu0 0.0
      %2128 = vmatpush1.msra.mxu0 0.0
      %2129 = vmatprep.subr.mxu0 0.0
      %2130 = vmatpush1.msra.mxu0 0.0
      %2131 = vmatprep.subr.mxu0 0.0
      %2132 = vmatpush1.msra.mxu0 0.0
      %2133 = vmatprep.subr.mxu0 0.0
      %2134 = vmatpush1.msra.mxu0 0.0
      %2135 = vmatprep.subr.mxu0 0.0
      %2136 = vmatpush1.msra.mxu0 0.0
      %2137 = vmatprep.subr.mxu0 0.0
      %2138 = vmatpush1.msra.mxu0 0.0
      %2139 = vmatprep.subr.mxu0 0.0
      %2140 = vmatpush1.msra.mxu0 0.0
      %2141 = vmatprep.subr.mxu0 0.0
      %2142 = vmatpush1.msra.mxu0 0.0
      %2143 = vmatprep.subr.mxu0 0.0
      %2144 = vmatpush1.msra.mxu0 0.0
      %2145 = vmatprep.subr.mxu0 0.0
      %2146 = vmatpush1.msra.mxu0 0.0
      %2147 = vmatprep.subr.mxu0 0.0
      %2148 = vmatpush1.msra.mxu0 0.0
      %2149 = vmatprep.subr.mxu0 0.0
      %2150 = vmatpush1.msra.mxu0 0.0
      %2151 = vmatprep.subr.mxu0 0.0
      %2152 = vmatpush1.msra.mxu0 0.0
      %2153 = vmatprep.subr.mxu0 0.0
      %2154 = vmatpush1.msra.mxu0 0.0
      %2155 = vmatprep.mubr.f32.mxu0 0.0
      %2156 = vmatmul.mubr.f32.gmra.mrb[0].mxu0 %v2089
      %v2157 = vpop.f32.mrb[0].mxu0
      %v2158 = vadd.f32 0.0, %v2157
      %v2159 = vpop.f32.mrb[0].mxu0
      %2160 = vdwg.mxu0
      %v2162 = vsel %vm1926, %v2004, 0
      %2164 = vmatprep.subr.mxu0 0.0
      %2165 = vmatpush1.msra.mxu0 %v1308
      %2166 = vmatprep.subr.mxu0 0.0
      %2167 = vmatpush1.msra.mxu0 0.0
      %2168 = vmatprep.subr.mxu0 0.0
      %2169 = vmatpush1.msra.mxu0 0.0
      %2170 = vmatprep.subr.mxu0 0.0
      %2171 = vmatpush1.msra.mxu0 0.0
      %2172 = vmatprep.subr.mxu0 0.0
      %2173 = vmatpush1.msra.mxu0 0.0
      %2174 = vmatprep.subr.mxu0 0.0
      %2175 = vmatpush1.msra.mxu0 0.0
      %2176 = vmatprep.subr.mxu0 0.0
      %2177 = vmatpush1.msra.mxu0 0.0
      %2178 = vmatprep.subr.mxu0 0.0
      %2179 = vmatpush1.msra.mxu0 0.0
      %2180 = vmatprep.subr.mxu0 0.0
      %2181 = vmatpush1.msra.mxu0 0.0
      %2182 = vmatprep.subr.mxu0 0.0
      %2183 = vmatpush1.msra.mxu0 0.0
      %2184 = vmatprep.subr.mxu0 0.0
      %2185 = vmatpush1.msra.mxu0 0.0
      %2186 = vmatprep.subr.mxu0 0.0
      %2187 = vmatpush1.msra.mxu0 0.0
      %2188 = vmatprep.subr.mxu0 0.0
      %2189 = vmatpush1.msra.mxu0 0.0
      %2190 = vmatprep.subr.mxu0 0.0
      %2191 = vmatpush1.msra.mxu0 0.0
      %2192 = vmatprep.subr.mxu0 0.0
      %2193 = vmatpush1.msra.mxu0 0.0
      %2194 = vmatprep.subr.mxu0 0.0
      %2195 = vmatpush1.msra.mxu0 0.0
      %2196 = vmatprep.subr.mxu0 0.0
      %2197 = vmatpush1.msra.mxu0 0.0
      %2198 = vmatprep.subr.mxu0 0.0
      %2199 = vmatpush1.msra.mxu0 0.0
      %2200 = vmatprep.subr.mxu0 0.0
      %2201 = vmatpush1.msra.mxu0 0.0
      %2202 = vmatprep.subr.mxu0 0.0
      %2203 = vmatpush1.msra.mxu0 0.0
      %2204 = vmatprep.subr.mxu0 0.0
      %2205 = vmatpush1.msra.mxu0 0.0
      %2206 = vmatprep.subr.mxu0 0.0
      %2207 = vmatpush1.msra.mxu0 0.0
      %2208 = vmatprep.subr.mxu0 0.0
      %2209 = vmatpush1.msra.mxu0 0.0
      %2210 = vmatprep.subr.mxu0 0.0
      %2211 = vmatpush1.msra.mxu0 0.0
      %2212 = vmatprep.subr.mxu0 0.0
      %2213 = vmatpush1.msra.mxu0 0.0
      %2214 = vmatprep.subr.mxu0 0.0
      %2215 = vmatpush1.msra.mxu0 0.0
      %2216 = vmatprep.subr.mxu0 0.0
      %2217 = vmatpush1.msra.mxu0 0.0
      %2218 = vmatprep.subr.mxu0 0.0
      %2219 = vmatpush1.msra.mxu0 0.0
      %2220 = vmatprep.subr.mxu0 0.0
      %2221 = vmatpush1.msra.mxu0 0.0
      %2222 = vmatprep.subr.mxu0 0.0
      %2223 = vmatpush1.msra.mxu0 0.0
      %2224 = vmatprep.subr.mxu0 0.0
      %2225 = vmatpush1.msra.mxu0 0.0
      %2226 = vmatprep.subr.mxu0 0.0
      %2227 = vmatpush1.msra.mxu0 0.0
      %2228 = vmatprep.mubr.f32.mxu0 0.0
      %2229 = vmatmul.mubr.f32.gmra.mrb[0].mxu0 %v2162
      %v2230 = vpop.f32.mrb[0].mxu0
      %v2231 = vadd.f32 0.0, %v2230
      %v2232 = vpop.f32.mrb[0].mxu0
      %2233 = vdwg.mxu0
      %v2235 = vsel %vm1926, %v2006, 0
      %2237 = vmatprep.subr.mxu0 0.0
      %2238 = vmatpush1.msra.mxu0 %v1310
      %2239 = vmatprep.subr.mxu0 0.0
      %2240 = vmatpush1.msra.mxu0 0.0
      %2241 = vmatprep.subr.mxu0 0.0
      %2242 = vmatpush1.msra.mxu0 0.0
      %2243 = vmatprep.subr.mxu0 0.0
      %2244 = vmatpush1.msra.mxu0 0.0
      %2245 = vmatprep.subr.mxu0 0.0
      %2246 = vmatpush1.msra.mxu0 0.0
      %2247 = vmatprep.subr.mxu0 0.0
      %2248 = vmatpush1.msra.mxu0 0.0
      %2249 = vmatprep.subr.mxu0 0.0
      %2250 = vmatpush1.msra.mxu0 0.0
      %2251 = vmatprep.subr.mxu0 0.0
      %2252 = vmatpush1.msra.mxu0 0.0
      %2253 = vmatprep.subr.mxu0 0.0
      %2254 = vmatpush1.msra.mxu0 0.0
      %2255 = vmatprep.subr.mxu0 0.0
      %2256 = vmatpush1.msra.mxu0 0.0
      %2257 = vmatprep.subr.mxu0 0.0
      %2258 = vmatpush1.msra.mxu0 0.0
      %2259 = vmatprep.subr.mxu0 0.0
      %2260 = vmatpush1.msra.mxu0 0.0
      %2261 = vmatprep.subr.mxu0 0.0
      %2262 = vmatpush1.msra.mxu0 0.0
      %2263 = vmatprep.subr.mxu0 0.0
      %2264 = vmatpush1.msra.mxu0 0.0
      %2265 = vmatprep.subr.mxu0 0.0
      %2266 = vmatpush1.msra.mxu0 0.0
      %2267 = vmatprep.subr.mxu0 0.0
      %2268 = vmatpush1.msra.mxu0 0.0
      %2269 = vmatprep.subr.mxu0 0.0
      %2270 = vmatpush1.msra.mxu0 0.0
      %2271 = vmatprep.subr.mxu0 0.0
      %2272 = vmatpush1.msra.mxu0 0.0
      %2273 = vmatprep.subr.mxu0 0.0
      %2274 = vmatpush1.msra.mxu0 0.0
      %2275 = vmatprep.subr.mxu0 0.0
      %2276 = vmatpush1.msra.mxu0 0.0
      %2277 = vmatprep.subr.mxu0 0.0
      %2278 = vmatpush1.msra.mxu0 0.0
      %2279 = vmatprep.subr.mxu0 0.0
      %2280 = vmatpush1.msra.mxu0 0.0
      %2281 = vmatprep.subr.mxu0 0.0
      %2282 = vmatpush1.msra.mxu0 0.0
      %2283 = vmatprep.subr.mxu0 0.0
      %2284 = vmatpush1.msra.mxu0 0.0
      %2285 = vmatprep.subr.mxu0 0.0
      %2286 = vmatpush1.msra.mxu0 0.0
      %2287 = vmatprep.subr.mxu0 0.0
      %2288 = vmatpush1.msra.mxu0 0.0
      %2289 = vmatprep.subr.mxu0 0.0
      %2290 = vmatpush1.msra.mxu0 0.0
      %2291 = vmatprep.subr.mxu0 0.0
      %2292 = vmatpush1.msra.mxu0 0.0
      %2293 = vmatprep.subr.mxu0 0.0
      %2294 = vmatpush1.msra.mxu0 0.0
      %2295 = vmatprep.subr.mxu0 0.0
      %2296 = vmatpush1.msra.mxu0 0.0
      %2297 = vmatprep.subr.mxu0 0.0
      %2298 = vmatpush1.msra.mxu0 0.0
      %2299 = vmatprep.subr.mxu0 0.0
      %2300 = vmatpush1.msra.mxu0 0.0
      %2301 = vmatprep.mubr.f32.mxu0 0.0
      %2302 = vmatmul.mubr.f32.gmra.mrb[0].mxu0 %v2235
      %v2303 = vpop.f32.mrb[0].mxu0
      %v2304 = vadd.f32 0.0, %v2303
      %v2305 = vpop.f32.mrb[0].mxu0
      %2306 = vdwg.mxu0
      %v2308 = vsel %vm1926, %v2008, 0
      %2310 = vmatprep.subr.mxu0 0.0
      %2311 = vmatpush1.msra.mxu0 %v1314
      %2312 = vmatprep.subr.mxu0 0.0
      %2313 = vmatpush1.msra.mxu0 0.0
      %2314 = vmatprep.subr.mxu0 0.0
      %2315 = vmatpush1.msra.mxu0 0.0
      %2316 = vmatprep.subr.mxu0 0.0
      %2317 = vmatpush1.msra.mxu0 0.0
      %2318 = vmatprep.subr.mxu0 0.0
      %2319 = vmatpush1.msra.mxu0 0.0
      %2320 = vmatprep.subr.mxu0 0.0
      %2321 = vmatpush1.msra.mxu0 0.0
      %2322 = vmatprep.subr.mxu0 0.0
      %2323 = vmatpush1.msra.mxu0 0.0
      %2324 = vmatprep.subr.mxu0 0.0
      %2325 = vmatpush1.msra.mxu0 0.0
      %2326 = vmatprep.subr.mxu0 0.0
      %2327 = vmatpush1.msra.mxu0 0.0
      %2328 = vmatprep.subr.mxu0 0.0
      %2329 = vmatpush1.msra.mxu0 0.0
      %2330 = vmatprep.subr.mxu0 0.0
      %2331 = vmatpush1.msra.mxu0 0.0
      %2332 = vmatprep.subr.mxu0 0.0
      %2333 = vmatpush1.msra.mxu0 0.0
      %2334 = vmatprep.subr.mxu0 0.0
      %2335 = vmatpush1.msra.mxu0 0.0
      %2336 = vmatprep.subr.mxu0 0.0
      %2337 = vmatpush1.msra.mxu0 0.0
      %2338 = vmatprep.subr.mxu0 0.0
      %2339 = vmatpush1.msra.mxu0 0.0
      %2340 = vmatprep.subr.mxu0 0.0
      %2341 = vmatpush1.msra.mxu0 0.0
      %2342 = vmatprep.subr.mxu0 0.0
      %2343 = vmatpush1.msra.mxu0 0.0
      %2344 = vmatprep.subr.mxu0 0.0
      %2345 = vmatpush1.msra.mxu0 0.0
      %2346 = vmatprep.subr.mxu0 0.0
      %2347 = vmatpush1.msra.mxu0 0.0
      %2348 = vmatprep.subr.mxu0 0.0
      %2349 = vmatpush1.msra.mxu0 0.0
      %2350 = vmatprep.subr.mxu0 0.0
      %2351 = vmatpush1.msra.mxu0 0.0
      %2352 = vmatprep.subr.mxu0 0.0
      %2353 = vmatpush1.msra.mxu0 0.0
      %2354 = vmatprep.subr.mxu0 0.0
      %2355 = vmatpush1.msra.mxu0 0.0
      %2356 = vmatprep.subr.mxu0 0.0
      %2357 = vmatpush1.msra.mxu0 0.0
      %2358 = vmatprep.subr.mxu0 0.0
      %2359 = vmatpush1.msra.mxu0 0.0
      %2360 = vmatprep.subr.mxu0 0.0
      %2361 = vmatpush1.msra.mxu0 0.0
      %2362 = vmatprep.subr.mxu0 0.0
      %2363 = vmatpush1.msra.mxu0 0.0
      %2364 = vmatprep.subr.mxu0 0.0
      %2365 = vmatpush1.msra.mxu0 0.0
      %2366 = vmatprep.subr.mxu0 0.0
      %2367 = vmatpush1.msra.mxu0 0.0
      %2368 = vmatprep.subr.mxu0 0.0
      %2369 = vmatpush1.msra.mxu0 0.0
      %2370 = vmatprep.subr.mxu0 0.0
      %2371 = vmatpush1.msra.mxu0 0.0
      %2372 = vmatprep.subr.mxu0 0.0
      %2373 = vmatpush1.msra.mxu0 0.0
      %2374 = vmatprep.mubr.f32.mxu0 0.0
      %2375 = vmatmul.mubr.f32.gmra.mrb[0].mxu0 %v2308
      %v2376 = vpop.f32.mrb[0].mxu0
      %v2377 = vadd.f32 0.0, %v2376
      %v2378 = vpop.f32.mrb[0].mxu0
      %2379 = vdwg.mxu0
      %v2381 = vsel %vm1926, %v2010, 0
      %2383 = vmatprep.subr.mxu0 0.0
      %2384 = vmatpush1.msra.mxu0 %v1316
      %2385 = vmatprep.subr.mxu0 0.0
      %2386 = vmatpush1.msra.mxu0 0.0
      %2387 = vmatprep.subr.mxu0 0.0
      %2388 = vmatpush1.msra.mxu0 0.0
      %2389 = vmatprep.subr.mxu0 0.0
      %2390 = vmatpush1.msra.mxu0 0.0
      %2391 = vmatprep.subr.mxu0 0.0
      %2392 = vmatpush1.msra.mxu0 0.0
      %2393 = vmatprep.subr.mxu0 0.0
      %2394 = vmatpush1.msra.mxu0 0.0
      %2395 = vmatprep.subr.mxu0 0.0
      %2396 = vmatpush1.msra.mxu0 0.0
      %2397 = vmatprep.subr.mxu0 0.0
      %2398 = vmatpush1.msra.mxu0 0.0
      %2399 = vmatprep.subr.mxu0 0.0
      %2400 = vmatpush1.msra.mxu0 0.0
      %2401 = vmatprep.subr.mxu0 0.0
      %2402 = vmatpush1.msra.mxu0 0.0
      %2403 = vmatprep.subr.mxu0 0.0
      %2404 = vmatpush1.msra.mxu0 0.0
      %2405 = vmatprep.subr.mxu0 0.0
      %2406 = vmatpush1.msra.mxu0 0.0
      %2407 = vmatprep.subr.mxu0 0.0
      %2408 = vmatpush1.msra.mxu0 0.0
      %2409 = vmatprep.subr.mxu0 0.0
      %2410 = vmatpush1.msra.mxu0 0.0
      %2411 = vmatprep.subr.mxu0 0.0
      %2412 = vmatpush1.msra.mxu0 0.0
      %2413 = vmatprep.subr.mxu0 0.0
      %2414 = vmatpush1.msra.mxu0 0.0
      %2415 = vmatprep.subr.mxu0 0.0
      %2416 = vmatpush1.msra.mxu0 0.0
      %2417 = vmatprep.subr.mxu0 0.0
      %2418 = vmatpush1.msra.mxu0 0.0
      %2419 = vmatprep.subr.mxu0 0.0
      %2420 = vmatpush1.msra.mxu0 0.0
      %2421 = vmatprep.subr.mxu0 0.0
      %2422 = vmatpush1.msra.mxu0 0.0
      %2423 = vmatprep.subr.mxu0 0.0
      %2424 = vmatpush1.msra.mxu0 0.0
      %2425 = vmatprep.subr.mxu0 0.0
      %2426 = vmatpush1.msra.mxu0 0.0
      %2427 = vmatprep.subr.mxu0 0.0
      %2428 = vmatpush1.msra.mxu0 0.0
      %2429 = vmatprep.subr.mxu0 0.0
      %2430 = vmatpush1.msra.mxu0 0.0
      %2431 = vmatprep.subr.mxu0 0.0
      %2432 = vmatpush1.msra.mxu0 0.0
      %2433 = vmatprep.subr.mxu0 0.0
      %2434 = vmatpush1.msra.mxu0 0.0
      %2435 = vmatprep.subr.mxu0 0.0
      %2436 = vmatpush1.msra.mxu0 0.0
      %2437 = vmatprep.subr.mxu0 0.0
      %2438 = vmatpush1.msra.mxu0 0.0
      %2439 = vmatprep.subr.mxu0 0.0
      %2440 = vmatpush1.msra.mxu0 0.0
      %2441 = vmatprep.subr.mxu0 0.0
      %2442 = vmatpush1.msra.mxu0 0.0
      %2443 = vmatprep.subr.mxu0 0.0
      %2444 = vmatpush1.msra.mxu0 0.0
      %2445 = vmatprep.subr.mxu0 0.0
      %2446 = vmatpush1.msra.mxu0 0.0
      %2447 = vmatprep.mubr.f32.mxu0 0.0
      %2448 = vmatmul.mubr.f32.gmra.mrb[0].mxu0 %v2381
      %v2449 = vpop.f32.mrb[0].mxu0
      %v2450 = vadd.f32 0.0, %v2449
      %v2451 = vpop.f32.mrb[0].mxu0
      %2452 = vdwg.mxu0
      %v2454 = vsel %vm1926, %v2012, 0
      %2456 = vmatprep.subr.mxu0 0.0
      %2457 = vmatpush1.msra.mxu0 %v1320
      %2458 = vmatprep.subr.mxu0 0.0
      %2459 = vmatpush1.msra.mxu0 0.0
      %2460 = vmatprep.subr.mxu0 0.0
      %2461 = vmatpush1.msra.mxu0 0.0
      %2462 = vmatprep.subr.mxu0 0.0
      %2463 = vmatpush1.msra.mxu0 0.0
      %2464 = vmatprep.subr.mxu0 0.0
      %2465 = vmatpush1.msra.mxu0 0.0
      %2466 = vmatprep.subr.mxu0 0.0
      %2467 = vmatpush1.msra.mxu0 0.0
      %2468 = vmatprep.subr.mxu0 0.0
      %2469 = vmatpush1.msra.mxu0 0.0
      %2470 = vmatprep.subr.mxu0 0.0
      %2471 = vmatpush1.msra.mxu0 0.0
      %2472 = vmatprep.subr.mxu0 0.0
      %2473 = vmatpush1.msra.mxu0 0.0
      %2474 = vmatprep.subr.mxu0 0.0
      %2475 = vmatpush1.msra.mxu0 0.0
      %2476 = vmatprep.subr.mxu0 0.0
      %2477 = vmatpush1.msra.mxu0 0.0
      %2478 = vmatprep.subr.mxu0 0.0
      %2479 = vmatpush1.msra.mxu0 0.0
      %2480 = vmatprep.subr.mxu0 0.0
      %2481 = vmatpush1.msra.mxu0 0.0
      %2482 = vmatprep.subr.mxu0 0.0
      %2483 = vmatpush1.msra.mxu0 0.0
      %2484 = vmatprep.subr.mxu0 0.0
      %2485 = vmatpush1.msra.mxu0 0.0
      %2486 = vmatprep.subr.mxu0 0.0
      %2487 = vmatpush1.msra.mxu0 0.0
      %2488 = vmatprep.subr.mxu0 0.0
      %2489 = vmatpush1.msra.mxu0 0.0
      %2490 = vmatprep.subr.mxu0 0.0
      %2491 = vmatpush1.msra.mxu0 0.0
      %2492 = vmatprep.subr.mxu0 0.0
      %2493 = vmatpush1.msra.mxu0 0.0
      %2494 = vmatprep.subr.mxu0 0.0
      %2495 = vmatpush1.msra.mxu0 0.0
      %2496 = vmatprep.subr.mxu0 0.0
      %2497 = vmatpush1.msra.mxu0 0.0
      %2498 = vmatprep.subr.mxu0 0.0
      %2499 = vmatpush1.msra.mxu0 0.0
      %2500 = vmatprep.subr.mxu0 0.0
      %2501 = vmatpush1.msra.mxu0 0.0
      %2502 = vmatprep.subr.mxu0 0.0
      %2503 = vmatpush1.msra.mxu0 0.0
      %2504 = vmatprep.subr.mxu0 0.0
      %2505 = vmatpush1.msra.mxu0 0.0
      %2506 = vmatprep.subr.mxu0 0.0
      %2507 = vmatpush1.msra.mxu0 0.0
      %2508 = vmatprep.subr.mxu0 0.0
      %2509 = vmatpush1.msra.mxu0 0.0
      %2510 = vmatprep.subr.mxu0 0.0
      %2511 = vmatpush1.msra.mxu0 0.0
      %2512 = vmatprep.subr.mxu0 0.0
      %2513 = vmatpush1.msra.mxu0 0.0
      %2514 = vmatprep.subr.mxu0 0.0
      %2515 = vmatpush1.msra.mxu0 0.0
      %2516 = vmatprep.subr.mxu0 0.0
      %2517 = vmatpush1.msra.mxu0 0.0
      %2518 = vmatprep.subr.mxu0 0.0
      %2519 = vmatpush1.msra.mxu0 0.0
      %2520 = vmatprep.mubr.f32.mxu0 0.0
      %2521 = vmatmul.mubr.f32.gmra.mrb[0].mxu0 %v2454
      %v2522 = vpop.f32.mrb[0].mxu0
      %v2523 = vadd.f32 0.0, %v2522
      %v2524 = vpop.f32.mrb[0].mxu0
      %2525 = vdwg.mxu0
      %v2527 = vsel %vm1926, %v2014, 0
      %2529 = vmatprep.subr.mxu0 0.0
      %2530 = vmatpush1.msra.mxu0 %v1322
      %2531 = vmatprep.subr.mxu0 0.0
      %2532 = vmatpush1.msra.mxu0 0.0
      %2533 = vmatprep.subr.mxu0 0.0
      %2534 = vmatpush1.msra.mxu0 0.0
      %2535 = vmatprep.subr.mxu0 0.0
      %2536 = vmatpush1.msra.mxu0 0.0
      %2537 = vmatprep.subr.mxu0 0.0
      %2538 = vmatpush1.msra.mxu0 0.0
      %2539 = vmatprep.subr.mxu0 0.0
      %2540 = vmatpush1.msra.mxu0 0.0
      %2541 = vmatprep.subr.mxu0 0.0
      %2542 = vmatpush1.msra.mxu0 0.0
      %2543 = vmatprep.subr.mxu0 0.0
      %2544 = vmatpush1.msra.mxu0 0.0
      %2545 = vmatprep.subr.mxu0 0.0
      %2546 = vmatpush1.msra.mxu0 0.0
      %2547 = vmatprep.subr.mxu0 0.0
      %2548 = vmatpush1.msra.mxu0 0.0
      %2549 = vmatprep.subr.mxu0 0.0
      %2550 = vmatpush1.msra.mxu0 0.0
      %2551 = vmatprep.subr.mxu0 0.0
      %2552 = vmatpush1.msra.mxu0 0.0
      %2553 = vmatprep.subr.mxu0 0.0
      %2554 = vmatpush1.msra.mxu0 0.0
      %2555 = vmatprep.subr.mxu0 0.0
      %2556 = vmatpush1.msra.mxu0 0.0
      %2557 = vmatprep.subr.mxu0 0.0
      %2558 = vmatpush1.msra.mxu0 0.0
      %2559 = vmatprep.subr.mxu0 0.0
      %2560 = vmatpush1.msra.mxu0 0.0
      %2561 = vmatprep.subr.mxu0 0.0
      %2562 = vmatpush1.msra.mxu0 0.0
      %2563 = vmatprep.subr.mxu0 0.0
      %2564 = vmatpush1.msra.mxu0 0.0
      %2565 = vmatprep.subr.mxu0 0.0
      %2566 = vmatpush1.msra.mxu0 0.0
      %2567 = vmatprep.subr.mxu0 0.0
      %2568 = vmatpush1.msra.mxu0 0.0
      %2569 = vmatprep.subr.mxu0 0.0
      %2570 = vmatpush1.msra.mxu0 0.0
      %2571 = vmatprep.subr.mxu0 0.0
      %2572 = vmatpush1.msra.mxu0 0.0
      %2573 = vmatprep.subr.mxu0 0.0
      %2574 = vmatpush1.msra.mxu0 0.0
      %2575 = vmatprep.subr.mxu0 0.0
      %2576 = vmatpush1.msra.mxu0 0.0
      %2577 = vmatprep.subr.mxu0 0.0
      %2578 = vmatpush1.msra.mxu0 0.0
      %2579 = vmatprep.subr.mxu0 0.0
      %2580 = vmatpush1.msra.mxu0 0.0
      %2581 = vmatprep.subr.mxu0 0.0
      %2582 = vmatpush1.msra.mxu0 0.0
      %2583 = vmatprep.subr.mxu0 0.0
      %2584 = vmatpush1.msra.mxu0 0.0
      %2585 = vmatprep.subr.mxu0 0.0
      %2586 = vmatpush1.msra.mxu0 0.0
      %2587 = vmatprep.subr.mxu0 0.0
      %2588 = vmatpush1.msra.mxu0 0.0
      %2589 = vmatprep.subr.mxu0 0.0
      %2590 = vmatpush1.msra.mxu0 0.0
      %2591 = vmatprep.subr.mxu0 0.0
      %2592 = vmatpush1.msra.mxu0 0.0
      %2593 = vmatprep.mubr.f32.mxu0 0.0
      %2594 = vmatmul.mubr.f32.gmra.mrb[0].mxu0 %v2527
      %v2595 = vpop.f32.mrb[0].mxu0
      %v2596 = vadd.f32 0.0, %v2595
      %v2597 = vpop.f32.mrb[0].mxu0
      %2598 = vdwg.mxu0
      %v2599 = vpack.c.bf16 %v2158, %v2085
      %v2600 = vpack.c.bf16 %v2304, %v2231
      %v2601 = vpack.c.bf16 %v2450, %v2377
      %v2602 = vpack.c.bf16 %v2596, %v2523
      %v2603 = vld [vmem:[%s987] sm:$0xf]
      %v2604 = vld [vmem:[%s987 + $0x4] sm:$0xf]
      %v2605 = vld [vmem:[%s987 + $0x8] sm:$0xf]
      %v2606 = vld [vmem:[%s987 + $0xc] sm:$0xf]
      %v2607 = vld [vmem:[%s987 + $0x10] sm:$0xf]
      %v2608 = vld [vmem:[%s987 + $0x14] sm:$0xf]
      %v2609 = vld [vmem:[%s987 + $0x18] sm:$0xf]
      %v2610 = vld [vmem:[%s987 + $0x1c] sm:$0xf]
      %v2613 = vunpack.c.l.b16 %v2603
      %v2614 = vunpack.c.l.b16 %v2604
      %v2615 = vpack.c.b16 %v2614, %v2613
      %v2618 = vsel %vm1325, %v2599, 0
      %2620 = vmatprep.subr.bf16.mxu0 0
      %2621 = vmatpush1.bf16.msra.mxu0 %v2615
      %2622 = vmatprep.subr.bf16.mxu0 0
      %2623 = vmatpush1.bf16.msra.mxu0 0
      %2624 = vmatprep.subr.bf16.mxu0 0
      %2625 = vmatpush1.bf16.msra.mxu0 0
      %2626 = vmatprep.subr.bf16.mxu0 0
      %2627 = vmatpush1.bf16.msra.mxu0 0
      %2628 = vmatprep.subr.bf16.mxu0 0
      %2629 = vmatpush1.bf16.msra.mxu0 0
      %2630 = vmatprep.subr.bf16.mxu0 0
      %2631 = vmatpush1.bf16.msra.mxu0 0
      %2632 = vmatprep.subr.bf16.mxu0 0
      %2633 = vmatpush1.bf16.msra.mxu0 0
      %2634 = vmatprep.subr.bf16.mxu0 0
      %2635 = vmatpush1.bf16.msra.mxu0 0
      %2636 = vmatprep.subr.bf16.mxu0 0
      %2637 = vmatpush1.bf16.msra.mxu0 0
      %2638 = vmatprep.subr.bf16.mxu0 0
      %2639 = vmatpush1.bf16.msra.mxu0 0
      %2640 = vmatprep.subr.bf16.mxu0 0
      %2641 = vmatpush1.bf16.msra.mxu0 0
      %2642 = vmatprep.subr.bf16.mxu0 0
      %2643 = vmatpush1.bf16.msra.mxu0 0
      %2644 = vmatprep.subr.bf16.mxu0 0
      %2645 = vmatpush1.bf16.msra.mxu0 0
      %2646 = vmatprep.subr.bf16.mxu0 0
      %2647 = vmatpush1.bf16.msra.mxu0 0
      %2648 = vmatprep.subr.bf16.mxu0 0
      %2649 = vmatpush1.bf16.msra.mxu0 0
      %2650 = vmatprep.subr.bf16.mxu0 0
      %2651 = vmatpush1.bf16.msra.mxu0 0
      %2652 = vmatprep.mubr.bf16.mxu0 0
      %2653 = vmatmul.mubr.bf16.gmra.mrb[0].mxu0 %v2618
      %v2654 = vpop.f32.mrb[0].mxu0
      %v2655 = vadd.f32 0.0, %v2654
      %v2656 = vpop.f32.mrb[0].mxu0
      %v2657 = vpop.f32.mrb[0].mxu0
      %v2658 = vadd.f32 0.0, %v2657
      %v2659 = vpop.f32.mrb[0].mxu0
      %2660 = vdwg.mxu0
      %v2663 = vunpack.c.l.b16 %v2605
      %v2664 = vunpack.c.l.b16 %v2606
      %v2665 = vpack.c.b16 %v2664, %v2663
      %v2668 = vsel %vm1325, %v2600, 0
      %2670 = vmatprep.subr.bf16.mxu0 0
      %2671 = vmatpush1.bf16.msra.mxu0 %v2665
      %2672 = vmatprep.subr.bf16.mxu0 0
      %2673 = vmatpush1.bf16.msra.mxu0 0
      %2674 = vmatprep.subr.bf16.mxu0 0
      %2675 = vmatpush1.bf16.msra.mxu0 0
      %2676 = vmatprep.subr.bf16.mxu0 0
      %2677 = vmatpush1.bf16.msra.mxu0 0
      %2678 = vmatprep.subr.bf16.mxu0 0
      %2679 = vmatpush1.bf16.msra.mxu0 0
      %2680 = vmatprep.subr.bf16.mxu0 0
      %2681 = vmatpush1.bf16.msra.mxu0 0
      %2682 = vmatprep.subr.bf16.mxu0 0
      %2683 = vmatpush1.bf16.msra.mxu0 0
      %2684 = vmatprep.subr.bf16.mxu0 0
      %2685 = vmatpush1.bf16.msra.mxu0 0
      %2686 = vmatprep.subr.bf16.mxu0 0
      %2687 = vmatpush1.bf16.msra.mxu0 0
      %2688 = vmatprep.subr.bf16.mxu0 0
      %2689 = vmatpush1.bf16.msra.mxu0 0
      %2690 = vmatprep.subr.bf16.mxu0 0
      %2691 = vmatpush1.bf16.msra.mxu0 0
      %2692 = vmatprep.subr.bf16.mxu0 0
      %2693 = vmatpush1.bf16.msra.mxu0 0
      %2694 = vmatprep.subr.bf16.mxu0 0
      %2695 = vmatpush1.bf16.msra.mxu0 0
      %2696 = vmatprep.subr.bf16.mxu0 0
      %2697 = vmatpush1.bf16.msra.mxu0 0
      %2698 = vmatprep.subr.bf16.mxu0 0
      %2699 = vmatpush1.bf16.msra.mxu0 0
      %2700 = vmatprep.subr.bf16.mxu0 0
      %2701 = vmatpush1.bf16.msra.mxu0 0
      %2702 = vmatprep.mubr.bf16.mxu0 0
      %2703 = vmatmul.mubr.bf16.gmra.mrb[0].mxu0 %v2668
      %v2704 = vpop.f32.mrb[0].mxu0
      %v2705 = vadd.f32 0.0, %v2704
      %v2706 = vpop.f32.mrb[0].mxu0
      %v2707 = vpop.f32.mrb[0].mxu0
      %v2708 = vadd.f32 0.0, %v2707
      %v2709 = vpop.f32.mrb[0].mxu0
      %2710 = vdwg.mxu0
      %v2713 = vunpack.c.l.b16 %v2607
      %v2714 = vunpack.c.l.b16 %v2608
      %v2715 = vpack.c.b16 %v2714, %v2713
      %v2718 = vsel %vm1325, %v2601, 0
      %2720 = vmatprep.subr.bf16.mxu0 0
      %2721 = vmatpush1.bf16.msra.mxu0 %v2715
      %2722 = vmatprep.subr.bf16.mxu0 0
      %2723 = vmatpush1.bf16.msra.mxu0 0
      %2724 = vmatprep.subr.bf16.mxu0 0
      %2725 = vmatpush1.bf16.msra.mxu0 0
      %2726 = vmatprep.subr.bf16.mxu0 0
      %2727 = vmatpush1.bf16.msra.mxu0 0
      %2728 = vmatprep.subr.bf16.mxu0 0
      %2729 = vmatpush1.bf16.msra.mxu0 0
      %2730 = vmatprep.subr.bf16.mxu0 0
      %2731 = vmatpush1.bf16.msra.mxu0 0
      %2732 = vmatprep.subr.bf16.mxu0 0
      %2733 = vmatpush1.bf16.msra.mxu0 0
      %2734 = vmatprep.subr.bf16.mxu0 0
      %2735 = vmatpush1.bf16.msra.mxu0 0
      %2736 = vmatprep.subr.bf16.mxu0 0
      %2737 = vmatpush1.bf16.msra.mxu0 0
      %2738 = vmatprep.subr.bf16.mxu0 0
      %2739 = vmatpush1.bf16.msra.mxu0 0
      %2740 = vmatprep.subr.bf16.mxu0 0
      %2741 = vmatpush1.bf16.msra.mxu0 0
      %2742 = vmatprep.subr.bf16.mxu0 0
      %2743 = vmatpush1.bf16.msra.mxu0 0
      %2744 = vmatprep.subr.bf16.mxu0 0
      %2745 = vmatpush1.bf16.msra.mxu0 0
      %2746 = vmatprep.subr.bf16.mxu0 0
      %2747 = vmatpush1.bf16.msra.mxu0 0
      %2748 = vmatprep.subr.bf16.mxu0 0
      %2749 = vmatpush1.bf16.msra.mxu0 0
      %2750 = vmatprep.subr.bf16.mxu0 0
      %2751 = vmatpush1.bf16.msra.mxu0 0
      %2752 = vmatprep.mubr.bf16.mxu0 0
      %2753 = vmatmul.mubr.bf16.gmra.mrb[0].mxu0 %v2718
      %v2754 = vpop.f32.mrb[0].mxu0
      %v2755 = vadd.f32 0.0, %v2754
      %v2756 = vpop.f32.mrb[0].mxu0
      %v2757 = vpop.f32.mrb[0].mxu0
      %v2758 = vadd.f32 0.0, %v2757
      %v2759 = vpop.f32.mrb[0].mxu0
      %2760 = vdwg.mxu0
      %v2763 = vunpack.c.l.b16 %v2609
      %v2764 = vunpack.c.l.b16 %v2610
      %v2765 = vpack.c.b16 %v2764, %v2763
      %v2768 = vsel %vm1325, %v2602, 0
      %2770 = vmatprep.subr.bf16.mxu0 0
      %2771 = vmatpush1.bf16.msra.mxu0 %v2765
      %2772 = vmatprep.subr.bf16.mxu0 0
      %2773 = vmatpush1.bf16.msra.mxu0 0
      %2774 = vmatprep.subr.bf16.mxu0 0
      %2775 = vmatpush1.bf16.msra.mxu0 0
      %2776 = vmatprep.subr.bf16.mxu0 0
      %2777 = vmatpush1.bf16.msra.mxu0 0
      %2778 = vmatprep.subr.bf16.mxu0 0
      %2779 = vmatpush1.bf16.msra.mxu0 0
      %2780 = vmatprep.subr.bf16.mxu0 0
      %2781 = vmatpush1.bf16.msra.mxu0 0
      %2782 = vmatprep.subr.bf16.mxu0 0
      %2783 = vmatpush1.bf16.msra.mxu0 0
      %2784 = vmatprep.subr.bf16.mxu0 0
      %2785 = vmatpush1.bf16.msra.mxu0 0
      %2786 = vmatprep.subr.bf16.mxu0 0
      %2787 = vmatpush1.bf16.msra.mxu0 0
      %2788 = vmatprep.subr.bf16.mxu0 0
      %2789 = vmatpush1.bf16.msra.mxu0 0
      %2790 = vmatprep.subr.bf16.mxu0 0
      %2791 = vmatpush1.bf16.msra.mxu0 0
      %2792 = vmatprep.subr.bf16.mxu0 0
      %2793 = vmatpush1.bf16.msra.mxu0 0
      %2794 = vmatprep.subr.bf16.mxu0 0
      %2795 = vmatpush1.bf16.msra.mxu0 0
      %2796 = vmatprep.subr.bf16.mxu0 0
      %2797 = vmatpush1.bf16.msra.mxu0 0
      %2798 = vmatprep.subr.bf16.mxu0 0
      %2799 = vmatpush1.bf16.msra.mxu0 0
      %2800 = vmatprep.subr.bf16.mxu0 0
      %2801 = vmatpush1.bf16.msra.mxu0 0
      %2802 = vmatprep.mubr.bf16.mxu0 0
      %2803 = vmatmul.mubr.bf16.gmra.mrb[0].mxu0 %v2768
      %v2804 = vpop.f32.mrb[0].mxu0
      %v2805 = vadd.f32 0.0, %v2804
      %v2806 = vpop.f32.mrb[0].mxu0
      %v2807 = vpop.f32.mrb[0].mxu0
      %v2808 = vadd.f32 0.0, %v2807
      %v2809 = vpop.f32.mrb[0].mxu0
      %2810 = vdwg.mxu0
      %v2811 = vsel %vm1072, %v2655, 0.0
      %v2812 = vsel %vm1072, %v2705, 0.0
      %v2813 = vadd.f32 %v2811, %v2812
      %v2814 = vsel %vm1072, %v2755, 0.0
      %v2815 = vadd.f32 %v2813, %v2814
      %v2816 = vsel %vm1072, %v2805, 0.0
      %v2817 = vadd.f32 %v2815, %v2816
      %v2818 = vsel %vm1072, %v2658, 0.0
      %v2819 = vsel %vm1072, %v2708, 0.0
      %v2820 = vadd.f32 %v2818, %v2819
      %v2821 = vsel %vm1072, %v2758, 0.0
      %v2822 = vadd.f32 %v2820, %v2821
      %v2823 = vsel %vm1072, %v2808, 0.0
      %v2824 = vadd.f32 %v2822, %v2823
      %v2825 = vld [vmem:[%s990] sm:$0x1]
      %v2827 = vlaneseq
      %v2828 = vshrl.u32 %v2827, 7
      %v2829 = vsub.s32 0, %v2828
      %v2830 = vrot.slane %v2825, %v2829
      %v2832 = vadd.f32 %v2817, %v2830
      %v2833 = vadd.f32 %v2824, %v2830
      %v2834 = vadd.f32 %v1030, %v2832
      %v2835 = vadd.f32 %v1031, %v2833
      %v2836 = vld [vmem:[%s993] sm:$0x1]
      %v2837 = vld [vmem:[%s996] sm:$0x1]
      %v2838 = vsel %vm1072, %v2834, 0.0
      %2839 = vadd.xlane.f32.xlu0 %v2838
      %v2840 = vpop.xlane.xlu0 %2839
      %v2841 = vsel %vm1072, %v2835, 0.0
      %2842 = vadd.xlane.f32.xlu0 %v2841
      %v2843 = vpop.xlane.xlu0 %2842
      %v2844 = vrcp.pop 64.0
      %v2845 = vmul.f32 %v2840, %v2844
      %v2846 = vmul.f32 %v2843, %v2844
      %v2847 = vsub.f32 %v2834, %v2845
      %v2848 = vsub.f32 %v2835, %v2846
      %v2849 = vmul.f32 %v2847, %v2847
      %v2850 = vmul.f32 %v2848, %v2848
      %v2851 = vsel %vm1072, %v2849, 0.0
      %2852 = vadd.xlane.f32.xlu0 %v2851
      %v2853 = vpop.xlane.xlu0 %2852
      %v2854 = vsel %vm1072, %v2850, 0.0
      %2855 = vadd.xlane.f32.xlu0 %v2854
      %v2856 = vpop.xlane.xlu0 %2855
      %v2857 = vmul.f32 %v2853, %v2844
      %v2858 = vmul.f32 %v2856, %v2844
      %v2859 = vadd.f32 %v2857, 1e-05
      %v2860 = vadd.f32 %v2858, 1e-05
      %v2861 = vrsqrt.pop %v2859
      %v2862 = vrsqrt.pop %v2860
      %v2863 = vmul.f32 %v2847, %v2861
      %v2864 = vmul.f32 %v2848, %v2862
      %v2866 = vlaneseq
      %v2867 = vshrl.u32 %v2866, 7
      %v2868 = vsub.s32 0, %v2867
      %v2869 = vrot.slane %v2836, %v2868
      %v2871 = vmul.f32 %v2863, %v2869
      %v2872 = vmul.f32 %v2864, %v2869
      %v2874 = vlaneseq
      %v2875 = vshrl.u32 %v2874, 7
      %v2876 = vsub.s32 0, %v2875
      %v2877 = vrot.slane %v2837, %v2876
      %v2879 = vadd.f32 %v2871, %v2877
      %v2880 = vadd.f32 %v2872, %v2877
      %v2881 = vpack.c.bf16 %v2880, %v2879
      %v2882 = vld [vmem:[%s1001] sm:$0xff]
      %v2883 = vld [vmem:[%s1001 + $0x8] sm:$0xff]
      %v2884 = vld [vmem:[%s1001 + $0x10] sm:$0xff]
      %v2885 = vld [vmem:[%s1001 + $0x18] sm:$0xff]
      %v2886 = vld [vmem:[%s1001 + $0x20] sm:$0xff]
      %v2887 = vld [vmem:[%s1001 + $0x28] sm:$0xff]
      %v2888 = vld [vmem:[%s1001 + $0x30] sm:$0xff]
      %v2889 = vld [vmem:[%s1001 + $0x38] sm:$0xff]
      %v2890 = vld [vmem:[%s1001 + $0x40] sm:$0xff]
      %v2891 = vld [vmem:[%s1001 + $0x48] sm:$0xff]
      %v2892 = vld [vmem:[%s1001 + $0x50] sm:$0xff]
      %v2893 = vld [vmem:[%s1001 + $0x58] sm:$0xff]
      %v2894 = vld [vmem:[%s1001 + $0x60] sm:$0xff]
      %v2895 = vld [vmem:[%s1001 + $0x68] sm:$0xff]
      %v2896 = vld [vmem:[%s1001 + $0x70] sm:$0xff]
      %v2897 = vld [vmem:[%s1001 + $0x78] sm:$0xff]
      %v2898 = vld [vmem:[%s1001 + $0x80] sm:$0xff]
      %v2899 = vld [vmem:[%s1001 + $0x88] sm:$0xff]
      %v2900 = vld [vmem:[%s1001 + $0x90] sm:$0xff]
      %v2901 = vld [vmem:[%s1001 + $0x98] sm:$0xff]
      %v2902 = vld [vmem:[%s1001 + $0xa0] sm:$0xff]
      %v2903 = vld [vmem:[%s1001 + $0xa8] sm:$0xff]
      %v2904 = vld [vmem:[%s1001 + $0xb0] sm:$0xff]
      %v2905 = vld [vmem:[%s1001 + $0xb8] sm:$0xff]
      %v2906 = vld [vmem:[%s1001 + $0xc0] sm:$0xff]
      %v2907 = vld [vmem:[%s1001 + $0xc8] sm:$0xff]
      %v2908 = vld [vmem:[%s1001 + $0xd0] sm:$0xff]
      %v2909 = vld [vmem:[%s1001 + $0xd8] sm:$0xff]
      %v2910 = vld [vmem:[%s1001 + $0xe0] sm:$0xff]
      %v2911 = vld [vmem:[%s1001 + $0xe8] sm:$0xff]
      %v2912 = vld [vmem:[%s1001 + $0xf0] sm:$0xff]
      %v2913 = vld [vmem:[%s1001 + $0xf8] sm:$0xff]
      %v2914 = vld [vmem:[%s1001 + $0x100] sm:$0xff]
      %v2915 = vld [vmem:[%s1001 + $0x108] sm:$0xff]
      %v2916 = vld [vmem:[%s1001 + $0x110] sm:$0xff]
      %v2917 = vld [vmem:[%s1001 + $0x118] sm:$0xff]
      %v2918 = vld [vmem:[%s1001 + $0x120] sm:$0xff]
      %v2919 = vld [vmem:[%s1001 + $0x128] sm:$0xff]
      %v2920 = vld [vmem:[%s1001 + $0x130] sm:$0xff]
      %v2921 = vld [vmem:[%s1001 + $0x138] sm:$0xff]
      %v2922 = vld [vmem:[%s1001 + $0x140] sm:$0xff]
      %v2923 = vld [vmem:[%s1001 + $0x148] sm:$0xff]
      %v2924 = vld [vmem:[%s1001 + $0x150] sm:$0xff]
      %v2925 = vld [vmem:[%s1001 + $0x158] sm:$0xff]
      %v2926 = vld [vmem:[%s1001 + $0x160] sm:$0xff]
      %v2927 = vld [vmem:[%s1001 + $0x168] sm:$0xff]
      %v2928 = vld [vmem:[%s1001 + $0x170] sm:$0xff]
      %v2929 = vld [vmem:[%s1001 + $0x178] sm:$0xff]
      %v2930 = vld [vmem:[%s1001 + $0x180] sm:$0xff]
      %v2931 = vld [vmem:[%s1001 + $0x188] sm:$0xff]
      %v2932 = vld [vmem:[%s1001 + $0x190] sm:$0xff]
      %v2933 = vld [vmem:[%s1001 + $0x198] sm:$0xff]
      %v2934 = vld [vmem:[%s1001 + $0x1a0] sm:$0xff]
      %v2935 = vld [vmem:[%s1001 + $0x1a8] sm:$0xff]
      %v2936 = vld [vmem:[%s1001 + $0x1b0] sm:$0xff]
      %v2937 = vld [vmem:[%s1001 + $0x1b8] sm:$0xff]
      %v2938 = vld [vmem:[%s1001 + $0x1c0] sm:$0xff]
      %v2939 = vld [vmem:[%s1001 + $0x1c8] sm:$0xff]
      %v2940 = vld [vmem:[%s1001 + $0x1d0] sm:$0xff]
      %v2941 = vld [vmem:[%s1001 + $0x1d8] sm:$0xff]
      %v2942 = vld [vmem:[%s1001 + $0x1e0] sm:$0xff]
      %v2943 = vld [vmem:[%s1001 + $0x1e8] sm:$0xff]
      %v2944 = vld [vmem:[%s1001 + $0x1f0] sm:$0xff]
      %v2945 = vld [vmem:[%s1001 + $0x1f8] sm:$0xff]
      %v2946 = vld [vmem:[%s1005] sm:$0xff]
      %v2947 = vld [vmem:[%s1005 + $0x8] sm:$0xff]
      %v2950 = vlaneseq
      %v2951 = vshrl.u32 %v2950, 7
      %v2952 = vsub.s32 0, %v2951
      %v2953 = vrot.slane %v2946, %v2952
      %v2954 = vlaneseq
      %v2955 = vshrl.u32 %v2954, 7
      %v2956 = vsub.s32 1, %v2955
      %v2957 = vrot.slane %v2946, %v2956
      %v2958 = vlaneseq
      %v2959 = vshrl.u32 %v2958, 7
      %v2960 = vsub.s32 2, %v2959
      %v2961 = vrot.slane %v2946, %v2960
      %v2962 = vlaneseq
      %v2963 = vshrl.u32 %v2962, 7
      %v2964 = vsub.s32 3, %v2963
      %v2965 = vrot.slane %v2946, %v2964
      %v2966 = vlaneseq
      %v2967 = vshrl.u32 %v2966, 7
      %v2968 = vsub.s32 4, %v2967
      %v2969 = vrot.slane %v2946, %v2968
      %v2970 = vlaneseq
      %v2971 = vshrl.u32 %v2970, 7
      %v2972 = vsub.s32 5, %v2971
      %v2973 = vrot.slane %v2946, %v2972
      %v2974 = vlaneseq
      %v2975 = vshrl.u32 %v2974, 7
      %v2976 = vsub.s32 6, %v2975
      %v2977 = vrot.slane %v2946, %v2976
      %v2978 = vlaneseq
      %v2979 = vshrl.u32 %v2978, 7
      %v2980 = vsub.s32 7, %v2979
      %v2981 = vrot.slane %v2946, %v2980
      %v2982 = vlaneseq
      %v2983 = vshrl.u32 %v2982, 7
      %v2984 = vsub.s32 0, %v2983
      %v2985 = vrot.slane %v2947, %v2984
      %v2986 = vlaneseq
      %v2987 = vshrl.u32 %v2986, 7
      %v2988 = vsub.s32 1, %v2987
      %v2989 = vrot.slane %v2947, %v2988
      %v2990 = vlaneseq
      %v2991 = vshrl.u32 %v2990, 7
      %v2992 = vsub.s32 2, %v2991
      %v2993 = vrot.slane %v2947, %v2992
      %v2994 = vlaneseq
      %v2995 = vshrl.u32 %v2994, 7
      %v2996 = vsub.s32 3, %v2995
      %v2997 = vrot.slane %v2947, %v2996
      %v2998 = vlaneseq
      %v2999 = vshrl.u32 %v2998, 7
      %v3000 = vsub.s32 4, %v2999
      %v3001 = vrot.slane %v2947, %v3000
      %v3002 = vlaneseq
      %v3003 = vshrl.u32 %v3002, 7
      %v3004 = vsub.s32 5, %v3003
      %v3005 = vrot.slane %v2947, %v3004
      %v3006 = vlaneseq
      %v3007 = vshrl.u32 %v3006, 7
      %v3008 = vsub.s32 6, %v3007
      %v3009 = vrot.slane %v2947, %v3008
      %v3010 = vlaneseq
      %v3011 = vshrl.u32 %v3010, 7
      %v3012 = vsub.s32 7, %v3011
      %v3013 = vrot.slane %v2947, %v3012
      %v3094 = vunpack.c.l.b16 %v2882
      %v3095 = vunpack.c.h.b16 %v2882
      %v3096 = vunpack.c.l.b16 %v2883
      %v3097 = vunpack.c.h.b16 %v2883
      %v3098 = vunpack.c.l.b16 %v2884
      %v3099 = vunpack.c.h.b16 %v2884
      %v3100 = vunpack.c.l.b16 %v2885
      %v3101 = vunpack.c.h.b16 %v2885
      %v3102 = vunpack.c.l.b16 %v2886
      %v3103 = vunpack.c.h.b16 %v2886
      %v3104 = vunpack.c.l.b16 %v2887
      %v3105 = vunpack.c.h.b16 %v2887
      %v3106 = vunpack.c.l.b16 %v2888
      %v3107 = vunpack.c.h.b16 %v2888
      %v3108 = vunpack.c.l.b16 %v2889
      %v3109 = vunpack.c.h.b16 %v2889
      %v3110 = vunpack.c.l.b16 %v2890
      %v3111 = vunpack.c.h.b16 %v2890
      %v3112 = vunpack.c.l.b16 %v2891
      %v3113 = vunpack.c.h.b16 %v2891
      %v3114 = vunpack.c.l.b16 %v2892
      %v3115 = vunpack.c.h.b16 %v2892
      %v3116 = vunpack.c.l.b16 %v2893
      %v3117 = vunpack.c.h.b16 %v2893
      %v3118 = vunpack.c.l.b16 %v2894
      %v3119 = vunpack.c.h.b16 %v2894
      %v3120 = vunpack.c.l.b16 %v2895
      %v3121 = vunpack.c.h.b16 %v2895
      %v3122 = vunpack.c.l.b16 %v2896
      %v3123 = vunpack.c.h.b16 %v2896
      %v3124 = vunpack.c.l.b16 %v2897
      %v3125 = vunpack.c.h.b16 %v2897
      %v3126 = vunpack.c.l.b16 %v2898
      %v3127 = vunpack.c.h.b16 %v2898
      %v3128 = vunpack.c.l.b16 %v2899
      %v3129 = vunpack.c.h.b16 %v2899
      %v3130 = vunpack.c.l.b16 %v2900
      %v3131 = vunpack.c.h.b16 %v2900
      %v3132 = vunpack.c.l.b16 %v2901
      %v3133 = vunpack.c.h.b16 %v2901
      %v3134 = vunpack.c.l.b16 %v2902
      %v3135 = vunpack.c.h.b16 %v2902
      %v3136 = vunpack.c.l.b16 %v2903
      %v3137 = vunpack.c.h.b16 %v2903
      %v3138 = vunpack.c.l.b16 %v2904
      %v3139 = vunpack.c.h.b16 %v2904
      %v3140 = vunpack.c.l.b16 %v2905
      %v3141 = vunpack.c.h.b16 %v2905
      %v3142 = vunpack.c.l.b16 %v2906
      %v3143 = vunpack.c.h.b16 %v2906
      %v3144 = vunpack.c.l.b16 %v2907
      %v3145 = vunpack.c.h.b16 %v2907
      %v3146 = vunpack.c.l.b16 %v2908
      %v3147 = vunpack.c.h.b16 %v2908
      %v3148 = vunpack.c.l.b16 %v2909
      %v3149 = vunpack.c.h.b16 %v2909
      %v3150 = vunpack.c.l.b16 %v2910
      %v3151 = vunpack.c.h.b16 %v2910
      %v3152 = vunpack.c.l.b16 %v2911
      %v3153 = vunpack.c.h.b16 %v2911
      %v3154 = vunpack.c.l.b16 %v2912
      %v3155 = vunpack.c.h.b16 %v2912
      %v3156 = vunpack.c.l.b16 %v2913
      %v3157 = vunpack.c.h.b16 %v2913
      %v3158 = vunpack.c.l.b16 %v2914
      %v3159 = vunpack.c.h.b16 %v2914
      %v3160 = vunpack.c.l.b16 %v2915
      %v3161 = vunpack.c.h.b16 %v2915
      %v3162 = vunpack.c.l.b16 %v2916
      %v3163 = vunpack.c.h.b16 %v2916
      %v3164 = vunpack.c.l.b16 %v2917
      %v3165 = vunpack.c.h.b16 %v2917
      %v3166 = vunpack.c.l.b16 %v2918
      %v3167 = vunpack.c.h.b16 %v2918
      %v3168 = vunpack.c.l.b16 %v2919
      %v3169 = vunpack.c.h.b16 %v2919
      %v3170 = vunpack.c.l.b16 %v2920
      %v3171 = vunpack.c.h.b16 %v2920
      %v3172 = vunpack.c.l.b16 %v2921
      %v3173 = vunpack.c.h.b16 %v2921
      %v3174 = vunpack.c.l.b16 %v2922
      %v3175 = vunpack.c.h.b16 %v2922
      %v3176 = vunpack.c.l.b16 %v2923
      %v3177 = vunpack.c.h.b16 %v2923
      %v3178 = vunpack.c.l.b16 %v2924
      %v3179 = vunpack.c.h.b16 %v2924
      %v3180 = vunpack.c.l.b16 %v2925
      %v3181 = vunpack.c.h.b16 %v2925
      %v3182 = vunpack.c.l.b16 %v2926
      %v3183 = vunpack.c.h.b16 %v2926
      %v3184 = vunpack.c.l.b16 %v2927
      %v3185 = vunpack.c.h.b16 %v2927
      %v3186 = vunpack.c.l.b16 %v2928
      %v3187 = vunpack.c.h.b16 %v2928
      %v3188 = vunpack.c.l.b16 %v2929
      %v3189 = vunpack.c.h.b16 %v2929
      %v3190 = vunpack.c.l.b16 %v2930
      %v3191 = vunpack.c.h.b16 %v2930
      %v3192 = vunpack.c.l.b16 %v2931
      %v3193 = vunpack.c.h.b16 %v2931
      %v3194 = vunpack.c.l.b16 %v2932
      %v3195 = vunpack.c.h.b16 %v2932
      %v3196 = vunpack.c.l.b16 %v2933
      %v3197 = vunpack.c.h.b16 %v2933
      %v3198 = vunpack.c.l.b16 %v2934
      %v3199 = vunpack.c.h.b16 %v2934
      %v3200 = vunpack.c.l.b16 %v2935
      %v3201 = vunpack.c.h.b16 %v2935
      %v3202 = vunpack.c.l.b16 %v2936
      %v3203 = vunpack.c.h.b16 %v2936
      %v3204 = vunpack.c.l.b16 %v2937
      %v3205 = vunpack.c.h.b16 %v2937
      %v3206 = vunpack.c.l.b16 %v2938
      %v3207 = vunpack.c.h.b16 %v2938
      %v3208 = vunpack.c.l.b16 %v2939
      %v3209 = vunpack.c.h.b16 %v2939
      %v3210 = vunpack.c.l.b16 %v2940
      %v3211 = vunpack.c.h.b16 %v2940
      %v3212 = vunpack.c.l.b16 %v2941
      %v3213 = vunpack.c.h.b16 %v2941
      %v3214 = vunpack.c.l.b16 %v2942
      %v3215 = vunpack.c.h.b16 %v2942
      %v3216 = vunpack.c.l.b16 %v2943
      %v3217 = vunpack.c.h.b16 %v2943
      %v3218 = vunpack.c.l.b16 %v2944
      %v3219 = vunpack.c.h.b16 %v2944
      %v3220 = vunpack.c.l.b16 %v2945
      %v3221 = vunpack.c.h.b16 %v2945
      %v3222 = vpack.c.b16 %v3110, %v3094
      %v3223 = vpack.c.b16 %v3111, %v3095
      %v3224 = vpack.c.b16 %v3112, %v3096
      %v3225 = vpack.c.b16 %v3113, %v3097
      %v3226 = vpack.c.b16 %v3114, %v3098
      %v3227 = vpack.c.b16 %v3115, %v3099
      %v3228 = vpack.c.b16 %v3116, %v3100
      %v3229 = vpack.c.b16 %v3117, %v3101
      %v3230 = vpack.c.b16 %v3118, %v3102
      %v3231 = vpack.c.b16 %v3119, %v3103
      %v3232 = vpack.c.b16 %v3120, %v3104
      %v3233 = vpack.c.b16 %v3121, %v3105
      %v3234 = vpack.c.b16 %v3122, %v3106
      %v3235 = vpack.c.b16 %v3123, %v3107
      %v3236 = vpack.c.b16 %v3124, %v3108
      %v3237 = vpack.c.b16 %v3125, %v3109
      %v3238 = vpack.c.b16 %v3142, %v3126
      %v3239 = vpack.c.b16 %v3143, %v3127
      %v3240 = vpack.c.b16 %v3144, %v3128
      %v3241 = vpack.c.b16 %v3145, %v3129
      %v3242 = vpack.c.b16 %v3146, %v3130
      %v3243 = vpack.c.b16 %v3147, %v3131
      %v3244 = vpack.c.b16 %v3148, %v3132
      %v3245 = vpack.c.b16 %v3149, %v3133
      %v3246 = vpack.c.b16 %v3150, %v3134
      %v3247 = vpack.c.b16 %v3151, %v3135
      %v3248 = vpack.c.b16 %v3152, %v3136
      %v3249 = vpack.c.b16 %v3153, %v3137
      %v3250 = vpack.c.b16 %v3154, %v3138
      %v3251 = vpack.c.b16 %v3155, %v3139
      %v3252 = vpack.c.b16 %v3156, %v3140
      %v3253 = vpack.c.b16 %v3157, %v3141
      %v3254 = vpack.c.b16 %v3174, %v3158
      %v3255 = vpack.c.b16 %v3175, %v3159
      %v3256 = vpack.c.b16 %v3176, %v3160
      %v3257 = vpack.c.b16 %v3177, %v3161
      %v3258 = vpack.c.b16 %v3178, %v3162
      %v3259 = vpack.c.b16 %v3179, %v3163
      %v3260 = vpack.c.b16 %v3180, %v3164
      %v3261 = vpack.c.b16 %v3181, %v3165
      %v3262 = vpack.c.b16 %v3182, %v3166
      %v3263 = vpack.c.b16 %v3183, %v3167
      %v3264 = vpack.c.b16 %v3184, %v3168
      %v3265 = vpack.c.b16 %v3185, %v3169
      %v3266 = vpack.c.b16 %v3186, %v3170
      %v3267 = vpack.c.b16 %v3187, %v3171
      %v3268 = vpack.c.b16 %v3188, %v3172
      %v3269 = vpack.c.b16 %v3189, %v3173
      %v3270 = vpack.c.b16 %v3206, %v3190
      %v3271 = vpack.c.b16 %v3207, %v3191
      %v3272 = vpack.c.b16 %v3208, %v3192
      %v3273 = vpack.c.b16 %v3209, %v3193
      %v3274 = vpack.c.b16 %v3210, %v3194
      %v3275 = vpack.c.b16 %v3211, %v3195
      %v3276 = vpack.c.b16 %v3212, %v3196
      %v3277 = vpack.c.b16 %v3213, %v3197
      %v3278 = vpack.c.b16 %v3214, %v3198
      %v3279 = vpack.c.b16 %v3215, %v3199
      %v3280 = vpack.c.b16 %v3216, %v3200
      %v3281 = vpack.c.b16 %v3217, %v3201
      %v3282 = vpack.c.b16 %v3218, %v3202
      %v3283 = vpack.c.b16 %v3219, %v3203
      %v3284 = vpack.c.b16 %v3220, %v3204
      %v3285 = vpack.c.b16 %v3221, %v3205
      %v3351 = vsel %vm1072, %v2881, 0
      %3353 = vmatprep.subr.bf16.mxu0 %v3223
      %3354 = vmatpush1.bf16.msra.mxu0 %v3222
      %3355 = vmatprep.subr.bf16.mxu0 %v3239
      %3356 = vmatpush1.bf16.msra.mxu0 %v3238
      %3357 = vmatprep.subr.bf16.mxu0 %v3255
      %3358 = vmatpush1.bf16.msra.mxu0 %v3254
      %3359 = vmatprep.subr.bf16.mxu0 %v3271
      %3360 = vmatpush1.bf16.msra.mxu0 %v3270
      %3361 = vmatprep.subr.bf16.mxu0 0
      %3362 = vmatpush1.bf16.msra.mxu0 0
      %3363 = vmatprep.subr.bf16.mxu0 0
      %3364 = vmatpush1.bf16.msra.mxu0 0
      %3365 = vmatprep.subr.bf16.mxu0 0
      %3366 = vmatpush1.bf16.msra.mxu0 0
      %3367 = vmatprep.subr.bf16.mxu0 0
      %3368 = vmatpush1.bf16.msra.mxu0 0
      %3369 = vmatprep.subr.bf16.mxu0 0
      %3370 = vmatpush1.bf16.msra.mxu0 0
      %3371 = vmatprep.subr.bf16.mxu0 0
      %3372 = vmatpush1.bf16.msra.mxu0 0
      %3373 = vmatprep.subr.bf16.mxu0 0
      %3374 = vmatpush1.bf16.msra.mxu0 0
      %3375 = vmatprep.subr.bf16.mxu0 0
      %3376 = vmatpush1.bf16.msra.mxu0 0
      %3377 = vmatprep.subr.bf16.mxu0 0
      %3378 = vmatpush1.bf16.msra.mxu0 0
      %3379 = vmatprep.subr.bf16.mxu0 0
      %3380 = vmatpush1.bf16.msra.mxu0 0
      %3381 = vmatprep.subr.bf16.mxu0 0
      %3382 = vmatpush1.bf16.msra.mxu0 0
      %3383 = vmatprep.subr.bf16.mxu0 0
      %3384 = vmatpush1.bf16.msra.mxu0 0
      %3385 = vmatprep.mubr.bf16.mxu0 0
      %3386 = vmatmul.mubr.bf16.gmra.mrb[0].mxu0 %v3351
      %v3387 = vpop.f32.mrb[0].mxu0
      %v3388 = vadd.f32 %v2953, %v3387
      %v3389 = vpop.f32.mrb[0].mxu0
      %v3390 = vadd.f32 %v2957, %v3389
      %v3391 = vpop.f32.mrb[0].mxu0
      %v3392 = vadd.f32 %v2953, %v3391
      %v3393 = vpop.f32.mrb[0].mxu0
      %v3394 = vadd.f32 %v2957, %v3393
      %3395 = vdwg.mxu0
      %3396 = vmatprep.subr.bf16.mxu0 %v3225
      %3397 = vmatpush1.bf16.msra.mxu0 %v3224
      %3398 = vmatprep.subr.bf16.mxu0 %v3241
      %3399 = vmatpush1.bf16.msra.mxu0 %v3240
      %3400 = vmatprep.subr.bf16.mxu0 %v3257
      %3401 = vmatpush1.bf16.msra.mxu0 %v3256
      %3402 = vmatprep.subr.bf16.mxu0 %v3273
      %3403 = vmatpush1.bf16.msra.mxu0 %v3272
      %3404 = vmatprep.subr.bf16.mxu0 0
      %3405 = vmatpush1.bf16.msra.mxu0 0
      %3406 = vmatprep.subr.bf16.mxu0 0
      %3407 = vmatpush1.bf16.msra.mxu0 0
      %3408 = vmatprep.subr.bf16.mxu0 0
      %3409 = vmatpush1.bf16.msra.mxu0 0
      %3410 = vmatprep.subr.bf16.mxu0 0
      %3411 = vmatpush1.bf16.msra.mxu0 0
      %3412 = vmatprep.subr.bf16.mxu0 0
      %3413 = vmatpush1.bf16.msra.mxu0 0
      %3414 = vmatprep.subr.bf16.mxu0 0
      %3415 = vmatpush1.bf16.msra.mxu0 0
      %3416 = vmatprep.subr.bf16.mxu0 0
      %3417 = vmatpush1.bf16.msra.mxu0 0
      %3418 = vmatprep.subr.bf16.mxu0 0
      %3419 = vmatpush1.bf16.msra.mxu0 0
      %3420 = vmatprep.subr.bf16.mxu0 0
      %3421 = vmatpush1.bf16.msra.mxu0 0
      %3422 = vmatprep.subr.bf16.mxu0 0
      %3423 = vmatpush1.bf16.msra.mxu0 0
      %3424 = vmatprep.subr.bf16.mxu0 0
      %3425 = vmatpush1.bf16.msra.mxu0 0
      %3426 = vmatprep.subr.bf16.mxu0 0
      %3427 = vmatpush1.bf16.msra.mxu0 0
      %3428 = vmatprep.mubr.bf16.mxu0 0
      %3429 = vmatmul.mubr.bf16.gmra.mrb[0].mxu0 %v3351
      %v3430 = vpop.f32.mrb[0].mxu0
      %v3431 = vadd.f32 %v2961, %v3430
      %v3432 = vpop.f32.mrb[0].mxu0
      %v3433 = vadd.f32 %v2965, %v3432
      %v3434 = vpop.f32.mrb[0].mxu0
      %v3435 = vadd.f32 %v2961, %v3434
      %v3436 = vpop.f32.mrb[0].mxu0
      %v3437 = vadd.f32 %v2965, %v3436
      %3438 = vdwg.mxu0
      %3439 = vmatprep.subr.bf16.mxu0 %v3227
      %3440 = vmatpush1.bf16.msra.mxu0 %v3226
      %3441 = vmatprep.subr.bf16.mxu0 %v3243
      %3442 = vmatpush1.bf16.msra.mxu0 %v3242
      %3443 = vmatprep.subr.bf16.mxu0 %v3259
      %3444 = vmatpush1.bf16.msra.mxu0 %v3258
      %3445 = vmatprep.subr.bf16.mxu0 %v3275
      %3446 = vmatpush1.bf16.msra.mxu0 %v3274
      %3447 = vmatprep.subr.bf16.mxu0 0
      %3448 = vmatpush1.bf16.msra.mxu0 0
      %3449 = vmatprep.subr.bf16.mxu0 0
      %3450 = vmatpush1.bf16.msra.mxu0 0
      %3451 = vmatprep.subr.bf16.mxu0 0
      %3452 = vmatpush1.bf16.msra.mxu0 0
      %3453 = vmatprep.subr.bf16.mxu0 0
      %3454 = vmatpush1.bf16.msra.mxu0 0
      %3455 = vmatprep.subr.bf16.mxu0 0
      %3456 = vmatpush1.bf16.msra.mxu0 0
      %3457 = vmatprep.subr.bf16.mxu0 0
      %3458 = vmatpush1.bf16.msra.mxu0 0
      %3459 = vmatprep.subr.bf16.mxu0 0
      %3460 = vmatpush1.bf16.msra.mxu0 0
      %3461 = vmatprep.subr.bf16.mxu0 0
      %3462 = vmatpush1.bf16.msra.mxu0 0
      %3463 = vmatprep.subr.bf16.mxu0 0
      %3464 = vmatpush1.bf16.msra.mxu0 0
      %3465 = vmatprep.subr.bf16.mxu0 0
      %3466 = vmatpush1.bf16.msra.mxu0 0
      %3467 = vmatprep.subr.bf16.mxu0 0
      %3468 = vmatpush1.bf16.msra.mxu0 0
      %3469 = vmatprep.subr.bf16.mxu0 0
      %3470 = vmatpush1.bf16.msra.mxu0 0
      %3471 = vmatprep.mubr.bf16.mxu0 0
      %3472 = vmatmul.mubr.bf16.gmra.mrb[0].mxu0 %v3351
      %v3473 = vpop.f32.mrb[0].mxu0
      %v3474 = vadd.f32 %v2969, %v3473
      %v3475 = vpop.f32.mrb[0].mxu0
      %v3476 = vadd.f32 %v2973, %v3475
      %v3477 = vpop.f32.mrb[0].mxu0
      %v3478 = vadd.f32 %v2969, %v3477
      %v3479 = vpop.f32.mrb[0].mxu0
      %v3480 = vadd.f32 %v2973, %v3479
      %3481 = vdwg.mxu0
      %3482 = vmatprep.subr.bf16.mxu0 %v3229
      %3483 = vmatpush1.bf16.msra.mxu0 %v3228
      %3484 = vmatprep.subr.bf16.mxu0 %v3245
      %3485 = vmatpush1.bf16.msra.mxu0 %v3244
      %3486 = vmatprep.subr.bf16.mxu0 %v3261
      %3487 = vmatpush1.bf16.msra.mxu0 %v3260
      %3488 = vmatprep.subr.bf16.mxu0 %v3277
      %3489 = vmatpush1.bf16.msra.mxu0 %v3276
      %3490 = vmatprep.subr.bf16.mxu0 0
      %3491 = vmatpush1.bf16.msra.mxu0 0
      %3492 = vmatprep.subr.bf16.mxu0 0
      %3493 = vmatpush1.bf16.msra.mxu0 0
      %3494 = vmatprep.subr.bf16.mxu0 0
      %3495 = vmatpush1.bf16.msra.mxu0 0
      %3496 = vmatprep.subr.bf16.mxu0 0
      %3497 = vmatpush1.bf16.msra.mxu0 0
      %3498 = vmatprep.subr.bf16.mxu0 0
      %3499 = vmatpush1.bf16.msra.mxu0 0
      %3500 = vmatprep.subr.bf16.mxu0 0
      %3501 = vmatpush1.bf16.msra.mxu0 0
      %3502 = vmatprep.subr.bf16.mxu0 0
      %3503 = vmatpush1.bf16.msra.mxu0 0
      %3504 = vmatprep.subr.bf16.mxu0 0
      %3505 = vmatpush1.bf16.msra.mxu0 0
      %3506 = vmatprep.subr.bf16.mxu0 0
      %3507 = vmatpush1.bf16.msra.mxu0 0
      %3508 = vmatprep.subr.bf16.mxu0 0
      %3509 = vmatpush1.bf16.msra.mxu0 0
      %3510 = vmatprep.subr.bf16.mxu0 0
      %3511 = vmatpush1.bf16.msra.mxu0 0
      %3512 = vmatprep.subr.bf16.mxu0 0
      %3513 = vmatpush1.bf16.msra.mxu0 0
      %3514 = vmatprep.mubr.bf16.mxu0 0
      %3515 = vmatmul.mubr.bf16.gmra.mrb[0].mxu0 %v3351
      %v3516 = vpop.f32.mrb[0].mxu0
      %v3517 = vadd.f32 %v2977, %v3516
      %v3518 = vpop.f32.mrb[0].mxu0
      %v3519 = vadd.f32 %v2981, %v3518
      %v3520 = vpop.f32.mrb[0].mxu0
      %v3521 = vadd.f32 %v2977, %v3520
      %v3522 = vpop.f32.mrb[0].mxu0
      %v3523 = vadd.f32 %v2981, %v3522
      %3524 = vdwg.mxu0
      %3525 = vmatprep.subr.bf16.mxu0 %v3231
      %3526 = vmatpush1.bf16.msra.mxu0 %v3230
      %3527 = vmatprep.subr.bf16.mxu0 %v3247
      %3528 = vmatpush1.bf16.msra.mxu0 %v3246
      %3529 = vmatprep.subr.bf16.mxu0 %v3263
      %3530 = vmatpush1.bf16.msra.mxu0 %v3262
      %3531 = vmatprep.subr.bf16.mxu0 %v3279
      %3532 = vmatpush1.bf16.msra.mxu0 %v3278
      %3533 = vmatprep.subr.bf16.mxu0 0
      %3534 = vmatpush1.bf16.msra.mxu0 0
      %3535 = vmatprep.subr.bf16.mxu0 0
      %3536 = vmatpush1.bf16.msra.mxu0 0
      %3537 = vmatprep.subr.bf16.mxu0 0
      %3538 = vmatpush1.bf16.msra.mxu0 0
      %3539 = vmatprep.subr.bf16.mxu0 0
      %3540 = vmatpush1.bf16.msra.mxu0 0
      %3541 = vmatprep.subr.bf16.mxu0 0
      %3542 = vmatpush1.bf16.msra.mxu0 0
      %3543 = vmatprep.subr.bf16.mxu0 0
      %3544 = vmatpush1.bf16.msra.mxu0 0
      %3545 = vmatprep.subr.bf16.mxu0 0
      %3546 = vmatpush1.bf16.msra.mxu0 0
      %3547 = vmatprep.subr.bf16.mxu0 0
      %3548 = vmatpush1.bf16.msra.mxu0 0
      %3549 = vmatprep.subr.bf16.mxu0 0
      %3550 = vmatpush1.bf16.msra.mxu0 0
      %3551 = vmatprep.subr.bf16.mxu0 0
      %3552 = vmatpush1.bf16.msra.mxu0 0
      %3553 = vmatprep.subr.bf16.mxu0 0
      %3554 = vmatpush1.bf16.msra.mxu0 0
      %3555 = vmatprep.subr.bf16.mxu0 0
      %3556 = vmatpush1.bf16.msra.mxu0 0
      %3557 = vmatprep.mubr.bf16.mxu0 0
      %3558 = vmatmul.mubr.bf16.gmra.mrb[0].mxu0 %v3351
      %v3559 = vpop.f32.mrb[0].mxu0
      %v3560 = vadd.f32 %v2985, %v3559
      %v3561 = vpop.f32.mrb[0].mxu0
      %v3562 = vadd.f32 %v2989, %v3561
      %v3563 = vpop.f32.mrb[0].mxu0
      %v3564 = vadd.f32 %v2985, %v3563
      %v3565 = vpop.f32.mrb[0].mxu0
      %v3566 = vadd.f32 %v2989, %v3565
      %3567 = vdwg.mxu0
      %3568 = vmatprep.subr.bf16.mxu0 %v3233
      %3569 = vmatpush1.bf16.msra.mxu0 %v3232
      %3570 = vmatprep.subr.bf16.mxu0 %v3249
      %3571 = vmatpush1.bf16.msra.mxu0 %v3248
      %3572 = vmatprep.subr.bf16.mxu0 %v3265
      %3573 = vmatpush1.bf16.msra.mxu0 %v3264
      %3574 = vmatprep.subr.bf16.mxu0 %v3281
      %3575 = vmatpush1.bf16.msra.mxu0 %v3280
      %3576 = vmatprep.subr.bf16.mxu0 0
      %3577 = vmatpush1.bf16.msra.mxu0 0
      %3578 = vmatprep.subr.bf16.mxu0 0
      %3579 = vmatpush1.bf16.msra.mxu0 0
      %3580 = vmatprep.subr.bf16.mxu0 0
      %3581 = vmatpush1.bf16.msra.mxu0 0
      %3582 = vmatprep.subr.bf16.mxu0 0
      %3583 = vmatpush1.bf16.msra.mxu0 0
      %3584 = vmatprep.subr.bf16.mxu0 0
      %3585 = vmatpush1.bf16.msra.mxu0 0
      %3586 = vmatprep.subr.bf16.mxu0 0
      %3587 = vmatpush1.bf16.msra.mxu0 0
      %3588 = vmatprep.subr.bf16.mxu0 0
      %3589 = vmatpush1.bf16.msra.mxu0 0
      %3590 = vmatprep.subr.bf16.mxu0 0
      %3591 = vmatpush1.bf16.msra.mxu0 0
      %3592 = vmatprep.subr.bf16.mxu0 0
      %3593 = vmatpush1.bf16.msra.mxu0 0
      %3594 = vmatprep.subr.bf16.mxu0 0
      %3595 = vmatpush1.bf16.msra.mxu0 0
      %3596 = vmatprep.subr.bf16.mxu0 0
      %3597 = vmatpush1.bf16.msra.mxu0 0
      %3598 = vmatprep.subr.bf16.mxu0 0
      %3599 = vmatpush1.bf16.msra.mxu0 0
      %3600 = vmatprep.mubr.bf16.mxu0 0
      %3601 = vmatmul.mubr.bf16.gmra.mrb[0].mxu0 %v3351
      %v3602 = vpop.f32.mrb[0].mxu0
      %v3603 = vadd.f32 %v2993, %v3602
      %v3604 = vpop.f32.mrb[0].mxu0
      %v3605 = vadd.f32 %v2997, %v3604
      %v3606 = vpop.f32.mrb[0].mxu0
      %v3607 = vadd.f32 %v2993, %v3606
      %v3608 = vpop.f32.mrb[0].mxu0
      %v3609 = vadd.f32 %v2997, %v3608
      %3610 = vdwg.mxu0
      %3611 = vmatprep.subr.bf16.mxu0 %v3235
      %3612 = vmatpush1.bf16.msra.mxu0 %v3234
      %3613 = vmatprep.subr.bf16.mxu0 %v3251
      %3614 = vmatpush1.bf16.msra.mxu0 %v3250
      %3615 = vmatprep.subr.bf16.mxu0 %v3267
      %3616 = vmatpush1.bf16.msra.mxu0 %v3266
      %3617 = vmatprep.subr.bf16.mxu0 %v3283
      %3618 = vmatpush1.bf16.msra.mxu0 %v3282
      %3619 = vmatprep.subr.bf16.mxu0 0
      %3620 = vmatpush1.bf16.msra.mxu0 0
      %3621 = vmatprep.subr.bf16.mxu0 0
      %3622 = vmatpush1.bf16.msra.mxu0 0
      %3623 = vmatprep.subr.bf16.mxu0 0
      %3624 = vmatpush1.bf16.msra.mxu0 0
      %3625 = vmatprep.subr.bf16.mxu0 0
      %3626 = vmatpush1.bf16.msra.mxu0 0
      %3627 = vmatprep.subr.bf16.mxu0 0
      %3628 = vmatpush1.bf16.msra.mxu0 0
      %3629 = vmatprep.subr.bf16.mxu0 0
      %3630 = vmatpush1.bf16.msra.mxu0 0
      %3631 = vmatprep.subr.bf16.mxu0 0
      %3632 = vmatpush1.bf16.msra.mxu0 0
      %3633 = vmatprep.subr.bf16.mxu0 0
      %3634 = vmatpush1.bf16.msra.mxu0 0
      %3635 = vmatprep.subr.bf16.mxu0 0
      %3636 = vmatpush1.bf16.msra.mxu0 0
      %3637 = vmatprep.subr.bf16.mxu0 0
      %3638 = vmatpush1.bf16.msra.mxu0 0
      %3639 = vmatprep.subr.bf16.mxu0 0
      %3640 = vmatpush1.bf16.msra.mxu0 0
      %3641 = vmatprep.subr.bf16.mxu0 0
      %3642 = vmatpush1.bf16.msra.mxu0 0
      %3643 = vmatprep.mubr.bf16.mxu0 0
      %3644 = vmatmul.mubr.bf16.gmra.mrb[0].mxu0 %v3351
      %v3645 = vpop.f32.mrb[0].mxu0
      %v3646 = vadd.f32 %v3001, %v3645
      %v3647 = vpop.f32.mrb[0].mxu0
      %v3648 = vadd.f32 %v3005, %v3647
      %v3649 = vpop.f32.mrb[0].mxu0
      %v3650 = vadd.f32 %v3001, %v3649
      %v3651 = vpop.f32.mrb[0].mxu0
      %v3652 = vadd.f32 %v3005, %v3651
      %3653 = vdwg.mxu0
      %3654 = vmatprep.subr.bf16.mxu0 %v3237
      %3655 = vmatpush1.bf16.msra.mxu0 %v3236
      %3656 = vmatprep.subr.bf16.mxu0 %v3253
      %3657 = vmatpush1.bf16.msra.mxu0 %v3252
      %3658 = vmatprep.subr.bf16.mxu0 %v3269
      %3659 = vmatpush1.bf16.msra.mxu0 %v3268
      %3660 = vmatprep.subr.bf16.mxu0 %v3285
      %3661 = vmatpush1.bf16.msra.mxu0 %v3284
      %3662 = vmatprep.subr.bf16.mxu0 0
      %3663 = vmatpush1.bf16.msra.mxu0 0
      %3664 = vmatprep.subr.bf16.mxu0 0
      %3665 = vmatpush1.bf16.msra.mxu0 0
      %3666 = vmatprep.subr.bf16.mxu0 0
      %3667 = vmatpush1.bf16.msra.mxu0 0
      %3668 = vmatprep.subr.bf16.mxu0 0
      %3669 = vmatpush1.bf16.msra.mxu0 0
      %3670 = vmatprep.subr.bf16.mxu0 0
      %3671 = vmatpush1.bf16.msra.mxu0 0
      %3672 = vmatprep.subr.bf16.mxu0 0
      %3673 = vmatpush1.bf16.msra.mxu0 0
      %3674 = vmatprep.subr.bf16.mxu0 0
      %3675 = vmatpush1.bf16.msra.mxu0 0
      %3676 = vmatprep.subr.bf16.mxu0 0
      %3677 = vmatpush1.bf16.msra.mxu0 0
      %3678 = vmatprep.subr.bf16.mxu0 0
      %3679 = vmatpush1.bf16.msra.mxu0 0
      %3680 = vmatprep.subr.bf16.mxu0 0
      %3681 = vmatpush1.bf16.msra.mxu0 0
      %3682 = vmatprep.subr.bf16.mxu0 0
      %3683 = vmatpush1.bf16.msra.mxu0 0
      %3684 = vmatprep.subr.bf16.mxu0 0
      %3685 = vmatpush1.bf16.msra.mxu0 0
      %3686 = vmatprep.mubr.bf16.mxu0 0
      %3687 = vmatmul.mubr.bf16.gmra.mrb[0].mxu0 %v3351
      %v3688 = vpop.f32.mrb[0].mxu0
      %v3689 = vadd.f32 %v3009, %v3688
      %v3690 = vpop.f32.mrb[0].mxu0
      %v3691 = vadd.f32 %v3013, %v3690
      %v3692 = vpop.f32.mrb[0].mxu0
      %v3693 = vadd.f32 %v3009, %v3692
      %v3694 = vpop.f32.mrb[0].mxu0
      %v3695 = vadd.f32 %v3013, %v3694
      %3696 = vdwg.mxu0
      %v3697 = vmax.f32 %v3388, 0.0
      %v3698 = vmax.f32 %v3390, 0.0
      %v3699 = vmax.f32 %v3431, 0.0
      %v3700 = vmax.f32 %v3433, 0.0
      %v3701 = vmax.f32 %v3474, 0.0
      %v3702 = vmax.f32 %v3476, 0.0
      %v3703 = vmax.f32 %v3517, 0.0
      %v3704 = vmax.f32 %v3519, 0.0
      %v3705 = vmax.f32 %v3560, 0.0
      %v3706 = vmax.f32 %v3562, 0.0
      %v3707 = vmax.f32 %v3603, 0.0
      %v3708 = vmax.f32 %v3605, 0.0
      %v3709 = vmax.f32 %v3646, 0.0
      %v3710 = vmax.f32 %v3648, 0.0
      %v3711 = vmax.f32 %v3689, 0.0
      %v3712 = vmax.f32 %v3691, 0.0
      %v3713 = vmax.f32 %v3392, 0.0
      %v3714 = vmax.f32 %v3394, 0.0
      %v3715 = vmax.f32 %v3435, 0.0
      %v3716 = vmax.f32 %v3437, 0.0
      %v3717 = vmax.f32 %v3478, 0.0
      %v3718 = vmax.f32 %v3480, 0.0
      %v3719 = vmax.f32 %v3521, 0.0
      %v3720 = vmax.f32 %v3523, 0.0
      %v3721 = vmax.f32 %v3564, 0.0
      %v3722 = vmax.f32 %v3566, 0.0
      %v3723 = vmax.f32 %v3607, 0.0
      %v3724 = vmax.f32 %v3609, 0.0
      %v3725 = vmax.f32 %v3650, 0.0
      %v3726 = vmax.f32 %v3652, 0.0
      %v3727 = vmax.f32 %v3693, 0.0
      %v3728 = vmax.f32 %v3695, 0.0
      %v3729 = vpack.c.bf16 %v3713, %v3697
      %v3730 = vpack.c.bf16 %v3714, %v3698
      %v3731 = vpack.c.bf16 %v3715, %v3699
      %v3732 = vpack.c.bf16 %v3716, %v3700
      %v3733 = vpack.c.bf16 %v3717, %v3701
      %v3734 = vpack.c.bf16 %v3718, %v3702
      %v3735 = vpack.c.bf16 %v3719, %v3703
      %v3736 = vpack.c.bf16 %v3720, %v3704
      %v3737 = vpack.c.bf16 %v3721, %v3705
      %v3738 = vpack.c.bf16 %v3722, %v3706
      %v3739 = vpack.c.bf16 %v3723, %v3707
      %v3740 = vpack.c.bf16 %v3724, %v3708
      %v3741 = vpack.c.bf16 %v3725, %v3709
      %v3742 = vpack.c.bf16 %v3726, %v3710
      %v3743 = vpack.c.bf16 %v3727, %v3711
      %v3744 = vpack.c.bf16 %v3728, %v3712
      %v3745 = vld [vmem:[%s1010] sm:$0xf]
      %v3746 = vld [vmem:[%s1010 + $0x4] sm:$0xf]
      %v3747 = vld [vmem:[%s1010 + $0x8] sm:$0xf]
      %v3748 = vld [vmem:[%s1010 + $0xc] sm:$0xf]
      %v3749 = vld [vmem:[%s1010 + $0x10] sm:$0xf]
      %v3750 = vld [vmem:[%s1010 + $0x14] sm:$0xf]
      %v3751 = vld [vmem:[%s1010 + $0x18] sm:$0xf]
      %v3752 = vld [vmem:[%s1010 + $0x1c] sm:$0xf]
      %v3753 = vld [vmem:[%s1010 + $0x20] sm:$0xf]
      %v3754 = vld [vmem:[%s1010 + $0x24] sm:$0xf]
      %v3755 = vld [vmem:[%s1010 + $0x28] sm:$0xf]
      %v3756 = vld [vmem:[%s1010 + $0x2c] sm:$0xf]
      %v3757 = vld [vmem:[%s1010 + $0x30] sm:$0xf]
      %v3758 = vld [vmem:[%s1010 + $0x34] sm:$0xf]
      %v3759 = vld [vmem:[%s1010 + $0x38] sm:$0xf]
      %v3760 = vld [vmem:[%s1010 + $0x3c] sm:$0xf]
      %v3761 = vld [vmem:[%s1010 + $0x40] sm:$0xf]
      %v3762 = vld [vmem:[%s1010 + $0x44] sm:$0xf]
      %v3763 = vld [vmem:[%s1010 + $0x48] sm:$0xf]
      %v3764 = vld [vmem:[%s1010 + $0x4c] sm:$0xf]
      %v3765 = vld [vmem:[%s1010 + $0x50] sm:$0xf]
      %v3766 = vld [vmem:[%s1010 + $0x54] sm:$0xf]
      %v3767 = vld [vmem:[%s1010 + $0x58] sm:$0xf]
      %v3768 = vld [vmem:[%s1010 + $0x5c] sm:$0xf]
      %v3769 = vld [vmem:[%s1010 + $0x60] sm:$0xf]
      %v3770 = vld [vmem:[%s1010 + $0x64] sm:$0xf]
      %v3771 = vld [vmem:[%s1010 + $0x68] sm:$0xf]
      %v3772 = vld [vmem:[%s1010 + $0x6c] sm:$0xf]
      %v3773 = vld [vmem:[%s1010 + $0x70] sm:$0xf]
      %v3774 = vld [vmem:[%s1010 + $0x74] sm:$0xf]
      %v3775 = vld [vmem:[%s1010 + $0x78] sm:$0xf]
      %v3776 = vld [vmem:[%s1010 + $0x7c] sm:$0xf]
      %v3777 = vld [vmem:[%s1010 + $0x80] sm:$0xf]
      %v3778 = vld [vmem:[%s1010 + $0x84] sm:$0xf]
      %v3779 = vld [vmem:[%s1010 + $0x88] sm:$0xf]
      %v3780 = vld [vmem:[%s1010 + $0x8c] sm:$0xf]
      %v3781 = vld [vmem:[%s1010 + $0x90] sm:$0xf]
      %v3782 = vld [vmem:[%s1010 + $0x94] sm:$0xf]
      %v3783 = vld [vmem:[%s1010 + $0x98] sm:$0xf]
      %v3784 = vld [vmem:[%s1010 + $0x9c] sm:$0xf]
      %v3785 = vld [vmem:[%s1010 + $0xa0] sm:$0xf]
      %v3786 = vld [vmem:[%s1010 + $0xa4] sm:$0xf]
      %v3787 = vld [vmem:[%s1010 + $0xa8] sm:$0xf]
      %v3788 = vld [vmem:[%s1010 + $0xac] sm:$0xf]
      %v3789 = vld [vmem:[%s1010 + $0xb0] sm:$0xf]
      %v3790 = vld [vmem:[%s1010 + $0xb4] sm:$0xf]
      %v3791 = vld [vmem:[%s1010 + $0xb8] sm:$0xf]
      %v3792 = vld [vmem:[%s1010 + $0xbc] sm:$0xf]
      %v3793 = vld [vmem:[%s1010 + $0xc0] sm:$0xf]
      %v3794 = vld [vmem:[%s1010 + $0xc4] sm:$0xf]
      %v3795 = vld [vmem:[%s1010 + $0xc8] sm:$0xf]
      %v3796 = vld [vmem:[%s1010 + $0xcc] sm:$0xf]
      %v3797 = vld [vmem:[%s1010 + $0xd0] sm:$0xf]
      %v3798 = vld [vmem:[%s1010 + $0xd4] sm:$0xf]
      %v3799 = vld [vmem:[%s1010 + $0xd8] sm:$0xf]
      %v3800 = vld [vmem:[%s1010 + $0xdc] sm:$0xf]
      %v3801 = vld [vmem:[%s1010 + $0xe0] sm:$0xf]
      %v3802 = vld [vmem:[%s1010 + $0xe4] sm:$0xf]
      %v3803 = vld [vmem:[%s1010 + $0xe8] sm:$0xf]
      %v3804 = vld [vmem:[%s1010 + $0xec] sm:$0xf]
      %v3805 = vld [vmem:[%s1010 + $0xf0] sm:$0xf]
      %v3806 = vld [vmem:[%s1010 + $0xf4] sm:$0xf]
      %v3807 = vld [vmem:[%s1010 + $0xf8] sm:$0xf]
      %v3808 = vld [vmem:[%s1010 + $0xfc] sm:$0xf]
      %v3809 = vld [vmem:[%s1010 + $0x100] sm:$0xf]
      %v3810 = vld [vmem:[%s1010 + $0x104] sm:$0xf]
      %v3811 = vld [vmem:[%s1010 + $0x108] sm:$0xf]
      %v3812 = vld [vmem:[%s1010 + $0x10c] sm:$0xf]
      %v3813 = vld [vmem:[%s1010 + $0x110] sm:$0xf]
      %v3814 = vld [vmem:[%s1010 + $0x114] sm:$0xf]
      %v3815 = vld [vmem:[%s1010 + $0x118] sm:$0xf]
      %v3816 = vld [vmem:[%s1010 + $0x11c] sm:$0xf]
      %v3817 = vld [vmem:[%s1010 + $0x120] sm:$0xf]
      %v3818 = vld [vmem:[%s1010 + $0x124] sm:$0xf]
      %v3819 = vld [vmem:[%s1010 + $0x128] sm:$0xf]
      %v3820 = vld [vmem:[%s1010 + $0x12c] sm:$0xf]
      %v3821 = vld [vmem:[%s1010 + $0x130] sm:$0xf]
      %v3822 = vld [vmem:[%s1010 + $0x134] sm:$0xf]
      %v3823 = vld [vmem:[%s1010 + $0x138] sm:$0xf]
      %v3824 = vld [vmem:[%s1010 + $0x13c] sm:$0xf]
      %v3825 = vld [vmem:[%s1010 + $0x140] sm:$0xf]
      %v3826 = vld [vmem:[%s1010 + $0x144] sm:$0xf]
      %v3827 = vld [vmem:[%s1010 + $0x148] sm:$0xf]
      %v3828 = vld [vmem:[%s1010 + $0x14c] sm:$0xf]
      %v3829 = vld [vmem:[%s1010 + $0x150] sm:$0xf]
      %v3830 = vld [vmem:[%s1010 + $0x154] sm:$0xf]
      %v3831 = vld [vmem:[%s1010 + $0x158] sm:$0xf]
      %v3832 = vld [vmem:[%s1010 + $0x15c] sm:$0xf]
      %v3833 = vld [vmem:[%s1010 + $0x160] sm:$0xf]
      %v3834 = vld [vmem:[%s1010 + $0x164] sm:$0xf]
      %v3835 = vld [vmem:[%s1010 + $0x168] sm:$0xf]
      %v3836 = vld [vmem:[%s1010 + $0x16c] sm:$0xf]
      %v3837 = vld [vmem:[%s1010 + $0x170] sm:$0xf]
      %v3838 = vld [vmem:[%s1010 + $0x174] sm:$0xf]
      %v3839 = vld [vmem:[%s1010 + $0x178] sm:$0xf]
      %v3840 = vld [vmem:[%s1010 + $0x17c] sm:$0xf]
      %v3841 = vld [vmem:[%s1010 + $0x180] sm:$0xf]
      %v3842 = vld [vmem:[%s1010 + $0x184] sm:$0xf]
      %v3843 = vld [vmem:[%s1010 + $0x188] sm:$0xf]
      %v3844 = vld [vmem:[%s1010 + $0x18c] sm:$0xf]
      %v3845 = vld [vmem:[%s1010 + $0x190] sm:$0xf]
      %v3846 = vld [vmem:[%s1010 + $0x194] sm:$0xf]
      %v3847 = vld [vmem:[%s1010 + $0x198] sm:$0xf]
      %v3848 = vld [vmem:[%s1010 + $0x19c] sm:$0xf]
      %v3849 = vld [vmem:[%s1010 + $0x1a0] sm:$0xf]
      %v3850 = vld [vmem:[%s1010 + $0x1a4] sm:$0xf]
      %v3851 = vld [vmem:[%s1010 + $0x1a8] sm:$0xf]
      %v3852 = vld [vmem:[%s1010 + $0x1ac] sm:$0xf]
      %v3853 = vld [vmem:[%s1010 + $0x1b0] sm:$0xf]
      %v3854 = vld [vmem:[%s1010 + $0x1b4] sm:$0xf]
      %v3855 = vld [vmem:[%s1010 + $0x1b8] sm:$0xf]
      %v3856 = vld [vmem:[%s1010 + $0x1bc] sm:$0xf]
      %v3857 = vld [vmem:[%s1010 + $0x1c0] sm:$0xf]
      %v3858 = vld [vmem:[%s1010 + $0x1c4] sm:$0xf]
      %v3859 = vld [vmem:[%s1010 + $0x1c8] sm:$0xf]
      %v3860 = vld [vmem:[%s1010 + $0x1cc] sm:$0xf]
      %v3861 = vld [vmem:[%s1010 + $0x1d0] sm:$0xf]
      %v3862 = vld [vmem:[%s1010 + $0x1d4] sm:$0xf]
      %v3863 = vld [vmem:[%s1010 + $0x1d8] sm:$0xf]
      %v3864 = vld [vmem:[%s1010 + $0x1dc] sm:$0xf]
      %v3865 = vld [vmem:[%s1010 + $0x1e0] sm:$0xf]
      %v3866 = vld [vmem:[%s1010 + $0x1e4] sm:$0xf]
      %v3867 = vld [vmem:[%s1010 + $0x1e8] sm:$0xf]
      %v3868 = vld [vmem:[%s1010 + $0x1ec] sm:$0xf]
      %v3869 = vld [vmem:[%s1010 + $0x1f0] sm:$0xf]
      %v3870 = vld [vmem:[%s1010 + $0x1f4] sm:$0xf]
      %v3871 = vld [vmem:[%s1010 + $0x1f8] sm:$0xf]
      %v3872 = vld [vmem:[%s1010 + $0x1fc] sm:$0xf]
      %v3873 = vld [vmem:[%s1010 + $0x200] sm:$0xf]
      %v3874 = vld [vmem:[%s1010 + $0x204] sm:$0xf]
      %v3875 = vld [vmem:[%s1010 + $0x208] sm:$0xf]
      %v3876 = vld [vmem:[%s1010 + $0x20c] sm:$0xf]
      %v3877 = vld [vmem:[%s1010 + $0x210] sm:$0xf]
      %v3878 = vld [vmem:[%s1010 + $0x214] sm:$0xf]
      %v3879 = vld [vmem:[%s1010 + $0x218] sm:$0xf]
      %v3880 = vld [vmem:[%s1010 + $0x21c] sm:$0xf]
      %v3881 = vld [vmem:[%s1010 + $0x220] sm:$0xf]
      %v3882 = vld [vmem:[%s1010 + $0x224] sm:$0xf]
      %v3883 = vld [vmem:[%s1010 + $0x228] sm:$0xf]
      %v3884 = vld [vmem:[%s1010 + $0x22c] sm:$0xf]
      %v3885 = vld [vmem:[%s1010 + $0x230] sm:$0xf]
      %v3886 = vld [vmem:[%s1010 + $0x234] sm:$0xf]
      %v3887 = vld [vmem:[%s1010 + $0x238] sm:$0xf]
      %v3888 = vld [vmem:[%s1010 + $0x23c] sm:$0xf]
      %v3889 = vld [vmem:[%s1010 + $0x240] sm:$0xf]
      %v3890 = vld [vmem:[%s1010 + $0x244] sm:$0xf]
      %v3891 = vld [vmem:[%s1010 + $0x248] sm:$0xf]
      %v3892 = vld [vmem:[%s1010 + $0x24c] sm:$0xf]
      %v3893 = vld [vmem:[%s1010 + $0x250] sm:$0xf]
      %v3894 = vld [vmem:[%s1010 + $0x254] sm:$0xf]
      %v3895 = vld [vmem:[%s1010 + $0x258] sm:$0xf]
      %v3896 = vld [vmem:[%s1010 + $0x25c] sm:$0xf]
      %v3897 = vld [vmem:[%s1010 + $0x260] sm:$0xf]
      %v3898 = vld [vmem:[%s1010 + $0x264] sm:$0xf]
      %v3899 = vld [vmem:[%s1010 + $0x268] sm:$0xf]
      %v3900 = vld [vmem:[%s1010 + $0x26c] sm:$0xf]
      %v3901 = vld [vmem:[%s1010 + $0x270] sm:$0xf]
      %v3902 = vld [vmem:[%s1010 + $0x274] sm:$0xf]
      %v3903 = vld [vmem:[%s1010 + $0x278] sm:$0xf]
      %v3904 = vld [vmem:[%s1010 + $0x27c] sm:$0xf]
      %v3905 = vld [vmem:[%s1010 + $0x280] sm:$0xf]
      %v3906 = vld [vmem:[%s1010 + $0x284] sm:$0xf]
      %v3907 = vld [vmem:[%s1010 + $0x288] sm:$0xf]
      %v3908 = vld [vmem:[%s1010 + $0x28c] sm:$0xf]
      %v3909 = vld [vmem:[%s1010 + $0x290] sm:$0xf]
      %v3910 = vld [vmem:[%s1010 + $0x294] sm:$0xf]
      %v3911 = vld [vmem:[%s1010 + $0x298] sm:$0xf]
      %v3912 = vld [vmem:[%s1010 + $0x29c] sm:$0xf]
      %v3913 = vld [vmem:[%s1010 + $0x2a0] sm:$0xf]
      %v3914 = vld [vmem:[%s1010 + $0x2a4] sm:$0xf]
      %v3915 = vld [vmem:[%s1010 + $0x2a8] sm:$0xf]
      %v3916 = vld [vmem:[%s1010 + $0x2ac] sm:$0xf]
      %v3917 = vld [vmem:[%s1010 + $0x2b0] sm:$0xf]
      %v3918 = vld [vmem:[%s1010 + $0x2b4] sm:$0xf]
      %v3919 = vld [vmem:[%s1010 + $0x2b8] sm:$0xf]
      %v3920 = vld [vmem:[%s1010 + $0x2bc] sm:$0xf]
      %v3921 = vld [vmem:[%s1010 + $0x2c0] sm:$0xf]
      %v3922 = vld [vmem:[%s1010 + $0x2c4] sm:$0xf]
      %v3923 = vld [vmem:[%s1010 + $0x2c8] sm:$0xf]
      %v3924 = vld [vmem:[%s1010 + $0x2cc] sm:$0xf]
      %v3925 = vld [vmem:[%s1010 + $0x2d0] sm:$0xf]
      %v3926 = vld [vmem:[%s1010 + $0x2d4] sm:$0xf]
      %v3927 = vld [vmem:[%s1010 + $0x2d8] sm:$0xf]
      %v3928 = vld [vmem:[%s1010 + $0x2dc] sm:$0xf]
      %v3929 = vld [vmem:[%s1010 + $0x2e0] sm:$0xf]
      %v3930 = vld [vmem:[%s1010 + $0x2e4] sm:$0xf]
      %v3931 = vld [vmem:[%s1010 + $0x2e8] sm:$0xf]
      %v3932 = vld [vmem:[%s1010 + $0x2ec] sm:$0xf]
      %v3933 = vld [vmem:[%s1010 + $0x2f0] sm:$0xf]
      %v3934 = vld [vmem:[%s1010 + $0x2f4] sm:$0xf]
      %v3935 = vld [vmem:[%s1010 + $0x2f8] sm:$0xf]
      %v3936 = vld [vmem:[%s1010 + $0x2fc] sm:$0xf]
      %v3937 = vld [vmem:[%s1010 + $0x300] sm:$0xf]
      %v3938 = vld [vmem:[%s1010 + $0x304] sm:$0xf]
      %v3939 = vld [vmem:[%s1010 + $0x308] sm:$0xf]
      %v3940 = vld [vmem:[%s1010 + $0x30c] sm:$0xf]
      %v3941 = vld [vmem:[%s1010 + $0x310] sm:$0xf]
      %v3942 = vld [vmem:[%s1010 + $0x314] sm:$0xf]
      %v3943 = vld [vmem:[%s1010 + $0x318] sm:$0xf]
      %v3944 = vld [vmem:[%s1010 + $0x31c] sm:$0xf]
      %v3945 = vld [vmem:[%s1010 + $0x320] sm:$0xf]
      %v3946 = vld [vmem:[%s1010 + $0x324] sm:$0xf]
      %v3947 = vld [vmem:[%s1010 + $0x328] sm:$0xf]
      %v3948 = vld [vmem:[%s1010 + $0x32c] sm:$0xf]
      %v3949 = vld [vmem:[%s1010 + $0x330] sm:$0xf]
      %v3950 = vld [vmem:[%s1010 + $0x334] sm:$0xf]
      %v3951 = vld [vmem:[%s1010 + $0x338] sm:$0xf]
      %v3952 = vld [vmem:[%s1010 + $0x33c] sm:$0xf]
      %v3953 = vld [vmem:[%s1010 + $0x340] sm:$0xf]
      %v3954 = vld [vmem:[%s1010 + $0x344] sm:$0xf]
      %v3955 = vld [vmem:[%s1010 + $0x348] sm:$0xf]
      %v3956 = vld [vmem:[%s1010 + $0x34c] sm:$0xf]
      %v3957 = vld [vmem:[%s1010 + $0x350] sm:$0xf]
      %v3958 = vld [vmem:[%s1010 + $0x354] sm:$0xf]
      %v3959 = vld [vmem:[%s1010 + $0x358] sm:$0xf]
      %v3960 = vld [vmem:[%s1010 + $0x35c] sm:$0xf]
      %v3961 = vld [vmem:[%s1010 + $0x360] sm:$0xf]
      %v3962 = vld [vmem:[%s1010 + $0x364] sm:$0xf]
      %v3963 = vld [vmem:[%s1010 + $0x368] sm:$0xf]
      %v3964 = vld [vmem:[%s1010 + $0x36c] sm:$0xf]
      %v3965 = vld [vmem:[%s1010 + $0x370] sm:$0xf]
      %v3966 = vld [vmem:[%s1010 + $0x374] sm:$0xf]
      %v3967 = vld [vmem:[%s1010 + $0x378] sm:$0xf]
      %v3968 = vld [vmem:[%s1010 + $0x37c] sm:$0xf]
      %v3969 = vld [vmem:[%s1010 + $0x380] sm:$0xf]
      %v3970 = vld [vmem:[%s1010 + $0x384] sm:$0xf]
      %v3971 = vld [vmem:[%s1010 + $0x388] sm:$0xf]
      %v3972 = vld [vmem:[%s1010 + $0x38c] sm:$0xf]
      %v3973 = vld [vmem:[%s1010 + $0x390] sm:$0xf]
      %v3974 = vld [vmem:[%s1010 + $0x394] sm:$0xf]
      %v3975 = vld [vmem:[%s1010 + $0x398] sm:$0xf]
      %v3976 = vld [vmem:[%s1010 + $0x39c] sm:$0xf]
      %v3977 = vld [vmem:[%s1010 + $0x3a0] sm:$0xf]
      %v3978 = vld [vmem:[%s1010 + $0x3a4] sm:$0xf]
      %v3979 = vld [vmem:[%s1010 + $0x3a8] sm:$0xf]
      %v3980 = vld [vmem:[%s1010 + $0x3ac] sm:$0xf]
      %v3981 = vld [vmem:[%s1010 + $0x3b0] sm:$0xf]
      %v3982 = vld [vmem:[%s1010 + $0x3b4] sm:$0xf]
      %v3983 = vld [vmem:[%s1010 + $0x3b8] sm:$0xf]
      %v3984 = vld [vmem:[%s1010 + $0x3bc] sm:$0xf]
      %v3985 = vld [vmem:[%s1010 + $0x3c0] sm:$0xf]
      %v3986 = vld [vmem:[%s1010 + $0x3c4] sm:$0xf]
      %v3987 = vld [vmem:[%s1010 + $0x3c8] sm:$0xf]
      %v3988 = vld [vmem:[%s1010 + $0x3cc] sm:$0xf]
      %v3989 = vld [vmem:[%s1010 + $0x3d0] sm:$0xf]
      %v3990 = vld [vmem:[%s1010 + $0x3d4] sm:$0xf]
      %v3991 = vld [vmem:[%s1010 + $0x3d8] sm:$0xf]
      %v3992 = vld [vmem:[%s1010 + $0x3dc] sm:$0xf]
      %v3993 = vld [vmem:[%s1010 + $0x3e0] sm:$0xf]
      %v3994 = vld [vmem:[%s1010 + $0x3e4] sm:$0xf]
      %v3995 = vld [vmem:[%s1010 + $0x3e8] sm:$0xf]
      %v3996 = vld [vmem:[%s1010 + $0x3ec] sm:$0xf]
      %v3997 = vld [vmem:[%s1010 + $0x3f0] sm:$0xf]
      %v3998 = vld [vmem:[%s1010 + $0x3f4] sm:$0xf]
      %v3999 = vld [vmem:[%s1010 + $0x3f8] sm:$0xf]
      %v4000 = vld [vmem:[%s1010 + $0x3fc] sm:$0xf]
      %v4001 = vld [vmem:[%s1013] sm:$0x1]
      %v4003 = vlaneseq
      %v4004 = vshrl.u32 %v4003, 7
      %v4005 = vsub.s32 0, %v4004
      %v4006 = vrot.slane %v4001, %v4005
      %v4264 = vunpack.c.l.b16 %v3745
      %v4265 = vunpack.c.l.b16 %v3746
      %v4266 = vunpack.c.l.b16 %v3747
      %v4267 = vunpack.c.l.b16 %v3748
      %v4268 = vunpack.c.l.b16 %v3749
      %v4269 = vunpack.c.l.b16 %v3750
      %v4270 = vunpack.c.l.b16 %v3751
      %v4271 = vunpack.c.l.b16 %v3752
      %v4272 = vunpack.c.l.b16 %v3753
      %v4273 = vunpack.c.l.b16 %v3754
      %v4274 = vunpack.c.l.b16 %v3755
      %v4275 = vunpack.c.l.b16 %v3756
      %v4276 = vunpack.c.l.b16 %v3757
      %v4277 = vunpack.c.l.b16 %v3758
      %v4278 = vunpack.c.l.b16 %v3759
      %v4279 = vunpack.c.l.b16 %v3760
      %v4280 = vunpack.c.l.b16 %v3761
      %v4281 = vunpack.c.l.b16 %v3762
      %v4282 = vunpack.c.l.b16 %v3763
      %v4283 = vunpack.c.l.b16 %v3764
      %v4284 = vunpack.c.l.b16 %v3765
      %v4285 = vunpack.c.l.b16 %v3766
      %v4286 = vunpack.c.l.b16 %v3767
      %v4287 = vunpack.c.l.b16 %v3768
      %v4288 = vunpack.c.l.b16 %v3769
      %v4289 = vunpack.c.l.b16 %v3770
      %v4290 = vunpack.c.l.b16 %v3771
      %v4291 = vunpack.c.l.b16 %v3772
      %v4292 = vunpack.c.l.b16 %v3773
      %v4293 = vunpack.c.l.b16 %v3774
      %v4294 = vunpack.c.l.b16 %v3775
      %v4295 = vunpack.c.l.b16 %v3776
      %v4296 = vunpack.c.l.b16 %v3777
      %v4297 = vunpack.c.l.b16 %v3778
      %v4298 = vunpack.c.l.b16 %v3779
      %v4299 = vunpack.c.l.b16 %v3780
      %v4300 = vunpack.c.l.b16 %v3781
      %v4301 = vunpack.c.l.b16 %v3782
      %v4302 = vunpack.c.l.b16 %v3783
      %v4303 = vunpack.c.l.b16 %v3784
      %v4304 = vunpack.c.l.b16 %v3785
      %v4305 = vunpack.c.l.b16 %v3786
      %v4306 = vunpack.c.l.b16 %v3787
      %v4307 = vunpack.c.l.b16 %v3788
      %v4308 = vunpack.c.l.b16 %v3789
      %v4309 = vunpack.c.l.b16 %v3790
      %v4310 = vunpack.c.l.b16 %v3791
      %v4311 = vunpack.c.l.b16 %v3792
      %v4312 = vunpack.c.l.b16 %v3793
      %v4313 = vunpack.c.l.b16 %v3794
      %v4314 = vunpack.c.l.b16 %v3795
      %v4315 = vunpack.c.l.b16 %v3796
      %v4316 = vunpack.c.l.b16 %v3797
      %v4317 = vunpack.c.l.b16 %v3798
      %v4318 = vunpack.c.l.b16 %v3799
      %v4319 = vunpack.c.l.b16 %v3800
      %v4320 = vunpack.c.l.b16 %v3801
      %v4321 = vunpack.c.l.b16 %v3802
      %v4322 = vunpack.c.l.b16 %v3803
      %v4323 = vunpack.c.l.b16 %v3804
      %v4324 = vunpack.c.l.b16 %v3805
      %v4325 = vunpack.c.l.b16 %v3806
      %v4326 = vunpack.c.l.b16 %v3807
      %v4327 = vunpack.c.l.b16 %v3808
      %v4328 = vunpack.c.l.b16 %v3809
      %v4329 = vunpack.c.l.b16 %v3810
      %v4330 = vunpack.c.l.b16 %v3811
      %v4331 = vunpack.c.l.b16 %v3812
      %v4332 = vunpack.c.l.b16 %v3813
      %v4333 = vunpack.c.l.b16 %v3814
      %v4334 = vunpack.c.l.b16 %v3815
      %v4335 = vunpack.c.l.b16 %v3816
      %v4336 = vunpack.c.l.b16 %v3817
      %v4337 = vunpack.c.l.b16 %v3818
      %v4338 = vunpack.c.l.b16 %v3819
      %v4339 = vunpack.c.l.b16 %v3820
      %v4340 = vunpack.c.l.b16 %v3821
      %v4341 = vunpack.c.l.b16 %v3822
      %v4342 = vunpack.c.l.b16 %v3823
      %v4343 = vunpack.c.l.b16 %v3824
      %v4344 = vunpack.c.l.b16 %v3825
      %v4345 = vunpack.c.l.b16 %v3826
      %v4346 = vunpack.c.l.b16 %v3827
      %v4347 = vunpack.c.l.b16 %v3828
      %v4348 = vunpack.c.l.b16 %v3829
      %v4349 = vunpack.c.l.b16 %v3830
      %v4350 = vunpack.c.l.b16 %v3831
      %v4351 = vunpack.c.l.b16 %v3832
      %v4352 = vunpack.c.l.b16 %v3833
      %v4353 = vunpack.c.l.b16 %v3834
      %v4354 = vunpack.c.l.b16 %v3835
      %v4355 = vunpack.c.l.b16 %v3836
      %v4356 = vunpack.c.l.b16 %v3837
      %v4357 = vunpack.c.l.b16 %v3838
      %v4358 = vunpack.c.l.b16 %v3839
      %v4359 = vunpack.c.l.b16 %v3840
      %v4360 = vunpack.c.l.b16 %v3841
      %v4361 = vunpack.c.l.b16 %v3842
      %v4362 = vunpack.c.l.b16 %v3843
      %v4363 = vunpack.c.l.b16 %v3844
      %v4364 = vunpack.c.l.b16 %v3845
      %v4365 = vunpack.c.l.b16 %v3846
      %v4366 = vunpack.c.l.b16 %v3847
      %v4367 = vunpack.c.l.b16 %v3848
      %v4368 = vunpack.c.l.b16 %v3849
      %v4369 = vunpack.c.l.b16 %v3850
      %v4370 = vunpack.c.l.b16 %v3851
      %v4371 = vunpack.c.l.b16 %v3852
      %v4372 = vunpack.c.l.b16 %v3853
      %v4373 = vunpack.c.l.b16 %v3854
      %v4374 = vunpack.c.l.b16 %v3855
      %v4375 = vunpack.c.l.b16 %v3856
      %v4376 = vunpack.c.l.b16 %v3857
      %v4377 = vunpack.c.l.b16 %v3858
      %v4378 = vunpack.c.l.b16 %v3859
      %v4379 = vunpack.c.l.b16 %v3860
      %v4380 = vunpack.c.l.b16 %v3861
      %v4381 = vunpack.c.l.b16 %v3862
      %v4382 = vunpack.c.l.b16 %v3863
      %v4383 = vunpack.c.l.b16 %v3864
      %v4384 = vunpack.c.l.b16 %v3865
      %v4385 = vunpack.c.l.b16 %v3866
      %v4386 = vunpack.c.l.b16 %v3867
      %v4387 = vunpack.c.l.b16 %v3868
      %v4388 = vunpack.c.l.b16 %v3869
      %v4389 = vunpack.c.l.b16 %v3870
      %v4390 = vunpack.c.l.b16 %v3871
      %v4391 = vunpack.c.l.b16 %v3872
      %v4392 = vunpack.c.l.b16 %v3873
      %v4393 = vunpack.c.l.b16 %v3874
      %v4394 = vunpack.c.l.b16 %v3875
      %v4395 = vunpack.c.l.b16 %v3876
      %v4396 = vunpack.c.l.b16 %v3877
      %v4397 = vunpack.c.l.b16 %v3878
      %v4398 = vunpack.c.l.b16 %v3879
      %v4399 = vunpack.c.l.b16 %v3880
      %v4400 = vunpack.c.l.b16 %v3881
      %v4401 = vunpack.c.l.b16 %v3882
      %v4402 = vunpack.c.l.b16 %v3883
      %v4403 = vunpack.c.l.b16 %v3884
      %v4404 = vunpack.c.l.b16 %v3885
      %v4405 = vunpack.c.l.b16 %v3886
      %v4406 = vunpack.c.l.b16 %v3887
      %v4407 = vunpack.c.l.b16 %v3888
      %v4408 = vunpack.c.l.b16 %v3889
      %v4409 = vunpack.c.l.b16 %v3890
      %v4410 = vunpack.c.l.b16 %v3891
      %v4411 = vunpack.c.l.b16 %v3892
      %v4412 = vunpack.c.l.b16 %v3893
      %v4413 = vunpack.c.l.b16 %v3894
      %v4414 = vunpack.c.l.b16 %v3895
      %v4415 = vunpack.c.l.b16 %v3896
      %v4416 = vunpack.c.l.b16 %v3897
      %v4417 = vunpack.c.l.b16 %v3898
      %v4418 = vunpack.c.l.b16 %v3899
      %v4419 = vunpack.c.l.b16 %v3900
      %v4420 = vunpack.c.l.b16 %v3901
      %v4421 = vunpack.c.l.b16 %v3902
      %v4422 = vunpack.c.l.b16 %v3903
      %v4423 = vunpack.c.l.b16 %v3904
      %v4424 = vunpack.c.l.b16 %v3905
      %v4425 = vunpack.c.l.b16 %v3906
      %v4426 = vunpack.c.l.b16 %v3907
      %v4427 = vunpack.c.l.b16 %v3908
      %v4428 = vunpack.c.l.b16 %v3909
      %v4429 = vunpack.c.l.b16 %v3910
      %v4430 = vunpack.c.l.b16 %v3911
      %v4431 = vunpack.c.l.b16 %v3912
      %v4432 = vunpack.c.l.b16 %v3913
      %v4433 = vunpack.c.l.b16 %v3914
      %v4434 = vunpack.c.l.b16 %v3915
      %v4435 = vunpack.c.l.b16 %v3916
      %v4436 = vunpack.c.l.b16 %v3917
      %v4437 = vunpack.c.l.b16 %v3918
      %v4438 = vunpack.c.l.b16 %v3919
      %v4439 = vunpack.c.l.b16 %v3920
      %v4440 = vunpack.c.l.b16 %v3921
      %v4441 = vunpack.c.l.b16 %v3922
      %v4442 = vunpack.c.l.b16 %v3923
      %v4443 = vunpack.c.l.b16 %v3924
      %v4444 = vunpack.c.l.b16 %v3925
      %v4445 = vunpack.c.l.b16 %v3926
      %v4446 = vunpack.c.l.b16 %v3927
      %v4447 = vunpack.c.l.b16 %v3928
      %v4448 = vunpack.c.l.b16 %v3929
      %v4449 = vunpack.c.l.b16 %v3930
      %v4450 = vunpack.c.l.b16 %v3931
      %v4451 = vunpack.c.l.b16 %v3932
      %v4452 = vunpack.c.l.b16 %v3933
      %v4453 = vunpack.c.l.b16 %v3934
      %v4454 = vunpack.c.l.b16 %v3935
      %v4455 = vunpack.c.l.b16 %v3936
      %v4456 = vunpack.c.l.b16 %v3937
      %v4457 = vunpack.c.l.b16 %v3938
      %v4458 = vunpack.c.l.b16 %v3939
      %v4459 = vunpack.c.l.b16 %v3940
      %v4460 = vunpack.c.l.b16 %v3941
      %v4461 = vunpack.c.l.b16 %v3942
      %v4462 = vunpack.c.l.b16 %v3943
      %v4463 = vunpack.c.l.b16 %v3944
      %v4464 = vunpack.c.l.b16 %v3945
      %v4465 = vunpack.c.l.b16 %v3946
      %v4466 = vunpack.c.l.b16 %v3947
      %v4467 = vunpack.c.l.b16 %v3948
      %v4468 = vunpack.c.l.b16 %v3949
      %v4469 = vunpack.c.l.b16 %v3950
      %v4470 = vunpack.c.l.b16 %v3951
      %v4471 = vunpack.c.l.b16 %v3952
      %v4472 = vunpack.c.l.b16 %v3953
      %v4473 = vunpack.c.l.b16 %v3954
      %v4474 = vunpack.c.l.b16 %v3955
      %v4475 = vunpack.c.l.b16 %v3956
      %v4476 = vunpack.c.l.b16 %v3957
      %v4477 = vunpack.c.l.b16 %v3958
      %v4478 = vunpack.c.l.b16 %v3959
      %v4479 = vunpack.c.l.b16 %v3960
      %v4480 = vunpack.c.l.b16 %v3961
      %v4481 = vunpack.c.l.b16 %v3962
      %v4482 = vunpack.c.l.b16 %v3963
      %v4483 = vunpack.c.l.b16 %v3964
      %v4484 = vunpack.c.l.b16 %v3965
      %v4485 = vunpack.c.l.b16 %v3966
      %v4486 = vunpack.c.l.b16 %v3967
      %v4487 = vunpack.c.l.b16 %v3968
      %v4488 = vunpack.c.l.b16 %v3969
      %v4489 = vunpack.c.l.b16 %v3970
      %v4490 = vunpack.c.l.b16 %v3971
      %v4491 = vunpack.c.l.b16 %v3972
      %v4492 = vunpack.c.l.b16 %v3973
      %v4493 = vunpack.c.l.b16 %v3974
      %v4494 = vunpack.c.l.b16 %v3975
      %v4495 = vunpack.c.l.b16 %v3976
      %v4496 = vunpack.c.l.b16 %v3977
      %v4497 = vunpack.c.l.b16 %v3978
      %v4498 = vunpack.c.l.b16 %v3979
      %v4499 = vunpack.c.l.b16 %v3980
      %v4500 = vunpack.c.l.b16 %v3981
      %v4501 = vunpack.c.l.b16 %v3982
      %v4502 = vunpack.c.l.b16 %v3983
      %v4503 = vunpack.c.l.b16 %v3984
      %v4504 = vunpack.c.l.b16 %v3985
      %v4505 = vunpack.c.l.b16 %v3986
      %v4506 = vunpack.c.l.b16 %v3987
      %v4507 = vunpack.c.l.b16 %v3988
      %v4508 = vunpack.c.l.b16 %v3989
      %v4509 = vunpack.c.l.b16 %v3990
      %v4510 = vunpack.c.l.b16 %v3991
      %v4511 = vunpack.c.l.b16 %v3992
      %v4512 = vunpack.c.l.b16 %v3993
      %v4513 = vunpack.c.l.b16 %v3994
      %v4514 = vunpack.c.l.b16 %v3995
      %v4515 = vunpack.c.l.b16 %v3996
      %v4516 = vunpack.c.l.b16 %v3997
      %v4517 = vunpack.c.l.b16 %v3998
      %v4518 = vunpack.c.l.b16 %v3999
      %v4519 = vunpack.c.l.b16 %v4000
      %v4520 = vpack.c.b16 %v4265, %v4264
      %v4521 = vpack.c.b16 %v4267, %v4266
      %v4522 = vpack.c.b16 %v4269, %v4268
      %v4523 = vpack.c.b16 %v4271, %v4270
      %v4524 = vpack.c.b16 %v4273, %v4272
      %v4525 = vpack.c.b16 %v4275, %v4274
      %v4526 = vpack.c.b16 %v4277, %v4276
      %v4527 = vpack.c.b16 %v4279, %v4278
      %v4528 = vpack.c.b16 %v4281, %v4280
      %v4529 = vpack.c.b16 %v4283, %v4282
      %v4530 = vpack.c.b16 %v4285, %v4284
      %v4531 = vpack.c.b16 %v4287, %v4286
      %v4532 = vpack.c.b16 %v4289, %v4288
      %v4533 = vpack.c.b16 %v4291, %v4290
      %v4534 = vpack.c.b16 %v4293, %v4292
      %v4535 = vpack.c.b16 %v4295, %v4294
      %v4536 = vpack.c.b16 %v4297, %v4296
      %v4537 = vpack.c.b16 %v4299, %v4298
      %v4538 = vpack.c.b16 %v4301, %v4300
      %v4539 = vpack.c.b16 %v4303, %v4302
      %v4540 = vpack.c.b16 %v4305, %v4304
      %v4541 = vpack.c.b16 %v4307, %v4306
      %v4542 = vpack.c.b16 %v4309, %v4308
      %v4543 = vpack.c.b16 %v4311, %v4310
      %v4544 = vpack.c.b16 %v4313, %v4312
      %v4545 = vpack.c.b16 %v4315, %v4314
      %v4546 = vpack.c.b16 %v4317, %v4316
      %v4547 = vpack.c.b16 %v4319, %v4318
      %v4548 = vpack.c.b16 %v4321, %v4320
      %v4549 = vpack.c.b16 %v4323, %v4322
      %v4550 = vpack.c.b16 %v4325, %v4324
      %v4551 = vpack.c.b16 %v4327, %v4326
      %v4552 = vpack.c.b16 %v4329, %v4328
      %v4553 = vpack.c.b16 %v4331, %v4330
      %v4554 = vpack.c.b16 %v4333, %v4332
      %v4555 = vpack.c.b16 %v4335, %v4334
      %v4556 = vpack.c.b16 %v4337, %v4336
      %v4557 = vpack.c.b16 %v4339, %v4338
      %v4558 = vpack.c.b16 %v4341, %v4340
      %v4559 = vpack.c.b16 %v4343, %v4342
      %v4560 = vpack.c.b16 %v4345, %v4344
      %v4561 = vpack.c.b16 %v4347, %v4346
      %v4562 = vpack.c.b16 %v4349, %v4348
      %v4563 = vpack.c.b16 %v4351, %v4350
      %v4564 = vpack.c.b16 %v4353, %v4352
      %v4565 = vpack.c.b16 %v4355, %v4354
      %v4566 = vpack.c.b16 %v4357, %v4356
      %v4567 = vpack.c.b16 %v4359, %v4358
      %v4568 = vpack.c.b16 %v4361, %v4360
      %v4569 = vpack.c.b16 %v4363, %v4362
      %v4570 = vpack.c.b16 %v4365, %v4364
      %v4571 = vpack.c.b16 %v4367, %v4366
      %v4572 = vpack.c.b16 %v4369, %v4368
      %v4573 = vpack.c.b16 %v4371, %v4370
      %v4574 = vpack.c.b16 %v4373, %v4372
      %v4575 = vpack.c.b16 %v4375, %v4374
      %v4576 = vpack.c.b16 %v4377, %v4376
      %v4577 = vpack.c.b16 %v4379, %v4378
      %v4578 = vpack.c.b16 %v4381, %v4380
      %v4579 = vpack.c.b16 %v4383, %v4382
      %v4580 = vpack.c.b16 %v4385, %v4384
      %v4581 = vpack.c.b16 %v4387, %v4386
      %v4582 = vpack.c.b16 %v4389, %v4388
      %v4583 = vpack.c.b16 %v4391, %v4390
      %v4584 = vpack.c.b16 %v4393, %v4392
      %v4585 = vpack.c.b16 %v4395, %v4394
      %v4586 = vpack.c.b16 %v4397, %v4396
      %v4587 = vpack.c.b16 %v4399, %v4398
      %v4588 = vpack.c.b16 %v4401, %v4400
      %v4589 = vpack.c.b16 %v4403, %v4402
      %v4590 = vpack.c.b16 %v4405, %v4404
      %v4591 = vpack.c.b16 %v4407, %v4406
      %v4592 = vpack.c.b16 %v4409, %v4408
      %v4593 = vpack.c.b16 %v4411, %v4410
      %v4594 = vpack.c.b16 %v4413, %v4412
      %v4595 = vpack.c.b16 %v4415, %v4414
      %v4596 = vpack.c.b16 %v4417, %v4416
      %v4597 = vpack.c.b16 %v4419, %v4418
      %v4598 = vpack.c.b16 %v4421, %v4420
      %v4599 = vpack.c.b16 %v4423, %v4422
      %v4600 = vpack.c.b16 %v4425, %v4424
      %v4601 = vpack.c.b16 %v4427, %v4426
      %v4602 = vpack.c.b16 %v4429, %v4428
      %v4603 = vpack.c.b16 %v4431, %v4430
      %v4604 = vpack.c.b16 %v4433, %v4432
      %v4605 = vpack.c.b16 %v4435, %v4434
      %v4606 = vpack.c.b16 %v4437, %v4436
      %v4607 = vpack.c.b16 %v4439, %v4438
      %v4608 = vpack.c.b16 %v4441, %v4440
      %v4609 = vpack.c.b16 %v4443, %v4442
      %v4610 = vpack.c.b16 %v4445, %v4444
      %v4611 = vpack.c.b16 %v4447, %v4446
      %v4612 = vpack.c.b16 %v4449, %v4448
      %v4613 = vpack.c.b16 %v4451, %v4450
      %v4614 = vpack.c.b16 %v4453, %v4452
      %v4615 = vpack.c.b16 %v4455, %v4454
      %v4616 = vpack.c.b16 %v4457, %v4456
      %v4617 = vpack.c.b16 %v4459, %v4458
      %v4618 = vpack.c.b16 %v4461, %v4460
      %v4619 = vpack.c.b16 %v4463, %v4462
      %v4620 = vpack.c.b16 %v4465, %v4464
      %v4621 = vpack.c.b16 %v4467, %v4466
      %v4622 = vpack.c.b16 %v4469, %v4468
      %v4623 = vpack.c.b16 %v4471, %v4470
      %v4624 = vpack.c.b16 %v4473, %v4472
      %v4625 = vpack.c.b16 %v4475, %v4474
      %v4626 = vpack.c.b16 %v4477, %v4476
      %v4627 = vpack.c.b16 %v4479, %v4478
      %v4628 = vpack.c.b16 %v4481, %v4480
      %v4629 = vpack.c.b16 %v4483, %v4482
      %v4630 = vpack.c.b16 %v4485, %v4484
      %v4631 = vpack.c.b16 %v4487, %v4486
      %v4632 = vpack.c.b16 %v4489, %v4488
      %v4633 = vpack.c.b16 %v4491, %v4490
      %v4634 = vpack.c.b16 %v4493, %v4492
      %v4635 = vpack.c.b16 %v4495, %v4494
      %v4636 = vpack.c.b16 %v4497, %v4496
      %v4637 = vpack.c.b16 %v4499, %v4498
      %v4638 = vpack.c.b16 %v4501, %v4500
      %v4639 = vpack.c.b16 %v4503, %v4502
      %v4640 = vpack.c.b16 %v4505, %v4504
      %v4641 = vpack.c.b16 %v4507, %v4506
      %v4642 = vpack.c.b16 %v4509, %v4508
      %v4643 = vpack.c.b16 %v4511, %v4510
      %v4644 = vpack.c.b16 %v4513, %v4512
      %v4645 = vpack.c.b16 %v4515, %v4514
      %v4646 = vpack.c.b16 %v4517, %v4516
      %v4647 = vpack.c.b16 %v4519, %v4518
      %4776 = vmatprep.subr.bf16.mxu0 0
      %4777 = vmatpush1.bf16.msra.mxu0 %v4520
      %4778 = vmatprep.subr.bf16.mxu0 0
      %4779 = vmatpush1.bf16.msra.mxu0 %v4521
      %4780 = vmatprep.subr.bf16.mxu0 0
      %4781 = vmatpush1.bf16.msra.mxu0 %v4522
      %4782 = vmatprep.subr.bf16.mxu0 0
      %4783 = vmatpush1.bf16.msra.mxu0 %v4523
      %4784 = vmatprep.subr.bf16.mxu0 0
      %4785 = vmatpush1.bf16.msra.mxu0 %v4524
      %4786 = vmatprep.subr.bf16.mxu0 0
      %4787 = vmatpush1.bf16.msra.mxu0 %v4525
      %4788 = vmatprep.subr.bf16.mxu0 0
      %4789 = vmatpush1.bf16.msra.mxu0 %v4526
      %4790 = vmatprep.subr.bf16.mxu0 0
      %4791 = vmatpush1.bf16.msra.mxu0 %v4527
      %4792 = vmatprep.subr.bf16.mxu0 0
      %4793 = vmatpush1.bf16.msra.mxu0 %v4528
      %4794 = vmatprep.subr.bf16.mxu0 0
      %4795 = vmatpush1.bf16.msra.mxu0 %v4529
      %4796 = vmatprep.subr.bf16.mxu0 0
      %4797 = vmatpush1.bf16.msra.mxu0 %v4530
      %4798 = vmatprep.subr.bf16.mxu0 0
      %4799 = vmatpush1.bf16.msra.mxu0 %v4531
      %4800 = vmatprep.subr.bf16.mxu0 0
      %4801 = vmatpush1.bf16.msra.mxu0 %v4532
      %4802 = vmatprep.subr.bf16.mxu0 0
      %4803 = vmatpush1.bf16.msra.mxu0 %v4533
      %4804 = vmatprep.subr.bf16.mxu0 0
      %4805 = vmatpush1.bf16.msra.mxu0 %v4534
      %4806 = vmatprep.subr.bf16.mxu0 0
      %4807 = vmatpush1.bf16.msra.mxu0 %v4535
      %4808 = vmatprep.mubr.bf16.mxu0 %v3730
      %4809 = vmatmul.mubr.bf16.gmra.mrb[0].mxu0 %v3729
      %v4810 = vpop.f32.mrb[0].mxu0
      %v4811 = vadd.f32 %v4006, %v4810
      %v4812 = vpop.f32.mrb[0].mxu0
      %v4813 = vpop.f32.mrb[0].mxu0
      %v4814 = vadd.f32 %v4006, %v4813
      %v4815 = vpop.f32.mrb[0].mxu0
      %4816 = vdwg.mxu0
      %4817 = vmatprep.subr.bf16.mxu0 0
      %4818 = vmatpush1.bf16.msra.mxu0 %v4536
      %4819 = vmatprep.subr.bf16.mxu0 0
      %4820 = vmatpush1.bf16.msra.mxu0 %v4537
      %4821 = vmatprep.subr.bf16.mxu0 0
      %4822 = vmatpush1.bf16.msra.mxu0 %v4538
      %4823 = vmatprep.subr.bf16.mxu0 0
      %4824 = vmatpush1.bf16.msra.mxu0 %v4539
      %4825 = vmatprep.subr.bf16.mxu0 0
      %4826 = vmatpush1.bf16.msra.mxu0 %v4540
      %4827 = vmatprep.subr.bf16.mxu0 0
      %4828 = vmatpush1.bf16.msra.mxu0 %v4541
      %4829 = vmatprep.subr.bf16.mxu0 0
      %4830 = vmatpush1.bf16.msra.mxu0 %v4542
      %4831 = vmatprep.subr.bf16.mxu0 0
      %4832 = vmatpush1.bf16.msra.mxu0 %v4543
      %4833 = vmatprep.subr.bf16.mxu0 0
      %4834 = vmatpush1.bf16.msra.mxu0 %v4544
      %4835 = vmatprep.subr.bf16.mxu0 0
      %4836 = vmatpush1.bf16.msra.mxu0 %v4545
      %4837 = vmatprep.subr.bf16.mxu0 0
      %4838 = vmatpush1.bf16.msra.mxu0 %v4546
      %4839 = vmatprep.subr.bf16.mxu0 0
      %4840 = vmatpush1.bf16.msra.mxu0 %v4547
      %4841 = vmatprep.subr.bf16.mxu0 0
      %4842 = vmatpush1.bf16.msra.mxu0 %v4548
      %4843 = vmatprep.subr.bf16.mxu0 0
      %4844 = vmatpush1.bf16.msra.mxu0 %v4549
      %4845 = vmatprep.subr.bf16.mxu0 0
      %4846 = vmatpush1.bf16.msra.mxu0 %v4550
      %4847 = vmatprep.subr.bf16.mxu0 0
      %4848 = vmatpush1.bf16.msra.mxu0 %v4551
      %4849 = vmatprep.mubr.bf16.mxu0 %v3732
      %4850 = vmatmul.mubr.bf16.gmra.mrb[0].mxu0 %v3731
      %v4851 = vpop.f32.mrb[0].mxu0
      %v4852 = vadd.f32 %v4811, %v4851
      %v4853 = vpop.f32.mrb[0].mxu0
      %v4854 = vpop.f32.mrb[0].mxu0
      %v4855 = vadd.f32 %v4814, %v4854
      %v4856 = vpop.f32.mrb[0].mxu0
      %4857 = vdwg.mxu0
      %4858 = vmatprep.subr.bf16.mxu0 0
      %4859 = vmatpush1.bf16.msra.mxu0 %v4552
      %4860 = vmatprep.subr.bf16.mxu0 0
      %4861 = vmatpush1.bf16.msra.mxu0 %v4553
      %4862 = vmatprep.subr.bf16.mxu0 0
      %4863 = vmatpush1.bf16.msra.mxu0 %v4554
      %4864 = vmatprep.subr.bf16.mxu0 0
      %4865 = vmatpush1.bf16.msra.mxu0 %v4555
      %4866 = vmatprep.subr.bf16.mxu0 0
      %4867 = vmatpush1.bf16.msra.mxu0 %v4556
      %4868 = vmatprep.subr.bf16.mxu0 0
      %4869 = vmatpush1.bf16.msra.mxu0 %v4557
      %4870 = vmatprep.subr.bf16.mxu0 0
      %4871 = vmatpush1.bf16.msra.mxu0 %v4558
      %4872 = vmatprep.subr.bf16.mxu0 0
      %4873 = vmatpush1.bf16.msra.mxu0 %v4559
      %4874 = vmatprep.subr.bf16.mxu0 0
      %4875 = vmatpush1.bf16.msra.mxu0 %v4560
      %4876 = vmatprep.subr.bf16.mxu0 0
      %4877 = vmatpush1.bf16.msra.mxu0 %v4561
      %4878 = vmatprep.subr.bf16.mxu0 0
      %4879 = vmatpush1.bf16.msra.mxu0 %v4562
      %4880 = vmatprep.subr.bf16.mxu0 0
      %4881 = vmatpush1.bf16.msra.mxu0 %v4563
      %4882 = vmatprep.subr.bf16.mxu0 0
      %4883 = vmatpush1.bf16.msra.mxu0 %v4564
      %4884 = vmatprep.subr.bf16.mxu0 0
      %4885 = vmatpush1.bf16.msra.mxu0 %v4565
      %4886 = vmatprep.subr.bf16.mxu0 0
      %4887 = vmatpush1.bf16.msra.mxu0 %v4566
      %4888 = vmatprep.subr.bf16.mxu0 0
      %4889 = vmatpush1.bf16.msra.mxu0 %v4567
      %4890 = vmatprep.mubr.bf16.mxu0 %v3734
      %4891 = vmatmul.mubr.bf16.gmra.mrb[0].mxu0 %v3733
      %v4892 = vpop.f32.mrb[0].mxu0
      %v4893 = vadd.f32 %v4852, %v4892
      %v4894 = vpop.f32.mrb[0].mxu0
      %v4895 = vpop.f32.mrb[0].mxu0
      %v4896 = vadd.f32 %v4855, %v4895
      %v4897 = vpop.f32.mrb[0].mxu0
      %4898 = vdwg.mxu0
      %4899 = vmatprep.subr.bf16.mxu0 0
      %4900 = vmatpush1.bf16.msra.mxu0 %v4568
      %4901 = vmatprep.subr.bf16.mxu0 0
      %4902 = vmatpush1.bf16.msra.mxu0 %v4569
      %4903 = vmatprep.subr.bf16.mxu0 0
      %4904 = vmatpush1.bf16.msra.mxu0 %v4570
      %4905 = vmatprep.subr.bf16.mxu0 0
      %4906 = vmatpush1.bf16.msra.mxu0 %v4571
      %4907 = vmatprep.subr.bf16.mxu0 0
      %4908 = vmatpush1.bf16.msra.mxu0 %v4572
      %4909 = vmatprep.subr.bf16.mxu0 0
      %4910 = vmatpush1.bf16.msra.mxu0 %v4573
      %4911 = vmatprep.subr.bf16.mxu0 0
      %4912 = vmatpush1.bf16.msra.mxu0 %v4574
      %4913 = vmatprep.subr.bf16.mxu0 0
      %4914 = vmatpush1.bf16.msra.mxu0 %v4575
      %4915 = vmatprep.subr.bf16.mxu0 0
      %4916 = vmatpush1.bf16.msra.mxu0 %v4576
      %4917 = vmatprep.subr.bf16.mxu0 0
      %4918 = vmatpush1.bf16.msra.mxu0 %v4577
      %4919 = vmatprep.subr.bf16.mxu0 0
      %4920 = vmatpush1.bf16.msra.mxu0 %v4578
      %4921 = vmatprep.subr.bf16.mxu0 0
      %4922 = vmatpush1.bf16.msra.mxu0 %v4579
      %4923 = vmatprep.subr.bf16.mxu0 0
      %4924 = vmatpush1.bf16.msra.mxu0 %v4580
      %4925 = vmatprep.subr.bf16.mxu0 0
      %4926 = vmatpush1.bf16.msra.mxu0 %v4581
      %4927 = vmatprep.subr.bf16.mxu0 0
      %4928 = vmatpush1.bf16.msra.mxu0 %v4582
      %4929 = vmatprep.subr.bf16.mxu0 0
      %4930 = vmatpush1.bf16.msra.mxu0 %v4583
      %4931 = vmatprep.mubr.bf16.mxu0 %v3736
      %4932 = vmatmul.mubr.bf16.gmra.mrb[0].mxu0 %v3735
      %v4933 = vpop.f32.mrb[0].mxu0
      %v4934 = vadd.f32 %v4893, %v4933
      %v4935 = vpop.f32.mrb[0].mxu0
      %v4936 = vpop.f32.mrb[0].mxu0
      %v4937 = vadd.f32 %v4896, %v4936
      %v4938 = vpop.f32.mrb[0].mxu0
      %4939 = vdwg.mxu0
      %4940 = vmatprep.subr.bf16.mxu0 0
      %4941 = vmatpush1.bf16.msra.mxu0 %v4584
      %4942 = vmatprep.subr.bf16.mxu0 0
      %4943 = vmatpush1.bf16.msra.mxu0 %v4585
      %4944 = vmatprep.subr.bf16.mxu0 0
      %4945 = vmatpush1.bf16.msra.mxu0 %v4586
      %4946 = vmatprep.subr.bf16.mxu0 0
      %4947 = vmatpush1.bf16.msra.mxu0 %v4587
      %4948 = vmatprep.subr.bf16.mxu0 0
      %4949 = vmatpush1.bf16.msra.mxu0 %v4588
      %4950 = vmatprep.subr.bf16.mxu0 0
      %4951 = vmatpush1.bf16.msra.mxu0 %v4589
      %4952 = vmatprep.subr.bf16.mxu0 0
      %4953 = vmatpush1.bf16.msra.mxu0 %v4590
      %4954 = vmatprep.subr.bf16.mxu0 0
      %4955 = vmatpush1.bf16.msra.mxu0 %v4591
      %4956 = vmatprep.subr.bf16.mxu0 0
      %4957 = vmatpush1.bf16.msra.mxu0 %v4592
      %4958 = vmatprep.subr.bf16.mxu0 0
      %4959 = vmatpush1.bf16.msra.mxu0 %v4593
      %4960 = vmatprep.subr.bf16.mxu0 0
      %4961 = vmatpush1.bf16.msra.mxu0 %v4594
      %4962 = vmatprep.subr.bf16.mxu0 0
      %4963 = vmatpush1.bf16.msra.mxu0 %v4595
      %4964 = vmatprep.subr.bf16.mxu0 0
      %4965 = vmatpush1.bf16.msra.mxu0 %v4596
      %4966 = vmatprep.subr.bf16.mxu0 0
      %4967 = vmatpush1.bf16.msra.mxu0 %v4597
      %4968 = vmatprep.subr.bf16.mxu0 0
      %4969 = vmatpush1.bf16.msra.mxu0 %v4598
      %4970 = vmatprep.subr.bf16.mxu0 0
      %4971 = vmatpush1.bf16.msra.mxu0 %v4599
      %4972 = vmatprep.mubr.bf16.mxu0 %v3738
      %4973 = vmatmul.mubr.bf16.gmra.mrb[0].mxu0 %v3737
      %v4974 = vpop.f32.mrb[0].mxu0
      %v4975 = vadd.f32 %v4934, %v4974
      %v4976 = vpop.f32.mrb[0].mxu0
      %v4977 = vpop.f32.mrb[0].mxu0
      %v4978 = vadd.f32 %v4937, %v4977
      %v4979 = vpop.f32.mrb[0].mxu0
      %4980 = vdwg.mxu0
      %4981 = vmatprep.subr.bf16.mxu0 0
      %4982 = vmatpush1.bf16.msra.mxu0 %v4600
      %4983 = vmatprep.subr.bf16.mxu0 0
      %4984 = vmatpush1.bf16.msra.mxu0 %v4601
      %4985 = vmatprep.subr.bf16.mxu0 0
      %4986 = vmatpush1.bf16.msra.mxu0 %v4602
      %4987 = vmatprep.subr.bf16.mxu0 0
      %4988 = vmatpush1.bf16.msra.mxu0 %v4603
      %4989 = vmatprep.subr.bf16.mxu0 0
      %4990 = vmatpush1.bf16.msra.mxu0 %v4604
      %4991 = vmatprep.subr.bf16.mxu0 0
      %4992 = vmatpush1.bf16.msra.mxu0 %v4605
      %4993 = vmatprep.subr.bf16.mxu0 0
      %4994 = vmatpush1.bf16.msra.mxu0 %v4606
      %4995 = vmatprep.subr.bf16.mxu0 0
      %4996 = vmatpush1.bf16.msra.mxu0 %v4607
      %4997 = vmatprep.subr.bf16.mxu0 0
      %4998 = vmatpush1.bf16.msra.mxu0 %v4608
      %4999 = vmatprep.subr.bf16.mxu0 0
      %5000 = vmatpush1.bf16.msra.mxu0 %v4609
      %5001 = vmatprep.subr.bf16.mxu0 0
      %5002 = vmatpush1.bf16.msra.mxu0 %v4610
      %5003 = vmatprep.subr.bf16.mxu0 0
      %5004 = vmatpush1.bf16.msra.mxu0 %v4611
      %5005 = vmatprep.subr.bf16.mxu0 0
      %5006 = vmatpush1.bf16.msra.mxu0 %v4612
      %5007 = vmatprep.subr.bf16.mxu0 0
      %5008 = vmatpush1.bf16.msra.mxu0 %v4613
      %5009 = vmatprep.subr.bf16.mxu0 0
      %5010 = vmatpush1.bf16.msra.mxu0 %v4614
      %5011 = vmatprep.subr.bf16.mxu0 0
      %5012 = vmatpush1.bf16.msra.mxu0 %v4615
      %5013 = vmatprep.mubr.bf16.mxu0 %v3740
      %5014 = vmatmul.mubr.bf16.gmra.mrb[0].mxu0 %v3739
      %v5015 = vpop.f32.mrb[0].mxu0
      %v5016 = vadd.f32 %v4975, %v5015
      %v5017 = vpop.f32.mrb[0].mxu0
      %v5018 = vpop.f32.mrb[0].mxu0
      %v5019 = vadd.f32 %v4978, %v5018
      %v5020 = vpop.f32.mrb[0].mxu0
      %5021 = vdwg.mxu0
      %5022 = vmatprep.subr.bf16.mxu0 0
      %5023 = vmatpush1.bf16.msra.mxu0 %v4616
      %5024 = vmatprep.subr.bf16.mxu0 0
      %5025 = vmatpush1.bf16.msra.mxu0 %v4617
      %5026 = vmatprep.subr.bf16.mxu0 0
      %5027 = vmatpush1.bf16.msra.mxu0 %v4618
      %5028 = vmatprep.subr.bf16.mxu0 0
      %5029 = vmatpush1.bf16.msra.mxu0 %v4619
      %5030 = vmatprep.subr.bf16.mxu0 0
      %5031 = vmatpush1.bf16.msra.mxu0 %v4620
      %5032 = vmatprep.subr.bf16.mxu0 0
      %5033 = vmatpush1.bf16.msra.mxu0 %v4621
      %5034 = vmatprep.subr.bf16.mxu0 0
      %5035 = vmatpush1.bf16.msra.mxu0 %v4622
      %5036 = vmatprep.subr.bf16.mxu0 0
      %5037 = vmatpush1.bf16.msra.mxu0 %v4623
      %5038 = vmatprep.subr.bf16.mxu0 0
      %5039 = vmatpush1.bf16.msra.mxu0 %v4624
      %5040 = vmatprep.subr.bf16.mxu0 0
      %5041 = vmatpush1.bf16.msra.mxu0 %v4625
      %5042 = vmatprep.subr.bf16.mxu0 0
      %5043 = vmatpush1.bf16.msra.mxu0 %v4626
      %5044 = vmatprep.subr.bf16.mxu0 0
      %5045 = vmatpush1.bf16.msra.mxu0 %v4627
      %5046 = vmatprep.subr.bf16.mxu0 0
      %5047 = vmatpush1.bf16.msra.mxu0 %v4628
      %5048 = vmatprep.subr.bf16.mxu0 0
      %5049 = vmatpush1.bf16.msra.mxu0 %v4629
      %5050 = vmatprep.subr.bf16.mxu0 0
      %5051 = vmatpush1.bf16.msra.mxu0 %v4630
      %5052 = vmatprep.subr.bf16.mxu0 0
      %5053 = vmatpush1.bf16.msra.mxu0 %v4631
      %5054 = vmatprep.mubr.bf16.mxu0 %v3742
      %5055 = vmatmul.mubr.bf16.gmra.mrb[0].mxu0 %v3741
      %v5056 = vpop.f32.mrb[0].mxu0
      %v5057 = vadd.f32 %v5016, %v5056
      %v5058 = vpop.f32.mrb[0].mxu0
      %v5059 = vpop.f32.mrb[0].mxu0
      %v5060 = vadd.f32 %v5019, %v5059
      %v5061 = vpop.f32.mrb[0].mxu0
      %5062 = vdwg.mxu0
      %5063 = vmatprep.subr.bf16.mxu0 0
      %5064 = vmatpush1.bf16.msra.mxu0 %v4632
      %5065 = vmatprep.subr.bf16.mxu0 0
      %5066 = vmatpush1.bf16.msra.mxu0 %v4633
      %5067 = vmatprep.subr.bf16.mxu0 0
      %5068 = vmatpush1.bf16.msra.mxu0 %v4634
      %5069 = vmatprep.subr.bf16.mxu0 0
      %5070 = vmatpush1.bf16.msra.mxu0 %v4635
      %5071 = vmatprep.subr.bf16.mxu0 0
      %5072 = vmatpush1.bf16.msra.mxu0 %v4636
      %5073 = vmatprep.subr.bf16.mxu0 0
      %5074 = vmatpush1.bf16.msra.mxu0 %v4637
      %5075 = vmatprep.subr.bf16.mxu0 0
      %5076 = vmatpush1.bf16.msra.mxu0 %v4638
      %5077 = vmatprep.subr.bf16.mxu0 0
      %5078 = vmatpush1.bf16.msra.mxu0 %v4639
      %5079 = vmatprep.subr.bf16.mxu0 0
      %5080 = vmatpush1.bf16.msra.mxu0 %v4640
      %5081 = vmatprep.subr.bf16.mxu0 0
      %5082 = vmatpush1.bf16.msra.mxu0 %v4641
      %5083 = vmatprep.subr.bf16.mxu0 0
      %5084 = vmatpush1.bf16.msra.mxu0 %v4642
      %5085 = vmatprep.subr.bf16.mxu0 0
      %5086 = vmatpush1.bf16.msra.mxu0 %v4643
      %5087 = vmatprep.subr.bf16.mxu0 0
      %5088 = vmatpush1.bf16.msra.mxu0 %v4644
      %5089 = vmatprep.subr.bf16.mxu0 0
      %5090 = vmatpush1.bf16.msra.mxu0 %v4645
      %5091 = vmatprep.subr.bf16.mxu0 0
      %5092 = vmatpush1.bf16.msra.mxu0 %v4646
      %5093 = vmatprep.subr.bf16.mxu0 0
      %5094 = vmatpush1.bf16.msra.mxu0 %v4647
      %5095 = vmatprep.mubr.bf16.mxu0 %v3744
      %5096 = vmatmul.mubr.bf16.gmra.mrb[0].mxu0 %v3743
      %v5097 = vpop.f32.mrb[0].mxu0
      %v5098 = vadd.f32 %v5057, %v5097
      %v5099 = vpop.f32.mrb[0].mxu0
      %v5100 = vpop.f32.mrb[0].mxu0
      %v5101 = vadd.f32 %v5060, %v5100
      %v5102 = vpop.f32.mrb[0].mxu0
      %5103 = vdwg.mxu0
      %v5104 = vadd.f32 %v2879, %v5098
      %v5105 = vadd.f32 %v2880, %v5101
      %v5106 = vld [vmem:[%s1016] sm:$0x1]
      %v5107 = vld [vmem:[%s1019] sm:$0x1]
      %v5108 = vsel %vm1072, %v5104, 0.0
      %5109 = vadd.xlane.f32.xlu0 %v5108
      %v5110 = vpop.xlane.xlu0 %5109
      %v5111 = vsel %vm1072, %v5105, 0.0
      %5112 = vadd.xlane.f32.xlu0 %v5111
      %v5113 = vpop.xlane.xlu0 %5112
      %v5114 = vmul.f32 %v5110, %v2844
      %v5115 = vmul.f32 %v5113, %v2844
      %v5116 = vsub.f32 %v5104, %v5114
      %v5117 = vsub.f32 %v5105, %v5115
      %v5118 = vmul.f32 %v5116, %v5116
      %v5119 = vmul.f32 %v5117, %v5117
      %v5120 = vsel %vm1072, %v5118, 0.0
      %5121 = vadd.xlane.f32.xlu0 %v5120
      %v5122 = vpop.xlane.xlu0 %5121
      %v5123 = vsel %vm1072, %v5119, 0.0
      %5124 = vadd.xlane.f32.xlu0 %v5123
      %v5125 = vpop.xlane.xlu0 %5124
      %v5126 = vmul.f32 %v5122, %v2844
      %v5127 = vmul.f32 %v5125, %v2844
      %v5128 = vadd.f32 %v5126, 1e-05
      %v5129 = vadd.f32 %v5127, 1e-05
      %v5130 = vrsqrt.pop %v5128
      %v5131 = vrsqrt.pop %v5129
      %v5132 = vmul.f32 %v5116, %v5130
      %v5133 = vmul.f32 %v5117, %v5131
      %v5135 = vlaneseq
      %v5136 = vshrl.u32 %v5135, 7
      %v5137 = vsub.s32 0, %v5136
      %v5138 = vrot.slane %v5106, %v5137
      %v5140 = vmul.f32 %v5132, %v5138
      %v5141 = vmul.f32 %v5133, %v5138
      %v5143 = vlaneseq
      %v5144 = vshrl.u32 %v5143, 7
      %v5145 = vsub.s32 0, %v5144
      %v5146 = vrot.slane %v5107, %v5145
      %v5148 = vadd.f32 %v5140, %v5146
      %v5149 = vadd.f32 %v5141, %v5146
      %5150 = vst.msk [vmem:[#allocation2] sm:$0xff] %vm1072, %v5148
      %5151 = vst.msk [vmem:[#allocation2 + $0x8] sm:$0xff] %vm1072, %v5149
      %p5152 = scmp.eq.s32.totalorder %s37, 1
      // Predicated region
      $region129: #{question_row_classifier_forward.1} parent=123 // pred_check
        %p5153 = pneg %p5152
      $region130: #{question_row_classifier_forward.1} parent=123 // pred_check_branch
        %5155 = sbr.rel (%p5153) target = $region132
      $region131: #{question_row_classifier_forward.1} parent=123 // pred_region
        %v5156 = vsel %vm1072, %v5148, 0.0
        %v5157 = vrot.slane %v5156, 4
        %v5158 = vadd.f32 %v5156, %v5157
        %v5159 = vrot.slane %v5158, 2
        %v5160 = vadd.f32 %v5158, %v5159
        %v5161 = vrot.slane %v5160, 1
        %v5162 = vadd.f32 %v5160, %v5161
        %v5163 = vsel %vm1072, %v5149, 0.0
        %v5164 = vrot.slane %v5163, 4
        %v5165 = vadd.f32 %v5163, %v5164
        %v5166 = vrot.slane %v5165, 2
        %v5167 = vadd.f32 %v5165, %v5166
        %v5168 = vrot.slane %v5167, 1
        %v5169 = vadd.f32 %v5167, %v5168
        %v5170 = vrcp.pop 8.0
        %v5171 = vmul.f32 %v5162, %v5170
        %v5172 = vmul.f32 %v5169, %v5170
        %v5173 = vld [vmem:[%s1] sm:$0xff]
        %v5174 = vld [vmem:[%s1 + $0x8] sm:$0xff]
        %v5175 = vld [vmem:[%s1 + $0x10] sm:$0xff]
        %v5176 = vpack.c.bf16 %v5174, %v5173
        %v5177 = vpack.c.bf16 %v5175, %v5175
        %v5178 = vld [vmem:[%s18] sm:$0xf]
        %v5179 = vld [vmem:[%s18 + $0x4] sm:$0xf]
        %v5180 = vld [vmem:[%s19] sm:$0x1]
        %v5182 = vlaneseq
        %v5183 = vshrl.u32 %v5182, 7
        %v5184 = vsub.s32 0, %v5183
        %v5185 = vrot.slane %v5180, %v5184
        %v5189 = vunpack.c.l.b16 %v5178
        %v5190 = vunpack.c.l.b16 %v5179
        %v5191 = vpack.c.b16 %v5190, %v5189
        %v5194 = vsel %vm1325, %v5176, 0
        %v5197 = vsel %vm1325, %v5177, 0
        %5199 = vmatprep.subr.bf16.mxu0 0
        %5200 = vmatpush1.bf16.msra.mxu0 %v5191
        %5201 = vmatprep.subr.bf16.mxu0 0
        %5202 = vmatpush1.bf16.msra.mxu0 0
        %5203 = vmatprep.subr.bf16.mxu0 0
        %5204 = vmatpush1.bf16.msra.mxu0 0
        %5205 = vmatprep.subr.bf16.mxu0 0
        %5206 = vmatpush1.bf16.msra.mxu0 0
        %5207 = vmatprep.subr.bf16.mxu0 0
        %5208 = vmatpush1.bf16.msra.mxu0 0
        %5209 = vmatprep.subr.bf16.mxu0 0
        %5210 = vmatpush1.bf16.msra.mxu0 0
        %5211 = vmatprep.subr.bf16.mxu0 0
        %5212 = vmatpush1.bf16.msra.mxu0 0
        %5213 = vmatprep.subr.bf16.mxu0 0
        %5214 = vmatpush1.bf16.msra.mxu0 0
        %5215 = vmatprep.subr.bf16.mxu0 0
        %5216 = vmatpush1.bf16.msra.mxu0 0
        %5217 = vmatprep.subr.bf16.mxu0 0
        %5218 = vmatpush1.bf16.msra.mxu0 0
        %5219 = vmatprep.subr.bf16.mxu0 0
        %5220 = vmatpush1.bf16.msra.mxu0 0
        %5221 = vmatprep.subr.bf16.mxu0 0
        %5222 = vmatpush1.bf16.msra.mxu0 0
        %5223 = vmatprep.subr.bf16.mxu0 0
        %5224 = vmatpush1.bf16.msra.mxu0 0
        %5225 = vmatprep.subr.bf16.mxu0 0
        %5226 = vmatpush1.bf16.msra.mxu0 0
        %5227 = vmatprep.subr.bf16.mxu0 0
        %5228 = vmatpush1.bf16.msra.mxu0 0
        %5229 = vmatprep.subr.bf16.mxu0 0
        %5230 = vmatpush1.bf16.msra.mxu0 0
        %5231 = vmatprep.mubr.bf16.mxu0 0
        %5232 = vmatmul.mubr.bf16.gmra.mrb[0].mxu0 %v5194
        %v5233 = vpop.f32.mrb[0].mxu0
        %v5234 = vadd.f32 %v5185, %v5233
        %v5235 = vpop.f32.mrb[0].mxu0
        %v5236 = vpop.f32.mrb[0].mxu0
        %v5237 = vadd.f32 %v5185, %v5236
        %v5238 = vpop.f32.mrb[0].mxu0
        %5239 = vmatprep.mubr.bf16.mxu0 0
        %5240 = vmatmul.mubr.bf16.gmra.mrb[0].mxu0 %v5197
        %v5241 = vpop.f32.mrb[0].mxu0
        %v5242 = vadd.f32 %v5185, %v5241
        %v5243 = vpop.f32.mrb[0].mxu0
        %v5244 = vpop.f32.mrb[0].mxu0
        %v5245 = vpop.f32.mrb[0].mxu0
        %5246 = vdwg.mxu0
        %v5247 = vld [vmem:[%s20] sm:$0xf]
        %v5248 = vld [vmem:[%s20 + $0x4] sm:$0xf]
        %v5249 = vld [vmem:[%s21] sm:$0x1]
        %v5251 = vlaneseq
        %v5252 = vshrl.u32 %v5251, 7
        %v5253 = vsub.s32 0, %v5252
        %v5254 = vrot.slane %v5249, %v5253
        %v5258 = vunpack.c.l.b16 %v5247
        %v5259 = vunpack.c.l.b16 %v5248
        %v5260 = vpack.c.b16 %v5259, %v5258
        %5262 = vmatprep.subr.bf16.mxu0 0
        %5263 = vmatpush1.bf16.msra.mxu0 %v5260
        %5264 = vmatprep.subr.bf16.mxu0 0
        %5265 = vmatpush1.bf16.msra.mxu0 0
        %5266 = vmatprep.subr.bf16.mxu0 0
        %5267 = vmatpush1.bf16.msra.mxu0 0
        %5268 = vmatprep.subr.bf16.mxu0 0
        %5269 = vmatpush1.bf16.msra.mxu0 0
        %5270 = vmatprep.subr.bf16.mxu0 0
        %5271 = vmatpush1.bf16.msra.mxu0 0
        %5272 = vmatprep.subr.bf16.mxu0 0
        %5273 = vmatpush1.bf16.msra.mxu0 0
        %5274 = vmatprep.subr.bf16.mxu0 0
        %5275 = vmatpush1.bf16.msra.mxu0 0
        %5276 = vmatprep.subr.bf16.mxu0 0
        %5277 = vmatpush1.bf16.msra.mxu0 0
        %5278 = vmatprep.subr.bf16.mxu0 0
        %5279 = vmatpush1.bf16.msra.mxu0 0
        %5280 = vmatprep.subr.bf16.mxu0 0
        %5281 = vmatpush1.bf16.msra.mxu0 0
        %5282 = vmatprep.subr.bf16.mxu0 0
        %5283 = vmatpush1.bf16.msra.mxu0 0
        %5284 = vmatprep.subr.bf16.mxu0 0
        %5285 = vmatpush1.bf16.msra.mxu0 0
        %5286 = vmatprep.subr.bf16.mxu0 0
        %5287 = vmatpush1.bf16.msra.mxu0 0
        %5288 = vmatprep.subr.bf16.mxu0 0
        %5289 = vmatpush1.bf16.msra.mxu0 0
        %5290 = vmatprep.subr.bf16.mxu0 0
        %5291 = vmatpush1.bf16.msra.mxu0 0
        %5292 = vmatprep.subr.bf16.mxu0 0
        %5293 = vmatpush1.bf16.msra.mxu0 0
        %5294 = vmatprep.mubr.bf16.mxu0 0
        %5295 = vmatmul.mubr.bf16.gmra.mrb[0].mxu0 %v5194
        %v5296 = vpop.f32.mrb[0].mxu0
        %v5297 = vadd.f32 %v5254, %v5296
        %v5298 = vpop.f32.mrb[0].mxu0
        %v5299 = vpop.f32.mrb[0].mxu0
        %v5300 = vadd.f32 %v5254, %v5299
        %v5301 = vpop.f32.mrb[0].mxu0
        %5302 = vmatprep.mubr.bf16.mxu0 0
        %5303 = vmatmul.mubr.bf16.gmra.mrb[0].mxu0 %v5197
        %v5304 = vpop.f32.mrb[0].mxu0
        %v5305 = vadd.f32 %v5254, %v5304
        %v5306 = vpop.f32.mrb[0].mxu0
        %v5307 = vpop.f32.mrb[0].mxu0
        %v5308 = vpop.f32.mrb[0].mxu0
        %5309 = vdwg.mxu0
        %v5310 = vld [vmem:[%s22] sm:$0xf]
        %v5311 = vld [vmem:[%s22 + $0x4] sm:$0xf]
        %v5312 = vld [vmem:[%s23] sm:$0x1]
        %v5314 = vlaneseq
        %v5315 = vshrl.u32 %v5314, 7
        %v5316 = vsub.s32 0, %v5315
        %v5317 = vrot.slane %v5312, %v5316
        %v5321 = vunpack.c.l.b16 %v5310
        %v5322 = vunpack.c.l.b16 %v5311
        %v5323 = vpack.c.b16 %v5322, %v5321
        %5325 = vmatprep.subr.bf16.mxu0 0
        %5326 = vmatpush1.bf16.msra.mxu0 %v5323
        %5327 = vmatprep.subr.bf16.mxu0 0
        %5328 = vmatpush1.bf16.msra.mxu0 0
        %5329 = vmatprep.subr.bf16.mxu0 0
        %5330 = vmatpush1.bf16.msra.mxu0 0
        %5331 = vmatprep.subr.bf16.mxu0 0
        %5332 = vmatpush1.bf16.msra.mxu0 0
        %5333 = vmatprep.subr.bf16.mxu0 0
        %5334 = vmatpush1.bf16.msra.mxu0 0
        %5335 = vmatprep.subr.bf16.mxu0 0
        %5336 = vmatpush1.bf16.msra.mxu0 0
        %5337 = vmatprep.subr.bf16.mxu0 0
        %5338 = vmatpush1.bf16.msra.mxu0 0
        %5339 = vmatprep.subr.bf16.mxu0 0
        %5340 = vmatpush1.bf16.msra.mxu0 0
        %5341 = vmatprep.subr.bf16.mxu0 0
        %5342 = vmatpush1.bf16.msra.mxu0 0
        %5343 = vmatprep.subr.bf16.mxu0 0
        %5344 = vmatpush1.bf16.msra.mxu0 0
        %5345 = vmatprep.subr.bf16.mxu0 0
        %5346 = vmatpush1.bf16.msra.mxu0 0
        %5347 = vmatprep.subr.bf16.mxu0 0
        %5348 = vmatpush1.bf16.msra.mxu0 0
        %5349 = vmatprep.subr.bf16.mxu0 0
        %5350 = vmatpush1.bf16.msra.mxu0 0
        %5351 = vmatprep.subr.bf16.mxu0 0
        %5352 = vmatpush1.bf16.msra.mxu0 0
        %5353 = vmatprep.subr.bf16.mxu0 0
        %5354 = vmatpush1.bf16.msra.mxu0 0
        %5355 = vmatprep.subr.bf16.mxu0 0
        %5356 = vmatpush1.bf16.msra.mxu0 0
        %5357 = vmatprep.mubr.bf16.mxu0 0
        %5358 = vmatmul.mubr.bf16.gmra.mrb[0].mxu0 %v5194
        %v5359 = vpop.f32.mrb[0].mxu0
        %v5360 = vadd.f32 %v5317, %v5359
        %v5361 = vpop.f32.mrb[0].mxu0
        %v5362 = vpop.f32.mrb[0].mxu0
        %v5363 = vadd.f32 %v5317, %v5362
        %v5364 = vpop.f32.mrb[0].mxu0
        %5365 = vmatprep.mubr.bf16.mxu0 0
        %5366 = vmatmul.mubr.bf16.gmra.mrb[0].mxu0 %v5197
        %v5367 = vpop.f32.mrb[0].mxu0
        %v5368 = vadd.f32 %v5317, %v5367
        %v5369 = vpop.f32.mrb[0].mxu0
        %v5370 = vpop.f32.mrb[0].mxu0
        %v5371 = vpop.f32.mrb[0].mxu0
        %5372 = vdwg.mxu0
        %v5376 = vcombine.high %v5234, %v5234
        %v5377 = vcombine.high %v5237, %v5237
        %v5378 = vcombine.high %v5242, %v5242
        %v5382 = vcombine.high %v5297, %v5297
        %v5383 = vcombine.high %v5300, %v5300
        %v5384 = vcombine.high %v5305, %v5305
        %v5388 = vcombine.high %v5360, %v5360
        %v5389 = vcombine.high %v5363, %v5363
        %v5390 = vcombine.high %v5368, %v5368
        %v5391 = vsel %vm1325, %v5234, 0
        %v5393 = vsel %vm1325, %v5297, 0
        %5395 = vmatprep.subr.mxu0 0.0
        %5396 = vmatpush1.xpose.msra.mxu0 %v5393
        %5397 = vmatprep.subr.mxu0 0.0
        %5398 = vmatpush1.xpose.msra.mxu0 0.0
        %5399 = vmatprep.subr.mxu0 0.0
        %5400 = vmatpush1.xpose.msra.mxu0 0.0
        %5401 = vmatprep.subr.mxu0 0.0
        %5402 = vmatpush1.xpose.msra.mxu0 0.0
        %5403 = vmatprep.subr.mxu0 0.0
        %5404 = vmatpush1.xpose.msra.mxu0 0.0
        %5405 = vmatprep.subr.mxu0 0.0
        %5406 = vmatpush1.xpose.msra.mxu0 0.0
        %5407 = vmatprep.subr.mxu0 0.0
        %5408 = vmatpush1.xpose.msra.mxu0 0.0
        %5409 = vmatprep.subr.mxu0 0.0
        %5410 = vmatpush1.xpose.msra.mxu0 0.0
        %5411 = vmatprep.subr.mxu0 0.0
        %5412 = vmatpush1.xpose.msra.mxu0 0.0
        %5413 = vmatprep.subr.mxu0 0.0
        %5414 = vmatpush1.xpose.msra.mxu0 0.0
        %5415 = vmatprep.subr.mxu0 0.0
        %5416 = vmatpush1.xpose.msra.mxu0 0.0
        %5417 = vmatprep.subr.mxu0 0.0
        %5418 = vmatpush1.xpose.msra.mxu0 0.0
        %5419 = vmatprep.subr.mxu0 0.0
        %5420 = vmatpush1.xpose.msra.mxu0 0.0
        %5421 = vmatprep.subr.mxu0 0.0
        %5422 = vmatpush1.xpose.msra.mxu0 0.0
        %5423 = vmatprep.subr.mxu0 0.0
        %5424 = vmatpush1.xpose.msra.mxu0 0.0
        %5425 = vmatprep.subr.mxu0 0.0
        %5426 = vmatpush1.xpose.msra.mxu0 0.0
        %5427 = vmatprep.subr.mxu0 0.0
        %5428 = vmatpush1.xpose.msra.mxu0 0.0
        %5429 = vmatprep.subr.mxu0 0.0
        %5430 = vmatpush1.xpose.msra.mxu0 0.0
        %5431 = vmatprep.subr.mxu0 0.0
        %5432 = vmatpush1.xpose.msra.mxu0 0.0
        %5433 = vmatprep.subr.mxu0 0.0
        %5434 = vmatpush1.xpose.msra.mxu0 0.0
        %5435 = vmatprep.subr.mxu0 0.0
        %5436 = vmatpush1.xpose.msra.mxu0 0.0
        %5437 = vmatprep.subr.mxu0 0.0
        %5438 = vmatpush1.xpose.msra.mxu0 0.0
        %5439 = vmatprep.subr.mxu0 0.0
        %5440 = vmatpush1.xpose.msra.mxu0 0.0
        %5441 = vmatprep.subr.mxu0 0.0
        %5442 = vmatpush1.xpose.msra.mxu0 0.0
        %5443 = vmatprep.subr.mxu0 0.0
        %5444 = vmatpush1.xpose.msra.mxu0 0.0
        %5445 = vmatprep.subr.mxu0 0.0
        %5446 = vmatpush1.xpose.msra.mxu0 0.0
        %5447 = vmatprep.subr.mxu0 0.0
        %5448 = vmatpush1.xpose.msra.mxu0 0.0
        %5449 = vmatprep.subr.mxu0 0.0
        %5450 = vmatpush1.xpose.msra.mxu0 0.0
        %5451 = vmatprep.subr.mxu0 0.0
        %5452 = vmatpush1.xpose.msra.mxu0 0.0
        %5453 = vmatprep.subr.mxu0 0.0
        %5454 = vmatpush1.xpose.msra.mxu0 0.0
        %5455 = vmatprep.subr.mxu0 0.0
        %5456 = vmatpush1.xpose.msra.mxu0 0.0
        %5457 = vmatprep.subr.mxu0 0.0
        %5458 = vmatpush1.xpose.msra.mxu0 0.0
        %5459 = vmatprep.mubr.f32.mxu0 0.0
        %5460 = vmatmul.mubr.f32.gmra.mrb[0].mxu0 %v5391
        %v5461 = vpop.f32.mrb[0].mxu0
        %v5462 = vadd.f32 0.0, %v5461
        %v5463 = vpop.f32.mrb[0].mxu0
        %5464 = vdwg.mxu0
        %v5465 = vsel %vm1325, %v5376, 0
        %v5467 = vsel %vm1325, %v5382, 0
        %5469 = vmatprep.subr.mxu0 0.0
        %5470 = vmatpush1.xpose.msra.mxu0 %v5467
        %5471 = vmatprep.subr.mxu0 0.0
        %5472 = vmatpush1.xpose.msra.mxu0 0.0
        %5473 = vmatprep.subr.mxu0 0.0
        %5474 = vmatpush1.xpose.msra.mxu0 0.0
        %5475 = vmatprep.subr.mxu0 0.0
        %5476 = vmatpush1.xpose.msra.mxu0 0.0
        %5477 = vmatprep.subr.mxu0 0.0
        %5478 = vmatpush1.xpose.msra.mxu0 0.0
        %5479 = vmatprep.subr.mxu0 0.0
        %5480 = vmatpush1.xpose.msra.mxu0 0.0
        %5481 = vmatprep.subr.mxu0 0.0
        %5482 = vmatpush1.xpose.msra.mxu0 0.0
        %5483 = vmatprep.subr.mxu0 0.0
        %5484 = vmatpush1.xpose.msra.mxu0 0.0
        %5485 = vmatprep.subr.mxu0 0.0
        %5486 = vmatpush1.xpose.msra.mxu0 0.0
        %5487 = vmatprep.subr.mxu0 0.0
        %5488 = vmatpush1.xpose.msra.mxu0 0.0
        %5489 = vmatprep.subr.mxu0 0.0
        %5490 = vmatpush1.xpose.msra.mxu0 0.0
        %5491 = vmatprep.subr.mxu0 0.0
        %5492 = vmatpush1.xpose.msra.mxu0 0.0
        %5493 = vmatprep.subr.mxu0 0.0
        %5494 = vmatpush1.xpose.msra.mxu0 0.0
        %5495 = vmatprep.subr.mxu0 0.0
        %5496 = vmatpush1.xpose.msra.mxu0 0.0
        %5497 = vmatprep.subr.mxu0 0.0
        %5498 = vmatpush1.xpose.msra.mxu0 0.0
        %5499 = vmatprep.subr.mxu0 0.0
        %5500 = vmatpush1.xpose.msra.mxu0 0.0
        %5501 = vmatprep.subr.mxu0 0.0
        %5502 = vmatpush1.xpose.msra.mxu0 0.0
        %5503 = vmatprep.subr.mxu0 0.0
        %5504 = vmatpush1.xpose.msra.mxu0 0.0
        %5505 = vmatprep.subr.mxu0 0.0
        %5506 = vmatpush1.xpose.msra.mxu0 0.0
        %5507 = vmatprep.subr.mxu0 0.0
        %5508 = vmatpush1.xpose.msra.mxu0 0.0
        %5509 = vmatprep.subr.mxu0 0.0
        %5510 = vmatpush1.xpose.msra.mxu0 0.0
        %5511 = vmatprep.subr.mxu0 0.0
        %5512 = vmatpush1.xpose.msra.mxu0 0.0
        %5513 = vmatprep.subr.mxu0 0.0
        %5514 = vmatpush1.xpose.msra.mxu0 0.0
        %5515 = vmatprep.subr.mxu0 0.0
        %5516 = vmatpush1.xpose.msra.mxu0 0.0
        %5517 = vmatprep.subr.mxu0 0.0
        %5518 = vmatpush1.xpose.msra.mxu0 0.0
        %5519 = vmatprep.subr.mxu0 0.0
        %5520 = vmatpush1.xpose.msra.mxu0 0.0
        %5521 = vmatprep.subr.mxu0 0.0
        %5522 = vmatpush1.xpose.msra.mxu0 0.0
        %5523 = vmatprep.subr.mxu0 0.0
        %5524 = vmatpush1.xpose.msra.mxu0 0.0
        %5525 = vmatprep.subr.mxu0 0.0
        %5526 = vmatpush1.xpose.msra.mxu0 0.0
        %5527 = vmatprep.subr.mxu0 0.0
        %5528 = vmatpush1.xpose.msra.mxu0 0.0
        %5529 = vmatprep.subr.mxu0 0.0
        %5530 = vmatpush1.xpose.msra.mxu0 0.0
        %5531 = vmatprep.subr.mxu0 0.0
        %5532 = vmatpush1.xpose.msra.mxu0 0.0
        %5533 = vmatprep.mubr.f32.mxu0 0.0
        %5534 = vmatmul.mubr.f32.gmra.mrb[0].mxu0 %v5465
        %v5535 = vpop.f32.mrb[0].mxu0
        %v5536 = vadd.f32 0.0, %v5535
        %v5537 = vpop.f32.mrb[0].mxu0
        %5538 = vdwg.mxu0
        %v5539 = vsel %vm1325, %v5237, 0
        %v5541 = vsel %vm1325, %v5300, 0
        %5543 = vmatprep.subr.mxu0 0.0
        %5544 = vmatpush1.xpose.msra.mxu0 %v5541
        %5545 = vmatprep.subr.mxu0 0.0
        %5546 = vmatpush1.xpose.msra.mxu0 0.0
        %5547 = vmatprep.subr.mxu0 0.0
        %5548 = vmatpush1.xpose.msra.mxu0 0.0
        %5549 = vmatprep.subr.mxu0 0.0
        %5550 = vmatpush1.xpose.msra.mxu0 0.0
        %5551 = vmatprep.subr.mxu0 0.0
        %5552 = vmatpush1.xpose.msra.mxu0 0.0
        %5553 = vmatprep.subr.mxu0 0.0
        %5554 = vmatpush1.xpose.msra.mxu0 0.0
        %5555 = vmatprep.subr.mxu0 0.0
        %5556 = vmatpush1.xpose.msra.mxu0 0.0
        %5557 = vmatprep.subr.mxu0 0.0
        %5558 = vmatpush1.xpose.msra.mxu0 0.0
        %5559 = vmatprep.subr.mxu0 0.0
        %5560 = vmatpush1.xpose.msra.mxu0 0.0
        %5561 = vmatprep.subr.mxu0 0.0
        %5562 = vmatpush1.xpose.msra.mxu0 0.0
        %5563 = vmatprep.subr.mxu0 0.0
        %5564 = vmatpush1.xpose.msra.mxu0 0.0
        %5565 = vmatprep.subr.mxu0 0.0
        %5566 = vmatpush1.xpose.msra.mxu0 0.0
        %5567 = vmatprep.subr.mxu0 0.0
        %5568 = vmatpush1.xpose.msra.mxu0 0.0
        %5569 = vmatprep.subr.mxu0 0.0
        %5570 = vmatpush1.xpose.msra.mxu0 0.0
        %5571 = vmatprep.subr.mxu0 0.0
        %5572 = vmatpush1.xpose.msra.mxu0 0.0
        %5573 = vmatprep.subr.mxu0 0.0
        %5574 = vmatpush1.xpose.msra.mxu0 0.0
        %5575 = vmatprep.subr.mxu0 0.0
        %5576 = vmatpush1.xpose.msra.mxu0 0.0
        %5577 = vmatprep.subr.mxu0 0.0
        %5578 = vmatpush1.xpose.msra.mxu0 0.0
        %5579 = vmatprep.subr.mxu0 0.0
        %5580 = vmatpush1.xpose.msra.mxu0 0.0
        %5581 = vmatprep.subr.mxu0 0.0
        %5582 = vmatpush1.xpose.msra.mxu0 0.0
        %5583 = vmatprep.subr.mxu0 0.0
        %5584 = vmatpush1.xpose.msra.mxu0 0.0
        %5585 = vmatprep.subr.mxu0 0.0
        %5586 = vmatpush1.xpose.msra.mxu0 0.0
        %5587 = vmatprep.subr.mxu0 0.0
        %5588 = vmatpush1.xpose.msra.mxu0 0.0
        %5589 = vmatprep.subr.mxu0 0.0
        %5590 = vmatpush1.xpose.msra.mxu0 0.0
        %5591 = vmatprep.subr.mxu0 0.0
        %5592 = vmatpush1.xpose.msra.mxu0 0.0
        %5593 = vmatprep.subr.mxu0 0.0
        %5594 = vmatpush1.xpose.msra.mxu0 0.0
        %5595 = vmatprep.subr.mxu0 0.0
        %5596 = vmatpush1.xpose.msra.mxu0 0.0
        %5597 = vmatprep.subr.mxu0 0.0
        %5598 = vmatpush1.xpose.msra.mxu0 0.0
        %5599 = vmatprep.subr.mxu0 0.0
        %5600 = vmatpush1.xpose.msra.mxu0 0.0
        %5601 = vmatprep.subr.mxu0 0.0
        %5602 = vmatpush1.xpose.msra.mxu0 0.0
        %5603 = vmatprep.subr.mxu0 0.0
        %5604 = vmatpush1.xpose.msra.mxu0 0.0
        %5605 = vmatprep.subr.mxu0 0.0
        %5606 = vmatpush1.xpose.msra.mxu0 0.0
        %5607 = vmatprep.mubr.f32.mxu0 0.0
        %5608 = vmatmul.mubr.f32.gmra.mrb[0].mxu0 %v5539
        %v5609 = vpop.f32.mrb[0].mxu0
        %v5610 = vadd.f32 0.0, %v5609
        %v5611 = vpop.f32.mrb[0].mxu0
        %5612 = vdwg.mxu0
        %v5613 = vsel %vm1325, %v5377, 0
        %v5615 = vsel %vm1325, %v5383, 0
        %5617 = vmatprep.subr.mxu0 0.0
        %5618 = vmatpush1.xpose.msra.mxu0 %v5615
        %5619 = vmatprep.subr.mxu0 0.0
        %5620 = vmatpush1.xpose.msra.mxu0 0.0
        %5621 = vmatprep.subr.mxu0 0.0
        %5622 = vmatpush1.xpose.msra.mxu0 0.0
        %5623 = vmatprep.subr.mxu0 0.0
        %5624 = vmatpush1.xpose.msra.mxu0 0.0
        %5625 = vmatprep.subr.mxu0 0.0
        %5626 = vmatpush1.xpose.msra.mxu0 0.0
        %5627 = vmatprep.subr.mxu0 0.0
        %5628 = vmatpush1.xpose.msra.mxu0 0.0
        %5629 = vmatprep.subr.mxu0 0.0
        %5630 = vmatpush1.xpose.msra.mxu0 0.0
        %5631 = vmatprep.subr.mxu0 0.0
        %5632 = vmatpush1.xpose.msra.mxu0 0.0
        %5633 = vmatprep.subr.mxu0 0.0
        %5634 = vmatpush1.xpose.msra.mxu0 0.0
        %5635 = vmatprep.subr.mxu0 0.0
        %5636 = vmatpush1.xpose.msra.mxu0 0.0
        %5637 = vmatprep.subr.mxu0 0.0
        %5638 = vmatpush1.xpose.msra.mxu0 0.0
        %5639 = vmatprep.subr.mxu0 0.0
        %5640 = vmatpush1.xpose.msra.mxu0 0.0
        %5641 = vmatprep.subr.mxu0 0.0
        %5642 = vmatpush1.xpose.msra.mxu0 0.0
        %5643 = vmatprep.subr.mxu0 0.0
        %5644 = vmatpush1.xpose.msra.mxu0 0.0
        %5645 = vmatprep.subr.mxu0 0.0
        %5646 = vmatpush1.xpose.msra.mxu0 0.0
        %5647 = vmatprep.subr.mxu0 0.0
        %5648 = vmatpush1.xpose.msra.mxu0 0.0
        %5649 = vmatprep.subr.mxu0 0.0
        %5650 = vmatpush1.xpose.msra.mxu0 0.0
        %5651 = vmatprep.subr.mxu0 0.0
        %5652 = vmatpush1.xpose.msra.mxu0 0.0
        %5653 = vmatprep.subr.mxu0 0.0
        %5654 = vmatpush1.xpose.msra.mxu0 0.0
        %5655 = vmatprep.subr.mxu0 0.0
        %5656 = vmatpush1.xpose.msra.mxu0 0.0
        %5657 = vmatprep.subr.mxu0 0.0
        %5658 = vmatpush1.xpose.msra.mxu0 0.0
        %5659 = vmatprep.subr.mxu0 0.0
        %5660 = vmatpush1.xpose.msra.mxu0 0.0
        %5661 = vmatprep.subr.mxu0 0.0
        %5662 = vmatpush1.xpose.msra.mxu0 0.0
        %5663 = vmatprep.subr.mxu0 0.0
        %5664 = vmatpush1.xpose.msra.mxu0 0.0
        %5665 = vmatprep.subr.mxu0 0.0
        %5666 = vmatpush1.xpose.msra.mxu0 0.0
        %5667 = vmatprep.subr.mxu0 0.0
        %5668 = vmatpush1.xpose.msra.mxu0 0.0
        %5669 = vmatprep.subr.mxu0 0.0
        %5670 = vmatpush1.xpose.msra.mxu0 0.0
        %5671 = vmatprep.subr.mxu0 0.0
        %5672 = vmatpush1.xpose.msra.mxu0 0.0
        %5673 = vmatprep.subr.mxu0 0.0
        %5674 = vmatpush1.xpose.msra.mxu0 0.0
        %5675 = vmatprep.subr.mxu0 0.0
        %5676 = vmatpush1.xpose.msra.mxu0 0.0
        %5677 = vmatprep.subr.mxu0 0.0
        %5678 = vmatpush1.xpose.msra.mxu0 0.0
        %5679 = vmatprep.subr.mxu0 0.0
        %5680 = vmatpush1.xpose.msra.mxu0 0.0
        %5681 = vmatprep.mubr.f32.mxu0 0.0
        %5682 = vmatmul.mubr.f32.gmra.mrb[0].mxu0 %v5613
        %v5683 = vpop.f32.mrb[0].mxu0
        %v5684 = vadd.f32 0.0, %v5683
        %v5685 = vpop.f32.mrb[0].mxu0
        %5686 = vdwg.mxu0
        %v5687 = vsel %vm1325, %v5242, 0
        %v5689 = vsel %vm1325, %v5305, 0
        %5691 = vmatprep.subr.mxu0 0.0
        %5692 = vmatpush1.xpose.msra.mxu0 %v5689
        %5693 = vmatprep.subr.mxu0 0.0
        %5694 = vmatpush1.xpose.msra.mxu0 0.0
        %5695 = vmatprep.subr.mxu0 0.0
        %5696 = vmatpush1.xpose.msra.mxu0 0.0
        %5697 = vmatprep.subr.mxu0 0.0
        %5698 = vmatpush1.xpose.msra.mxu0 0.0
        %5699 = vmatprep.subr.mxu0 0.0
        %5700 = vmatpush1.xpose.msra.mxu0 0.0
        %5701 = vmatprep.subr.mxu0 0.0
        %5702 = vmatpush1.xpose.msra.mxu0 0.0
        %5703 = vmatprep.subr.mxu0 0.0
        %5704 = vmatpush1.xpose.msra.mxu0 0.0
        %5705 = vmatprep.subr.mxu0 0.0
        %5706 = vmatpush1.xpose.msra.mxu0 0.0
        %5707 = vmatprep.subr.mxu0 0.0
        %5708 = vmatpush1.xpose.msra.mxu0 0.0
        %5709 = vmatprep.subr.mxu0 0.0
        %5710 = vmatpush1.xpose.msra.mxu0 0.0
        %5711 = vmatprep.subr.mxu0 0.0
        %5712 = vmatpush1.xpose.msra.mxu0 0.0
        %5713 = vmatprep.subr.mxu0 0.0
        %5714 = vmatpush1.xpose.msra.mxu0 0.0
        %5715 = vmatprep.subr.mxu0 0.0
        %5716 = vmatpush1.xpose.msra.mxu0 0.0
        %5717 = vmatprep.subr.mxu0 0.0
        %5718 = vmatpush1.xpose.msra.mxu0 0.0
        %5719 = vmatprep.subr.mxu0 0.0
        %5720 = vmatpush1.xpose.msra.mxu0 0.0
        %5721 = vmatprep.subr.mxu0 0.0
        %5722 = vmatpush1.xpose.msra.mxu0 0.0
        %5723 = vmatprep.subr.mxu0 0.0
        %5724 = vmatpush1.xpose.msra.mxu0 0.0
        %5725 = vmatprep.subr.mxu0 0.0
        %5726 = vmatpush1.xpose.msra.mxu0 0.0
        %5727 = vmatprep.subr.mxu0 0.0
        %5728 = vmatpush1.xpose.msra.mxu0 0.0
        %5729 = vmatprep.subr.mxu0 0.0
        %5730 = vmatpush1.xpose.msra.mxu0 0.0
        %5731 = vmatprep.subr.mxu0 0.0
        %5732 = vmatpush1.xpose.msra.mxu0 0.0
        %5733 = vmatprep.subr.mxu0 0.0
        %5734 = vmatpush1.xpose.msra.mxu0 0.0
        %5735 = vmatprep.subr.mxu0 0.0
        %5736 = vmatpush1.xpose.msra.mxu0 0.0
        %5737 = vmatprep.subr.mxu0 0.0
        %5738 = vmatpush1.xpose.msra.mxu0 0.0
        %5739 = vmatprep.subr.mxu0 0.0
        %5740 = vmatpush1.xpose.msra.mxu0 0.0
        %5741 = vmatprep.subr.mxu0 0.0
        %5742 = vmatpush1.xpose.msra.mxu0 0.0
        %5743 = vmatprep.subr.mxu0 0.0
        %5744 = vmatpush1.xpose.msra.mxu0 0.0
        %5745 = vmatprep.subr.mxu0 0.0
        %5746 = vmatpush1.xpose.msra.mxu0 0.0
        %5747 = vmatprep.subr.mxu0 0.0
        %5748 = vmatpush1.xpose.msra.mxu0 0.0
        %5749 = vmatprep.subr.mxu0 0.0
        %5750 = vmatpush1.xpose.msra.mxu0 0.0
        %5751 = vmatprep.subr.mxu0 0.0
        %5752 = vmatpush1.xpose.msra.mxu0 0.0
        %5753 = vmatprep.subr.mxu0 0.0
        %5754 = vmatpush1.xpose.msra.mxu0 0.0
        %5755 = vmatprep.mubr.f32.mxu0 0.0
        %5756 = vmatmul.mubr.f32.gmra.mrb[0].mxu0 %v5687
        %v5757 = vpop.f32.mrb[0].mxu0
        %v5758 = vadd.f32 0.0, %v5757
        %v5759 = vpop.f32.mrb[0].mxu0
        %5760 = vdwg.mxu0
        %v5761 = vsel %vm1325, %v5378, 0
        %v5763 = vsel %vm1325, %v5384, 0
        %5765 = vmatprep.subr.mxu0 0.0
        %5766 = vmatpush1.xpose.msra.mxu0 %v5763
        %5767 = vmatprep.subr.mxu0 0.0
        %5768 = vmatpush1.xpose.msra.mxu0 0.0
        %5769 = vmatprep.subr.mxu0 0.0
        %5770 = vmatpush1.xpose.msra.mxu0 0.0
        %5771 = vmatprep.subr.mxu0 0.0
        %5772 = vmatpush1.xpose.msra.mxu0 0.0
        %5773 = vmatprep.subr.mxu0 0.0
        %5774 = vmatpush1.xpose.msra.mxu0 0.0
        %5775 = vmatprep.subr.mxu0 0.0
        %5776 = vmatpush1.xpose.msra.mxu0 0.0
        %5777 = vmatprep.subr.mxu0 0.0
        %5778 = vmatpush1.xpose.msra.mxu0 0.0
        %5779 = vmatprep.subr.mxu0 0.0
        %5780 = vmatpush1.xpose.msra.mxu0 0.0
        %5781 = vmatprep.subr.mxu0 0.0
        %5782 = vmatpush1.xpose.msra.mxu0 0.0
        %5783 = vmatprep.subr.mxu0 0.0
        %5784 = vmatpush1.xpose.msra.mxu0 0.0
        %5785 = vmatprep.subr.mxu0 0.0
        %5786 = vmatpush1.xpose.msra.mxu0 0.0
        %5787 = vmatprep.subr.mxu0 0.0
        %5788 = vmatpush1.xpose.msra.mxu0 0.0
        %5789 = vmatprep.subr.mxu0 0.0
        %5790 = vmatpush1.xpose.msra.mxu0 0.0
        %5791 = vmatprep.subr.mxu0 0.0
        %5792 = vmatpush1.xpose.msra.mxu0 0.0
        %5793 = vmatprep.subr.mxu0 0.0
        %5794 = vmatpush1.xpose.msra.mxu0 0.0
        %5795 = vmatprep.subr.mxu0 0.0
        %5796 = vmatpush1.xpose.msra.mxu0 0.0
        %5797 = vmatprep.subr.mxu0 0.0
        %5798 = vmatpush1.xpose.msra.mxu0 0.0
        %5799 = vmatprep.subr.mxu0 0.0
        %5800 = vmatpush1.xpose.msra.mxu0 0.0
        %5801 = vmatprep.subr.mxu0 0.0
        %5802 = vmatpush1.xpose.msra.mxu0 0.0
        %5803 = vmatprep.subr.mxu0 0.0
        %5804 = vmatpush1.xpose.msra.mxu0 0.0
        %5805 = vmatprep.subr.mxu0 0.0
        %5806 = vmatpush1.xpose.msra.mxu0 0.0
        %5807 = vmatprep.subr.mxu0 0.0
        %5808 = vmatpush1.xpose.msra.mxu0 0.0
        %5809 = vmatprep.subr.mxu0 0.0
        %5810 = vmatpush1.xpose.msra.mxu0 0.0
        %5811 = vmatprep.subr.mxu0 0.0
        %5812 = vmatpush1.xpose.msra.mxu0 0.0
        %5813 = vmatprep.subr.mxu0 0.0
        %5814 = vmatpush1.xpose.msra.mxu0 0.0
        %5815 = vmatprep.subr.mxu0 0.0
        %5816 = vmatpush1.xpose.msra.mxu0 0.0
        %5817 = vmatprep.subr.mxu0 0.0
        %5818 = vmatpush1.xpose.msra.mxu0 0.0
        %5819 = vmatprep.subr.mxu0 0.0
        %5820 = vmatpush1.xpose.msra.mxu0 0.0
        %5821 = vmatprep.subr.mxu0 0.0
        %5822 = vmatpush1.xpose.msra.mxu0 0.0
        %5823 = vmatprep.subr.mxu0 0.0
        %5824 = vmatpush1.xpose.msra.mxu0 0.0
        %5825 = vmatprep.subr.mxu0 0.0
        %5826 = vmatpush1.xpose.msra.mxu0 0.0
        %5827 = vmatprep.subr.mxu0 0.0
        %5828 = vmatpush1.xpose.msra.mxu0 0.0
        %5829 = vmatprep.mubr.f32.mxu0 0.0
        %5830 = vmatmul.mubr.f32.gmra.mrb[0].mxu0 %v5761
        %v5831 = vpop.f32.mrb[0].mxu0
        %v5832 = vadd.f32 0.0, %v5831
        %v5833 = vpop.f32.mrb[0].mxu0
        %5834 = vdwg.mxu0
        %v5835 = vmul.f32 %v5462, 0.25
        %v5836 = vmul.f32 %v5536, 0.25
        %v5837 = vmul.f32 %v5610, 0.25
        %v5838 = vmul.f32 %v5684, 0.25
        %v5839 = vmul.f32 %v5758, 0.25
        %v5840 = vmul.f32 %v5832, 0.25
        %vm5841 = vcmask 27648
        %v5842 = vsel %vm5841, %v5835, -inf
        %5843 = vmax.xlane.f32.xlu0 %v5842
        %v5844 = vpop.xlane.xlu0 %5843
        %v5845 = vsel %vm5841, %v5836, -inf
        %5846 = vmax.xlane.f32.xlu0 %v5845
        %v5847 = vpop.xlane.xlu0 %5846
        %v5848 = vsel %vm5841, %v5837, -inf
        %5849 = vmax.xlane.f32.xlu0 %v5848
        %v5850 = vpop.xlane.xlu0 %5849
        %v5851 = vsel %vm5841, %v5838, -inf
        %5852 = vmax.xlane.f32.xlu0 %v5851
        %v5853 = vpop.xlane.xlu0 %5852
        %v5854 = vsel %vm5841, %v5839, -inf
        %5855 = vmax.xlane.f32.xlu0 %v5854
        %v5856 = vpop.xlane.xlu0 %5855
        %v5857 = vsel %vm5841, %v5840, -inf
        %5858 = vmax.xlane.f32.xlu0 %v5857
        %v5859 = vpop.xlane.xlu0 %5858
        %v5860 = vsub.f32 %v5835, %v5844
        %v5861 = vsub.f32 %v5836, %v5847
        %v5862 = vsub.f32 %v5837, %v5850
        %v5863 = vsub.f32 %v5838, %v5853
        %v5864 = vsub.f32 %v5839, %v5856
        %v5865 = vsub.f32 %v5840, %v5859
        %v5866 = vmul.f32 %v5860, 1.442695
        %v5867 = vpow.pop %v5866
        %v5868 = vmul.f32 %v5861, 1.442695
        %v5869 = vpow.pop %v5868
        %v5870 = vmul.f32 %v5862, 1.442695
        %v5871 = vpow.pop %v5870
        %v5872 = vmul.f32 %v5863, 1.442695
        %v5873 = vpow.pop %v5872
        %v5874 = vmul.f32 %v5864, 1.442695
        %v5875 = vpow.pop %v5874
        %v5876 = vmul.f32 %v5865, 1.442695
        %v5877 = vpow.pop %v5876
        %v5878 = vsel %vm5841, %v5867, 0.0
        %5879 = vadd.xlane.f32.xlu0 %v5878
        %v5880 = vpop.xlane.xlu0 %5879
        %v5881 = vsel %vm5841, %v5869, 0.0
        %5882 = vadd.xlane.f32.xlu0 %v5881
        %v5883 = vpop.xlane.xlu0 %5882
        %v5884 = vsel %vm5841, %v5871, 0.0
        %5885 = vadd.xlane.f32.xlu0 %v5884
        %v5886 = vpop.xlane.xlu0 %5885
        %v5887 = vsel %vm5841, %v5873, 0.0
        %5888 = vadd.xlane.f32.xlu0 %v5887
        %v5889 = vpop.xlane.xlu0 %5888
        %v5890 = vsel %vm5841, %v5875, 0.0
        %5891 = vadd.xlane.f32.xlu0 %v5890
        %v5892 = vpop.xlane.xlu0 %5891
        %v5893 = vsel %vm5841, %v5877, 0.0
        %5894 = vadd.xlane.f32.xlu0 %v5893
        %v5895 = vpop.xlane.xlu0 %5894
        %v5896 = vrcp.pop %v5880
        %v5897 = vmul.f32 %v5867, %v5896
        %v5898 = vrcp.pop %v5883
        %v5899 = vmul.f32 %v5869, %v5898
        %v5900 = vrcp.pop %v5886
        %v5901 = vmul.f32 %v5871, %v5900
        %v5902 = vrcp.pop %v5889
        %v5903 = vmul.f32 %v5873, %v5902
        %v5904 = vrcp.pop %v5892
        %v5905 = vmul.f32 %v5875, %v5904
        %v5906 = vrcp.pop %v5895
        %v5907 = vmul.f32 %v5877, %v5906
        %vm5908 = vcmask 31744
        %v5910 = vsel %vm5908, %v5897, 0
        %vm5912 = vcmask 1043456
        %v5913 = vsel %vm5912, %v5360, 0
        %5915 = vmatprep.subr.mxu0 0.0
        %5916 = vmatpush1.msra.mxu0 %v5913
        %5917 = vmatprep.subr.mxu0 0.0
        %5918 = vmatpush1.msra.mxu0 0.0
        %5919 = vmatprep.subr.mxu0 0.0
        %5920 = vmatpush1.msra.mxu0 0.0
        %5921 = vmatprep.subr.mxu0 0.0
        %5922 = vmatpush1.msra.mxu0 0.0
        %5923 = vmatprep.subr.mxu0 0.0
        %5924 = vmatpush1.msra.mxu0 0.0
        %5925 = vmatprep.subr.mxu0 0.0
        %5926 = vmatpush1.msra.mxu0 0.0
        %5927 = vmatprep.subr.mxu0 0.0
        %5928 = vmatpush1.msra.mxu0 0.0
        %5929 = vmatprep.subr.mxu0 0.0
        %5930 = vmatpush1.msra.mxu0 0.0
        %5931 = vmatprep.subr.mxu0 0.0
        %5932 = vmatpush1.msra.mxu0 0.0
        %5933 = vmatprep.subr.mxu0 0.0
        %5934 = vmatpush1.msra.mxu0 0.0
        %5935 = vmatprep.subr.mxu0 0.0
        %5936 = vmatpush1.msra.mxu0 0.0
        %5937 = vmatprep.subr.mxu0 0.0
        %5938 = vmatpush1.msra.mxu0 0.0
        %5939 = vmatprep.subr.mxu0 0.0
        %5940 = vmatpush1.msra.mxu0 0.0
        %5941 = vmatprep.subr.mxu0 0.0
        %5942 = vmatpush1.msra.mxu0 0.0
        %5943 = vmatprep.subr.mxu0 0.0
        %5944 = vmatpush1.msra.mxu0 0.0
        %5945 = vmatprep.subr.mxu0 0.0
        %5946 = vmatpush1.msra.mxu0 0.0
        %5947 = vmatprep.subr.mxu0 0.0
        %5948 = vmatpush1.msra.mxu0 0.0
        %5949 = vmatprep.subr.mxu0 0.0
        %5950 = vmatpush1.msra.mxu0 0.0
        %5951 = vmatprep.subr.mxu0 0.0
        %5952 = vmatpush1.msra.mxu0 0.0
        %5953 = vmatprep.subr.mxu0 0.0
        %5954 = vmatpush1.msra.mxu0 0.0
        %5955 = vmatprep.subr.mxu0 0.0
        %5956 = vmatpush1.msra.mxu0 0.0
        %5957 = vmatprep.subr.mxu0 0.0
        %5958 = vmatpush1.msra.mxu0 0.0
        %5959 = vmatprep.subr.mxu0 0.0
        %5960 = vmatpush1.msra.mxu0 0.0
        %5961 = vmatprep.subr.mxu0 0.0
        %5962 = vmatpush1.msra.mxu0 0.0
        %5963 = vmatprep.subr.mxu0 0.0
        %5964 = vmatpush1.msra.mxu0 0.0
        %5965 = vmatprep.subr.mxu0 0.0
        %5966 = vmatpush1.msra.mxu0 0.0
        %5967 = vmatprep.subr.mxu0 0.0
        %5968 = vmatpush1.msra.mxu0 0.0
        %5969 = vmatprep.subr.mxu0 0.0
        %5970 = vmatpush1.msra.mxu0 0.0
        %5971 = vmatprep.subr.mxu0 0.0
        %5972 = vmatpush1.msra.mxu0 0.0
        %5973 = vmatprep.subr.mxu0 0.0
        %5974 = vmatpush1.msra.mxu0 0.0
        %5975 = vmatprep.subr.mxu0 0.0
        %5976 = vmatpush1.msra.mxu0 0.0
        %5977 = vmatprep.subr.mxu0 0.0
        %5978 = vmatpush1.msra.mxu0 0.0
        %5979 = vmatprep.mubr.f32.mxu0 0.0
        %5980 = vmatmul.mubr.f32.gmra.mrb[0].mxu0 %v5910
        %v5981 = vpop.f32.mrb[0].mxu0
        %v5982 = vadd.f32 0.0, %v5981
        %v5983 = vpop.f32.mrb[0].mxu0
        %5984 = vdwg.mxu0
        %v5986 = vsel %vm5908, %v5899, 0
        %v5988 = vsel %vm5912, %v5388, 0
        %5990 = vmatprep.subr.mxu0 0.0
        %5991 = vmatpush1.msra.mxu0 %v5988
        %5992 = vmatprep.subr.mxu0 0.0
        %5993 = vmatpush1.msra.mxu0 0.0
        %5994 = vmatprep.subr.mxu0 0.0
        %5995 = vmatpush1.msra.mxu0 0.0
        %5996 = vmatprep.subr.mxu0 0.0
        %5997 = vmatpush1.msra.mxu0 0.0
        %5998 = vmatprep.subr.mxu0 0.0
        %5999 = vmatpush1.msra.mxu0 0.0
        %6000 = vmatprep.subr.mxu0 0.0
        %6001 = vmatpush1.msra.mxu0 0.0
        %6002 = vmatprep.subr.mxu0 0.0
        %6003 = vmatpush1.msra.mxu0 0.0
        %6004 = vmatprep.subr.mxu0 0.0
        %6005 = vmatpush1.msra.mxu0 0.0
        %6006 = vmatprep.subr.mxu0 0.0
        %6007 = vmatpush1.msra.mxu0 0.0
        %6008 = vmatprep.subr.mxu0 0.0
        %6009 = vmatpush1.msra.mxu0 0.0
        %6010 = vmatprep.subr.mxu0 0.0
        %6011 = vmatpush1.msra.mxu0 0.0
        %6012 = vmatprep.subr.mxu0 0.0
        %6013 = vmatpush1.msra.mxu0 0.0
        %6014 = vmatprep.subr.mxu0 0.0
        %6015 = vmatpush1.msra.mxu0 0.0
        %6016 = vmatprep.subr.mxu0 0.0
        %6017 = vmatpush1.msra.mxu0 0.0
        %6018 = vmatprep.subr.mxu0 0.0
        %6019 = vmatpush1.msra.mxu0 0.0
        %6020 = vmatprep.subr.mxu0 0.0
        %6021 = vmatpush1.msra.mxu0 0.0
        %6022 = vmatprep.subr.mxu0 0.0
        %6023 = vmatpush1.msra.mxu0 0.0
        %6024 = vmatprep.subr.mxu0 0.0
        %6025 = vmatpush1.msra.mxu0 0.0
        %6026 = vmatprep.subr.mxu0 0.0
        %6027 = vmatpush1.msra.mxu0 0.0
        %6028 = vmatprep.subr.mxu0 0.0
        %6029 = vmatpush1.msra.mxu0 0.0
        %6030 = vmatprep.subr.mxu0 0.0
        %6031 = vmatpush1.msra.mxu0 0.0
        %6032 = vmatprep.subr.mxu0 0.0
        %6033 = vmatpush1.msra.mxu0 0.0
        %6034 = vmatprep.subr.mxu0 0.0
        %6035 = vmatpush1.msra.mxu0 0.0
        %6036 = vmatprep.subr.mxu0 0.0
        %6037 = vmatpush1.msra.mxu0 0.0
        %6038 = vmatprep.subr.mxu0 0.0
        %6039 = vmatpush1.msra.mxu0 0.0
        %6040 = vmatprep.subr.mxu0 0.0
        %6041 = vmatpush1.msra.mxu0 0.0
        %6042 = vmatprep.subr.mxu0 0.0
        %6043 = vmatpush1.msra.mxu0 0.0
        %6044 = vmatprep.subr.mxu0 0.0
        %6045 = vmatpush1.msra.mxu0 0.0
        %6046 = vmatprep.subr.mxu0 0.0
        %6047 = vmatpush1.msra.mxu0 0.0
        %6048 = vmatprep.subr.mxu0 0.0
        %6049 = vmatpush1.msra.mxu0 0.0
        %6050 = vmatprep.subr.mxu0 0.0
        %6051 = vmatpush1.msra.mxu0 0.0
        %6052 = vmatprep.subr.mxu0 0.0
        %6053 = vmatpush1.msra.mxu0 0.0
        %6054 = vmatprep.mubr.f32.mxu0 0.0
        %6055 = vmatmul.mubr.f32.gmra.mrb[0].mxu0 %v5986
        %v6056 = vpop.f32.mrb[0].mxu0
        %v6057 = vadd.f32 0.0, %v6056
        %v6058 = vpop.f32.mrb[0].mxu0
        %6059 = vdwg.mxu0
        %v6061 = vsel %vm5908, %v5901, 0
        %v6063 = vsel %vm5912, %v5363, 0
        %6065 = vmatprep.subr.mxu0 0.0
        %6066 = vmatpush1.msra.mxu0 %v6063
        %6067 = vmatprep.subr.mxu0 0.0
        %6068 = vmatpush1.msra.mxu0 0.0
        %6069 = vmatprep.subr.mxu0 0.0
        %6070 = vmatpush1.msra.mxu0 0.0
        %6071 = vmatprep.subr.mxu0 0.0
        %6072 = vmatpush1.msra.mxu0 0.0
        %6073 = vmatprep.subr.mxu0 0.0
        %6074 = vmatpush1.msra.mxu0 0.0
        %6075 = vmatprep.subr.mxu0 0.0
        %6076 = vmatpush1.msra.mxu0 0.0
        %6077 = vmatprep.subr.mxu0 0.0
        %6078 = vmatpush1.msra.mxu0 0.0
        %6079 = vmatprep.subr.mxu0 0.0
        %6080 = vmatpush1.msra.mxu0 0.0
        %6081 = vmatprep.subr.mxu0 0.0
        %6082 = vmatpush1.msra.mxu0 0.0
        %6083 = vmatprep.subr.mxu0 0.0
        %6084 = vmatpush1.msra.mxu0 0.0
        %6085 = vmatprep.subr.mxu0 0.0
        %6086 = vmatpush1.msra.mxu0 0.0
        %6087 = vmatprep.subr.mxu0 0.0
        %6088 = vmatpush1.msra.mxu0 0.0
        %6089 = vmatprep.subr.mxu0 0.0
        %6090 = vmatpush1.msra.mxu0 0.0
        %6091 = vmatprep.subr.mxu0 0.0
        %6092 = vmatpush1.msra.mxu0 0.0
        %6093 = vmatprep.subr.mxu0 0.0
        %6094 = vmatpush1.msra.mxu0 0.0
        %6095 = vmatprep.subr.mxu0 0.0
        %6096 = vmatpush1.msra.mxu0 0.0
        %6097 = vmatprep.subr.mxu0 0.0
        %6098 = vmatpush1.msra.mxu0 0.0
        %6099 = vmatprep.subr.mxu0 0.0
        %6100 = vmatpush1.msra.mxu0 0.0
        %6101 = vmatprep.subr.mxu0 0.0
        %6102 = vmatpush1.msra.mxu0 0.0
        %6103 = vmatprep.subr.mxu0 0.0
        %6104 = vmatpush1.msra.mxu0 0.0
        %6105 = vmatprep.subr.mxu0 0.0
        %6106 = vmatpush1.msra.mxu0 0.0
        %6107 = vmatprep.subr.mxu0 0.0
        %6108 = vmatpush1.msra.mxu0 0.0
        %6109 = vmatprep.subr.mxu0 0.0
        %6110 = vmatpush1.msra.mxu0 0.0
        %6111 = vmatprep.subr.mxu0 0.0
        %6112 = vmatpush1.msra.mxu0 0.0
        %6113 = vmatprep.subr.mxu0 0.0
        %6114 = vmatpush1.msra.mxu0 0.0
        %6115 = vmatprep.subr.mxu0 0.0
        %6116 = vmatpush1.msra.mxu0 0.0
        %6117 = vmatprep.subr.mxu0 0.0
        %6118 = vmatpush1.msra.mxu0 0.0
        %6119 = vmatprep.subr.mxu0 0.0
        %6120 = vmatpush1.msra.mxu0 0.0
        %6121 = vmatprep.subr.mxu0 0.0
        %6122 = vmatpush1.msra.mxu0 0.0
        %6123 = vmatprep.subr.mxu0 0.0
        %6124 = vmatpush1.msra.mxu0 0.0
        %6125 = vmatprep.subr.mxu0 0.0
        %6126 = vmatpush1.msra.mxu0 0.0
        %6127 = vmatprep.subr.mxu0 0.0
        %6128 = vmatpush1.msra.mxu0 0.0
        %6129 = vmatprep.mubr.f32.mxu0 0.0
        %6130 = vmatmul.mubr.f32.gmra.mrb[0].mxu0 %v6061
        %v6131 = vpop.f32.mrb[0].mxu0
        %v6132 = vadd.f32 0.0, %v6131
        %v6133 = vpop.f32.mrb[0].mxu0
        %6134 = vdwg.mxu0
        %v6136 = vsel %vm5908, %v5903, 0
        %v6138 = vsel %vm5912, %v5389, 0
        %6140 = vmatprep.subr.mxu0 0.0
        %6141 = vmatpush1.msra.mxu0 %v6138
        %6142 = vmatprep.subr.mxu0 0.0
        %6143 = vmatpush1.msra.mxu0 0.0
        %6144 = vmatprep.subr.mxu0 0.0
        %6145 = vmatpush1.msra.mxu0 0.0
        %6146 = vmatprep.subr.mxu0 0.0
        %6147 = vmatpush1.msra.mxu0 0.0
        %6148 = vmatprep.subr.mxu0 0.0
        %6149 = vmatpush1.msra.mxu0 0.0
        %6150 = vmatprep.subr.mxu0 0.0
        %6151 = vmatpush1.msra.mxu0 0.0
        %6152 = vmatprep.subr.mxu0 0.0
        %6153 = vmatpush1.msra.mxu0 0.0
        %6154 = vmatprep.subr.mxu0 0.0
        %6155 = vmatpush1.msra.mxu0 0.0
        %6156 = vmatprep.subr.mxu0 0.0
        %6157 = vmatpush1.msra.mxu0 0.0
        %6158 = vmatprep.subr.mxu0 0.0
        %6159 = vmatpush1.msra.mxu0 0.0
        %6160 = vmatprep.subr.mxu0 0.0
        %6161 = vmatpush1.msra.mxu0 0.0
        %6162 = vmatprep.subr.mxu0 0.0
        %6163 = vmatpush1.msra.mxu0 0.0
        %6164 = vmatprep.subr.mxu0 0.0
        %6165 = vmatpush1.msra.mxu0 0.0
        %6166 = vmatprep.subr.mxu0 0.0
        %6167 = vmatpush1.msra.mxu0 0.0
        %6168 = vmatprep.subr.mxu0 0.0
        %6169 = vmatpush1.msra.mxu0 0.0
        %6170 = vmatprep.subr.mxu0 0.0
        %6171 = vmatpush1.msra.mxu0 0.0
        %6172 = vmatprep.subr.mxu0 0.0
        %6173 = vmatpush1.msra.mxu0 0.0
        %6174 = vmatprep.subr.mxu0 0.0
        %6175 = vmatpush1.msra.mxu0 0.0
        %6176 = vmatprep.subr.mxu0 0.0
        %6177 = vmatpush1.msra.mxu0 0.0
        %6178 = vmatprep.subr.mxu0 0.0
        %6179 = vmatpush1.msra.mxu0 0.0
        %6180 = vmatprep.subr.mxu0 0.0
        %6181 = vmatpush1.msra.mxu0 0.0
        %6182 = vmatprep.subr.mxu0 0.0
        %6183 = vmatpush1.msra.mxu0 0.0
        %6184 = vmatprep.subr.mxu0 0.0
        %6185 = vmatpush1.msra.mxu0 0.0
        %6186 = vmatprep.subr.mxu0 0.0
        %6187 = vmatpush1.msra.mxu0 0.0
        %6188 = vmatprep.subr.mxu0 0.0
        %6189 = vmatpush1.msra.mxu0 0.0
        %6190 = vmatprep.subr.mxu0 0.0
        %6191 = vmatpush1.msra.mxu0 0.0
        %6192 = vmatprep.subr.mxu0 0.0
        %6193 = vmatpush1.msra.mxu0 0.0
        %6194 = vmatprep.subr.mxu0 0.0
        %6195 = vmatpush1.msra.mxu0 0.0
        %6196 = vmatprep.subr.mxu0 0.0
        %6197 = vmatpush1.msra.mxu0 0.0
        %6198 = vmatprep.subr.mxu0 0.0
        %6199 = vmatpush1.msra.mxu0 0.0
        %6200 = vmatprep.subr.mxu0 0.0
        %6201 = vmatpush1.msra.mxu0 0.0
        %6202 = vmatprep.subr.mxu0 0.0
        %6203 = vmatpush1.msra.mxu0 0.0
        %6204 = vmatprep.mubr.f32.mxu0 0.0
        %6205 = vmatmul.mubr.f32.gmra.mrb[0].mxu0 %v6136
        %v6206 = vpop.f32.mrb[0].mxu0
        %v6207 = vadd.f32 0.0, %v6206
        %v6208 = vpop.f32.mrb[0].mxu0
        %6209 = vdwg.mxu0
        %v6211 = vsel %vm5908, %v5905, 0
        %v6213 = vsel %vm5912, %v5368, 0
        %6215 = vmatprep.subr.mxu0 0.0
        %6216 = vmatpush1.msra.mxu0 %v6213
        %6217 = vmatprep.subr.mxu0 0.0
        %6218 = vmatpush1.msra.mxu0 0.0
        %6219 = vmatprep.subr.mxu0 0.0
        %6220 = vmatpush1.msra.mxu0 0.0
        %6221 = vmatprep.subr.mxu0 0.0
        %6222 = vmatpush1.msra.mxu0 0.0
        %6223 = vmatprep.subr.mxu0 0.0
        %6224 = vmatpush1.msra.mxu0 0.0
        %6225 = vmatprep.subr.mxu0 0.0
        %6226 = vmatpush1.msra.mxu0 0.0
        %6227 = vmatprep.subr.mxu0 0.0
        %6228 = vmatpush1.msra.mxu0 0.0
        %6229 = vmatprep.subr.mxu0 0.0
        %6230 = vmatpush1.msra.mxu0 0.0
        %6231 = vmatprep.subr.mxu0 0.0
        %6232 = vmatpush1.msra.mxu0 0.0
        %6233 = vmatprep.subr.mxu0 0.0
        %6234 = vmatpush1.msra.mxu0 0.0
        %6235 = vmatprep.subr.mxu0 0.0
        %6236 = vmatpush1.msra.mxu0 0.0
        %6237 = vmatprep.subr.mxu0 0.0
        %6238 = vmatpush1.msra.mxu0 0.0
        %6239 = vmatprep.subr.mxu0 0.0
        %6240 = vmatpush1.msra.mxu0 0.0
        %6241 = vmatprep.subr.mxu0 0.0
        %6242 = vmatpush1.msra.mxu0 0.0
        %6243 = vmatprep.subr.mxu0 0.0
        %6244 = vmatpush1.msra.mxu0 0.0
        %6245 = vmatprep.subr.mxu0 0.0
        %6246 = vmatpush1.msra.mxu0 0.0
        %6247 = vmatprep.subr.mxu0 0.0
        %6248 = vmatpush1.msra.mxu0 0.0
        %6249 = vmatprep.subr.mxu0 0.0
        %6250 = vmatpush1.msra.mxu0 0.0
        %6251 = vmatprep.subr.mxu0 0.0
        %6252 = vmatpush1.msra.mxu0 0.0
        %6253 = vmatprep.subr.mxu0 0.0
        %6254 = vmatpush1.msra.mxu0 0.0
        %6255 = vmatprep.subr.mxu0 0.0
        %6256 = vmatpush1.msra.mxu0 0.0
        %6257 = vmatprep.subr.mxu0 0.0
        %6258 = vmatpush1.msra.mxu0 0.0
        %6259 = vmatprep.subr.mxu0 0.0
        %6260 = vmatpush1.msra.mxu0 0.0
        %6261 = vmatprep.subr.mxu0 0.0
        %6262 = vmatpush1.msra.mxu0 0.0
        %6263 = vmatprep.subr.mxu0 0.0
        %6264 = vmatpush1.msra.mxu0 0.0
        %6265 = vmatprep.subr.mxu0 0.0
        %6266 = vmatpush1.msra.mxu0 0.0
        %6267 = vmatprep.subr.mxu0 0.0
        %6268 = vmatpush1.msra.mxu0 0.0
        %6269 = vmatprep.subr.mxu0 0.0
        %6270 = vmatpush1.msra.mxu0 0.0
        %6271 = vmatprep.subr.mxu0 0.0
        %6272 = vmatpush1.msra.mxu0 0.0
        %6273 = vmatprep.subr.mxu0 0.0
        %6274 = vmatpush1.msra.mxu0 0.0
        %6275 = vmatprep.subr.mxu0 0.0
        %6276 = vmatpush1.msra.mxu0 0.0
        %6277 = vmatprep.subr.mxu0 0.0
        %6278 = vmatpush1.msra.mxu0 0.0
        %6279 = vmatprep.mubr.f32.mxu0 0.0
        %6280 = vmatmul.mubr.f32.gmra.mrb[0].mxu0 %v6211
        %v6281 = vpop.f32.mrb[0].mxu0
        %v6282 = vadd.f32 0.0, %v6281
        %v6283 = vpop.f32.mrb[0].mxu0
        %6284 = vdwg.mxu0
        %v6286 = vsel %vm5908, %v5907, 0
        %v6288 = vsel %vm5912, %v5390, 0
        %6290 = vmatprep.subr.mxu0 0.0
        %6291 = vmatpush1.msra.mxu0 %v6288
        %6292 = vmatprep.subr.mxu0 0.0
        %6293 = vmatpush1.msra.mxu0 0.0
        %6294 = vmatprep.subr.mxu0 0.0
        %6295 = vmatpush1.msra.mxu0 0.0
        %6296 = vmatprep.subr.mxu0 0.0
        %6297 = vmatpush1.msra.mxu0 0.0
        %6298 = vmatprep.subr.mxu0 0.0
        %6299 = vmatpush1.msra.mxu0 0.0
        %6300 = vmatprep.subr.mxu0 0.0
        %6301 = vmatpush1.msra.mxu0 0.0
        %6302 = vmatprep.subr.mxu0 0.0
        %6303 = vmatpush1.msra.mxu0 0.0
        %6304 = vmatprep.subr.mxu0 0.0
        %6305 = vmatpush1.msra.mxu0 0.0
        %6306 = vmatprep.subr.mxu0 0.0
        %6307 = vmatpush1.msra.mxu0 0.0
        %6308 = vmatprep.subr.mxu0 0.0
        %6309 = vmatpush1.msra.mxu0 0.0
        %6310 = vmatprep.subr.mxu0 0.0
        %6311 = vmatpush1.msra.mxu0 0.0
        %6312 = vmatprep.subr.mxu0 0.0
        %6313 = vmatpush1.msra.mxu0 0.0
        %6314 = vmatprep.subr.mxu0 0.0
        %6315 = vmatpush1.msra.mxu0 0.0
        %6316 = vmatprep.subr.mxu0 0.0
        %6317 = vmatpush1.msra.mxu0 0.0
        %6318 = vmatprep.subr.mxu0 0.0
        %6319 = vmatpush1.msra.mxu0 0.0
        %6320 = vmatprep.subr.mxu0 0.0
        %6321 = vmatpush1.msra.mxu0 0.0
        %6322 = vmatprep.subr.mxu0 0.0
        %6323 = vmatpush1.msra.mxu0 0.0
        %6324 = vmatprep.subr.mxu0 0.0
        %6325 = vmatpush1.msra.mxu0 0.0
        %6326 = vmatprep.subr.mxu0 0.0
        %6327 = vmatpush1.msra.mxu0 0.0
        %6328 = vmatprep.subr.mxu0 0.0
        %6329 = vmatpush1.msra.mxu0 0.0
        %6330 = vmatprep.subr.mxu0 0.0
        %6331 = vmatpush1.msra.mxu0 0.0
        %6332 = vmatprep.subr.mxu0 0.0
        %6333 = vmatpush1.msra.mxu0 0.0
        %6334 = vmatprep.subr.mxu0 0.0
        %6335 = vmatpush1.msra.mxu0 0.0
        %6336 = vmatprep.subr.mxu0 0.0
        %6337 = vmatpush1.msra.mxu0 0.0
        %6338 = vmatprep.subr.mxu0 0.0
        %6339 = vmatpush1.msra.mxu0 0.0
        %6340 = vmatprep.subr.mxu0 0.0
        %6341 = vmatpush1.msra.mxu0 0.0
        %6342 = vmatprep.subr.mxu0 0.0
        %6343 = vmatpush1.msra.mxu0 0.0
        %6344 = vmatprep.subr.mxu0 0.0
        %6345 = vmatpush1.msra.mxu0 0.0
        %6346 = vmatprep.subr.mxu0 0.0
        %6347 = vmatpush1.msra.mxu0 0.0
        %6348 = vmatprep.subr.mxu0 0.0
        %6349 = vmatpush1.msra.mxu0 0.0
        %6350 = vmatprep.subr.mxu0 0.0
        %6351 = vmatpush1.msra.mxu0 0.0
        %6352 = vmatprep.subr.mxu0 0.0
        %6353 = vmatpush1.msra.mxu0 0.0
        %6354 = vmatprep.mubr.f32.mxu0 0.0
        %6355 = vmatmul.mubr.f32.gmra.mrb[0].mxu0 %v6286
        %v6356 = vpop.f32.mrb[0].mxu0
        %v6357 = vadd.f32 0.0, %v6356
        %v6358 = vpop.f32.mrb[0].mxu0
        %6359 = vdwg.mxu0
        %v6363 = vunpack.c.l.s4 1966171168
        %v6364 = vunpack.c.0.s8 %v6363
        %v6365 = vlaneseq
        %v6366 = vshrl.u32 %v6365, 7
        %v6367 = vsub.s32 %v6364, %v6366
        %v6368 = vrot.slane %v5171, %v6367
        %v6369 = vcombine.high %v6368, %v6368
        %v6371 = vunpack.c.l.s4 1966171168
        %v6372 = vunpack.c.0.s8 %v6371
        %v6373 = vlaneseq
        %v6374 = vshrl.u32 %v6373, 7
        %v6375 = vsub.s32 %v6372, %v6374
        %v6376 = vrot.slane %v6368, %v6375
        %v6378 = vunpack.c.l.s4 1966171168
        %v6379 = vunpack.c.0.s8 %v6378
        %v6380 = vlaneseq
        %v6381 = vshrl.u32 %v6380, 7
        %v6382 = vsub.s32 %v6379, %v6381
        %v6383 = vrot.slane %v6369, %v6382
        %v6384 = vcombine.high %v6376, %v6376
        %v6386 = vunpack.c.l.s4 1966171168
        %v6387 = vunpack.c.0.s8 %v6386
        %v6388 = vlaneseq
        %v6389 = vshrl.u32 %v6388, 7
        %v6390 = vsub.s32 %v6387, %v6389
        %v6391 = vrot.slane %v5172, %v6390
        %v6392 = vcombine.high %v6391, %v6391
        %v6394 = vunpack.c.l.s4 1966171168
        %v6395 = vunpack.c.0.s8 %v6394
        %v6396 = vlaneseq
        %v6397 = vshrl.u32 %v6396, 7
        %v6398 = vsub.s32 %v6395, %v6397
        %v6399 = vrot.slane %v6391, %v6398
        %v6401 = vunpack.c.l.s4 1966171168
        %v6402 = vunpack.c.0.s8 %v6401
        %v6403 = vlaneseq
        %v6404 = vshrl.u32 %v6403, 7
        %v6405 = vsub.s32 %v6402, %v6404
        %v6406 = vrot.slane %v6392, %v6405
        %v6407 = vcombine.high %v6399, %v6399
        %v6414 = vmul.f32 %v6376, %v6376
        %v6415 = vmul.f32 %v6383, %v6383
        %v6416 = vmul.f32 %v6384, %v6384
        %v6417 = vmul.f32 %v6399, %v6399
        %v6418 = vmul.f32 %v6406, %v6406
        %v6419 = vmul.f32 %v6407, %v6407
        %v6426 = vcombine.low %v6414, %v6415
        %v6427 = vcombine.low %v6416, %v6417
        %v6428 = vcombine.low %v6418, %v6419
        %v6430 = vunpack.c.l.s4 1966171168
        %v6431 = vunpack.c.0.s8 %v6430
        %v6432 = vlaneseq
        %v6433 = vshrl.u32 %v6432, 7
        %v6434 = vsub.s32 %v6431, %v6433
        %v6435 = vrot.slane %v6426, %v6434
        %v6437 = vunpack.c.l.s4 1966171168
        %v6438 = vunpack.c.0.s8 %v6437
        %v6439 = vlaneseq
        %v6440 = vshrl.u32 %v6439, 7
        %v6441 = vsub.s32 %v6438, %v6440
        %v6442 = vrot.slane %v6427, %v6441
        %v6444 = vunpack.c.l.s4 1966171168
        %v6445 = vunpack.c.0.s8 %v6444
        %v6446 = vlaneseq
        %v6447 = vshrl.u32 %v6446, 7
        %v6448 = vsub.s32 %v6445, %v6447
        %v6449 = vrot.slane %v6428, %v6448
        %v6450 = vcombine.low %v6435, %v6442
        %v6452 = vunpack.c.l.s4 1966171168
        %v6453 = vunpack.c.0.s8 %v6452
        %v6454 = vlaneseq
        %v6455 = vshrl.u32 %v6454, 7
        %v6456 = vsub.s32 %v6453, %v6455
        %v6457 = vrot.slane %v6450, %v6456
        %v6459 = vunpack.c.l.s4 1966171168
        %v6460 = vunpack.c.0.s8 %v6459
        %v6461 = vlaneseq
        %v6462 = vshrl.u32 %v6461, 7
        %v6463 = vsub.s32 %v6460, %v6462
        %v6464 = vrot.slane %v6449, %v6463
        %v6465 = vcombine.low %v6457, %v6464
        %vm6467 = vcmask 521216
        %v6468 = vsel %vm6467, %v6465, 0.0
        %6469 = vadd.xlane.f32.xlu0 %v6468
        %v6470 = vpop.xlane.xlu0 %6469
        %v6471 = vrsqrt.pop %v6470
        %v6472 = vmul.f32 %v6470, %v6471
        %vm6473 = vcmp.eq.f32.partialorder %v6470, inf
        %v6474 = vsel %vm6473, %v6470, %v6472
        %vm6475 = vcmp.eq.f32.partialorder %v6470, 0.0
        %v6476 = vand.u32 %v6470, 2147483648
        %v6477 = vsel %vm6475, %v6476, %v6474
        %v6478 = vmax.f32 %v6477, 1e-08
        %v6479 = vmul.f32 %v5982, %v5982
        %v6480 = vmul.f32 %v6057, %v6057
        %v6481 = vmul.f32 %v6132, %v6132
        %v6482 = vmul.f32 %v6207, %v6207
        %v6483 = vmul.f32 %v6282, %v6282
        %v6484 = vmul.f32 %v6357, %v6357
        %vm6485 = vcmask 125952
        %v6486 = vsel %vm6485, %v6479, 0.0
        %6487 = vadd.xlane.f32.xlu0 %v6486
        %v6488 = vpop.xlane.xlu0 %6487
        %v6489 = vsel %vm6485, %v6480, 0.0
        %6490 = vadd.xlane.f32.xlu0 %v6489
        %v6491 = vpop.xlane.xlu0 %6490
        %v6492 = vsel %vm6485, %v6481, 0.0
        %6493 = vadd.xlane.f32.xlu0 %v6492
        %v6494 = vpop.xlane.xlu0 %6493
        %v6495 = vsel %vm6485, %v6482, 0.0
        %6496 = vadd.xlane.f32.xlu0 %v6495
        %v6497 = vpop.xlane.xlu0 %6496
        %v6498 = vsel %vm6485, %v6483, 0.0
        %6499 = vadd.xlane.f32.xlu0 %v6498
        %v6500 = vpop.xlane.xlu0 %6499
        %v6501 = vsel %vm6485, %v6484, 0.0
        %6502 = vadd.xlane.f32.xlu0 %v6501
        %v6503 = vpop.xlane.xlu0 %6502
        %v6510 = vlaneseq
        %v6511 = vand.u32 %v6510, 127
        %v6512 = vlaneseq
        %v6513 = vshrl.u32 %v6512, 7
        %v6514 = vsub.s32 %v6511, %v6513
        %v6515 = vrot.slane %v6488, %v6514
        %v6516 = vlaneseq
        %v6517 = vshrl.u32 %v6516, 7
        %v6518 = vsub.s32 %v6511, %v6517
        %v6519 = vrot.slane %v6491, %v6518
        %v6520 = vlaneseq
        %v6521 = vshrl.u32 %v6520, 7
        %v6522 = vsub.s32 %v6511, %v6521
        %v6523 = vrot.slane %v6494, %v6522
        %v6524 = vlaneseq
        %v6525 = vshrl.u32 %v6524, 7
        %v6526 = vsub.s32 %v6511, %v6525
        %v6527 = vrot.slane %v6497, %v6526
        %v6528 = vlaneseq
        %v6529 = vshrl.u32 %v6528, 7
        %v6530 = vsub.s32 %v6511, %v6529
        %v6531 = vrot.slane %v6500, %v6530
        %v6532 = vlaneseq
        %v6533 = vshrl.u32 %v6532, 7
        %v6534 = vsub.s32 %v6511, %v6533
        %v6535 = vrot.slane %v6503, %v6534
        %vm6536 = vcmask 1041409
        %v6537 = vsel %vm6536, %v6519, %v6515
        %vm6538 = vcmask 1042434
        %v6539 = vsel %vm6538, %v6523, %v6537
        %vm6540 = vcmask 1043459
        %v6541 = vsel %vm6540, %v6527, %v6539
        %vm6542 = vcmask 1044484
        %v6543 = vsel %vm6542, %v6531, %v6541
        %vm6544 = vcmask 1045509
        %v6545 = vsel %vm6544, %v6535, %v6543
        %vm6547 = vcmask 29696
        %v6548 = vsel %vm6547, %v6545, 0.0
        %6549 = vadd.xlane.f32.xlu0 %v6548
        %v6550 = vpop.xlane.xlu0 %6549
        %v6551 = vrsqrt.pop %v6550
        %v6552 = vmul.f32 %v6550, %v6551
        %vm6553 = vcmp.eq.f32.partialorder %v6550, inf
        %v6554 = vsel %vm6553, %v6550, %v6552
        %vm6555 = vcmp.eq.f32.partialorder %v6550, 0.0
        %v6556 = vand.u32 %v6550, 2147483648
        %v6557 = vsel %vm6555, %v6556, %v6554
        %v6558 = vmax.f32 %v6557, 1e-08
        %v6559 = vlaneseq
        %v6560 = vshrl.u32 %v6559, 7
        %v6561 = vsub.s32 0, %v6560
        %v6562 = vrot.slane %v6376, %v6561
        %v6563 = vlaneseq
        %v6564 = vshrl.u32 %v6563, 7
        %v6565 = vsub.s32 0, %v6564
        %v6566 = vrot.slane %v6383, %v6565
        %v6567 = vlaneseq
        %v6568 = vshrl.u32 %v6567, 7
        %v6569 = vsub.s32 0, %v6568
        %v6570 = vrot.slane %v6384, %v6569
        %v6571 = vlaneseq
        %v6572 = vshrl.u32 %v6571, 7
        %v6573 = vsub.s32 0, %v6572
        %v6574 = vrot.slane %v6399, %v6573
        %v6575 = vlaneseq
        %v6576 = vshrl.u32 %v6575, 7
        %v6577 = vsub.s32 0, %v6576
        %v6578 = vrot.slane %v6406, %v6577
        %v6579 = vlaneseq
        %v6580 = vshrl.u32 %v6579, 7
        %v6581 = vsub.s32 0, %v6580
        %v6582 = vrot.slane %v6407, %v6581
        %v6589 = vmul.f32 %v5982, %v6562
        %v6590 = vmul.f32 %v6057, %v6566
        %v6591 = vmul.f32 %v6132, %v6570
        %v6592 = vmul.f32 %v6207, %v6574
        %v6593 = vmul.f32 %v6282, %v6578
        %v6594 = vmul.f32 %v6357, %v6582
        %v6601 = vrot.slane %v6590, 7
        %v6602 = vsel %vm6536, %v6601, %v6589
        %v6603 = vrot.slane %v6591, 6
        %v6604 = vsel %vm6538, %v6603, %v6602
        %v6605 = vrot.slane %v6592, 5
        %v6606 = vsel %vm6540, %v6605, %v6604
        %v6607 = vrot.slane %v6593, 4
        %v6608 = vsel %vm6542, %v6607, %v6606
        %v6609 = vrot.slane %v6594, 3
        %v6610 = vsel %vm6544, %v6609, %v6608
        %vm6612 = vcmask 128000
        %v6613 = vsel %vm6612, %v6610, 0.0
        %6614 = vadd.xlane.f32.xlu0 %v6613
        %v6615 = vpop.xlane.xlu0 %6614
        %v6616 = vadd.f32 %v6615, 0.0
        %6617 = vrot.lane.b32.xlu0 %v6562, 112
        %v6618 = vpop.permute.xlu0 %6617
        %6619 = vrot.lane.b32.xlu0 %v6566, 112
        %v6620 = vpop.permute.xlu0 %6619
        %6621 = vrot.lane.b32.xlu0 %v6570, 112
        %v6622 = vpop.permute.xlu0 %6621
        %6623 = vrot.lane.b32.xlu0 %v6574, 112
        %v6624 = vpop.permute.xlu0 %6623
        %6625 = vrot.lane.b32.xlu0 %v6578, 112
        %v6626 = vpop.permute.xlu0 %6625
        %6627 = vrot.lane.b32.xlu0 %v6582, 112
        %v6628 = vpop.permute.xlu0 %6627
        %v6635 = vmul.f32 %v5982, %v6618
        %v6636 = vmul.f32 %v6057, %v6620
        %v6637 = vmul.f32 %v6132, %v6622
        %v6638 = vmul.f32 %v6207, %v6624
        %v6639 = vmul.f32 %v6282, %v6626
        %v6640 = vmul.f32 %v6357, %v6628
        %v6647 = vrot.slane %v6636, 7
        %v6648 = vsel %vm6538, %v6647, %v6635
        %v6649 = vrot.slane %v6637, 6
        %v6650 = vsel %vm6540, %v6649, %v6648
        %v6651 = vrot.slane %v6638, 5
        %v6652 = vsel %vm6542, %v6651, %v6650
        %v6653 = vrot.slane %v6639, 4
        %v6654 = vsel %vm6544, %v6653, %v6652
        %v6655 = vrot.slane %v6640, 3
        %vm6656 = vcmask 1046534
        %v6657 = vsel %vm6656, %v6655, %v6654
        %vm6659 = vcmask 129025
        %v6660 = vsel %vm6659, %v6657, 0.0
        %6661 = vadd.xlane.f32.xlu0 %v6660
        %v6662 = vpop.xlane.xlu0 %6661
        %v6664 = vrot.slane %v6662, 1
        %v6666 = vadd.f32 %v6616, %v6664
        %6667 = vrot.lane.b32.xlu0 %v6562, 96
        %v6668 = vpop.permute.xlu0 %6667
        %6669 = vrot.lane.b32.xlu0 %v6566, 96
        %v6670 = vpop.permute.xlu0 %6669
        %6671 = vrot.lane.b32.xlu0 %v6570, 96
        %v6672 = vpop.permute.xlu0 %6671
        %6673 = vrot.lane.b32.xlu0 %v6574, 96
        %v6674 = vpop.permute.xlu0 %6673
        %6675 = vrot.lane.b32.xlu0 %v6578, 96
        %v6676 = vpop.permute.xlu0 %6675
        %6677 = vrot.lane.b32.xlu0 %v6582, 96
        %v6678 = vpop.permute.xlu0 %6677
        %v6685 = vmul.f32 %v5982, %v6668
        %v6686 = vmul.f32 %v6057, %v6670
        %v6687 = vmul.f32 %v6132, %v6672
        %v6688 = vmul.f32 %v6207, %v6674
        %v6689 = vmul.f32 %v6282, %v6676
        %v6690 = vmul.f32 %v6357, %v6678
        %v6697 = vrot.slane %v6686, 7
        %v6698 = vsel %vm6540, %v6697, %v6685
        %v6699 = vrot.slane %v6687, 6
        %v6700 = vsel %vm6542, %v6699, %v6698
        %v6701 = vrot.slane %v6688, 5
        %v6702 = vsel %vm6544, %v6701, %v6700
        %v6703 = vrot.slane %v6689, 4
        %v6704 = vsel %vm6656, %v6703, %v6702
        %v6705 = vrot.slane %v6690, 3
        %vm6706 = vcmask 1047559
        %v6707 = vsel %vm6706, %v6705, %v6704
        %vm6709 = vcmask 130050
        %v6710 = vsel %vm6709, %v6707, 0.0
        %6711 = vadd.xlane.f32.xlu0 %v6710
        %v6712 = vpop.xlane.xlu0 %6711
        %v6714 = vrot.slane %v6712, 2
        %v6716 = vadd.f32 %v6666, %v6714
        %6717 = vrot.lane.b32.xlu0 %v6562, 80
        %v6718 = vpop.permute.xlu0 %6717
        %6719 = vrot.lane.b32.xlu0 %v6566, 80
        %v6720 = vpop.permute.xlu0 %6719
        %6721 = vrot.lane.b32.xlu0 %v6570, 80
        %v6722 = vpop.permute.xlu0 %6721
        %6723 = vrot.lane.b32.xlu0 %v6574, 80
        %v6724 = vpop.permute.xlu0 %6723
        %6725 = vrot.lane.b32.xlu0 %v6578, 80
        %v6726 = vpop.permute.xlu0 %6725
        %6727 = vrot.lane.b32.xlu0 %v6582, 80
        %v6728 = vpop.permute.xlu0 %6727
        %v6735 = vmul.f32 %v5982, %v6718
        %v6736 = vmul.f32 %v6057, %v6720
        %v6737 = vmul.f32 %v6132, %v6722
        %v6738 = vmul.f32 %v6207, %v6724
        %v6739 = vmul.f32 %v6282, %v6726
        %v6740 = vmul.f32 %v6357, %v6728
        %v6747 = vrot.slane %v6736, 7
        %v6748 = vsel %vm6542, %v6747, %v6735
        %v6749 = vrot.slane %v6737, 6
        %v6750 = vsel %vm6544, %v6749, %v6748
        %v6751 = vrot.slane %v6738, 5
        %v6752 = vsel %vm6656, %v6751, %v6750
        %v6753 = vrot.slane %v6739, 4
        %v6754 = vsel %vm6706, %v6753, %v6752
        %v6755 = vrot.slane %v6740, 3
        %vm6758 = vcmask 130051
        %v6759 = vsel %vm6758, %v6754, 0.0
        %6760 = vadd.xlane.f32.xlu0 %v6759
        %v6761 = vpop.xlane.xlu0 %6760
        %vm6762 = vcmask 122880
        %v6763 = vsel %vm6762, %v6755, 0.0
        %6764 = vadd.xlane.f32.xlu0 %v6763
        %v6765 = vpop.xlane.xlu0 %6764
        %vm6768 = vcmask 1044480
        %v6769 = vrot.slane %v6761, 3
        %v6770 = vrot.slane %v6765, 3
        %v6771 = vsel %vm6768, %v6769, %v6770
        %v6773 = vadd.f32 %v6716, %v6771
        %v6774 = vmul.f32 %v6478, %v6558
        %v6775 = vrcp.pop %v6774
        %v6776 = vmul.f32 %v6773, %v6775
        %v6777 = vld [vmem:[%s24] sm:$0x1]
        %6779 = vset.pattern.permute.xlu0 0
        %6780 = vperm.xlu0 %6779, %v6776
        %v6781 = vpop.permute.xlu0 %6780
        %v6784 = vlaneseq
        %v6785 = vshrl.u32 %v6784, 7
        %v6786 = vsub.s32 0, %v6785
        %v6787 = vrot.slane %v6777, %v6786
        %v6789 = vmul.f32 %v6781, %v6787
        %v6790 = vld [vmem:[%s25] sm:$0x1]
        %v6792 = vlaneseq
        %v6793 = vshrl.u32 %v6792, 7
        %v6794 = vsub.s32 0, %v6793
        %v6795 = vrot.slane %v6790, %v6794
        %v6797 = vadd.f32 %v6789, %v6795
        %vm6798 = vcmask 13312
        %6799 = vst.msk [vmem:[%s26] sm:$0x3f] %vm6798, %v6797
      $region132: #{question_row_classifier_forward.1} parent=123 // pred_fallthru
        _
      // Predicated region
      $region133: #{question_row_classifier_forward.1} parent=123 // pred_check
        %p6800 = pneg %p676
      $region134: #{question_row_classifier_forward.1} parent=123 // pred_check_branch
        %6802 = sbr.rel (%p6800) target = $region136
      $region135: #{question_row_classifier_forward.1} parent=123 // pred_region
        _
      $region136: #{question_row_classifier_forward.1} parent=123 // pred_fallthru
        _
      // Predicated region
      $region137: #{question_row_classifier_forward.1} parent=123 // pred_check
        %p6803 = pneg %p676
      $region138: #{question_row_classifier_forward.1} parent=123 // pred_check_branch
        %6805 = sbr.rel (%p6803) target = $region140
      $region139: #{question_row_classifier_forward.1} parent=123 // pred_region
        _
      $region140: #{question_row_classifier_forward.1} parent=123 // pred_fallthru
        _
    $region124: #{question_row_classifier_forward.1} parent=5 // pred_fallthru
      _
    %p6806 = scmp.le.s32.totalorder 2, %s32
    // Predicated region
    $region141: #{question_row_classifier_forward.1} parent=5 // pred_check
      %p6807 = pneg %p6806
    $region142: #{question_row_classifier_forward.1} parent=5 // pred_check_branch
      %6809 = sbr.rel (%p6807) target = $region144
    $region143: #{question_row_classifier_forward.1} parent=5 // pred_region
      %s6810 = ssub.s32 %s32, 2
    $region144: #{question_row_classifier_forward.1} parent=5 // pred_fallthru
      _
  $region6: #{question_row_classifier_forward.1} parent=0 // loop_footer
    %s36 = sadd.s32 1, %s32
  $region7: #{question_row_classifier_forward.1} parent=0 // loop_footer_branch
    %31 = sbr.rel target = $region3
  $region8: #{question_row_classifier_forward.1} parent=0 // loop_exit
    _

</llo_original>
